<compile_context>
chip_gen: v7x
topology: tpu7x:2x2x1
jax: 0.10.0
libtpu: 0.0.40
codegen_flags: <defaults>
</compile_context>

<pallas_src>
import functools

import jax
import jax.numpy as jnp
from jax import lax
from jax.experimental import pallas as pl
from jax.experimental.pallas import tpu as pltpu


# ---------------------------------------------------------------------------
# Exact GELU: erf via the Eigen/XLA float32 rational approximation
# (|error| < 1.5e-7), so it matches torch.nn.GELU (erf-based) while using only
# mul/add/div -- guaranteed to lower in Mosaic.
# ---------------------------------------------------------------------------
_ERF_ALPHA = (-2.72614225801306e-10, 2.77068142495902e-08, -2.10102402082508e-06,
              -5.69250639462346e-05, -7.34990630326855e-04, -2.95459980854025e-03,
              -1.60960333262415e-02)
_ERF_BETA = (-1.45660718464996e-05, -2.13374055278905e-04, -1.68282697438203e-03,
             -7.37332916720468e-03, -1.42647390514189e-02)
_ERF_CLAMP = 3.832506856900711


def _erf_f32(x):
    x = jnp.clip(x, -_ERF_CLAMP, _ERF_CLAMP)
    x2 = x * x
    p = jnp.full_like(x, _ERF_ALPHA[0])
    for c in _ERF_ALPHA[1:]:
        p = p * x2 + c
    p = p * x
    q = jnp.full_like(x, _ERF_BETA[0])
    for c in _ERF_BETA[1:]:
        q = q * x2 + c
    return p / q


def _gelu_exact(x):
    return 0.5 * x * (1.0 + _erf_f32(x * 0.7071067811865476))


# ---------------------------------------------------------------------------
# In-kernel helpers
# ---------------------------------------------------------------------------
def _layer_norm(x, gamma, beta, eps=1e-5):
    mu = jnp.mean(x, axis=-1, keepdims=True)
    xc = x - mu
    var = jnp.mean(xc * xc, axis=-1, keepdims=True)
    return xc * lax.rsqrt(var + eps) * gamma + beta


def _batched_head_attention(qT, kT, vT, num_heads, head_dim, scale):
    """qT: (E, NQ) transposed queries; kT/vT: (E, NK) transposed keys/values.

    Returns (attn_out (NQ, E), attn_probs (H, NQ, NK)).
    All heads are handled by two batched dot_generals (no per-head loop).
    """
    E, NQ = qT.shape
    NK = kT.shape[-1]
    H, Dh = num_heads, head_dim

    # Head split: leading-dim reshape only (lane dim untouched, Dh % 8 == 0) -> free.
    qh = jnp.swapaxes((qT * scale).reshape(H, Dh, NQ), 1, 2)   # (H, NQ, Dh)
    kh = kT.reshape(H, Dh, NK)                                 # (H, Dh, NK)
    vh = vT.reshape(H, Dh, NK)                                 # (H, Dh, NK)

    # scores: one batched MXU matmul over all heads.
    s = lax.dot_general(qh, kh, (((2,), (1,)), ((0,), (0,))),
                        preferred_element_type=jnp.float32)    # (H, NQ, NK)

    # softmax over keys (reciprocal + multiply; exp/recip live on the EUP slot).
    s = s - jnp.max(s, axis=-1, keepdims=True)
    e = jnp.exp(s)
    denom = jnp.sum(e, axis=-1, keepdims=True)
    p = e * pl.reciprocal(denom, approx=False)                 # approx=True possible if softmax
                                                               # need not be bit-tight.

    # attn @ v, batched over heads -> head-major transposed result (H, Dh, NQ).
    oTh = lax.dot_general(vh, p, (((2,), (2,)), ((0,), (0,))),
                          preferred_element_type=jnp.float32)
    o = oTh.reshape(E, NQ).T                                   # merge heads (free) + 2-D transpose
    return o, p


def _qformer_body(q_ref, img_ref, wq_c_ref, wkv_c_ref, wqkv_s_ref,
                  g1_ref, bt1_ref, g2_ref, bt2_ref, g3_ref, bt3_ref,
                  w1_ref, fb1_ref, w2_ref, fb2_ref, *, num_heads):
    f32 = jnp.float32
    x = q_ref[0]        # (NQ, E)   learned queries
    img = img_ref[0]    # (NK, IN)  image tokens
    E = x.shape[-1]
    H = num_heads
    Dh = E // H
    scale = float(Dh) ** -0.5

    # ---- cross attention (q_proj / fused k|v proj; bias=False, o_proj=Identity) ----
    qT = lax.dot_general(wq_c_ref[...], x, (((1,), (1,)), ((), ())),
                         preferred_element_type=f32)            # (E, NQ)
    kvT = lax.dot_general(wkv_c_ref[...], img, (((1,), (1,)), ((), ())),
                          preferred_element_type=f32)           # (2E, NK)
    o_c, p_c = _batched_head_attention(qT, kvT[:E], kvT[E:], H, Dh, scale)
    h = _layer_norm(x + o_c, g1_ref[...], bt1_ref[...])

    # ---- self attention (fused q|k|v projection) ----
    qkvT = lax.dot_general(wqkv_s_ref[...], h, (((1,), (1,)), ((), ())),
                           preferred_element_type=f32)          # (3E, NQ)
    o_s, p_s = _batched_head_attention(qkvT[:E], qkvT[E:2 * E], qkvT[2 * E:],
                                       H, Dh, scale)
    h = _layer_norm(h + o_s, g2_ref[...], bt2_ref[...])

    # ---- MLP: Linear -> GELU(exact) -> Linear (dropout p=0 => no-op) ----
    z = lax.dot_general(h, w1_ref[...], (((1,), (1,)), ((), ())),
                        preferred_element_type=f32) + fb1_ref[...]   # (NQ, 2E)
    z = _gelu_exact(z)
    y = lax.dot_general(z, w2_ref[...], (((1,), (1,)), ((), ())),
                        preferred_element_type=f32) + fb2_ref[...]   # (NQ, E)
    out = _layer_norm(h + y, g3_ref[...], bt3_ref[...])
    return out, p_c, p_s


def _qformer_kernel(q_ref, img_ref, wq_c_ref, wkv_c_ref, wqkv_s_ref,
                    g1_ref, bt1_ref, g2_ref, bt2_ref, g3_ref, bt3_ref,
                    w1_ref, fb1_ref, w2_ref, fb2_ref,
                    out_ref, *, num_heads):
    out, _, _ = _qformer_body(q_ref, img_ref, wq_c_ref, wkv_c_ref, wqkv_s_ref,
                              g1_ref, bt1_ref, g2_ref, bt2_ref, g3_ref, bt3_ref,
                              w1_ref, fb1_ref, w2_ref, fb2_ref,
                              num_heads=num_heads)
    out_ref[0] = out


def _qformer_kernel_with_attn(q_ref, img_ref, wq_c_ref, wkv_c_ref, wqkv_s_ref,
                              g1_ref, bt1_ref, g2_ref, bt2_ref, g3_ref, bt3_ref,
                              w1_ref, fb1_ref, w2_ref, fb2_ref,
                              out_ref, attn_c_ref, attn_s_ref, *, num_heads):
    out, p_c, p_s = _qformer_body(q_ref, img_ref, wq_c_ref, wkv_c_ref, wqkv_s_ref,
                                  g1_ref, bt1_ref, g2_ref, bt2_ref, g3_ref, bt3_ref,
                                  w1_ref, fb1_ref, w2_ref, fb2_ref,
                                  num_heads=num_heads)
    out_ref[0] = out
    attn_c_ref[0] = p_c        # single full-block store per attention map
    attn_s_ref[0] = p_s


# ---------------------------------------------------------------------------
# Host-side wrapper (BlockSpecs / grid / weight fusion)
# ---------------------------------------------------------------------------
def qformer_block(query, image, params, *, num_heads,
                  need_weights=False, average_attn_weights=False):
    B, NQ, E = query.shape
    _, NK, IN = image.shape
    assert E % num_heads == 0
    head_dim = E // num_heads
    assert head_dim % 8 == 0, (
        "head_dim must be a multiple of 8 (f32 sublane tile) so the in-kernel "
        "head split is a free leading-dim reshape")

    # Fuse projection weights (torch (out,in) layout kept as-is).
    wkv_c = jnp.concatenate([params['wk_c'], params['wv_c']], axis=0)            # (2E, IN)
    wqkv_s = jnp.concatenate([params['wq_s'], params['wk_s'], params['wv_s']], 0)  # (3E, E)
    row = lambda v: v.reshape(1, -1)

    ins = (query, image, params['wq_c'], wkv_c, wqkv_s,
           row(params['ln1_g']), row(params['ln1_b']),
           row(params['ln2_g']), row(params['ln2_b']),
           row(params['ln3_g']), row(params['ln3_b']),
           params['fc1_w'], row(params['fc1_b']),
           params['fc2_w'], row(params['fc2_b']))

    rep = lambda shape: pl.BlockSpec(shape, lambda b: (0, 0))
    in_specs = [
        pl.BlockSpec((1, NQ, E), lambda b: (b, 0, 0)),
        pl.BlockSpec((1, NK, IN), lambda b: (b, 0, 0)),
        rep((E, E)), rep((2 * E, IN)), rep((3 * E, E)),
        rep((1, E)), rep((1, E)), rep((1, E)), rep((1, E)), rep((1, E)), rep((1, E)),
        rep((2 * E, E)), rep((1, 2 * E)),
        rep((E, 2 * E)), rep((1, E)),
    ]
    cp = pltpu.CompilerParams(dimension_semantics=("parallel",))

    if need_weights:
        kernel = functools.partial(_qformer_kernel_with_attn, num_heads=num_heads)
        out, attn_c, attn_s = pl.pallas_call(
            kernel,
            grid=(B,),
            in_specs=in_specs,
            out_specs=(
                pl.BlockSpec((1, NQ, E), lambda b: (b, 0, 0)),
                pl.BlockSpec((1, num_heads, NQ, NK), lambda b: (b, 0, 0, 0)),
                pl.BlockSpec((1, num_heads, NQ, NQ), lambda b: (b, 0, 0, 0)),
            ),
            out_shape=(
                jax.ShapeDtypeStruct((B, NQ, E), jnp.float32),
                jax.ShapeDtypeStruct((B, num_heads, NQ, NK), jnp.float32),
                jax.ShapeDtypeStruct((B, num_heads, NQ, NQ), jnp.float32),
            ),
            compiler_params=cp,
        )(*ins)
        if average_attn_weights:
            attn_c = attn_c.mean(axis=1)
            attn_s = attn_s.mean(axis=1)
        return out, attn_c, attn_s

    # Default path: no attention-map writeback at all (separate compiled variant).
    kernel = functools.partial(_qformer_kernel, num_heads=num_heads)
    out = pl.pallas_call(
        kernel,
        grid=(B,),
        in_specs=in_specs,
        out_specs=pl.BlockSpec((1, NQ, E), lambda b: (b, 0, 0)),
        out_shape=jax.ShapeDtypeStruct((B, NQ, E), jnp.float32),
        compiler_params=cp,
    )(*ins)
    return out


# ---------------------------------------------------------------------------
# Pure-JAX reference mirroring the torch QFormerBlock forward.
# ---------------------------------------------------------------------------
def _reference_qformer(query, image, params, *, num_heads):
    lin = lambda x, w: jnp.einsum('bnd,cd->bnc', x, w)   # torch (out,in) weight

    def mha(q_in, kv_in, wq, wk, wv, H):
        q, k, v = lin(q_in, wq), lin(kv_in, wk), lin(kv_in, wv)
        B, NQ, C = q.shape
        NK = k.shape[1]
        Dh = C // H
        q = q.reshape(B, NQ, H, Dh).transpose(0, 2, 1, 3)
        k = k.reshape(B, NK, H, Dh).transpose(0, 2, 1, 3)
        v = v.reshape(B, NK, H, Dh).transpose(0, 2, 1, 3)
        s = jnp.einsum('bhqd,bhkd->bhqk', q, k) * (Dh ** -0.5)
        attn = jax.nn.softmax(s, axis=-1)
        o = jnp.einsum('bhqk,bhkd->bhqd', attn, v)
        return o.transpose(0, 2, 1, 3).reshape(B, NQ, C), attn

    def ln(x, g, b, eps=1e-5):
        mu = x.mean(-1, keepdims=True)
        var = ((x - mu) ** 2).mean(-1, keepdims=True)
        return (x - mu) / jnp.sqrt(var + eps) * g + b

    o_c, attn_c = mha(query, image, params['wq_c'], params['wk_c'], params['wv_c'], num_heads)
    x = ln(query + o_c, params['ln1_g'], params['ln1_b'])
    o_s, attn_s = mha(x, x, params['wq_s'], params['wk_s'], params['wv_s'], num_heads)
    x = ln(x + o_s, params['ln2_g'], params['ln2_b'])
    m = jax.nn.gelu(lin(x, params['fc1_w']) + params['fc1_b'], approximate=False)
    m = lin(m, params['fc2_w']) + params['fc2_b']
    x = ln(x + m, params['ln3_g'], params['ln3_b'])
    return x, attn_c, attn_s


# ---------------------------------------------------------------------------
if __name__ == "__main__":
    # QFormerBlock(in_dim=64, out_dim=128, num_heads=16) -> head_dim=8, mlp hidden=256.
    IN_DIM, OUT_DIM, HEADS = 64, 128, 16
    B, NQ, NK = 2, 8, 16

    key = jax.random.PRNGKey(0)
    ks = jax.random.split(key, 20)
    w = lambda k, shape, s=0.05: jax.random.normal(k, shape, jnp.float32) * s

    params = {
        'wq_c': w(ks[0], (OUT_DIM, OUT_DIM)),
        'wk_c': w(ks[1], (OUT_DIM, IN_DIM)),
        'wv_c': w(ks[2], (OUT_DIM, IN_DIM)),
        'wq_s': w(ks[3], (OUT_DIM, OUT_DIM)),
        'wk_s': w(ks[4], (OUT_DIM, OUT_DIM)),
        'wv_s': w(ks[5], (OUT_DIM, OUT_DIM)),
        'ln1_g': 1.0 + w(ks[6], (OUT_DIM,)), 'ln1_b': w(ks[7], (OUT_DIM,)),
        'ln2_g': 1.0 + w(ks[8], (OUT_DIM,)), 'ln2_b': w(ks[9], (OUT_DIM,)),
        'ln3_g': 1.0 + w(ks[10], (OUT_DIM,)), 'ln3_b': w(ks[11], (OUT_DIM,)),
        'fc1_w': w(ks[12], (2 * OUT_DIM, OUT_DIM)), 'fc1_b': w(ks[13], (2 * OUT_DIM,)),
        'fc2_w': w(ks[14], (OUT_DIM, 2 * OUT_DIM)), 'fc2_b': w(ks[15], (OUT_DIM,)),
    }
    query = jax.random.normal(ks[16], (B, NQ, OUT_DIM), jnp.float32)
    image = jax.random.normal(ks[17], (B, NK, IN_DIM), jnp.float32)

    # Fast path (default): no attention-map outputs.
    out = qformer_block(query, image, params, num_heads=HEADS)
    out = jax.block_until_ready(out)

    # Debug path: attention maps requested.
    out_w, attn_c, attn_s = qformer_block(query, image, params, num_heads=HEADS,
                                          need_weights=True, average_attn_weights=False)
    jax.block_until_ready((out_w, attn_c, attn_s))

    ref_out, ref_attn_c, ref_attn_s = _reference_qformer(query, image, params,
                                                         num_heads=HEADS)

    assert out.shape == (B, NQ, OUT_DIM)
    assert attn_c.shape == (B, HEADS, NQ, NK)
    assert attn_s.shape == (B, HEADS, NQ, NQ)
    # Tolerance covers MXU f32 rounding accumulated across the 6-matmul chain
    # plus minor exp/erf implementation differences between Mosaic and XLA.
    tol = dict(rtol=1e-3, atol=1e-3)
    assert jnp.allclose(out, ref_out, **tol)
    assert jnp.allclose(out_w, ref_out, **tol)
    assert jnp.allclose(attn_c, ref_attn_c, **tol)
    assert jnp.allclose(attn_s, ref_attn_s, **tol)
    print("KERNEL_OK")
</pallas_src>

<mosaic_0001>
module attributes {stable_mosaic.version = 11 : i64} {
  func.func @_qformer_kernel(%arg0: i32, %arg1: memref<1x8x128xf32, #tpu.memory_space<vmem>>, %arg2: memref<1x16x64xf32, #tpu.memory_space<vmem>>, %arg3: memref<128x128xf32, #tpu.memory_space<vmem>>, %arg4: memref<256x64xf32, #tpu.memory_space<vmem>>, %arg5: memref<384x128xf32, #tpu.memory_space<vmem>>, %arg6: memref<1x128xf32, #tpu.memory_space<vmem>>, %arg7: memref<1x128xf32, #tpu.memory_space<vmem>>, %arg8: memref<1x128xf32, #tpu.memory_space<vmem>>, %arg9: memref<1x128xf32, #tpu.memory_space<vmem>>, %arg10: memref<1x128xf32, #tpu.memory_space<vmem>>, %arg11: memref<1x128xf32, #tpu.memory_space<vmem>>, %arg12: memref<256x128xf32, #tpu.memory_space<vmem>>, %arg13: memref<1x256xf32, #tpu.memory_space<vmem>>, %arg14: memref<128x256xf32, #tpu.memory_space<vmem>>, %arg15: memref<1x128xf32, #tpu.memory_space<vmem>>, %arg16: memref<1x8x128xf32, #tpu.memory_space<vmem>>) attributes {dimension_semantics = [#tpu.dimension_semantics<parallel>], iteration_bounds = array<i64: 2>, scalar_prefetch = 0 : i64, scratch_operands = 0 : i64, tpu.core_type = #tpu.core_type<tc>, window_params = [{transform_indices = @transform_0, window_bounds = array<i64: 1, 8, 128>}, {transform_indices = @transform_1, window_bounds = array<i64: 1, 16, 64>}, {pipeline_mode = #tpu.pipeline_mode<synchronous>, transform_indices = @transform_2, window_bounds = array<i64: 128, 128>}, {pipeline_mode = #tpu.pipeline_mode<synchronous>, transform_indices = @transform_3, window_bounds = array<i64: 256, 64>}, {pipeline_mode = #tpu.pipeline_mode<synchronous>, transform_indices = @transform_4, window_bounds = array<i64: 384, 128>}, {pipeline_mode = #tpu.pipeline_mode<synchronous>, transform_indices = @transform_5, window_bounds = array<i64: 1, 128>}, {pipeline_mode = #tpu.pipeline_mode<synchronous>, transform_indices = @transform_6, window_bounds = array<i64: 1, 128>}, {pipeline_mode = #tpu.pipeline_mode<synchronous>, transform_indices = @transform_7, window_bounds = array<i64: 1, 128>}, {pipeline_mode = #tpu.pipeline_mode<synchronous>, transform_indices = @transform_8, window_bounds = array<i64: 1, 128>}, {pipeline_mode = #tpu.pipeline_mode<synchronous>, transform_indices = @transform_9, window_bounds = array<i64: 1, 128>}, {pipeline_mode = #tpu.pipeline_mode<synchronous>, transform_indices = @transform_10, window_bounds = array<i64: 1, 128>}, {pipeline_mode = #tpu.pipeline_mode<synchronous>, transform_indices = @transform_11, window_bounds = array<i64: 256, 128>}, {pipeline_mode = #tpu.pipeline_mode<synchronous>, transform_indices = @transform_12, window_bounds = array<i64: 1, 256>}, {pipeline_mode = #tpu.pipeline_mode<synchronous>, transform_indices = @transform_13, window_bounds = array<i64: 128, 256>}, {pipeline_mode = #tpu.pipeline_mode<synchronous>, transform_indices = @transform_14, window_bounds = array<i64: 1, 128>}, {transform_indices = @transform_15, window_bounds = array<i64: 1, 8, 128>}]} {
    %c0 = arith.constant 0 : index
    %c0_0 = arith.constant 0 : index
    %c0_1 = arith.constant 0 : index
    %0 = vector.load %arg1[%c0, %c0_0, %c0_1] : memref<1x8x128xf32, #tpu.memory_space<vmem>>, vector<1x8x128xf32>
    %1 = vector.shape_cast %0 : vector<1x8x128xf32> to vector<8x128xf32>
    %c0_2 = arith.constant 0 : index
    %c0_3 = arith.constant 0 : index
    %c0_4 = arith.constant 0 : index
    %2 = vector.load %arg2[%c0_2, %c0_3, %c0_4] : memref<1x16x64xf32, #tpu.memory_space<vmem>>, vector<1x16x64xf32>
    %3 = vector.shape_cast %2 : vector<1x16x64xf32> to vector<16x64xf32>
    %c0_5 = arith.constant 0 : index
    %c0_6 = arith.constant 0 : index
    %4 = vector.load %arg3[%c0_5, %c0_6] : memref<128x128xf32, #tpu.memory_space<vmem>>, vector<128x128xf32>
    %cst = arith.constant dense<0.000000e+00> : vector<128x8xf32>
    %5 = tpu.matmul %4, %1, %cst {dimension_numbers = #tpu.dot_dimension_numbers<[1], [1], [0], [0], [0, 0, 1, 0], [], []>} : vector<128x128xf32>, vector<8x128xf32>, vector<128x8xf32> -> vector<128x8xf32>
    %c0_7 = arith.constant 0 : index
    %c0_8 = arith.constant 0 : index
    %6 = vector.load %arg4[%c0_7, %c0_8] : memref<256x64xf32, #tpu.memory_space<vmem>>, vector<256x64xf32>
    %cst_9 = arith.constant dense<0.000000e+00> : vector<256x16xf32>
    %7 = tpu.matmul %6, %3, %cst_9 {dimension_numbers = #tpu.dot_dimension_numbers<[1], [1], [0], [0], [0, 0, 1, 0], [], []>} : vector<256x64xf32>, vector<16x64xf32>, vector<256x16xf32> -> vector<256x16xf32>
    %8 = vector.extract_strided_slice %7 {offsets = [0, 0], sizes = [128, 16], strides = [1, 1]} : vector<256x16xf32> to vector<128x16xf32>
    %9 = vector.extract_strided_slice %7 {offsets = [128, 0], sizes = [128, 16], strides = [1, 1]} : vector<256x16xf32> to vector<128x16xf32>
    %cst_10 = arith.constant 0.353553385 : f32
    %10 = vector.broadcast %cst_10 : f32 to vector<128x8xf32>
    %11 = arith.mulf %5, %10 : vector<128x8xf32>
    %12 = vector.shape_cast %11 : vector<128x8xf32> to vector<16x8x8xf32>
    %13 = tpu.transpose %12, [0, 2, 1] : vector<16x8x8xf32> -> vector<16x8x8xf32>
    %14 = vector.shape_cast %8 : vector<128x16xf32> to vector<16x8x16xf32>
    %15 = vector.shape_cast %9 : vector<128x16xf32> to vector<16x8x16xf32>
    %cst_11 = arith.constant dense<0.000000e+00> : vector<16x8x16xf32>
    %16 = tpu.matmul %13, %14, %cst_11 {dimension_numbers = #tpu.dot_dimension_numbers<[2], [1], [1], [2], [0, 0, 0, 1, 1, 2], [0], [0]>} : vector<16x8x8xf32>, vector<16x8x16xf32>, vector<16x8x16xf32> -> vector<16x8x16xf32>
    %cst_12 = arith.constant dense<0xFF800000> : vector<16x8xf32>
    %17 = vector.multi_reduction <maximumf>, %16, %cst_12 [2] : vector<16x8x16xf32> to vector<16x8xf32>
    %18 = vector.shape_cast %17 : vector<16x8xf32> to vector<16x8x1xf32>
    %19 = vector.broadcast %18 : vector<16x8x1xf32> to vector<16x8x16xf32>
    %20 = arith.subf %16, %19 : vector<16x8x16xf32>
    %21 = math.exp %20 : vector<16x8x16xf32>
    %cst_13 = arith.constant dense<0.000000e+00> : vector<16x8xf32>
    %22 = vector.multi_reduction <add>, %21, %cst_13 [2] : vector<16x8x16xf32> to vector<16x8xf32>
    %23 = vector.shape_cast %22 : vector<16x8xf32> to vector<16x8x1xf32>
    %24 = tpu.reciprocal %23 : vector<16x8x1xf32> -> vector<16x8x1xf32>
    %25 = vector.broadcast %24 : vector<16x8x1xf32> to vector<16x8x16xf32>
    %26 = arith.mulf %21, %25 : vector<16x8x16xf32>
    %cst_14 = arith.constant dense<0.000000e+00> : vector<16x8x8xf32>
    %27 = tpu.matmul %15, %26, %cst_14 {dimension_numbers = #tpu.dot_dimension_numbers<[2], [2], [1], [1], [0, 0, 0, 1, 1, 1], [0], [0]>} : vector<16x8x16xf32>, vector<16x8x16xf32>, vector<16x8x8xf32> -> vector<16x8x8xf32>
    %28 = vector.shape_cast %27 : vector<16x8x8xf32> to vector<128x8xf32>
    %29 = tpu.transpose %28, [1, 0] : vector<128x8xf32> -> vector<8x128xf32>
    %30 = arith.addf %1, %29 : vector<8x128xf32>
    %c0_15 = arith.constant 0 : index
    %c0_16 = arith.constant 0 : index
    %31 = vector.load %arg6[%c0_15, %c0_16] : memref<1x128xf32, #tpu.memory_space<vmem>>, vector<1x128xf32>
    %c0_17 = arith.constant 0 : index
    %c0_18 = arith.constant 0 : index
    %32 = vector.load %arg7[%c0_17, %c0_18] : memref<1x128xf32, #tpu.memory_space<vmem>>, vector<1x128xf32>
    %cst_19 = arith.constant dense<0.000000e+00> : vector<8xf32>
    %33 = vector.multi_reduction <add>, %30, %cst_19 [1] : vector<8x128xf32> to vector<8xf32>
    %34 = vector.shape_cast %33 : vector<8xf32> to vector<8x1xf32>
    %cst_20 = arith.constant 1.280000e+02 : f32
    %35 = vector.broadcast %cst_20 : f32 to vector<8x1xf32>
    %36 = arith.divf %34, %35 : vector<8x1xf32>
    %37 = vector.broadcast %36 : vector<8x1xf32> to vector<8x128xf32>
    %38 = arith.subf %30, %37 : vector<8x128xf32>
    %39 = arith.mulf %38, %38 : vector<8x128xf32>
    %cst_21 = arith.constant dense<0.000000e+00> : vector<8xf32>
    %40 = vector.multi_reduction <add>, %39, %cst_21 [1] : vector<8x128xf32> to vector<8xf32>
    %41 = vector.shape_cast %40 : vector<8xf32> to vector<8x1xf32>
    %cst_22 = arith.constant 1.280000e+02 : f32
    %42 = vector.broadcast %cst_22 : f32 to vector<8x1xf32>
    %43 = arith.divf %41, %42 : vector<8x1xf32>
    %cst_23 = arith.constant 9.99999974E-6 : f32
    %44 = vector.broadcast %cst_23 : f32 to vector<8x1xf32>
    %45 = arith.addf %43, %44 : vector<8x1xf32>
    %46 = math.rsqrt %45 : vector<8x1xf32>
    %47 = vector.broadcast %46 : vector<8x1xf32> to vector<8x128xf32>
    %48 = arith.mulf %38, %47 : vector<8x128xf32>
    %49 = vector.broadcast %31 : vector<1x128xf32> to vector<8x128xf32>
    %50 = arith.mulf %48, %49 : vector<8x128xf32>
    %51 = vector.broadcast %32 : vector<1x128xf32> to vector<8x128xf32>
    %52 = arith.addf %50, %51 : vector<8x128xf32>
    %c0_24 = arith.constant 0 : index
    %c0_25 = arith.constant 0 : index
    %53 = vector.load %arg5[%c0_24, %c0_25] : memref<384x128xf32, #tpu.memory_space<vmem>>, vector<384x128xf32>
    %cst_26 = arith.constant dense<0.000000e+00> : vector<384x8xf32>
    %54 = tpu.matmul %53, %52, %cst_26 {dimension_numbers = #tpu.dot_dimension_numbers<[1], [1], [0], [0], [0, 0, 1, 0], [], []>} : vector<384x128xf32>, vector<8x128xf32>, vector<384x8xf32> -> vector<384x8xf32>
    %55 = vector.extract_strided_slice %54 {offsets = [0, 0], sizes = [128, 8], strides = [1, 1]} : vector<384x8xf32> to vector<128x8xf32>
    %56 = vector.extract_strided_slice %54 {offsets = [128, 0], sizes = [128, 8], strides = [1, 1]} : vector<384x8xf32> to vector<128x8xf32>
    %57 = vector.extract_strided_slice %54 {offsets = [256, 0], sizes = [128, 8], strides = [1, 1]} : vector<384x8xf32> to vector<128x8xf32>
    %cst_27 = arith.constant 0.353553385 : f32
    %58 = vector.broadcast %cst_27 : f32 to vector<128x8xf32>
    %59 = arith.mulf %55, %58 : vector<128x8xf32>
    %60 = vector.shape_cast %59 : vector<128x8xf32> to vector<16x8x8xf32>
    %61 = tpu.transpose %60, [0, 2, 1] : vector<16x8x8xf32> -> vector<16x8x8xf32>
    %62 = vector.shape_cast %56 : vector<128x8xf32> to vector<16x8x8xf32>
    %63 = vector.shape_cast %57 : vector<128x8xf32> to vector<16x8x8xf32>
    %cst_28 = arith.constant dense<0.000000e+00> : vector<16x8x8xf32>
    %64 = tpu.matmul %61, %62, %cst_28 {dimension_numbers = #tpu.dot_dimension_numbers<[2], [1], [1], [2], [0, 0, 0, 1, 1, 2], [0], [0]>} : vector<16x8x8xf32>, vector<16x8x8xf32>, vector<16x8x8xf32> -> vector<16x8x8xf32>
    %cst_29 = arith.constant dense<0xFF800000> : vector<16x8xf32>
    %65 = vector.multi_reduction <maximumf>, %64, %cst_29 [2] : vector<16x8x8xf32> to vector<16x8xf32>
    %66 = vector.shape_cast %65 : vector<16x8xf32> to vector<16x8x1xf32>
    %67 = vector.broadcast %66 : vector<16x8x1xf32> to vector<16x8x8xf32>
    %68 = arith.subf %64, %67 : vector<16x8x8xf32>
    %69 = math.exp %68 : vector<16x8x8xf32>
    %cst_30 = arith.constant dense<0.000000e+00> : vector<16x8xf32>
    %70 = vector.multi_reduction <add>, %69, %cst_30 [2] : vector<16x8x8xf32> to vector<16x8xf32>
    %71 = vector.shape_cast %70 : vector<16x8xf32> to vector<16x8x1xf32>
    %72 = tpu.reciprocal %71 : vector<16x8x1xf32> -> vector<16x8x1xf32>
    %73 = vector.broadcast %72 : vector<16x8x1xf32> to vector<16x8x8xf32>
    %74 = arith.mulf %69, %73 : vector<16x8x8xf32>
    %cst_31 = arith.constant dense<0.000000e+00> : vector<16x8x8xf32>
    %75 = tpu.matmul %63, %74, %cst_31 {dimension_numbers = #tpu.dot_dimension_numbers<[2], [2], [1], [1], [0, 0, 0, 1, 1, 1], [0], [0]>} : vector<16x8x8xf32>, vector<16x8x8xf32>, vector<16x8x8xf32> -> vector<16x8x8xf32>
    %76 = vector.shape_cast %75 : vector<16x8x8xf32> to vector<128x8xf32>
    %77 = tpu.transpose %76, [1, 0] : vector<128x8xf32> -> vector<8x128xf32>
    %78 = arith.addf %52, %77 : vector<8x128xf32>
    %c0_32 = arith.constant 0 : index
    %c0_33 = arith.constant 0 : index
    %79 = vector.load %arg8[%c0_32, %c0_33] : memref<1x128xf32, #tpu.memory_space<vmem>>, vector<1x128xf32>
    %c0_34 = arith.constant 0 : index
    %c0_35 = arith.constant 0 : index
    %80 = vector.load %arg9[%c0_34, %c0_35] : memref<1x128xf32, #tpu.memory_space<vmem>>, vector<1x128xf32>
    %cst_36 = arith.constant dense<0.000000e+00> : vector<8xf32>
    %81 = vector.multi_reduction <add>, %78, %cst_36 [1] : vector<8x128xf32> to vector<8xf32>
    %82 = vector.shape_cast %81 : vector<8xf32> to vector<8x1xf32>
    %cst_37 = arith.constant 1.280000e+02 : f32
    %83 = vector.broadcast %cst_37 : f32 to vector<8x1xf32>
    %84 = arith.divf %82, %83 : vector<8x1xf32>
    %85 = vector.broadcast %84 : vector<8x1xf32> to vector<8x128xf32>
    %86 = arith.subf %78, %85 : vector<8x128xf32>
    %87 = arith.mulf %86, %86 : vector<8x128xf32>
    %cst_38 = arith.constant dense<0.000000e+00> : vector<8xf32>
    %88 = vector.multi_reduction <add>, %87, %cst_38 [1] : vector<8x128xf32> to vector<8xf32>
    %89 = vector.shape_cast %88 : vector<8xf32> to vector<8x1xf32>
    %cst_39 = arith.constant 1.280000e+02 : f32
    %90 = vector.broadcast %cst_39 : f32 to vector<8x1xf32>
    %91 = arith.divf %89, %90 : vector<8x1xf32>
    %cst_40 = arith.constant 9.99999974E-6 : f32
    %92 = vector.broadcast %cst_40 : f32 to vector<8x1xf32>
    %93 = arith.addf %91, %92 : vector<8x1xf32>
    %94 = math.rsqrt %93 : vector<8x1xf32>
    %95 = vector.broadcast %94 : vector<8x1xf32> to vector<8x128xf32>
    %96 = arith.mulf %86, %95 : vector<8x128xf32>
    %97 = vector.broadcast %79 : vector<1x128xf32> to vector<8x128xf32>
    %98 = arith.mulf %96, %97 : vector<8x128xf32>
    %99 = vector.broadcast %80 : vector<1x128xf32> to vector<8x128xf32>
    %100 = arith.addf %98, %99 : vector<8x128xf32>
    %c0_41 = arith.constant 0 : index
    %c0_42 = arith.constant 0 : index
    %101 = vector.load %arg12[%c0_41, %c0_42] : memref<256x128xf32, #tpu.memory_space<vmem>>, vector<256x128xf32>
    %cst_43 = arith.constant dense<0.000000e+00> : vector<8x256xf32>
    %102 = tpu.matmul %100, %101, %cst_43 {dimension_numbers = #tpu.dot_dimension_numbers<[1], [1], [0], [0], [0, 0, 1, 0], [], []>} : vector<8x128xf32>, vector<256x128xf32>, vector<8x256xf32> -> vector<8x256xf32>
    %c0_44 = arith.constant 0 : index
    %c0_45 = arith.constant 0 : index
    %103 = vector.load %arg13[%c0_44, %c0_45] : memref<1x256xf32, #tpu.memory_space<vmem>>, vector<1x256xf32>
    %104 = vector.broadcast %103 : vector<1x256xf32> to vector<8x256xf32>
    %105 = arith.addf %102, %104 : vector<8x256xf32>
    %cst_46 = arith.constant 5.000000e-01 : f32
    %106 = vector.broadcast %cst_46 : f32 to vector<8x256xf32>
    %107 = arith.mulf %106, %105 : vector<8x256xf32>
    %cst_47 = arith.constant 0.707106769 : f32
    %108 = vector.broadcast %cst_47 : f32 to vector<8x256xf32>
    %109 = arith.mulf %105, %108 : vector<8x256xf32>
    %cst_48 = arith.constant -3.8325069 : f32
    %cst_49 = arith.constant 3.8325069 : f32
    %110 = vector.broadcast %cst_48 : f32 to vector<8x256xf32>
    %111 = arith.maximumf %110, %109 : vector<8x256xf32>
    %112 = vector.broadcast %cst_49 : f32 to vector<8x256xf32>
    %113 = arith.minimumf %112, %111 : vector<8x256xf32>
    %114 = arith.mulf %113, %113 : vector<8x256xf32>
    %cst_50 = arith.constant -2.72614237E-10 : f32
    %115 = vector.broadcast %cst_50 : f32 to vector<8x256xf32>
    %116 = arith.mulf %115, %114 : vector<8x256xf32>
    %cst_51 = arith.constant 2.77068146E-8 : f32
    %117 = vector.broadcast %cst_51 : f32 to vector<8x256xf32>
    %118 = arith.addf %116, %117 : vector<8x256xf32>
    %119 = arith.mulf %118, %114 : vector<8x256xf32>
    %cst_52 = arith.constant -2.10102394E-6 : f32
    %120 = vector.broadcast %cst_52 : f32 to vector<8x256xf32>
    %121 = arith.addf %119, %120 : vector<8x256xf32>
    %122 = arith.mulf %121, %114 : vector<8x256xf32>
    %cst_53 = arith.constant -5.69250624E-5 : f32
    %123 = vector.broadcast %cst_53 : f32 to vector<8x256xf32>
    %124 = arith.addf %122, %123 : vector<8x256xf32>
    %125 = arith.mulf %124, %114 : vector<8x256xf32>
    %cst_54 = arith.constant -7.34990637E-4 : f32
    %126 = vector.broadcast %cst_54 : f32 to vector<8x256xf32>
    %127 = arith.addf %125, %126 : vector<8x256xf32>
    %128 = arith.mulf %127, %114 : vector<8x256xf32>
    %cst_55 = arith.constant -2.954600e-03 : f32
    %129 = vector.broadcast %cst_55 : f32 to vector<8x256xf32>
    %130 = arith.addf %128, %129 : vector<8x256xf32>
    %131 = arith.mulf %130, %114 : vector<8x256xf32>
    %cst_56 = arith.constant -0.0160960332 : f32
    %132 = vector.broadcast %cst_56 : f32 to vector<8x256xf32>
    %133 = arith.addf %131, %132 : vector<8x256xf32>
    %134 = arith.mulf %133, %113 : vector<8x256xf32>
    %cst_57 = arith.constant -1.45660715E-5 : f32
    %135 = vector.broadcast %cst_57 : f32 to vector<8x256xf32>
    %136 = arith.mulf %135, %114 : vector<8x256xf32>
    %cst_58 = arith.constant -2.13374049E-4 : f32
    %137 = vector.broadcast %cst_58 : f32 to vector<8x256xf32>
    %138 = arith.addf %136, %137 : vector<8x256xf32>
    %139 = arith.mulf %138, %114 : vector<8x256xf32>
    %cst_59 = arith.constant -0.00168282702 : f32
    %140 = vector.broadcast %cst_59 : f32 to vector<8x256xf32>
    %141 = arith.addf %139, %140 : vector<8x256xf32>
    %142 = arith.mulf %141, %114 : vector<8x256xf32>
    %cst_60 = arith.constant -0.00737332925 : f32
    %143 = vector.broadcast %cst_60 : f32 to vector<8x256xf32>
    %144 = arith.addf %142, %143 : vector<8x256xf32>
    %145 = arith.mulf %144, %114 : vector<8x256xf32>
    %cst_61 = arith.constant -0.0142647391 : f32
    %146 = vector.broadcast %cst_61 : f32 to vector<8x256xf32>
    %147 = arith.addf %145, %146 : vector<8x256xf32>
    %148 = arith.divf %134, %147 : vector<8x256xf32>
    %cst_62 = arith.constant 1.000000e+00 : f32
    %149 = vector.broadcast %cst_62 : f32 to vector<8x256xf32>
    %150 = arith.addf %149, %148 : vector<8x256xf32>
    %151 = arith.mulf %107, %150 : vector<8x256xf32>
    %c0_63 = arith.constant 0 : index
    %c0_64 = arith.constant 0 : index
    %152 = vector.load %arg14[%c0_63, %c0_64] : memref<128x256xf32, #tpu.memory_space<vmem>>, vector<128x256xf32>
    %cst_65 = arith.constant dense<0.000000e+00> : vector<8x128xf32>
    %153 = tpu.matmul %151, %152, %cst_65 {dimension_numbers = #tpu.dot_dimension_numbers<[1], [1], [0], [0], [0, 0, 1, 0], [], []>} : vector<8x256xf32>, vector<128x256xf32>, vector<8x128xf32> -> vector<8x128xf32>
    %c0_66 = arith.constant 0 : index
    %c0_67 = arith.constant 0 : index
    %154 = vector.load %arg15[%c0_66, %c0_67] : memref<1x128xf32, #tpu.memory_space<vmem>>, vector<1x128xf32>
    %155 = vector.broadcast %154 : vector<1x128xf32> to vector<8x128xf32>
    %156 = arith.addf %153, %155 : vector<8x128xf32>
    %157 = arith.addf %100, %156 : vector<8x128xf32>
    %c0_68 = arith.constant 0 : index
    %c0_69 = arith.constant 0 : index
    %158 = vector.load %arg10[%c0_68, %c0_69] : memref<1x128xf32, #tpu.memory_space<vmem>>, vector<1x128xf32>
    %c0_70 = arith.constant 0 : index
    %c0_71 = arith.constant 0 : index
    %159 = vector.load %arg11[%c0_70, %c0_71] : memref<1x128xf32, #tpu.memory_space<vmem>>, vector<1x128xf32>
    %cst_72 = arith.constant dense<0.000000e+00> : vector<8xf32>
    %160 = vector.multi_reduction <add>, %157, %cst_72 [1] : vector<8x128xf32> to vector<8xf32>
    %161 = vector.shape_cast %160 : vector<8xf32> to vector<8x1xf32>
    %cst_73 = arith.constant 1.280000e+02 : f32
    %162 = vector.broadcast %cst_73 : f32 to vector<8x1xf32>
    %163 = arith.divf %161, %162 : vector<8x1xf32>
    %164 = vector.broadcast %163 : vector<8x1xf32> to vector<8x128xf32>
    %165 = arith.subf %157, %164 : vector<8x128xf32>
    %166 = arith.mulf %165, %165 : vector<8x128xf32>
    %cst_74 = arith.constant dense<0.000000e+00> : vector<8xf32>
    %167 = vector.multi_reduction <add>, %166, %cst_74 [1] : vector<8x128xf32> to vector<8xf32>
    %168 = vector.shape_cast %167 : vector<8xf32> to vector<8x1xf32>
    %cst_75 = arith.constant 1.280000e+02 : f32
    %169 = vector.broadcast %cst_75 : f32 to vector<8x1xf32>
    %170 = arith.divf %168, %169 : vector<8x1xf32>
    %cst_76 = arith.constant 9.99999974E-6 : f32
    %171 = vector.broadcast %cst_76 : f32 to vector<8x1xf32>
    %172 = arith.addf %170, %171 : vector<8x1xf32>
    %173 = math.rsqrt %172 : vector<8x1xf32>
    %174 = vector.broadcast %173 : vector<8x1xf32> to vector<8x128xf32>
    %175 = arith.mulf %165, %174 : vector<8x128xf32>
    %176 = vector.broadcast %158 : vector<1x128xf32> to vector<8x128xf32>
    %177 = arith.mulf %175, %176 : vector<8x128xf32>
    %178 = vector.broadcast %159 : vector<1x128xf32> to vector<8x128xf32>
    %179 = arith.addf %177, %178 : vector<8x128xf32>
    %c0_77 = arith.constant 0 : index
    %c0_78 = arith.constant 0 : index
    %c0_79 = arith.constant 0 : index
    %180 = vector.load %arg16[%c0_77, %c0_78, %c0_79] : memref<1x8x128xf32, #tpu.memory_space<vmem>>, vector<1x8x128xf32>
    %181 = vector.shape_cast %180 : vector<1x8x128xf32> to vector<8x128xf32>
    %182 = vector.shape_cast %179 : vector<8x128xf32> to vector<1x8x128xf32>
    tpu.vector_store %arg16[%c0_77, %c0_78, %c0_79], %182 {strides = array<i32>} : memref<1x8x128xf32, #tpu.memory_space<vmem>>, vector<1x8x128xf32>,
    return
  }
  func.func @transform_0(%arg0: i32) -> (i32, i32, i32) {
    %c0_i32 = arith.constant 0 : i32
    %c0_i32_0 = arith.constant 0 : i32
    %c0_i32_1 = arith.constant 0 : i32
    return %arg0, %c0_i32, %c0_i32_0 : i32, i32, i32
  }
  func.func @transform_1(%arg0: i32) -> (i32, i32, i32) {
    %c0_i32 = arith.constant 0 : i32
    %c0_i32_0 = arith.constant 0 : i32
    %c0_i32_1 = arith.constant 0 : i32
    return %arg0, %c0_i32, %c0_i32_0 : i32, i32, i32
  }
  func.func @transform_2(%arg0: i32) -> (i32, i32) {
    %c0_i32 = arith.constant 0 : i32
    %c0_i32_0 = arith.constant 0 : i32
    %c0_i32_1 = arith.constant 0 : i32
    return %c0_i32, %c0_i32_0 : i32, i32
  }
  func.func @transform_3(%arg0: i32) -> (i32, i32) {
    %c0_i32 = arith.constant 0 : i32
    %c0_i32_0 = arith.constant 0 : i32
    %c0_i32_1 = arith.constant 0 : i32
    return %c0_i32, %c0_i32_0 : i32, i32
  }
  func.func @transform_4(%arg0: i32) -> (i32, i32) {
    %c0_i32 = arith.constant 0 : i32
    %c0_i32_0 = arith.constant 0 : i32
    %c0_i32_1 = arith.constant 0 : i32
    return %c0_i32, %c0_i32_0 : i32, i32
  }
  func.func @transform_5(%arg0: i32) -> (i32, i32) {
    %c0_i32 = arith.constant 0 : i32
    %c0_i32_0 = arith.constant 0 : i32
    %c0_i32_1 = arith.constant 0 : i32
    return %c0_i32, %c0_i32_0 : i32, i32
  }
  func.func @transform_6(%arg0: i32) -> (i32, i32) {
    %c0_i32 = arith.constant 0 : i32
    %c0_i32_0 = arith.constant 0 : i32
    %c0_i32_1 = arith.constant 0 : i32
    return %c0_i32, %c0_i32_0 : i32, i32
  }
  func.func @transform_7(%arg0: i32) -> (i32, i32) {
    %c0_i32 = arith.constant 0 : i32
    %c0_i32_0 = arith.constant 0 : i32
    %c0_i32_1 = arith.constant 0 : i32
    return %c0_i32, %c0_i32_0 : i32, i32
  }
  func.func @transform_8(%arg0: i32) -> (i32, i32) {
    %c0_i32 = arith.constant 0 : i32
    %c0_i32_0 = arith.constant 0 : i32
    %c0_i32_1 = arith.constant 0 : i32
    return %c0_i32, %c0_i32_0 : i32, i32
  }
  func.func @transform_9(%arg0: i32) -> (i32, i32) {
    %c0_i32 = arith.constant 0 : i32
    %c0_i32_0 = arith.constant 0 : i32
    %c0_i32_1 = arith.constant 0 : i32
    return %c0_i32, %c0_i32_0 : i32, i32
  }
  func.func @transform_10(%arg0: i32) -> (i32, i32) {
    %c0_i32 = arith.constant 0 : i32
    %c0_i32_0 = arith.constant 0 : i32
    %c0_i32_1 = arith.constant 0 : i32
    return %c0_i32, %c0_i32_0 : i32, i32
  }
  func.func @transform_11(%arg0: i32) -> (i32, i32) {
    %c0_i32 = arith.constant 0 : i32
    %c0_i32_0 = arith.constant 0 : i32
    %c0_i32_1 = arith.constant 0 : i32
    return %c0_i32, %c0_i32_0 : i32, i32
  }
  func.func @transform_12(%arg0: i32) -> (i32, i32) {
    %c0_i32 = arith.constant 0 : i32
    %c0_i32_0 = arith.constant 0 : i32
    %c0_i32_1 = arith.constant 0 : i32
    return %c0_i32, %c0_i32_0 : i32, i32
  }
  func.func @transform_13(%arg0: i32) -> (i32, i32) {
    %c0_i32 = arith.constant 0 : i32
    %c0_i32_0 = arith.constant 0 : i32
    %c0_i32_1 = arith.constant 0 : i32
    return %c0_i32, %c0_i32_0 : i32, i32
  }
  func.func @transform_14(%arg0: i32) -> (i32, i32) {
    %c0_i32 = arith.constant 0 : i32
    %c0_i32_0 = arith.constant 0 : i32
    %c0_i32_1 = arith.constant 0 : i32
    return %c0_i32, %c0_i32_0 : i32, i32
  }
  func.func @transform_15(%arg0: i32) -> (i32, i32, i32) {
    %c0_i32 = arith.constant 0 : i32
    %c0_i32_0 = arith.constant 0 : i32
    %c0_i32_1 = arith.constant 0 : i32
    return %arg0, %c0_i32, %c0_i32_0 : i32, i32, i32
  }
}

</mosaic_0001>

<llo_original>
// kernel: tpu_custom_call.1
$region0: #{tpu_custom_call.1}
  #allocation0 [shape = 'u32[]', space=smem, size = 0x4, offset = 0x4, fixed_abs, tag = 'smem constant byte address 0x4 - core index']
  #allocation1 [shape = 'u32[144,128]{1,0:T(1,128)}', space=vmem, size = 0x12000, scoped, tag = 'internal scratch']
  %s0 = inlined_call_operand.hbm [shape: f32[2,8,128], index: 0, kind: input, shape index: {}]
  %s1 = inlined_call_operand.hbm [shape: f32[2,16,64], index: 1, kind: input, shape index: {}]
  %s2 = inlined_call_operand.hbm [shape: f32[128,128], index: 2, kind: input, shape index: {}]
  %s3 = inlined_call_operand.vmem [shape: f32[256,64], index: 3, kind: input, shape index: {}]
  %s4 = inlined_call_operand.vmem [shape: f32[384,128], index: 4, kind: input, shape index: {}]
  %s5 = inlined_call_operand.vmem [shape: f32[1,128], index: 5, kind: input, shape index: {}]
  %s6 = inlined_call_operand.vmem [shape: f32[1,128], index: 6, kind: input, shape index: {}]
  %s7 = inlined_call_operand.vmem [shape: f32[1,128], index: 7, kind: input, shape index: {}]
  %s8 = inlined_call_operand.vmem [shape: f32[1,128], index: 8, kind: input, shape index: {}]
  %s9 = inlined_call_operand.vmem [shape: f32[1,128], index: 9, kind: input, shape index: {}]
  %s10 = inlined_call_operand.vmem [shape: f32[1,128], index: 10, kind: input, shape index: {}]
  %s11 = inlined_call_operand.hbm [shape: f32[256,128], index: 11, kind: input, shape index: {}]
  %s12 = inlined_call_operand.vmem [shape: f32[1,256], index: 12, kind: input, shape index: {}]
  %s13 = inlined_call_operand.hbm [shape: f32[128,256], index: 13, kind: input, shape index: {}]
  %s14 = inlined_call_operand.vmem [shape: f32[1,128], index: 14, kind: input, shape index: {}]
  %s15 = inlined_call_operand.hbm [shape: f32[2,8,128], index: 15, kind: output, shape index: {}]
  %s16 = sld [smem:[#allocation0]]
  $region113: #{tpu_custom_call.1} parent=0
    _
  %s18 = ssub.s32 1, %s16
  %s19 = scalar_select 0, %s18, %s16
  $region1: #{tpu_custom_call.1} parent=0
    #allocation2 [shape = 'u8[8192]{0}', space=vmem, size = 0x2000, scoped, tag = 'input window, operand 0']
    #allocation3 [shape = 's32[2]{0}', space=sflag, size = 0x8, scoped, tag = 'scoped memory for tpu_custom_call.1']
    #allocation4 [shape = 's32[2]{0}', space=sflag, size = 0x8, scoped, tag = 'scoped memory for tpu_custom_call.1']
    #allocation5 [shape = 'u8[16384]{0}', space=vmem, size = 0x4000, scoped, tag = 'input window, operand 1']
    #allocation6 [shape = 's32[2]{0}', space=sflag, size = 0x8, scoped, tag = 'scoped memory for tpu_custom_call.1']
    #allocation7 [shape = 'u8[65536]{0}', space=vmem, size = 0x10000, scoped, tag = 'input window, operand 2, single buffered']
    #allocation8 [shape = 'u8[131072]{0}', space=vmem, size = 0x20000, scoped, tag = 'input window, operand 11, single buffered']
    #allocation9 [shape = 's32[1]{0}', space=sflag, size = 0x4, scoped, tag = 'scoped memory for tpu_custom_call.1']
    #allocation10 [shape = 'u8[131072]{0}', space=vmem, size = 0x20000, scoped, tag = 'input window, operand 13, single buffered']
    #allocation11 [shape = 'u8[8192]{0}', space=vmem, size = 0x2000, scoped, tag = 'output window, operand 0']
    %20 = vsyncpa [#allocation3], 0
    %s21 = scalar_lea.sflag [#allocation3], 1
    %22 = vsyncpa %s21, 0
    %23 = vsyncpa [#allocation6], 0
    %s24 = scalar_lea.sflag [#allocation6], 1
    %25 = vsyncpa %s24, 0
    %26 = vsyncpa [#allocation9], 0
    %27 = vsyncpa [#allocation4], 0
    %s28 = scalar_lea.sflag [#allocation4], 1
    %29 = vsyncpa %s28, 0
    loop: start=0, step=1, limit=4
    $region2: #{tpu_custom_call.1} parent=1 // loop_pre_header
      _
    $region3: #{tpu_custom_call.1} parent=1 // loop_header
      %s31 = sphi 0, %s35
      %p32 = scmp.ge.s32.totalorder %s31, 4
      %s41 = sphi 0, %s43
      %s44 = sphi 0, %s41
      %s45 = sphi 0, %s44
      %s61 = sphi 0, %s45
      %s67 = sphi 0, %s69
      %s70 = sphi 0, %s67
      %s71 = sphi 0, %s70
      %s87 = sphi 0, %s71
      %s91 = sphi 0, %s91
      %s93 = sphi 0, %s91
      %s94 = sphi 0, %s93
      %s108 = sphi 0, %s94
      %s112 = sphi 0, %s112
      %s114 = sphi 0, %s112
      %s115 = sphi 0, %s114
      %s129 = sphi 0, %s115
      %s133 = sphi 0, %s133
      %s135 = sphi 0, %s133
      %s136 = sphi 0, %s135
      %s150 = sphi 0, %s136
      %s154 = sphi 0, %s154
      %s156 = sphi 0, %s154
      %s157 = sphi 0, %s156
      %s171 = sphi 0, %s157
      %s175 = sphi 0, %s175
      %s177 = sphi 0, %s175
      %s178 = sphi 0, %s177
      %s192 = sphi 0, %s178
      %s196 = sphi 0, %s196
      %s198 = sphi 0, %s196
      %s199 = sphi 0, %s198
      %s213 = sphi 0, %s199
      %s217 = sphi 0, %s217
      %s219 = sphi 0, %s217
      %s220 = sphi 0, %s219
      %s234 = sphi 0, %s220
      %s238 = sphi 0, %s238
      %s240 = sphi 0, %s238
      %s241 = sphi 0, %s240
      %s255 = sphi 0, %s241
      %s259 = sphi 0, %s259
      %s261 = sphi 0, %s259
      %s262 = sphi 0, %s261
      %s276 = sphi 0, %s262
      %s280 = sphi 0, %s280
      %s282 = sphi 0, %s280
      %s283 = sphi 0, %s282
      %s297 = sphi 0, %s283
      %s301 = sphi 0, %s301
      %s303 = sphi 0, %s301
      %s304 = sphi 0, %s303
      %s318 = sphi 0, %s304
      %s322 = sphi 0, %s322
      %s324 = sphi 0, %s322
      %s325 = sphi 0, %s324
      %s339 = sphi 0, %s325
      %s343 = sphi 0, %s343
      %s345 = sphi 0, %s343
      %s346 = sphi 0, %s345
      %s360 = sphi 0, %s346
      %s366 = sphi 0, %s368
      %s369 = sphi 0, %s366
      %s370 = sphi 0, %s369
      %s386 = sphi 0, %s370
    $region4: #{tpu_custom_call.1} parent=1 // loop_header_branch
      %34 = sbr.rel (%p32) target = $region8
    $region5: #{tpu_custom_call.1} parent=1 // loop_body
      %s36 = ssub.s32 %s31, 1
      %s37 = ssub.s32 %s31, 2
      %s38 = sadd.s32 %s31, 1
      %s39 = ssub.s32 %s31, %s38
      %p40 = scmp.eq.s32.totalorder %s39, 0
      %s42 = sadd.s32 %s41, 1
      %s43 = scalar_select %p40, %s41, %s42
      %p46 = pneg %p40
      %p47 = scmp.eq.s32.totalorder %s31, 1
      %p48 = por %p46, %p47
      %p49 = scmp.ne.s32.totalorder %s41, %s44
      %p50 = scmp.eq.s32.totalorder %s31, 0
      %p51 = por %p49, %p50
      %p52 = scmp.ne.s32.totalorder %s41, %s44
      %p53 = scmp.eq.s32.totalorder %s36, 1
      %p54 = por %p52, %p53
      %p55 = scmp.ne.s32.totalorder %s44, %s45
      %p56 = scmp.eq.s32.totalorder %s36, 0
      %p57 = por %p55, %p56
      %p58 = scmp.ne.s32.totalorder %s44, %s45
      %p59 = scmp.eq.s32.totalorder %s37, 1
      %p60 = por %p58, %p59
      %p62 = scmp.ne.s32.totalorder %s45, %s61
      %p63 = scmp.eq.s32.totalorder %s37, 0
      %p64 = por %p62, %p63
      %s65 = ssub.s32 %s31, %s38
      %p66 = scmp.eq.s32.totalorder %s65, 0
      %s68 = sadd.s32 %s67, 1
      %s69 = scalar_select %p66, %s67, %s68
      %p72 = pneg %p66
      %p73 = scmp.eq.s32.totalorder %s31, 1
      %p74 = por %p72, %p73
      %p75 = scmp.ne.s32.totalorder %s67, %s70
      %p76 = scmp.eq.s32.totalorder %s31, 0
      %p77 = por %p75, %p76
      %p78 = scmp.ne.s32.totalorder %s67, %s70
      %p79 = scmp.eq.s32.totalorder %s36, 1
      %p80 = por %p78, %p79
      %p81 = scmp.ne.s32.totalorder %s70, %s71
      %p82 = scmp.eq.s32.totalorder %s36, 0
      %p83 = por %p81, %p82
      %p84 = scmp.ne.s32.totalorder %s70, %s71
      %p85 = scmp.eq.s32.totalorder %s37, 1
      %p86 = por %p84, %p85
      %p88 = scmp.ne.s32.totalorder %s71, %s87
      %p89 = scmp.eq.s32.totalorder %s37, 0
      %p90 = por %p88, %p89
      %s92 = sadd.s32 %s91, 1
      %p95 = scmp.eq.s32.totalorder %s31, 1
      %p96 = scmp.ne.s32.totalorder %s91, %s93
      %p97 = scmp.eq.s32.totalorder %s31, 0
      %p98 = por %p96, %p97
      %p99 = scmp.ne.s32.totalorder %s91, %s93
      %p100 = scmp.eq.s32.totalorder %s36, 1
      %p101 = por %p99, %p100
      %p102 = scmp.ne.s32.totalorder %s93, %s94
      %p103 = scmp.eq.s32.totalorder %s36, 0
      %p104 = por %p102, %p103
      %p105 = scmp.ne.s32.totalorder %s93, %s94
      %p106 = scmp.eq.s32.totalorder %s37, 1
      %p107 = por %p105, %p106
      %p109 = scmp.ne.s32.totalorder %s94, %s108
      %p110 = scmp.eq.s32.totalorder %s37, 0
      %p111 = por %p109, %p110
      %s113 = sadd.s32 %s112, 1
      %p116 = scmp.eq.s32.totalorder %s31, 1
      %p117 = scmp.ne.s32.totalorder %s112, %s114
      %p118 = scmp.eq.s32.totalorder %s31, 0
      %p119 = por %p117, %p118
      %p120 = scmp.ne.s32.totalorder %s112, %s114
      %p121 = scmp.eq.s32.totalorder %s36, 1
      %p122 = por %p120, %p121
      %p123 = scmp.ne.s32.totalorder %s114, %s115
      %p124 = scmp.eq.s32.totalorder %s36, 0
      %p125 = por %p123, %p124
      %p126 = scmp.ne.s32.totalorder %s114, %s115
      %p127 = scmp.eq.s32.totalorder %s37, 1
      %p128 = por %p126, %p127
      %p130 = scmp.ne.s32.totalorder %s115, %s129
      %p131 = scmp.eq.s32.totalorder %s37, 0
      %p132 = por %p130, %p131
      %s134 = sadd.s32 %s133, 1
      %p137 = scmp.eq.s32.totalorder %s31, 1
      %p138 = scmp.ne.s32.totalorder %s133, %s135
      %p139 = scmp.eq.s32.totalorder %s31, 0
      %p140 = por %p138, %p139
      %p141 = scmp.ne.s32.totalorder %s133, %s135
      %p142 = scmp.eq.s32.totalorder %s36, 1
      %p143 = por %p141, %p142
      %p144 = scmp.ne.s32.totalorder %s135, %s136
      %p145 = scmp.eq.s32.totalorder %s36, 0
      %p146 = por %p144, %p145
      %p147 = scmp.ne.s32.totalorder %s135, %s136
      %p148 = scmp.eq.s32.totalorder %s37, 1
      %p149 = por %p147, %p148
      %p151 = scmp.ne.s32.totalorder %s136, %s150
      %p152 = scmp.eq.s32.totalorder %s37, 0
      %p153 = por %p151, %p152
      %s155 = sadd.s32 %s154, 1
      %p158 = scmp.eq.s32.totalorder %s31, 1
      %p159 = scmp.ne.s32.totalorder %s154, %s156
      %p160 = scmp.eq.s32.totalorder %s31, 0
      %p161 = por %p159, %p160
      %p162 = scmp.ne.s32.totalorder %s154, %s156
      %p163 = scmp.eq.s32.totalorder %s36, 1
      %p164 = por %p162, %p163
      %p165 = scmp.ne.s32.totalorder %s156, %s157
      %p166 = scmp.eq.s32.totalorder %s36, 0
      %p167 = por %p165, %p166
      %p168 = scmp.ne.s32.totalorder %s156, %s157
      %p169 = scmp.eq.s32.totalorder %s37, 1
      %p170 = por %p168, %p169
      %p172 = scmp.ne.s32.totalorder %s157, %s171
      %p173 = scmp.eq.s32.totalorder %s37, 0
      %p174 = por %p172, %p173
      %s176 = sadd.s32 %s175, 1
      %p179 = scmp.eq.s32.totalorder %s31, 1
      %p180 = scmp.ne.s32.totalorder %s175, %s177
      %p181 = scmp.eq.s32.totalorder %s31, 0
      %p182 = por %p180, %p181
      %p183 = scmp.ne.s32.totalorder %s175, %s177
      %p184 = scmp.eq.s32.totalorder %s36, 1
      %p185 = por %p183, %p184
      %p186 = scmp.ne.s32.totalorder %s177, %s178
      %p187 = scmp.eq.s32.totalorder %s36, 0
      %p188 = por %p186, %p187
      %p189 = scmp.ne.s32.totalorder %s177, %s178
      %p190 = scmp.eq.s32.totalorder %s37, 1
      %p191 = por %p189, %p190
      %p193 = scmp.ne.s32.totalorder %s178, %s192
      %p194 = scmp.eq.s32.totalorder %s37, 0
      %p195 = por %p193, %p194
      %s197 = sadd.s32 %s196, 1
      %p200 = scmp.eq.s32.totalorder %s31, 1
      %p201 = scmp.ne.s32.totalorder %s196, %s198
      %p202 = scmp.eq.s32.totalorder %s31, 0
      %p203 = por %p201, %p202
      %p204 = scmp.ne.s32.totalorder %s196, %s198
      %p205 = scmp.eq.s32.totalorder %s36, 1
      %p206 = por %p204, %p205
      %p207 = scmp.ne.s32.totalorder %s198, %s199
      %p208 = scmp.eq.s32.totalorder %s36, 0
      %p209 = por %p207, %p208
      %p210 = scmp.ne.s32.totalorder %s198, %s199
      %p211 = scmp.eq.s32.totalorder %s37, 1
      %p212 = por %p210, %p211
      %p214 = scmp.ne.s32.totalorder %s199, %s213
      %p215 = scmp.eq.s32.totalorder %s37, 0
      %p216 = por %p214, %p215
      %s218 = sadd.s32 %s217, 1
      %p221 = scmp.eq.s32.totalorder %s31, 1
      %p222 = scmp.ne.s32.totalorder %s217, %s219
      %p223 = scmp.eq.s32.totalorder %s31, 0
      %p224 = por %p222, %p223
      %p225 = scmp.ne.s32.totalorder %s217, %s219
      %p226 = scmp.eq.s32.totalorder %s36, 1
      %p227 = por %p225, %p226
      %p228 = scmp.ne.s32.totalorder %s219, %s220
      %p229 = scmp.eq.s32.totalorder %s36, 0
      %p230 = por %p228, %p229
      %p231 = scmp.ne.s32.totalorder %s219, %s220
      %p232 = scmp.eq.s32.totalorder %s37, 1
      %p233 = por %p231, %p232
      %p235 = scmp.ne.s32.totalorder %s220, %s234
      %p236 = scmp.eq.s32.totalorder %s37, 0
      %p237 = por %p235, %p236
      %s239 = sadd.s32 %s238, 1
      %p242 = scmp.eq.s32.totalorder %s31, 1
      %p243 = scmp.ne.s32.totalorder %s238, %s240
      %p244 = scmp.eq.s32.totalorder %s31, 0
      %p245 = por %p243, %p244
      %p246 = scmp.ne.s32.totalorder %s238, %s240
      %p247 = scmp.eq.s32.totalorder %s36, 1
      %p248 = por %p246, %p247
      %p249 = scmp.ne.s32.totalorder %s240, %s241
      %p250 = scmp.eq.s32.totalorder %s36, 0
      %p251 = por %p249, %p250
      %p252 = scmp.ne.s32.totalorder %s240, %s241
      %p253 = scmp.eq.s32.totalorder %s37, 1
      %p254 = por %p252, %p253
      %p256 = scmp.ne.s32.totalorder %s241, %s255
      %p257 = scmp.eq.s32.totalorder %s37, 0
      %p258 = por %p256, %p257
      %s260 = sadd.s32 %s259, 1
      %p263 = scmp.eq.s32.totalorder %s31, 1
      %p264 = scmp.ne.s32.totalorder %s259, %s261
      %p265 = scmp.eq.s32.totalorder %s31, 0
      %p266 = por %p264, %p265
      %p267 = scmp.ne.s32.totalorder %s259, %s261
      %p268 = scmp.eq.s32.totalorder %s36, 1
      %p269 = por %p267, %p268
      %p270 = scmp.ne.s32.totalorder %s261, %s262
      %p271 = scmp.eq.s32.totalorder %s36, 0
      %p272 = por %p270, %p271
      %p273 = scmp.ne.s32.totalorder %s261, %s262
      %p274 = scmp.eq.s32.totalorder %s37, 1
      %p275 = por %p273, %p274
      %p277 = scmp.ne.s32.totalorder %s262, %s276
      %p278 = scmp.eq.s32.totalorder %s37, 0
      %p279 = por %p277, %p278
      %s281 = sadd.s32 %s280, 1
      %p284 = scmp.eq.s32.totalorder %s31, 1
      %p285 = scmp.ne.s32.totalorder %s280, %s282
      %p286 = scmp.eq.s32.totalorder %s31, 0
      %p287 = por %p285, %p286
      %p288 = scmp.ne.s32.totalorder %s280, %s282
      %p289 = scmp.eq.s32.totalorder %s36, 1
      %p290 = por %p288, %p289
      %p291 = scmp.ne.s32.totalorder %s282, %s283
      %p292 = scmp.eq.s32.totalorder %s36, 0
      %p293 = por %p291, %p292
      %p294 = scmp.ne.s32.totalorder %s282, %s283
      %p295 = scmp.eq.s32.totalorder %s37, 1
      %p296 = por %p294, %p295
      %p298 = scmp.ne.s32.totalorder %s283, %s297
      %p299 = scmp.eq.s32.totalorder %s37, 0
      %p300 = por %p298, %p299
      %s302 = sadd.s32 %s301, 1
      %p305 = scmp.eq.s32.totalorder %s31, 1
      %p306 = scmp.ne.s32.totalorder %s301, %s303
      %p307 = scmp.eq.s32.totalorder %s31, 0
      %p308 = por %p306, %p307
      %p309 = scmp.ne.s32.totalorder %s301, %s303
      %p310 = scmp.eq.s32.totalorder %s36, 1
      %p311 = por %p309, %p310
      %p312 = scmp.ne.s32.totalorder %s303, %s304
      %p313 = scmp.eq.s32.totalorder %s36, 0
      %p314 = por %p312, %p313
      %p315 = scmp.ne.s32.totalorder %s303, %s304
      %p316 = scmp.eq.s32.totalorder %s37, 1
      %p317 = por %p315, %p316
      %p319 = scmp.ne.s32.totalorder %s304, %s318
      %p320 = scmp.eq.s32.totalorder %s37, 0
      %p321 = por %p319, %p320
      %s323 = sadd.s32 %s322, 1
      %p326 = scmp.eq.s32.totalorder %s31, 1
      %p327 = scmp.ne.s32.totalorder %s322, %s324
      %p328 = scmp.eq.s32.totalorder %s31, 0
      %p329 = por %p327, %p328
      %p330 = scmp.ne.s32.totalorder %s322, %s324
      %p331 = scmp.eq.s32.totalorder %s36, 1
      %p332 = por %p330, %p331
      %p333 = scmp.ne.s32.totalorder %s324, %s325
      %p334 = scmp.eq.s32.totalorder %s36, 0
      %p335 = por %p333, %p334
      %p336 = scmp.ne.s32.totalorder %s324, %s325
      %p337 = scmp.eq.s32.totalorder %s37, 1
      %p338 = por %p336, %p337
      %p340 = scmp.ne.s32.totalorder %s325, %s339
      %p341 = scmp.eq.s32.totalorder %s37, 0
      %p342 = por %p340, %p341
      %s344 = sadd.s32 %s343, 1
      %p347 = scmp.eq.s32.totalorder %s31, 1
      %p348 = scmp.ne.s32.totalorder %s343, %s345
      %p349 = scmp.eq.s32.totalorder %s31, 0
      %p350 = por %p348, %p349
      %p351 = scmp.ne.s32.totalorder %s343, %s345
      %p352 = scmp.eq.s32.totalorder %s36, 1
      %p353 = por %p351, %p352
      %p354 = scmp.ne.s32.totalorder %s345, %s346
      %p355 = scmp.eq.s32.totalorder %s36, 0
      %p356 = por %p354, %p355
      %p357 = scmp.ne.s32.totalorder %s345, %s346
      %p358 = scmp.eq.s32.totalorder %s37, 1
      %p359 = por %p357, %p358
      %p361 = scmp.ne.s32.totalorder %s346, %s360
      %p362 = scmp.eq.s32.totalorder %s37, 0
      %p363 = por %p361, %p362
      %s364 = ssub.s32 %s31, %s38
      %p365 = scmp.eq.s32.totalorder %s364, 0
      %s367 = sadd.s32 %s366, 1
      %s368 = scalar_select %p365, %s366, %s367
      %p371 = pneg %p365
      %p372 = scmp.eq.s32.totalorder %s31, 1
      %p373 = por %p371, %p372
      %p374 = scmp.ne.s32.totalorder %s366, %s369
      %p375 = scmp.eq.s32.totalorder %s31, 0
      %p376 = por %p374, %p375
      %p377 = scmp.ne.s32.totalorder %s366, %s369
      %p378 = scmp.eq.s32.totalorder %s36, 1
      %p379 = por %p377, %p378
      %p380 = scmp.ne.s32.totalorder %s369, %s370
      %p381 = scmp.eq.s32.totalorder %s36, 0
      %p382 = por %p380, %p381
      %p383 = scmp.ne.s32.totalorder %s369, %s370
      %p384 = scmp.eq.s32.totalorder %s37, 1
      %p385 = por %p383, %p384
      %p387 = scmp.ne.s32.totalorder %s370, %s386
      %p388 = scmp.eq.s32.totalorder %s37, 0
      %p389 = por %p387, %p388
      %p390 = scmp.le.s32.totalorder 1, %s31
      %p391 = scmp.lt.s32.totalorder %s31, 3
      %p392 = pnand %p390, %p391
      %p393 = pneg %p392
      // Predicated region
      $region9: #{tpu_custom_call.1} parent=5 // pred_check
        _
      $region10: #{tpu_custom_call.1} parent=5 // pred_check_branch
        %395 = sbr.rel (%p392) target = $region12
      $region11: #{tpu_custom_call.1} parent=5 // pred_region
        %s396 = ssub.s32 %s31, 1
        // Predicated region
        $region13: #{tpu_custom_call.1} parent=11 // pred_check
          %p397 = pneg %p104
        $region14: #{tpu_custom_call.1} parent=11 // pred_check_branch
          %399 = sbr.rel (%p397) target = $region16
        $region15: #{tpu_custom_call.1} parent=11 // pred_region
          %s401 = ssub.s32 2048, 2048
          %402 = vsyncadd [#allocation6], %s401
          %s403 = sshll.u32 [#allocation7], 4
          %s404 = int_to_ptr.vmem [resolvable:$true] %s403
          %409 = dma.hbm_to_vmem [thread:$0]  %s2, 2048, %s404, [#allocation6], 128, 128, 8
        $region16: #{tpu_custom_call.1} parent=11 // pred_fallthru
          _
        // Predicated region
        $region17: #{tpu_custom_call.1} parent=11 // pred_check
          %p410 = pneg %p125
        $region18: #{tpu_custom_call.1} parent=11 // pred_check_branch
          %412 = sbr.rel (%p410) target = $region20
        $region19: #{tpu_custom_call.1} parent=11 // pred_region
          _
        $region20: #{tpu_custom_call.1} parent=11 // pred_fallthru
          _
        // Predicated region
        $region21: #{tpu_custom_call.1} parent=11 // pred_check
          %p413 = pneg %p146
        $region22: #{tpu_custom_call.1} parent=11 // pred_check_branch
          %415 = sbr.rel (%p413) target = $region24
        $region23: #{tpu_custom_call.1} parent=11 // pred_region
          _
        $region24: #{tpu_custom_call.1} parent=11 // pred_fallthru
          _
        // Predicated region
        $region25: #{tpu_custom_call.1} parent=11 // pred_check
          %p416 = pneg %p167
        $region26: #{tpu_custom_call.1} parent=11 // pred_check_branch
          %418 = sbr.rel (%p416) target = $region28
        $region27: #{tpu_custom_call.1} parent=11 // pred_region
          _
        $region28: #{tpu_custom_call.1} parent=11 // pred_fallthru
          _
        // Predicated region
        $region29: #{tpu_custom_call.1} parent=11 // pred_check
          %p419 = pneg %p188
        $region30: #{tpu_custom_call.1} parent=11 // pred_check_branch
          %421 = sbr.rel (%p419) target = $region32
        $region31: #{tpu_custom_call.1} parent=11 // pred_region
          _
        $region32: #{tpu_custom_call.1} parent=11 // pred_fallthru
          _
        // Predicated region
        $region33: #{tpu_custom_call.1} parent=11 // pred_check
          %p422 = pneg %p209
        $region34: #{tpu_custom_call.1} parent=11 // pred_check_branch
          %424 = sbr.rel (%p422) target = $region36
        $region35: #{tpu_custom_call.1} parent=11 // pred_region
          _
        $region36: #{tpu_custom_call.1} parent=11 // pred_fallthru
          _
        // Predicated region
        $region37: #{tpu_custom_call.1} parent=11 // pred_check
          %p425 = pneg %p230
        $region38: #{tpu_custom_call.1} parent=11 // pred_check_branch
          %427 = sbr.rel (%p425) target = $region40
        $region39: #{tpu_custom_call.1} parent=11 // pred_region
          _
        $region40: #{tpu_custom_call.1} parent=11 // pred_fallthru
          _
        // Predicated region
        $region41: #{tpu_custom_call.1} parent=11 // pred_check
          %p428 = pneg %p251
        $region42: #{tpu_custom_call.1} parent=11 // pred_check_branch
          %430 = sbr.rel (%p428) target = $region44
        $region43: #{tpu_custom_call.1} parent=11 // pred_region
          _
        $region44: #{tpu_custom_call.1} parent=11 // pred_fallthru
          _
        // Predicated region
        $region45: #{tpu_custom_call.1} parent=11 // pred_check
          %p431 = pneg %p272
        $region46: #{tpu_custom_call.1} parent=11 // pred_check_branch
          %433 = sbr.rel (%p431) target = $region48
        $region47: #{tpu_custom_call.1} parent=11 // pred_region
          _
        $region48: #{tpu_custom_call.1} parent=11 // pred_fallthru
          _
        // Predicated region
        $region49: #{tpu_custom_call.1} parent=11 // pred_check
          %p434 = pneg %p293
        $region50: #{tpu_custom_call.1} parent=11 // pred_check_branch
          %436 = sbr.rel (%p434) target = $region52
        $region51: #{tpu_custom_call.1} parent=11 // pred_region
          %s438 = ssub.s32 4096, 4096
          %439 = vsyncadd [#allocation9], %s438
          %s440 = sshll.u32 [#allocation8], 4
          %s441 = int_to_ptr.vmem [resolvable:$true] %s440
          %446 = dma.hbm_to_vmem [thread:$0]  %s11, 4096, %s441, [#allocation9], 128, 128, 8
        $region52: #{tpu_custom_call.1} parent=11 // pred_fallthru
          _
        // Predicated region
        $region53: #{tpu_custom_call.1} parent=11 // pred_check
          %p447 = pneg %p314
        $region54: #{tpu_custom_call.1} parent=11 // pred_check_branch
          %449 = sbr.rel (%p447) target = $region56
        $region55: #{tpu_custom_call.1} parent=11 // pred_region
          _
        $region56: #{tpu_custom_call.1} parent=11 // pred_fallthru
          _
        // Predicated region
        $region57: #{tpu_custom_call.1} parent=11 // pred_check
          %p450 = pneg %p335
        $region58: #{tpu_custom_call.1} parent=11 // pred_check_branch
          %452 = sbr.rel (%p450) target = $region60
        $region59: #{tpu_custom_call.1} parent=11 // pred_region
          %s454 = ssub.s32 4096, 4096
          %455 = vsyncadd [#allocation9], %s454
          %s456 = sshll.u32 [#allocation10], 4
          %s457 = int_to_ptr.vmem [resolvable:$true] %s456
          %462 = dma.hbm_to_vmem [thread:$0]  %s13, 4096, %s457, [#allocation9], 256, 256, 16
        $region60: #{tpu_custom_call.1} parent=11 // pred_fallthru
          _
        // Predicated region
        $region61: #{tpu_custom_call.1} parent=11 // pred_check
          %p463 = pneg %p356
        $region62: #{tpu_custom_call.1} parent=11 // pred_check_branch
          %465 = sbr.rel (%p463) target = $region64
        $region63: #{tpu_custom_call.1} parent=11 // pred_region
          _
        $region64: #{tpu_custom_call.1} parent=11 // pred_fallthru
          _
      $region12: #{tpu_custom_call.1} parent=5 // pred_fallthru
        _
      %p466 = scmp.lt.s32.totalorder %s31, 2
      // Predicated region
      $region65: #{tpu_custom_call.1} parent=5 // pred_check
        %p467 = pneg %p466
      $region66: #{tpu_custom_call.1} parent=5 // pred_check_branch
        %469 = sbr.rel (%p467) target = $region68
      $region67: #{tpu_custom_call.1} parent=5 // pred_region
        // Predicated region
        $region69: #{tpu_custom_call.1} parent=67 // pred_check
          %p470 = pneg %p51
        $region70: #{tpu_custom_call.1} parent=67 // pred_check_branch
          %472 = sbr.rel (%p470) target = $region72
        $region71: #{tpu_custom_call.1} parent=67 // pred_region
          %s473 = sand.u32 %s41, 1
          %s474 = scalar_lea.sflag [#allocation3], %s473
          %s475 = sand.u32 %s41, 1
          %s476 = smul.addr %s475, 8
          %s477 = scalar_lea.vmem [#allocation2], %s476
          %s479 = ssub.s32 128, 128
          %480 = vsyncadd %s474, %s479
          %s481 = smul.addr %s31, 128
          %s482 = scalar_lea.hbm %s0, %s481
          %s484 = sshll.u32 %s477, 4
          %s485 = int_to_ptr.vmem [resolvable:$true] %s484
          %487 = dma.hbm_to_vmem [thread:$0]  %s482, 128, %s485, %s474
        $region72: #{tpu_custom_call.1} parent=67 // pred_fallthru
          _
        // Predicated region
        $region73: #{tpu_custom_call.1} parent=67 // pred_check
          %p488 = pneg %p77
        $region74: #{tpu_custom_call.1} parent=67 // pred_check_branch
          %490 = sbr.rel (%p488) target = $region76
        $region75: #{tpu_custom_call.1} parent=67 // pred_region
          %s491 = sand.u32 %s31, 1
          %s492 = scalar_lea.sflag [#allocation6], %s491
          %s493 = sand.u32 %s67, 1
          %s494 = smul.addr %s493, 16
          %s495 = scalar_lea.vmem [#allocation5], %s494
          %s497 = ssub.s32 256, 256
          %498 = vsyncadd %s492, %s497
          %s499 = smul.addr %s31, 2
          %s500 = smul.addr %s499, 128
          %s501 = scalar_lea.hbm %s1, %s500
          %s502 = sshll.u32 %s495, 4
          %s503 = int_to_ptr.vmem [resolvable:$true] %s502
          %508 = dma.hbm_to_vmem [thread:$0]  %s501, 256, %s503, %s492, 128, 128, 8
        $region76: #{tpu_custom_call.1} parent=67 // pred_fallthru
          _
      $region68: #{tpu_custom_call.1} parent=5 // pred_fallthru
        _
      %p509 = scmp.le.s32.totalorder 1, %s31
      %p510 = scmp.lt.s32.totalorder %s31, 3
      %p511 = pnand %p509, %p510
      %p512 = pneg %p511
      // Predicated region
      $region77: #{tpu_custom_call.1} parent=5 // pred_check
        _
      $region78: #{tpu_custom_call.1} parent=5 // pred_check_branch
        %514 = sbr.rel (%p511) target = $region80
      $region79: #{tpu_custom_call.1} parent=5 // pred_region
        %s515 = ssub.s32 %s31, 1
        %s516 = sand.u32 %s44, 1
        %s517 = scalar_lea.sflag [#allocation3], %s516
        %s518 = sand.u32 %s44, 1
        %s519 = smul.addr %s518, 8
        %s520 = scalar_lea.vmem [#allocation2], %s519
        // Predicated region
        $region81: #{tpu_custom_call.1} parent=79 // pred_check
          %p521 = pneg %p57
        $region82: #{tpu_custom_call.1} parent=79 // pred_check_branch
          %523 = sbr.rel (%p521) target = $region84
        $region83: #{tpu_custom_call.1} parent=79 // pred_region
          %524 = dma.done %s517, 128
        $region84: #{tpu_custom_call.1} parent=79 // pred_fallthru
          _
        %s525 = sand.u32 %s36, 1
        %s526 = scalar_lea.sflag [#allocation6], %s525
        %s527 = sand.u32 %s70, 1
        %s528 = smul.addr %s527, 16
        %s529 = scalar_lea.vmem [#allocation5], %s528
        // Predicated region
        $region85: #{tpu_custom_call.1} parent=79 // pred_check
          %p530 = pneg %p83
        $region86: #{tpu_custom_call.1} parent=79 // pred_check_branch
          %532 = sbr.rel (%p530) target = $region88
        $region87: #{tpu_custom_call.1} parent=79 // pred_region
          %533 = dma.done %s526, 256
        $region88: #{tpu_custom_call.1} parent=79 // pred_fallthru
          _
        // Predicated region
        $region89: #{tpu_custom_call.1} parent=79 // pred_check
          %p534 = pneg %p104
        $region90: #{tpu_custom_call.1} parent=79 // pred_check_branch
          %536 = sbr.rel (%p534) target = $region92
        $region91: #{tpu_custom_call.1} parent=79 // pred_region
          %537 = dma.done [#allocation6], 2048
        $region92: #{tpu_custom_call.1} parent=79 // pred_fallthru
          _
        // Predicated region
        $region93: #{tpu_custom_call.1} parent=79 // pred_check
          %p538 = pneg %p293
        $region94: #{tpu_custom_call.1} parent=79 // pred_check_branch
          %540 = sbr.rel (%p538) target = $region96
        $region95: #{tpu_custom_call.1} parent=79 // pred_region
          %541 = dma.done [#allocation9], 4096
        $region96: #{tpu_custom_call.1} parent=79 // pred_fallthru
          _
        // Predicated region
        $region97: #{tpu_custom_call.1} parent=79 // pred_check
          %p542 = pneg %p335
        $region98: #{tpu_custom_call.1} parent=79 // pred_check_branch
          %544 = sbr.rel (%p542) target = $region100
        $region99: #{tpu_custom_call.1} parent=79 // pred_region
          %545 = dma.done [#allocation9], 4096
        $region100: #{tpu_custom_call.1} parent=79 // pred_fallthru
          _
        %s546 = sand.u32 %s44, 1
        %s547 = scalar_lea.sflag [#allocation3], %s546
        %s548 = sand.u32 %s44, 1
        %s549 = smul.addr %s548, 8
        %s550 = scalar_lea.vmem [#allocation2], %s549
        %p551 = pneg %p57
        %p552 = pneg %p54
        %s553 = sand.u32 %s36, 1
        %s554 = scalar_lea.sflag [#allocation6], %s553
        %s555 = sand.u32 %s70, 1
        %s556 = smul.addr %s555, 16
        %s557 = scalar_lea.vmem [#allocation5], %s556
        %p558 = pneg %p83
        %p559 = pneg %p80
        %p560 = pneg %p104
        %p561 = pneg %p101
        %p562 = pneg %p125
        %p563 = pneg %p122
        %p564 = pneg %p146
        %p565 = pneg %p143
        %p566 = pneg %p167
        %p567 = pneg %p164
        %p568 = pneg %p188
        %p569 = pneg %p185
        %p570 = pneg %p209
        %p571 = pneg %p206
        %p572 = pneg %p230
        %p573 = pneg %p227
        %p574 = pneg %p251
        %p575 = pneg %p248
        %p576 = pneg %p272
        %p577 = pneg %p269
        %p578 = pneg %p293
        %p579 = pneg %p290
        %p580 = pneg %p314
        %p581 = pneg %p311
        %p582 = pneg %p335
        %p583 = pneg %p332
        %p584 = pneg %p356
        %p585 = pneg %p353
        %p586 = pneg %p382
        %p587 = pneg %p379
        %s588 = sand.u32 %s369, 1
        %s589 = scalar_lea.sflag [#allocation4], %s588
        %s590 = sand.u32 %s369, 1
        %s591 = smul.addr %s590, 8
        %s592 = scalar_lea.vmem [#allocation11], %s591
        %v593 = vld [vmem:[%s520] sm:$0xff]
        %v594 = vld [vmem:[%s529] sm:$0xff]
        %v595 = vld [vmem:[%s529 + $0x8] sm:$0xff]
        %v596 = vld [vmem:[#allocation7] sm:$0xff]
        %v597 = vld [vmem:[#allocation7 + $0x8] sm:$0xff]
        %v598 = vld [vmem:[#allocation7 + $0x10] sm:$0xff]
        %v599 = vld [vmem:[#allocation7 + $0x18] sm:$0xff]
        %v600 = vld [vmem:[#allocation7 + $0x20] sm:$0xff]
        %v601 = vld [vmem:[#allocation7 + $0x28] sm:$0xff]
        %v602 = vld [vmem:[#allocation7 + $0x30] sm:$0xff]
        %v603 = vld [vmem:[#allocation7 + $0x38] sm:$0xff]
        %v604 = vld [vmem:[#allocation7 + $0x40] sm:$0xff]
        %v605 = vld [vmem:[#allocation7 + $0x48] sm:$0xff]
        %v606 = vld [vmem:[#allocation7 + $0x50] sm:$0xff]
        %v607 = vld [vmem:[#allocation7 + $0x58] sm:$0xff]
        %v608 = vld [vmem:[#allocation7 + $0x60] sm:$0xff]
        %v609 = vld [vmem:[#allocation7 + $0x68] sm:$0xff]
        %v610 = vld [vmem:[#allocation7 + $0x70] sm:$0xff]
        %v611 = vld [vmem:[#allocation7 + $0x78] sm:$0xff]
        %612 = vmatprep.subr.mxu0 0.0
        %613 = vmatpush1.xpose.msra.mxu0 %v593
        %614 = vmatprep.subr.mxu0 0.0
        %615 = vmatpush1.xpose.msra.mxu0 0.0
        %616 = vmatprep.subr.mxu0 0.0
        %617 = vmatpush1.xpose.msra.mxu0 0.0
        %618 = vmatprep.subr.mxu0 0.0
        %619 = vmatpush1.xpose.msra.mxu0 0.0
        %620 = vmatprep.subr.mxu0 0.0
        %621 = vmatpush1.xpose.msra.mxu0 0.0
        %622 = vmatprep.subr.mxu0 0.0
        %623 = vmatpush1.xpose.msra.mxu0 0.0
        %624 = vmatprep.subr.mxu0 0.0
        %625 = vmatpush1.xpose.msra.mxu0 0.0
        %626 = vmatprep.subr.mxu0 0.0
        %627 = vmatpush1.xpose.msra.mxu0 0.0
        %628 = vmatprep.subr.mxu0 0.0
        %629 = vmatpush1.xpose.msra.mxu0 0.0
        %630 = vmatprep.subr.mxu0 0.0
        %631 = vmatpush1.xpose.msra.mxu0 0.0
        %632 = vmatprep.subr.mxu0 0.0
        %633 = vmatpush1.xpose.msra.mxu0 0.0
        %634 = vmatprep.subr.mxu0 0.0
        %635 = vmatpush1.xpose.msra.mxu0 0.0
        %636 = vmatprep.subr.mxu0 0.0
        %637 = vmatpush1.xpose.msra.mxu0 0.0
        %638 = vmatprep.subr.mxu0 0.0
        %639 = vmatpush1.xpose.msra.mxu0 0.0
        %640 = vmatprep.subr.mxu0 0.0
        %641 = vmatpush1.xpose.msra.mxu0 0.0
        %642 = vmatprep.subr.mxu0 0.0
        %643 = vmatpush1.xpose.msra.mxu0 0.0
        %644 = vmatprep.subr.mxu0 0.0
        %645 = vmatpush1.xpose.msra.mxu0 0.0
        %646 = vmatprep.subr.mxu0 0.0
        %647 = vmatpush1.xpose.msra.mxu0 0.0
        %648 = vmatprep.subr.mxu0 0.0
        %649 = vmatpush1.xpose.msra.mxu0 0.0
        %650 = vmatprep.subr.mxu0 0.0
        %651 = vmatpush1.xpose.msra.mxu0 0.0
        %652 = vmatprep.subr.mxu0 0.0
        %653 = vmatpush1.xpose.msra.mxu0 0.0
        %654 = vmatprep.subr.mxu0 0.0
        %655 = vmatpush1.xpose.msra.mxu0 0.0
        %656 = vmatprep.subr.mxu0 0.0
        %657 = vmatpush1.xpose.msra.mxu0 0.0
        %658 = vmatprep.subr.mxu0 0.0
        %659 = vmatpush1.xpose.msra.mxu0 0.0
        %660 = vmatprep.subr.mxu0 0.0
        %661 = vmatpush1.xpose.msra.mxu0 0.0
        %662 = vmatprep.subr.mxu0 0.0
        %663 = vmatpush1.xpose.msra.mxu0 0.0
        %664 = vmatprep.subr.mxu0 0.0
        %665 = vmatpush1.xpose.msra.mxu0 0.0
        %666 = vmatprep.subr.mxu0 0.0
        %667 = vmatpush1.xpose.msra.mxu0 0.0
        %668 = vmatprep.subr.mxu0 0.0
        %669 = vmatpush1.xpose.msra.mxu0 0.0
        %670 = vmatprep.subr.mxu0 0.0
        %671 = vmatpush1.xpose.msra.mxu0 0.0
        %672 = vmatprep.subr.mxu0 0.0
        %673 = vmatpush1.xpose.msra.mxu0 0.0
        %674 = vmatprep.subr.mxu0 0.0
        %675 = vmatpush1.xpose.msra.mxu0 0.0
        %676 = vmatprep.mubr.f32.mxu0 0.0
        %677 = vmatmul.mubr.f32.gmra.mrb[0].mxu0 %v596
        %v678 = vpop.f32.mrb[0].mxu0
        %v679 = vadd.f32 0.0, %v678
        %v680 = vpop.f32.mrb[0].mxu0
        %681 = vmatprep.mubr.f32.mxu0 0.0
        %682 = vmatmul.mubr.f32.gmra.mrb[0].mxu0 %v597
        %v683 = vpop.f32.mrb[0].mxu0
        %v684 = vadd.f32 0.0, %v683
        %v685 = vpop.f32.mrb[0].mxu0
        %686 = vmatprep.mubr.f32.mxu0 0.0
        %687 = vmatmul.mubr.f32.gmra.mrb[0].mxu0 %v598
        %v688 = vpop.f32.mrb[0].mxu0
        %v689 = vadd.f32 0.0, %v688
        %v690 = vpop.f32.mrb[0].mxu0
        %691 = vmatprep.mubr.f32.mxu0 0.0
        %692 = vmatmul.mubr.f32.gmra.mrb[0].mxu0 %v599
        %v693 = vpop.f32.mrb[0].mxu0
        %v694 = vadd.f32 0.0, %v693
        %v695 = vpop.f32.mrb[0].mxu0
        %696 = vmatprep.mubr.f32.mxu0 0.0
        %697 = vmatmul.mubr.f32.gmra.mrb[0].mxu0 %v600
        %v698 = vpop.f32.mrb[0].mxu0
        %v699 = vadd.f32 0.0, %v698
        %v700 = vpop.f32.mrb[0].mxu0
        %701 = vmatprep.mubr.f32.mxu0 0.0
        %702 = vmatmul.mubr.f32.gmra.mrb[0].mxu0 %v601
        %v703 = vpop.f32.mrb[0].mxu0
        %v704 = vadd.f32 0.0, %v703
        %v705 = vpop.f32.mrb[0].mxu0
        %706 = vmatprep.mubr.f32.mxu0 0.0
        %707 = vmatmul.mubr.f32.gmra.mrb[0].mxu0 %v602
        %v708 = vpop.f32.mrb[0].mxu0
        %v709 = vadd.f32 0.0, %v708
        %v710 = vpop.f32.mrb[0].mxu0
        %711 = vmatprep.mubr.f32.mxu0 0.0
        %712 = vmatmul.mubr.f32.gmra.mrb[0].mxu0 %v603
        %v713 = vpop.f32.mrb[0].mxu0
        %v714 = vadd.f32 0.0, %v713
        %v715 = vpop.f32.mrb[0].mxu0
        %716 = vmatprep.mubr.f32.mxu0 0.0
        %717 = vmatmul.mubr.f32.gmra.mrb[0].mxu0 %v604
        %v718 = vpop.f32.mrb[0].mxu0
        %v719 = vadd.f32 0.0, %v718
        %v720 = vpop.f32.mrb[0].mxu0
        %721 = vmatprep.mubr.f32.mxu0 0.0
        %722 = vmatmul.mubr.f32.gmra.mrb[0].mxu0 %v605
        %v723 = vpop.f32.mrb[0].mxu0
        %v724 = vadd.f32 0.0, %v723
        %v725 = vpop.f32.mrb[0].mxu0
        %726 = vmatprep.mubr.f32.mxu0 0.0
        %727 = vmatmul.mubr.f32.gmra.mrb[0].mxu0 %v606
        %v728 = vpop.f32.mrb[0].mxu0
        %v729 = vadd.f32 0.0, %v728
        %v730 = vpop.f32.mrb[0].mxu0
        %731 = vmatprep.mubr.f32.mxu0 0.0
        %732 = vmatmul.mubr.f32.gmra.mrb[0].mxu0 %v607
        %v733 = vpop.f32.mrb[0].mxu0
        %v734 = vadd.f32 0.0, %v733
        %v735 = vpop.f32.mrb[0].mxu0
        %736 = vmatprep.mubr.f32.mxu0 0.0
        %737 = vmatmul.mubr.f32.gmra.mrb[0].mxu0 %v608
        %v738 = vpop.f32.mrb[0].mxu0
        %v739 = vadd.f32 0.0, %v738
        %v740 = vpop.f32.mrb[0].mxu0
        %741 = vmatprep.mubr.f32.mxu0 0.0
        %742 = vmatmul.mubr.f32.gmra.mrb[0].mxu0 %v609
        %v743 = vpop.f32.mrb[0].mxu0
        %v744 = vadd.f32 0.0, %v743
        %v745 = vpop.f32.mrb[0].mxu0
        %746 = vmatprep.mubr.f32.mxu0 0.0
        %747 = vmatmul.mubr.f32.gmra.mrb[0].mxu0 %v610
        %v748 = vpop.f32.mrb[0].mxu0
        %v749 = vadd.f32 0.0, %v748
        %v750 = vpop.f32.mrb[0].mxu0
        %751 = vmatprep.mubr.f32.mxu0 0.0
        %752 = vmatmul.mubr.f32.gmra.mrb[0].mxu0 %v611
        %v753 = vpop.f32.mrb[0].mxu0
        %v754 = vadd.f32 0.0, %v753
        %v755 = vpop.f32.mrb[0].mxu0
        %756 = vdwg.mxu0
        %v757 = vld [vmem:[%s3] sm:$0xff]
        %v758 = vld [vmem:[%s3 + $0x8] sm:$0xff]
        %v759 = vld [vmem:[%s3 + $0x10] sm:$0xff]
        %v760 = vld [vmem:[%s3 + $0x18] sm:$0xff]
        %v761 = vld [vmem:[%s3 + $0x20] sm:$0xff]
        %v762 = vld [vmem:[%s3 + $0x28] sm:$0xff]
        %v763 = vld [vmem:[%s3 + $0x30] sm:$0xff]
        %v764 = vld [vmem:[%s3 + $0x38] sm:$0xff]
        %v765 = vld [vmem:[%s3 + $0x40] sm:$0xff]
        %v766 = vld [vmem:[%s3 + $0x48] sm:$0xff]
        %v767 = vld [vmem:[%s3 + $0x50] sm:$0xff]
        %v768 = vld [vmem:[%s3 + $0x58] sm:$0xff]
        %v769 = vld [vmem:[%s3 + $0x60] sm:$0xff]
        %v770 = vld [vmem:[%s3 + $0x68] sm:$0xff]
        %v771 = vld [vmem:[%s3 + $0x70] sm:$0xff]
        %v772 = vld [vmem:[%s3 + $0x78] sm:$0xff]
        %v773 = vld [vmem:[%s3 + $0x80] sm:$0xff]
        %v774 = vld [vmem:[%s3 + $0x88] sm:$0xff]
        %v775 = vld [vmem:[%s3 + $0x90] sm:$0xff]
        %v776 = vld [vmem:[%s3 + $0x98] sm:$0xff]
        %v777 = vld [vmem:[%s3 + $0xa0] sm:$0xff]
        %v778 = vld [vmem:[%s3 + $0xa8] sm:$0xff]
        %v779 = vld [vmem:[%s3 + $0xb0] sm:$0xff]
        %v780 = vld [vmem:[%s3 + $0xb8] sm:$0xff]
        %v781 = vld [vmem:[%s3 + $0xc0] sm:$0xff]
        %v782 = vld [vmem:[%s3 + $0xc8] sm:$0xff]
        %v783 = vld [vmem:[%s3 + $0xd0] sm:$0xff]
        %v784 = vld [vmem:[%s3 + $0xd8] sm:$0xff]
        %v785 = vld [vmem:[%s3 + $0xe0] sm:$0xff]
        %v786 = vld [vmem:[%s3 + $0xe8] sm:$0xff]
        %v787 = vld [vmem:[%s3 + $0xf0] sm:$0xff]
        %v788 = vld [vmem:[%s3 + $0xf8] sm:$0xff]
        %vm789 = vcmask 523264
        %v791 = vsel %vm789, %v757, 0
        %v794 = vsel %vm789, %v758, 0
        %v797 = vsel %vm789, %v759, 0
        %v800 = vsel %vm789, %v760, 0
        %v803 = vsel %vm789, %v761, 0
        %v806 = vsel %vm789, %v762, 0
        %v809 = vsel %vm789, %v763, 0
        %v812 = vsel %vm789, %v764, 0
        %v815 = vsel %vm789, %v765, 0
        %v818 = vsel %vm789, %v766, 0
        %v821 = vsel %vm789, %v767, 0
        %v824 = vsel %vm789, %v768, 0
        %v827 = vsel %vm789, %v769, 0
        %v830 = vsel %vm789, %v770, 0
        %v833 = vsel %vm789, %v771, 0
        %v836 = vsel %vm789, %v772, 0
        %v839 = vsel %vm789, %v773, 0
        %v842 = vsel %vm789, %v774, 0
        %v845 = vsel %vm789, %v775, 0
        %v848 = vsel %vm789, %v776, 0
        %v851 = vsel %vm789, %v777, 0
        %v854 = vsel %vm789, %v778, 0
        %v857 = vsel %vm789, %v779, 0
        %v860 = vsel %vm789, %v780, 0
        %v863 = vsel %vm789, %v781, 0
        %v866 = vsel %vm789, %v782, 0
        %v869 = vsel %vm789, %v783, 0
        %v872 = vsel %vm789, %v784, 0
        %v875 = vsel %vm789, %v785, 0
        %v878 = vsel %vm789, %v786, 0
        %v881 = vsel %vm789, %v787, 0
        %v884 = vsel %vm789, %v788, 0
        %v887 = vsel %vm789, %v594, 0
        %v890 = vsel %vm789, %v595, 0
        %892 = vmatprep.subr.mxu0 0.0
        %893 = vmatpush1.xpose.msra.mxu0 %v887
        %894 = vmatprep.subr.mxu0 0.0
        %895 = vmatpush1.xpose.msra.mxu0 %v890
        %896 = vmatprep.subr.mxu0 0.0
        %897 = vmatpush1.xpose.msra.mxu0 0.0
        %898 = vmatprep.subr.mxu0 0.0
        %899 = vmatpush1.xpose.msra.mxu0 0.0
        %900 = vmatprep.subr.mxu0 0.0
        %901 = vmatpush1.xpose.msra.mxu0 0.0
        %902 = vmatprep.subr.mxu0 0.0
        %903 = vmatpush1.xpose.msra.mxu0 0.0
        %904 = vmatprep.subr.mxu0 0.0
        %905 = vmatpush1.xpose.msra.mxu0 0.0
        %906 = vmatprep.subr.mxu0 0.0
        %907 = vmatpush1.xpose.msra.mxu0 0.0
        %908 = vmatprep.subr.mxu0 0.0
        %909 = vmatpush1.xpose.msra.mxu0 0.0
        %910 = vmatprep.subr.mxu0 0.0
        %911 = vmatpush1.xpose.msra.mxu0 0.0
        %912 = vmatprep.subr.mxu0 0.0
        %913 = vmatpush1.xpose.msra.mxu0 0.0
        %914 = vmatprep.subr.mxu0 0.0
        %915 = vmatpush1.xpose.msra.mxu0 0.0
        %916 = vmatprep.subr.mxu0 0.0
        %917 = vmatpush1.xpose.msra.mxu0 0.0
        %918 = vmatprep.subr.mxu0 0.0
        %919 = vmatpush1.xpose.msra.mxu0 0.0
        %920 = vmatprep.subr.mxu0 0.0
        %921 = vmatpush1.xpose.msra.mxu0 0.0
        %922 = vmatprep.subr.mxu0 0.0
        %923 = vmatpush1.xpose.msra.mxu0 0.0
        %924 = vmatprep.subr.mxu0 0.0
        %925 = vmatpush1.xpose.msra.mxu0 0.0
        %926 = vmatprep.subr.mxu0 0.0
        %927 = vmatpush1.xpose.msra.mxu0 0.0
        %928 = vmatprep.subr.mxu0 0.0
        %929 = vmatpush1.xpose.msra.mxu0 0.0
        %930 = vmatprep.subr.mxu0 0.0
        %931 = vmatpush1.xpose.msra.mxu0 0.0
        %932 = vmatprep.subr.mxu0 0.0
        %933 = vmatpush1.xpose.msra.mxu0 0.0
        %934 = vmatprep.subr.mxu0 0.0
        %935 = vmatpush1.xpose.msra.mxu0 0.0
        %936 = vmatprep.subr.mxu0 0.0
        %937 = vmatpush1.xpose.msra.mxu0 0.0
        %938 = vmatprep.subr.mxu0 0.0
        %939 = vmatpush1.xpose.msra.mxu0 0.0
        %940 = vmatprep.subr.mxu0 0.0
        %941 = vmatpush1.xpose.msra.mxu0 0.0
        %942 = vmatprep.subr.mxu0 0.0
        %943 = vmatpush1.xpose.msra.mxu0 0.0
        %944 = vmatprep.subr.mxu0 0.0
        %945 = vmatpush1.xpose.msra.mxu0 0.0
        %946 = vmatprep.subr.mxu0 0.0
        %947 = vmatpush1.xpose.msra.mxu0 0.0
        %948 = vmatprep.subr.mxu0 0.0
        %949 = vmatpush1.xpose.msra.mxu0 0.0
        %950 = vmatprep.subr.mxu0 0.0
        %951 = vmatpush1.xpose.msra.mxu0 0.0
        %952 = vmatprep.subr.mxu0 0.0
        %953 = vmatpush1.xpose.msra.mxu0 0.0
        %954 = vmatprep.subr.mxu0 0.0
        %955 = vmatpush1.xpose.msra.mxu0 0.0
        %956 = vmatprep.mubr.f32.mxu0 0.0
        %957 = vmatmul.mubr.f32.gmra.mrb[0].mxu0 %v791
        %v958 = vpop.f32.mrb[0].mxu0
        %v959 = vadd.f32 0.0, %v958
        %v960 = vpop.f32.mrb[0].mxu0
        %961 = vmatprep.mubr.f32.mxu0 0.0
        %962 = vmatmul.mubr.f32.gmra.mrb[0].mxu0 %v794
        %v963 = vpop.f32.mrb[0].mxu0
        %v964 = vadd.f32 0.0, %v963
        %v965 = vpop.f32.mrb[0].mxu0
        %966 = vmatprep.mubr.f32.mxu0 0.0
        %967 = vmatmul.mubr.f32.gmra.mrb[0].mxu0 %v797
        %v968 = vpop.f32.mrb[0].mxu0
        %v969 = vadd.f32 0.0, %v968
        %v970 = vpop.f32.mrb[0].mxu0
        %971 = vmatprep.mubr.f32.mxu0 0.0
        %972 = vmatmul.mubr.f32.gmra.mrb[0].mxu0 %v800
        %v973 = vpop.f32.mrb[0].mxu0
        %v974 = vadd.f32 0.0, %v973
        %v975 = vpop.f32.mrb[0].mxu0
        %976 = vmatprep.mubr.f32.mxu0 0.0
        %977 = vmatmul.mubr.f32.gmra.mrb[0].mxu0 %v803
        %v978 = vpop.f32.mrb[0].mxu0
        %v979 = vadd.f32 0.0, %v978
        %v980 = vpop.f32.mrb[0].mxu0
        %981 = vmatprep.mubr.f32.mxu0 0.0
        %982 = vmatmul.mubr.f32.gmra.mrb[0].mxu0 %v806
        %v983 = vpop.f32.mrb[0].mxu0
        %v984 = vadd.f32 0.0, %v983
        %v985 = vpop.f32.mrb[0].mxu0
        %986 = vmatprep.mubr.f32.mxu0 0.0
        %987 = vmatmul.mubr.f32.gmra.mrb[0].mxu0 %v809
        %v988 = vpop.f32.mrb[0].mxu0
        %v989 = vadd.f32 0.0, %v988
        %v990 = vpop.f32.mrb[0].mxu0
        %991 = vmatprep.mubr.f32.mxu0 0.0
        %992 = vmatmul.mubr.f32.gmra.mrb[0].mxu0 %v812
        %v993 = vpop.f32.mrb[0].mxu0
        %v994 = vadd.f32 0.0, %v993
        %v995 = vpop.f32.mrb[0].mxu0
        %996 = vmatprep.mubr.f32.mxu0 0.0
        %997 = vmatmul.mubr.f32.gmra.mrb[0].mxu0 %v815
        %v998 = vpop.f32.mrb[0].mxu0
        %v999 = vadd.f32 0.0, %v998
        %v1000 = vpop.f32.mrb[0].mxu0
        %1001 = vmatprep.mubr.f32.mxu0 0.0
        %1002 = vmatmul.mubr.f32.gmra.mrb[0].mxu0 %v818
        %v1003 = vpop.f32.mrb[0].mxu0
        %v1004 = vadd.f32 0.0, %v1003
        %v1005 = vpop.f32.mrb[0].mxu0
        %1006 = vmatprep.mubr.f32.mxu0 0.0
        %1007 = vmatmul.mubr.f32.gmra.mrb[0].mxu0 %v821
        %v1008 = vpop.f32.mrb[0].mxu0
        %v1009 = vadd.f32 0.0, %v1008
        %v1010 = vpop.f32.mrb[0].mxu0
        %1011 = vmatprep.mubr.f32.mxu0 0.0
        %1012 = vmatmul.mubr.f32.gmra.mrb[0].mxu0 %v824
        %v1013 = vpop.f32.mrb[0].mxu0
        %v1014 = vadd.f32 0.0, %v1013
        %v1015 = vpop.f32.mrb[0].mxu0
        %1016 = vmatprep.mubr.f32.mxu0 0.0
        %1017 = vmatmul.mubr.f32.gmra.mrb[0].mxu0 %v827
        %v1018 = vpop.f32.mrb[0].mxu0
        %v1019 = vadd.f32 0.0, %v1018
        %v1020 = vpop.f32.mrb[0].mxu0
        %1021 = vmatprep.mubr.f32.mxu0 0.0
        %1022 = vmatmul.mubr.f32.gmra.mrb[0].mxu0 %v830
        %v1023 = vpop.f32.mrb[0].mxu0
        %v1024 = vadd.f32 0.0, %v1023
        %v1025 = vpop.f32.mrb[0].mxu0
        %1026 = vmatprep.mubr.f32.mxu0 0.0
        %1027 = vmatmul.mubr.f32.gmra.mrb[0].mxu0 %v833
        %v1028 = vpop.f32.mrb[0].mxu0
        %v1029 = vadd.f32 0.0, %v1028
        %v1030 = vpop.f32.mrb[0].mxu0
        %1031 = vmatprep.mubr.f32.mxu0 0.0
        %1032 = vmatmul.mubr.f32.gmra.mrb[0].mxu0 %v836
        %v1033 = vpop.f32.mrb[0].mxu0
        %v1034 = vadd.f32 0.0, %v1033
        %v1035 = vpop.f32.mrb[0].mxu0
        %1036 = vmatprep.mubr.f32.mxu0 0.0
        %1037 = vmatmul.mubr.f32.gmra.mrb[0].mxu0 %v839
        %v1038 = vpop.f32.mrb[0].mxu0
        %v1039 = vadd.f32 0.0, %v1038
        %v1040 = vpop.f32.mrb[0].mxu0
        %1041 = vmatprep.mubr.f32.mxu0 0.0
        %1042 = vmatmul.mubr.f32.gmra.mrb[0].mxu0 %v842
        %v1043 = vpop.f32.mrb[0].mxu0
        %v1044 = vadd.f32 0.0, %v1043
        %v1045 = vpop.f32.mrb[0].mxu0
        %1046 = vmatprep.mubr.f32.mxu0 0.0
        %1047 = vmatmul.mubr.f32.gmra.mrb[0].mxu0 %v845
        %v1048 = vpop.f32.mrb[0].mxu0
        %v1049 = vadd.f32 0.0, %v1048
        %v1050 = vpop.f32.mrb[0].mxu0
        %1051 = vmatprep.mubr.f32.mxu0 0.0
        %1052 = vmatmul.mubr.f32.gmra.mrb[0].mxu0 %v848
        %v1053 = vpop.f32.mrb[0].mxu0
        %v1054 = vadd.f32 0.0, %v1053
        %v1055 = vpop.f32.mrb[0].mxu0
        %1056 = vmatprep.mubr.f32.mxu0 0.0
        %1057 = vmatmul.mubr.f32.gmra.mrb[0].mxu0 %v851
        %v1058 = vpop.f32.mrb[0].mxu0
        %v1059 = vadd.f32 0.0, %v1058
        %v1060 = vpop.f32.mrb[0].mxu0
        %1061 = vmatprep.mubr.f32.mxu0 0.0
        %1062 = vmatmul.mubr.f32.gmra.mrb[0].mxu0 %v854
        %v1063 = vpop.f32.mrb[0].mxu0
        %v1064 = vadd.f32 0.0, %v1063
        %v1065 = vpop.f32.mrb[0].mxu0
        %1066 = vmatprep.mubr.f32.mxu0 0.0
        %1067 = vmatmul.mubr.f32.gmra.mrb[0].mxu0 %v857
        %v1068 = vpop.f32.mrb[0].mxu0
        %v1069 = vadd.f32 0.0, %v1068
        %v1070 = vpop.f32.mrb[0].mxu0
        %1071 = vmatprep.mubr.f32.mxu0 0.0
        %1072 = vmatmul.mubr.f32.gmra.mrb[0].mxu0 %v860
        %v1073 = vpop.f32.mrb[0].mxu0
        %v1074 = vadd.f32 0.0, %v1073
        %v1075 = vpop.f32.mrb[0].mxu0
        %1076 = vmatprep.mubr.f32.mxu0 0.0
        %1077 = vmatmul.mubr.f32.gmra.mrb[0].mxu0 %v863
        %v1078 = vpop.f32.mrb[0].mxu0
        %v1079 = vadd.f32 0.0, %v1078
        %v1080 = vpop.f32.mrb[0].mxu0
        %1081 = vmatprep.mubr.f32.mxu0 0.0
        %1082 = vmatmul.mubr.f32.gmra.mrb[0].mxu0 %v866
        %v1083 = vpop.f32.mrb[0].mxu0
        %v1084 = vadd.f32 0.0, %v1083
        %v1085 = vpop.f32.mrb[0].mxu0
        %1086 = vmatprep.mubr.f32.mxu0 0.0
        %1087 = vmatmul.mubr.f32.gmra.mrb[0].mxu0 %v869
        %v1088 = vpop.f32.mrb[0].mxu0
        %v1089 = vadd.f32 0.0, %v1088
        %v1090 = vpop.f32.mrb[0].mxu0
        %1091 = vmatprep.mubr.f32.mxu0 0.0
        %1092 = vmatmul.mubr.f32.gmra.mrb[0].mxu0 %v872
        %v1093 = vpop.f32.mrb[0].mxu0
        %v1094 = vadd.f32 0.0, %v1093
        %v1095 = vpop.f32.mrb[0].mxu0
        %1096 = vmatprep.mubr.f32.mxu0 0.0
        %1097 = vmatmul.mubr.f32.gmra.mrb[0].mxu0 %v875
        %v1098 = vpop.f32.mrb[0].mxu0
        %v1099 = vadd.f32 0.0, %v1098
        %v1100 = vpop.f32.mrb[0].mxu0
        %1101 = vmatprep.mubr.f32.mxu0 0.0
        %1102 = vmatmul.mubr.f32.gmra.mrb[0].mxu0 %v878
        %v1103 = vpop.f32.mrb[0].mxu0
        %v1104 = vadd.f32 0.0, %v1103
        %v1105 = vpop.f32.mrb[0].mxu0
        %1106 = vmatprep.mubr.f32.mxu0 0.0
        %1107 = vmatmul.mubr.f32.gmra.mrb[0].mxu0 %v881
        %v1108 = vpop.f32.mrb[0].mxu0
        %v1109 = vadd.f32 0.0, %v1108
        %v1110 = vpop.f32.mrb[0].mxu0
        %1111 = vmatprep.mubr.f32.mxu0 0.0
        %1112 = vmatmul.mubr.f32.gmra.mrb[0].mxu0 %v884
        %v1113 = vpop.f32.mrb[0].mxu0
        %v1114 = vadd.f32 0.0, %v1113
        %v1115 = vpop.f32.mrb[0].mxu0
        %1116 = vdwg.mxu0
        %v1117 = vmul.f32 %v679, 0.35355338
        %v1118 = vmul.f32 %v684, 0.35355338
        %v1119 = vmul.f32 %v689, 0.35355338
        %v1120 = vmul.f32 %v694, 0.35355338
        %v1121 = vmul.f32 %v699, 0.35355338
        %v1122 = vmul.f32 %v704, 0.35355338
        %v1123 = vmul.f32 %v709, 0.35355338
        %v1124 = vmul.f32 %v714, 0.35355338
        %v1125 = vmul.f32 %v719, 0.35355338
        %v1126 = vmul.f32 %v724, 0.35355338
        %v1127 = vmul.f32 %v729, 0.35355338
        %v1128 = vmul.f32 %v734, 0.35355338
        %v1129 = vmul.f32 %v739, 0.35355338
        %v1130 = vmul.f32 %v744, 0.35355338
        %v1131 = vmul.f32 %v749, 0.35355338
        %v1132 = vmul.f32 %v754, 0.35355338
        %1133 = vxpose.xlu0.b32.start [1/16] %v1117, 128
        %1134 = vxpose.xlu0.b32.cont [2/16] 0.0, 128
        %1135 = vxpose.xlu0.b32.cont [3/16] 0.0, 128
        %1136 = vxpose.xlu0.b32.cont [4/16] 0.0, 128
        %1137 = vxpose.xlu0.b32.cont [5/16] 0.0, 128
        %1138 = vxpose.xlu0.b32.cont [6/16] 0.0, 128
        %1139 = vxpose.xlu0.b32.cont [7/16] 0.0, 128
        %1140 = vxpose.xlu0.b32.cont [8/16] 0.0, 128
        %1141 = vxpose.xlu0.b32.cont [9/16] 0.0, 128
        %1142 = vxpose.xlu0.b32.cont [10/16] 0.0, 128
        %1143 = vxpose.xlu0.b32.cont [11/16] 0.0, 128
        %1144 = vxpose.xlu0.b32.cont [12/16] 0.0, 128
        %1145 = vxpose.xlu0.b32.cont [13/16] 0.0, 128
        %1146 = vxpose.xlu0.b32.cont [14/16] 0.0, 128
        %1147 = vxpose.xlu0.b32.cont [15/16] 0.0, 128
        %1148 = vxpose.xlu0.b32.end [16/16] 0.0, 128
        %v1149 = vpop.trf.xlu0
        %v1150 = vpop.trf.xlu0
        %v1151 = vpop.trf.xlu0
        %v1152 = vpop.trf.xlu0
        %v1153 = vpop.trf.xlu0
        %v1154 = vpop.trf.xlu0
        %v1155 = vpop.trf.xlu0
        %v1156 = vpop.trf.xlu0
        %v1157 = vpop.trf.xlu0
        %v1158 = vpop.trf.xlu0
        %v1159 = vpop.trf.xlu0
        %v1160 = vpop.trf.xlu0
        %v1161 = vpop.trf.xlu0
        %v1162 = vpop.trf.xlu0
        %v1163 = vpop.trf.xlu0
        %v1164 = vpop.trf.xlu0
        %1165 = vxpose.xlu0.b32.start [1/16] %v1118, 128
        %1166 = vxpose.xlu0.b32.cont [2/16] 0.0, 128
        %1167 = vxpose.xlu0.b32.cont [3/16] 0.0, 128
        %1168 = vxpose.xlu0.b32.cont [4/16] 0.0, 128
        %1169 = vxpose.xlu0.b32.cont [5/16] 0.0, 128
        %1170 = vxpose.xlu0.b32.cont [6/16] 0.0, 128
        %1171 = vxpose.xlu0.b32.cont [7/16] 0.0, 128
        %1172 = vxpose.xlu0.b32.cont [8/16] 0.0, 128
        %1173 = vxpose.xlu0.b32.cont [9/16] 0.0, 128
        %1174 = vxpose.xlu0.b32.cont [10/16] 0.0, 128
        %1175 = vxpose.xlu0.b32.cont [11/16] 0.0, 128
        %1176 = vxpose.xlu0.b32.cont [12/16] 0.0, 128
        %1177 = vxpose.xlu0.b32.cont [13/16] 0.0, 128
        %1178 = vxpose.xlu0.b32.cont [14/16] 0.0, 128
        %1179 = vxpose.xlu0.b32.cont [15/16] 0.0, 128
        %1180 = vxpose.xlu0.b32.end [16/16] 0.0, 128
        %v1181 = vpop.trf.xlu0
        %v1182 = vpop.trf.xlu0
        %v1183 = vpop.trf.xlu0
        %v1184 = vpop.trf.xlu0
        %v1185 = vpop.trf.xlu0
        %v1186 = vpop.trf.xlu0
        %v1187 = vpop.trf.xlu0
        %v1188 = vpop.trf.xlu0
        %v1189 = vpop.trf.xlu0
        %v1190 = vpop.trf.xlu0
        %v1191 = vpop.trf.xlu0
        %v1192 = vpop.trf.xlu0
        %v1193 = vpop.trf.xlu0
        %v1194 = vpop.trf.xlu0
        %v1195 = vpop.trf.xlu0
        %v1196 = vpop.trf.xlu0
        %1197 = vxpose.xlu0.b32.start [1/16] %v1119, 128
        %1198 = vxpose.xlu0.b32.cont [2/16] 0.0, 128
        %1199 = vxpose.xlu0.b32.cont [3/16] 0.0, 128
        %1200 = vxpose.xlu0.b32.cont [4/16] 0.0, 128
        %1201 = vxpose.xlu0.b32.cont [5/16] 0.0, 128
        %1202 = vxpose.xlu0.b32.cont [6/16] 0.0, 128
        %1203 = vxpose.xlu0.b32.cont [7/16] 0.0, 128
        %1204 = vxpose.xlu0.b32.cont [8/16] 0.0, 128
        %1205 = vxpose.xlu0.b32.cont [9/16] 0.0, 128
        %1206 = vxpose.xlu0.b32.cont [10/16] 0.0, 128
        %1207 = vxpose.xlu0.b32.cont [11/16] 0.0, 128
        %1208 = vxpose.xlu0.b32.cont [12/16] 0.0, 128
        %1209 = vxpose.xlu0.b32.cont [13/16] 0.0, 128
        %1210 = vxpose.xlu0.b32.cont [14/16] 0.0, 128
        %1211 = vxpose.xlu0.b32.cont [15/16] 0.0, 128
        %1212 = vxpose.xlu0.b32.end [16/16] 0.0, 128
        %v1213 = vpop.trf.xlu0
        %v1214 = vpop.trf.xlu0
        %v1215 = vpop.trf.xlu0
        %v1216 = vpop.trf.xlu0
        %v1217 = vpop.trf.xlu0
        %v1218 = vpop.trf.xlu0
        %v1219 = vpop.trf.xlu0
        %v1220 = vpop.trf.xlu0
        %v1221 = vpop.trf.xlu0
        %v1222 = vpop.trf.xlu0
        %v1223 = vpop.trf.xlu0
        %v1224 = vpop.trf.xlu0
        %v1225 = vpop.trf.xlu0
        %v1226 = vpop.trf.xlu0
        %v1227 = vpop.trf.xlu0
        %v1228 = vpop.trf.xlu0
        %1229 = vxpose.xlu0.b32.start [1/16] %v1120, 128
        %1230 = vxpose.xlu0.b32.cont [2/16] 0.0, 128
        %1231 = vxpose.xlu0.b32.cont [3/16] 0.0, 128
        %1232 = vxpose.xlu0.b32.cont [4/16] 0.0, 128
        %1233 = vxpose.xlu0.b32.cont [5/16] 0.0, 128
        %1234 = vxpose.xlu0.b32.cont [6/16] 0.0, 128
        %1235 = vxpose.xlu0.b32.cont [7/16] 0.0, 128
        %1236 = vxpose.xlu0.b32.cont [8/16] 0.0, 128
        %1237 = vxpose.xlu0.b32.cont [9/16] 0.0, 128
        %1238 = vxpose.xlu0.b32.cont [10/16] 0.0, 128
        %1239 = vxpose.xlu0.b32.cont [11/16] 0.0, 128
        %1240 = vxpose.xlu0.b32.cont [12/16] 0.0, 128
        %1241 = vxpose.xlu0.b32.cont [13/16] 0.0, 128
        %1242 = vxpose.xlu0.b32.cont [14/16] 0.0, 128
        %1243 = vxpose.xlu0.b32.cont [15/16] 0.0, 128
        %1244 = vxpose.xlu0.b32.end [16/16] 0.0, 128
        %v1245 = vpop.trf.xlu0
        %v1246 = vpop.trf.xlu0
        %v1247 = vpop.trf.xlu0
        %v1248 = vpop.trf.xlu0
        %v1249 = vpop.trf.xlu0
        %v1250 = vpop.trf.xlu0
        %v1251 = vpop.trf.xlu0
        %v1252 = vpop.trf.xlu0
        %v1253 = vpop.trf.xlu0
        %v1254 = vpop.trf.xlu0
        %v1255 = vpop.trf.xlu0
        %v1256 = vpop.trf.xlu0
        %v1257 = vpop.trf.xlu0
        %v1258 = vpop.trf.xlu0
        %v1259 = vpop.trf.xlu0
        %v1260 = vpop.trf.xlu0
        %1261 = vxpose.xlu0.b32.start [1/16] %v1121, 128
        %1262 = vxpose.xlu0.b32.cont [2/16] 0.0, 128
        %1263 = vxpose.xlu0.b32.cont [3/16] 0.0, 128
        %1264 = vxpose.xlu0.b32.cont [4/16] 0.0, 128
        %1265 = vxpose.xlu0.b32.cont [5/16] 0.0, 128
        %1266 = vxpose.xlu0.b32.cont [6/16] 0.0, 128
        %1267 = vxpose.xlu0.b32.cont [7/16] 0.0, 128
        %1268 = vxpose.xlu0.b32.cont [8/16] 0.0, 128
        %1269 = vxpose.xlu0.b32.cont [9/16] 0.0, 128
        %1270 = vxpose.xlu0.b32.cont [10/16] 0.0, 128
        %1271 = vxpose.xlu0.b32.cont [11/16] 0.0, 128
        %1272 = vxpose.xlu0.b32.cont [12/16] 0.0, 128
        %1273 = vxpose.xlu0.b32.cont [13/16] 0.0, 128
        %1274 = vxpose.xlu0.b32.cont [14/16] 0.0, 128
        %1275 = vxpose.xlu0.b32.cont [15/16] 0.0, 128
        %1276 = vxpose.xlu0.b32.end [16/16] 0.0, 128
        %v1277 = vpop.trf.xlu0
        %v1278 = vpop.trf.xlu0
        %v1279 = vpop.trf.xlu0
        %v1280 = vpop.trf.xlu0
        %v1281 = vpop.trf.xlu0
        %v1282 = vpop.trf.xlu0
        %v1283 = vpop.trf.xlu0
        %v1284 = vpop.trf.xlu0
        %v1285 = vpop.trf.xlu0
        %v1286 = vpop.trf.xlu0
        %v1287 = vpop.trf.xlu0
        %v1288 = vpop.trf.xlu0
        %v1289 = vpop.trf.xlu0
        %v1290 = vpop.trf.xlu0
        %v1291 = vpop.trf.xlu0
        %v1292 = vpop.trf.xlu0
        %1293 = vxpose.xlu0.b32.start [1/16] %v1122, 128
        %1294 = vxpose.xlu0.b32.cont [2/16] 0.0, 128
        %1295 = vxpose.xlu0.b32.cont [3/16] 0.0, 128
        %1296 = vxpose.xlu0.b32.cont [4/16] 0.0, 128
        %1297 = vxpose.xlu0.b32.cont [5/16] 0.0, 128
        %1298 = vxpose.xlu0.b32.cont [6/16] 0.0, 128
        %1299 = vxpose.xlu0.b32.cont [7/16] 0.0, 128
        %1300 = vxpose.xlu0.b32.cont [8/16] 0.0, 128
        %1301 = vxpose.xlu0.b32.cont [9/16] 0.0, 128
        %1302 = vxpose.xlu0.b32.cont [10/16] 0.0, 128
        %1303 = vxpose.xlu0.b32.cont [11/16] 0.0, 128
        %1304 = vxpose.xlu0.b32.cont [12/16] 0.0, 128
        %1305 = vxpose.xlu0.b32.cont [13/16] 0.0, 128
        %1306 = vxpose.xlu0.b32.cont [14/16] 0.0, 128
        %1307 = vxpose.xlu0.b32.cont [15/16] 0.0, 128
        %1308 = vxpose.xlu0.b32.end [16/16] 0.0, 128
        %v1309 = vpop.trf.xlu0
        %v1310 = vpop.trf.xlu0
        %v1311 = vpop.trf.xlu0
        %v1312 = vpop.trf.xlu0
        %v1313 = vpop.trf.xlu0
        %v1314 = vpop.trf.xlu0
        %v1315 = vpop.trf.xlu0
        %v1316 = vpop.trf.xlu0
        %v1317 = vpop.trf.xlu0
        %v1318 = vpop.trf.xlu0
        %v1319 = vpop.trf.xlu0
        %v1320 = vpop.trf.xlu0
        %v1321 = vpop.trf.xlu0
        %v1322 = vpop.trf.xlu0
        %v1323 = vpop.trf.xlu0
        %v1324 = vpop.trf.xlu0
        %1325 = vxpose.xlu0.b32.start [1/16] %v1123, 128
        %1326 = vxpose.xlu0.b32.cont [2/16] 0.0, 128
        %1327 = vxpose.xlu0.b32.cont [3/16] 0.0, 128
        %1328 = vxpose.xlu0.b32.cont [4/16] 0.0, 128
        %1329 = vxpose.xlu0.b32.cont [5/16] 0.0, 128
        %1330 = vxpose.xlu0.b32.cont [6/16] 0.0, 128
        %1331 = vxpose.xlu0.b32.cont [7/16] 0.0, 128
        %1332 = vxpose.xlu0.b32.cont [8/16] 0.0, 128
        %1333 = vxpose.xlu0.b32.cont [9/16] 0.0, 128
        %1334 = vxpose.xlu0.b32.cont [10/16] 0.0, 128
        %1335 = vxpose.xlu0.b32.cont [11/16] 0.0, 128
        %1336 = vxpose.xlu0.b32.cont [12/16] 0.0, 128
        %1337 = vxpose.xlu0.b32.cont [13/16] 0.0, 128
        %1338 = vxpose.xlu0.b32.cont [14/16] 0.0, 128
        %1339 = vxpose.xlu0.b32.cont [15/16] 0.0, 128
        %1340 = vxpose.xlu0.b32.end [16/16] 0.0, 128
        %v1341 = vpop.trf.xlu0
        %v1342 = vpop.trf.xlu0
        %v1343 = vpop.trf.xlu0
        %v1344 = vpop.trf.xlu0
        %v1345 = vpop.trf.xlu0
        %v1346 = vpop.trf.xlu0
        %v1347 = vpop.trf.xlu0
        %v1348 = vpop.trf.xlu0
        %v1349 = vpop.trf.xlu0
        %v1350 = vpop.trf.xlu0
        %v1351 = vpop.trf.xlu0
        %v1352 = vpop.trf.xlu0
        %v1353 = vpop.trf.xlu0
        %v1354 = vpop.trf.xlu0
        %v1355 = vpop.trf.xlu0
        %v1356 = vpop.trf.xlu0
        %1357 = vxpose.xlu0.b32.start [1/16] %v1124, 128
        %1358 = vxpose.xlu0.b32.cont [2/16] 0.0, 128
        %1359 = vxpose.xlu0.b32.cont [3/16] 0.0, 128
        %1360 = vxpose.xlu0.b32.cont [4/16] 0.0, 128
        %1361 = vxpose.xlu0.b32.cont [5/16] 0.0, 128
        %1362 = vxpose.xlu0.b32.cont [6/16] 0.0, 128
        %1363 = vxpose.xlu0.b32.cont [7/16] 0.0, 128
        %1364 = vxpose.xlu0.b32.cont [8/16] 0.0, 128
        %1365 = vxpose.xlu0.b32.cont [9/16] 0.0, 128
        %1366 = vxpose.xlu0.b32.cont [10/16] 0.0, 128
        %1367 = vxpose.xlu0.b32.cont [11/16] 0.0, 128
        %1368 = vxpose.xlu0.b32.cont [12/16] 0.0, 128
        %1369 = vxpose.xlu0.b32.cont [13/16] 0.0, 128
        %1370 = vxpose.xlu0.b32.cont [14/16] 0.0, 128
        %1371 = vxpose.xlu0.b32.cont [15/16] 0.0, 128
        %1372 = vxpose.xlu0.b32.end [16/16] 0.0, 128
        %v1373 = vpop.trf.xlu0
        %v1374 = vpop.trf.xlu0
        %v1375 = vpop.trf.xlu0
        %v1376 = vpop.trf.xlu0
        %v1377 = vpop.trf.xlu0
        %v1378 = vpop.trf.xlu0
        %v1379 = vpop.trf.xlu0
        %v1380 = vpop.trf.xlu0
        %v1381 = vpop.trf.xlu0
        %v1382 = vpop.trf.xlu0
        %v1383 = vpop.trf.xlu0
        %v1384 = vpop.trf.xlu0
        %v1385 = vpop.trf.xlu0
        %v1386 = vpop.trf.xlu0
        %v1387 = vpop.trf.xlu0
        %v1388 = vpop.trf.xlu0
        %1389 = vxpose.xlu0.b32.start [1/16] %v1125, 128
        %1390 = vxpose.xlu0.b32.cont [2/16] 0.0, 128
        %1391 = vxpose.xlu0.b32.cont [3/16] 0.0, 128
        %1392 = vxpose.xlu0.b32.cont [4/16] 0.0, 128
        %1393 = vxpose.xlu0.b32.cont [5/16] 0.0, 128
        %1394 = vxpose.xlu0.b32.cont [6/16] 0.0, 128
        %1395 = vxpose.xlu0.b32.cont [7/16] 0.0, 128
        %1396 = vxpose.xlu0.b32.cont [8/16] 0.0, 128
        %1397 = vxpose.xlu0.b32.cont [9/16] 0.0, 128
        %1398 = vxpose.xlu0.b32.cont [10/16] 0.0, 128
        %1399 = vxpose.xlu0.b32.cont [11/16] 0.0, 128
        %1400 = vxpose.xlu0.b32.cont [12/16] 0.0, 128
        %1401 = vxpose.xlu0.b32.cont [13/16] 0.0, 128
        %1402 = vxpose.xlu0.b32.cont [14/16] 0.0, 128
        %1403 = vxpose.xlu0.b32.cont [15/16] 0.0, 128
        %1404 = vxpose.xlu0.b32.end [16/16] 0.0, 128
        %v1405 = vpop.trf.xlu0
        %v1406 = vpop.trf.xlu0
        %v1407 = vpop.trf.xlu0
        %v1408 = vpop.trf.xlu0
        %v1409 = vpop.trf.xlu0
        %v1410 = vpop.trf.xlu0
        %v1411 = vpop.trf.xlu0
        %v1412 = vpop.trf.xlu0
        %v1413 = vpop.trf.xlu0
        %v1414 = vpop.trf.xlu0
        %v1415 = vpop.trf.xlu0
        %v1416 = vpop.trf.xlu0
        %v1417 = vpop.trf.xlu0
        %v1418 = vpop.trf.xlu0
        %v1419 = vpop.trf.xlu0
        %v1420 = vpop.trf.xlu0
        %1421 = vxpose.xlu0.b32.start [1/16] %v1126, 128
        %1422 = vxpose.xlu0.b32.cont [2/16] 0.0, 128
        %1423 = vxpose.xlu0.b32.cont [3/16] 0.0, 128
        %1424 = vxpose.xlu0.b32.cont [4/16] 0.0, 128
        %1425 = vxpose.xlu0.b32.cont [5/16] 0.0, 128
        %1426 = vxpose.xlu0.b32.cont [6/16] 0.0, 128
        %1427 = vxpose.xlu0.b32.cont [7/16] 0.0, 128
        %1428 = vxpose.xlu0.b32.cont [8/16] 0.0, 128
        %1429 = vxpose.xlu0.b32.cont [9/16] 0.0, 128
        %1430 = vxpose.xlu0.b32.cont [10/16] 0.0, 128
        %1431 = vxpose.xlu0.b32.cont [11/16] 0.0, 128
        %1432 = vxpose.xlu0.b32.cont [12/16] 0.0, 128
        %1433 = vxpose.xlu0.b32.cont [13/16] 0.0, 128
        %1434 = vxpose.xlu0.b32.cont [14/16] 0.0, 128
        %1435 = vxpose.xlu0.b32.cont [15/16] 0.0, 128
        %1436 = vxpose.xlu0.b32.end [16/16] 0.0, 128
        %v1437 = vpop.trf.xlu0
        %v1438 = vpop.trf.xlu0
        %v1439 = vpop.trf.xlu0
        %v1440 = vpop.trf.xlu0
        %v1441 = vpop.trf.xlu0
        %v1442 = vpop.trf.xlu0
        %v1443 = vpop.trf.xlu0
        %v1444 = vpop.trf.xlu0
        %v1445 = vpop.trf.xlu0
        %v1446 = vpop.trf.xlu0
        %v1447 = vpop.trf.xlu0
        %v1448 = vpop.trf.xlu0
        %v1449 = vpop.trf.xlu0
        %v1450 = vpop.trf.xlu0
        %v1451 = vpop.trf.xlu0
        %v1452 = vpop.trf.xlu0
        %1453 = vxpose.xlu0.b32.start [1/16] %v1127, 128
        %1454 = vxpose.xlu0.b32.cont [2/16] 0.0, 128
        %1455 = vxpose.xlu0.b32.cont [3/16] 0.0, 128
        %1456 = vxpose.xlu0.b32.cont [4/16] 0.0, 128
        %1457 = vxpose.xlu0.b32.cont [5/16] 0.0, 128
        %1458 = vxpose.xlu0.b32.cont [6/16] 0.0, 128
        %1459 = vxpose.xlu0.b32.cont [7/16] 0.0, 128
        %1460 = vxpose.xlu0.b32.cont [8/16] 0.0, 128
        %1461 = vxpose.xlu0.b32.cont [9/16] 0.0, 128
        %1462 = vxpose.xlu0.b32.cont [10/16] 0.0, 128
        %1463 = vxpose.xlu0.b32.cont [11/16] 0.0, 128
        %1464 = vxpose.xlu0.b32.cont [12/16] 0.0, 128
        %1465 = vxpose.xlu0.b32.cont [13/16] 0.0, 128
        %1466 = vxpose.xlu0.b32.cont [14/16] 0.0, 128
        %1467 = vxpose.xlu0.b32.cont [15/16] 0.0, 128
        %1468 = vxpose.xlu0.b32.end [16/16] 0.0, 128
        %v1469 = vpop.trf.xlu0
        %v1470 = vpop.trf.xlu0
        %v1471 = vpop.trf.xlu0
        %v1472 = vpop.trf.xlu0
        %v1473 = vpop.trf.xlu0
        %v1474 = vpop.trf.xlu0
        %v1475 = vpop.trf.xlu0
        %v1476 = vpop.trf.xlu0
        %v1477 = vpop.trf.xlu0
        %v1478 = vpop.trf.xlu0
        %v1479 = vpop.trf.xlu0
        %v1480 = vpop.trf.xlu0
        %v1481 = vpop.trf.xlu0
        %v1482 = vpop.trf.xlu0
        %v1483 = vpop.trf.xlu0
        %v1484 = vpop.trf.xlu0
        %1485 = vxpose.xlu0.b32.start [1/16] %v1128, 128
        %1486 = vxpose.xlu0.b32.cont [2/16] 0.0, 128
        %1487 = vxpose.xlu0.b32.cont [3/16] 0.0, 128
        %1488 = vxpose.xlu0.b32.cont [4/16] 0.0, 128
        %1489 = vxpose.xlu0.b32.cont [5/16] 0.0, 128
        %1490 = vxpose.xlu0.b32.cont [6/16] 0.0, 128
        %1491 = vxpose.xlu0.b32.cont [7/16] 0.0, 128
        %1492 = vxpose.xlu0.b32.cont [8/16] 0.0, 128
        %1493 = vxpose.xlu0.b32.cont [9/16] 0.0, 128
        %1494 = vxpose.xlu0.b32.cont [10/16] 0.0, 128
        %1495 = vxpose.xlu0.b32.cont [11/16] 0.0, 128
        %1496 = vxpose.xlu0.b32.cont [12/16] 0.0, 128
        %1497 = vxpose.xlu0.b32.cont [13/16] 0.0, 128
        %1498 = vxpose.xlu0.b32.cont [14/16] 0.0, 128
        %1499 = vxpose.xlu0.b32.cont [15/16] 0.0, 128
        %1500 = vxpose.xlu0.b32.end [16/16] 0.0, 128
        %v1501 = vpop.trf.xlu0
        %v1502 = vpop.trf.xlu0
        %v1503 = vpop.trf.xlu0
        %v1504 = vpop.trf.xlu0
        %v1505 = vpop.trf.xlu0
        %v1506 = vpop.trf.xlu0
        %v1507 = vpop.trf.xlu0
        %v1508 = vpop.trf.xlu0
        %v1509 = vpop.trf.xlu0
        %v1510 = vpop.trf.xlu0
        %v1511 = vpop.trf.xlu0
        %v1512 = vpop.trf.xlu0
        %v1513 = vpop.trf.xlu0
        %v1514 = vpop.trf.xlu0
        %v1515 = vpop.trf.xlu0
        %v1516 = vpop.trf.xlu0
        %1517 = vxpose.xlu0.b32.start [1/16] %v1129, 128
        %1518 = vxpose.xlu0.b32.cont [2/16] 0.0, 128
        %1519 = vxpose.xlu0.b32.cont [3/16] 0.0, 128
        %1520 = vxpose.xlu0.b32.cont [4/16] 0.0, 128
        %1521 = vxpose.xlu0.b32.cont [5/16] 0.0, 128
        %1522 = vxpose.xlu0.b32.cont [6/16] 0.0, 128
        %1523 = vxpose.xlu0.b32.cont [7/16] 0.0, 128
        %1524 = vxpose.xlu0.b32.cont [8/16] 0.0, 128
        %1525 = vxpose.xlu0.b32.cont [9/16] 0.0, 128
        %1526 = vxpose.xlu0.b32.cont [10/16] 0.0, 128
        %1527 = vxpose.xlu0.b32.cont [11/16] 0.0, 128
        %1528 = vxpose.xlu0.b32.cont [12/16] 0.0, 128
        %1529 = vxpose.xlu0.b32.cont [13/16] 0.0, 128
        %1530 = vxpose.xlu0.b32.cont [14/16] 0.0, 128
        %1531 = vxpose.xlu0.b32.cont [15/16] 0.0, 128
        %1532 = vxpose.xlu0.b32.end [16/16] 0.0, 128
        %v1533 = vpop.trf.xlu0
        %v1534 = vpop.trf.xlu0
        %v1535 = vpop.trf.xlu0
        %v1536 = vpop.trf.xlu0
        %v1537 = vpop.trf.xlu0
        %v1538 = vpop.trf.xlu0
        %v1539 = vpop.trf.xlu0
        %v1540 = vpop.trf.xlu0
        %v1541 = vpop.trf.xlu0
        %v1542 = vpop.trf.xlu0
        %v1543 = vpop.trf.xlu0
        %v1544 = vpop.trf.xlu0
        %v1545 = vpop.trf.xlu0
        %v1546 = vpop.trf.xlu0
        %v1547 = vpop.trf.xlu0
        %v1548 = vpop.trf.xlu0
        %1549 = vxpose.xlu0.b32.start [1/16] %v1130, 128
        %1550 = vxpose.xlu0.b32.cont [2/16] 0.0, 128
        %1551 = vxpose.xlu0.b32.cont [3/16] 0.0, 128
        %1552 = vxpose.xlu0.b32.cont [4/16] 0.0, 128
        %1553 = vxpose.xlu0.b32.cont [5/16] 0.0, 128
        %1554 = vxpose.xlu0.b32.cont [6/16] 0.0, 128
        %1555 = vxpose.xlu0.b32.cont [7/16] 0.0, 128
        %1556 = vxpose.xlu0.b32.cont [8/16] 0.0, 128
        %1557 = vxpose.xlu0.b32.cont [9/16] 0.0, 128
        %1558 = vxpose.xlu0.b32.cont [10/16] 0.0, 128
        %1559 = vxpose.xlu0.b32.cont [11/16] 0.0, 128
        %1560 = vxpose.xlu0.b32.cont [12/16] 0.0, 128
        %1561 = vxpose.xlu0.b32.cont [13/16] 0.0, 128
        %1562 = vxpose.xlu0.b32.cont [14/16] 0.0, 128
        %1563 = vxpose.xlu0.b32.cont [15/16] 0.0, 128
        %1564 = vxpose.xlu0.b32.end [16/16] 0.0, 128
        %v1565 = vpop.trf.xlu0
        %v1566 = vpop.trf.xlu0
        %v1567 = vpop.trf.xlu0
        %v1568 = vpop.trf.xlu0
        %v1569 = vpop.trf.xlu0
        %v1570 = vpop.trf.xlu0
        %v1571 = vpop.trf.xlu0
        %v1572 = vpop.trf.xlu0
        %v1573 = vpop.trf.xlu0
        %v1574 = vpop.trf.xlu0
        %v1575 = vpop.trf.xlu0
        %v1576 = vpop.trf.xlu0
        %v1577 = vpop.trf.xlu0
        %v1578 = vpop.trf.xlu0
        %v1579 = vpop.trf.xlu0
        %v1580 = vpop.trf.xlu0
        %1581 = vxpose.xlu0.b32.start [1/16] %v1131, 128
        %1582 = vxpose.xlu0.b32.cont [2/16] 0.0, 128
        %1583 = vxpose.xlu0.b32.cont [3/16] 0.0, 128
        %1584 = vxpose.xlu0.b32.cont [4/16] 0.0, 128
        %1585 = vxpose.xlu0.b32.cont [5/16] 0.0, 128
        %1586 = vxpose.xlu0.b32.cont [6/16] 0.0, 128
        %1587 = vxpose.xlu0.b32.cont [7/16] 0.0, 128
        %1588 = vxpose.xlu0.b32.cont [8/16] 0.0, 128
        %1589 = vxpose.xlu0.b32.cont [9/16] 0.0, 128
        %1590 = vxpose.xlu0.b32.cont [10/16] 0.0, 128
        %1591 = vxpose.xlu0.b32.cont [11/16] 0.0, 128
        %1592 = vxpose.xlu0.b32.cont [12/16] 0.0, 128
        %1593 = vxpose.xlu0.b32.cont [13/16] 0.0, 128
        %1594 = vxpose.xlu0.b32.cont [14/16] 0.0, 128
        %1595 = vxpose.xlu0.b32.cont [15/16] 0.0, 128
        %1596 = vxpose.xlu0.b32.end [16/16] 0.0, 128
        %v1597 = vpop.trf.xlu0
        %v1598 = vpop.trf.xlu0
        %v1599 = vpop.trf.xlu0
        %v1600 = vpop.trf.xlu0
        %v1601 = vpop.trf.xlu0
        %v1602 = vpop.trf.xlu0
        %v1603 = vpop.trf.xlu0
        %v1604 = vpop.trf.xlu0
        %v1605 = vpop.trf.xlu0
        %v1606 = vpop.trf.xlu0
        %v1607 = vpop.trf.xlu0
        %v1608 = vpop.trf.xlu0
        %v1609 = vpop.trf.xlu0
        %v1610 = vpop.trf.xlu0
        %v1611 = vpop.trf.xlu0
        %v1612 = vpop.trf.xlu0
        %1613 = vxpose.xlu0.b32.start [1/16] %v1132, 128
        %1614 = vxpose.xlu0.b32.cont [2/16] 0.0, 128
        %1615 = vxpose.xlu0.b32.cont [3/16] 0.0, 128
        %1616 = vxpose.xlu0.b32.cont [4/16] 0.0, 128
        %1617 = vxpose.xlu0.b32.cont [5/16] 0.0, 128
        %1618 = vxpose.xlu0.b32.cont [6/16] 0.0, 128
        %1619 = vxpose.xlu0.b32.cont [7/16] 0.0, 128
        %1620 = vxpose.xlu0.b32.cont [8/16] 0.0, 128
        %1621 = vxpose.xlu0.b32.cont [9/16] 0.0, 128
        %1622 = vxpose.xlu0.b32.cont [10/16] 0.0, 128
        %1623 = vxpose.xlu0.b32.cont [11/16] 0.0, 128
        %1624 = vxpose.xlu0.b32.cont [12/16] 0.0, 128
        %1625 = vxpose.xlu0.b32.cont [13/16] 0.0, 128
        %1626 = vxpose.xlu0.b32.cont [14/16] 0.0, 128
        %1627 = vxpose.xlu0.b32.cont [15/16] 0.0, 128
        %1628 = vxpose.xlu0.b32.end [16/16] 0.0, 128
        %v1629 = vpop.trf.xlu0
        %v1630 = vpop.trf.xlu0
        %v1631 = vpop.trf.xlu0
        %v1632 = vpop.trf.xlu0
        %v1633 = vpop.trf.xlu0
        %v1634 = vpop.trf.xlu0
        %v1635 = vpop.trf.xlu0
        %v1636 = vpop.trf.xlu0
        %v1637 = vpop.trf.xlu0
        %v1638 = vpop.trf.xlu0
        %v1639 = vpop.trf.xlu0
        %v1640 = vpop.trf.xlu0
        %v1641 = vpop.trf.xlu0
        %v1642 = vpop.trf.xlu0
        %v1643 = vpop.trf.xlu0
        %v1644 = vpop.trf.xlu0
        %vm1645 = vcmask 64512
        %v1647 = vsel %vm1645, %v1149, 0
        %1649 = vmatprep.subr.mxu0 0.0
        %1650 = vmatpush1.msra.mxu0 %v959
        %1651 = vmatprep.subr.mxu0 0.0
        %1652 = vmatpush1.msra.mxu0 0.0
        %1653 = vmatprep.subr.mxu0 0.0
        %1654 = vmatpush1.msra.mxu0 0.0
        %1655 = vmatprep.subr.mxu0 0.0
        %1656 = vmatpush1.msra.mxu0 0.0
        %1657 = vmatprep.subr.mxu0 0.0
        %1658 = vmatpush1.msra.mxu0 0.0
        %1659 = vmatprep.subr.mxu0 0.0
        %1660 = vmatpush1.msra.mxu0 0.0
        %1661 = vmatprep.subr.mxu0 0.0
        %1662 = vmatpush1.msra.mxu0 0.0
        %1663 = vmatprep.subr.mxu0 0.0
        %1664 = vmatpush1.msra.mxu0 0.0
        %1665 = vmatprep.subr.mxu0 0.0
        %1666 = vmatpush1.msra.mxu0 0.0
        %1667 = vmatprep.subr.mxu0 0.0
        %1668 = vmatpush1.msra.mxu0 0.0
        %1669 = vmatprep.subr.mxu0 0.0
        %1670 = vmatpush1.msra.mxu0 0.0
        %1671 = vmatprep.subr.mxu0 0.0
        %1672 = vmatpush1.msra.mxu0 0.0
        %1673 = vmatprep.subr.mxu0 0.0
        %1674 = vmatpush1.msra.mxu0 0.0
        %1675 = vmatprep.subr.mxu0 0.0
        %1676 = vmatpush1.msra.mxu0 0.0
        %1677 = vmatprep.subr.mxu0 0.0
        %1678 = vmatpush1.msra.mxu0 0.0
        %1679 = vmatprep.subr.mxu0 0.0
        %1680 = vmatpush1.msra.mxu0 0.0
        %1681 = vmatprep.subr.mxu0 0.0
        %1682 = vmatpush1.msra.mxu0 0.0
        %1683 = vmatprep.subr.mxu0 0.0
        %1684 = vmatpush1.msra.mxu0 0.0
        %1685 = vmatprep.subr.mxu0 0.0
        %1686 = vmatpush1.msra.mxu0 0.0
        %1687 = vmatprep.subr.mxu0 0.0
        %1688 = vmatpush1.msra.mxu0 0.0
        %1689 = vmatprep.subr.mxu0 0.0
        %1690 = vmatpush1.msra.mxu0 0.0
        %1691 = vmatprep.subr.mxu0 0.0
        %1692 = vmatpush1.msra.mxu0 0.0
        %1693 = vmatprep.subr.mxu0 0.0
        %1694 = vmatpush1.msra.mxu0 0.0
        %1695 = vmatprep.subr.mxu0 0.0
        %1696 = vmatpush1.msra.mxu0 0.0
        %1697 = vmatprep.subr.mxu0 0.0
        %1698 = vmatpush1.msra.mxu0 0.0
        %1699 = vmatprep.subr.mxu0 0.0
        %1700 = vmatpush1.msra.mxu0 0.0
        %1701 = vmatprep.subr.mxu0 0.0
        %1702 = vmatpush1.msra.mxu0 0.0
        %1703 = vmatprep.subr.mxu0 0.0
        %1704 = vmatpush1.msra.mxu0 0.0
        %1705 = vmatprep.subr.mxu0 0.0
        %1706 = vmatpush1.msra.mxu0 0.0
        %1707 = vmatprep.subr.mxu0 0.0
        %1708 = vmatpush1.msra.mxu0 0.0
        %1709 = vmatprep.subr.mxu0 0.0
        %1710 = vmatpush1.msra.mxu0 0.0
        %1711 = vmatprep.subr.mxu0 0.0
        %1712 = vmatpush1.msra.mxu0 0.0
        %1713 = vmatprep.mubr.f32.mxu0 0.0
        %1714 = vmatmul.mubr.f32.gmra.mrb[0].mxu0 %v1647
        %v1715 = vpop.f32.mrb[0].mxu0
        %v1716 = vadd.f32 0.0, %v1715
        %v1717 = vpop.f32.mrb[0].mxu0
        %1718 = vdwg.mxu0
        %v1720 = vsel %vm1645, %v1181, 0
        %1722 = vmatprep.subr.mxu0 0.0
        %1723 = vmatpush1.msra.mxu0 %v964
        %1724 = vmatprep.subr.mxu0 0.0
        %1725 = vmatpush1.msra.mxu0 0.0
        %1726 = vmatprep.subr.mxu0 0.0
        %1727 = vmatpush1.msra.mxu0 0.0
        %1728 = vmatprep.subr.mxu0 0.0
        %1729 = vmatpush1.msra.mxu0 0.0
        %1730 = vmatprep.subr.mxu0 0.0
        %1731 = vmatpush1.msra.mxu0 0.0
        %1732 = vmatprep.subr.mxu0 0.0
        %1733 = vmatpush1.msra.mxu0 0.0
        %1734 = vmatprep.subr.mxu0 0.0
        %1735 = vmatpush1.msra.mxu0 0.0
        %1736 = vmatprep.subr.mxu0 0.0
        %1737 = vmatpush1.msra.mxu0 0.0
        %1738 = vmatprep.subr.mxu0 0.0
        %1739 = vmatpush1.msra.mxu0 0.0
        %1740 = vmatprep.subr.mxu0 0.0
        %1741 = vmatpush1.msra.mxu0 0.0
        %1742 = vmatprep.subr.mxu0 0.0
        %1743 = vmatpush1.msra.mxu0 0.0
        %1744 = vmatprep.subr.mxu0 0.0
        %1745 = vmatpush1.msra.mxu0 0.0
        %1746 = vmatprep.subr.mxu0 0.0
        %1747 = vmatpush1.msra.mxu0 0.0
        %1748 = vmatprep.subr.mxu0 0.0
        %1749 = vmatpush1.msra.mxu0 0.0
        %1750 = vmatprep.subr.mxu0 0.0
        %1751 = vmatpush1.msra.mxu0 0.0
        %1752 = vmatprep.subr.mxu0 0.0
        %1753 = vmatpush1.msra.mxu0 0.0
        %1754 = vmatprep.subr.mxu0 0.0
        %1755 = vmatpush1.msra.mxu0 0.0
        %1756 = vmatprep.subr.mxu0 0.0
        %1757 = vmatpush1.msra.mxu0 0.0
        %1758 = vmatprep.subr.mxu0 0.0
        %1759 = vmatpush1.msra.mxu0 0.0
        %1760 = vmatprep.subr.mxu0 0.0
        %1761 = vmatpush1.msra.mxu0 0.0
        %1762 = vmatprep.subr.mxu0 0.0
        %1763 = vmatpush1.msra.mxu0 0.0
        %1764 = vmatprep.subr.mxu0 0.0
        %1765 = vmatpush1.msra.mxu0 0.0
        %1766 = vmatprep.subr.mxu0 0.0
        %1767 = vmatpush1.msra.mxu0 0.0
        %1768 = vmatprep.subr.mxu0 0.0
        %1769 = vmatpush1.msra.mxu0 0.0
        %1770 = vmatprep.subr.mxu0 0.0
        %1771 = vmatpush1.msra.mxu0 0.0
        %1772 = vmatprep.subr.mxu0 0.0
        %1773 = vmatpush1.msra.mxu0 0.0
        %1774 = vmatprep.subr.mxu0 0.0
        %1775 = vmatpush1.msra.mxu0 0.0
        %1776 = vmatprep.subr.mxu0 0.0
        %1777 = vmatpush1.msra.mxu0 0.0
        %1778 = vmatprep.subr.mxu0 0.0
        %1779 = vmatpush1.msra.mxu0 0.0
        %1780 = vmatprep.subr.mxu0 0.0
        %1781 = vmatpush1.msra.mxu0 0.0
        %1782 = vmatprep.subr.mxu0 0.0
        %1783 = vmatpush1.msra.mxu0 0.0
        %1784 = vmatprep.subr.mxu0 0.0
        %1785 = vmatpush1.msra.mxu0 0.0
        %1786 = vmatprep.mubr.f32.mxu0 0.0
        %1787 = vmatmul.mubr.f32.gmra.mrb[0].mxu0 %v1720
        %v1788 = vpop.f32.mrb[0].mxu0
        %v1789 = vadd.f32 0.0, %v1788
        %v1790 = vpop.f32.mrb[0].mxu0
        %1791 = vdwg.mxu0
        %v1793 = vsel %vm1645, %v1213, 0
        %1795 = vmatprep.subr.mxu0 0.0
        %1796 = vmatpush1.msra.mxu0 %v969
        %1797 = vmatprep.subr.mxu0 0.0
        %1798 = vmatpush1.msra.mxu0 0.0
        %1799 = vmatprep.subr.mxu0 0.0
        %1800 = vmatpush1.msra.mxu0 0.0
        %1801 = vmatprep.subr.mxu0 0.0
        %1802 = vmatpush1.msra.mxu0 0.0
        %1803 = vmatprep.subr.mxu0 0.0
        %1804 = vmatpush1.msra.mxu0 0.0
        %1805 = vmatprep.subr.mxu0 0.0
        %1806 = vmatpush1.msra.mxu0 0.0
        %1807 = vmatprep.subr.mxu0 0.0
        %1808 = vmatpush1.msra.mxu0 0.0
        %1809 = vmatprep.subr.mxu0 0.0
        %1810 = vmatpush1.msra.mxu0 0.0
        %1811 = vmatprep.subr.mxu0 0.0
        %1812 = vmatpush1.msra.mxu0 0.0
        %1813 = vmatprep.subr.mxu0 0.0
        %1814 = vmatpush1.msra.mxu0 0.0
        %1815 = vmatprep.subr.mxu0 0.0
        %1816 = vmatpush1.msra.mxu0 0.0
        %1817 = vmatprep.subr.mxu0 0.0
        %1818 = vmatpush1.msra.mxu0 0.0
        %1819 = vmatprep.subr.mxu0 0.0
        %1820 = vmatpush1.msra.mxu0 0.0
        %1821 = vmatprep.subr.mxu0 0.0
        %1822 = vmatpush1.msra.mxu0 0.0
        %1823 = vmatprep.subr.mxu0 0.0
        %1824 = vmatpush1.msra.mxu0 0.0
        %1825 = vmatprep.subr.mxu0 0.0
        %1826 = vmatpush1.msra.mxu0 0.0
        %1827 = vmatprep.subr.mxu0 0.0
        %1828 = vmatpush1.msra.mxu0 0.0
        %1829 = vmatprep.subr.mxu0 0.0
        %1830 = vmatpush1.msra.mxu0 0.0
        %1831 = vmatprep.subr.mxu0 0.0
        %1832 = vmatpush1.msra.mxu0 0.0
        %1833 = vmatprep.subr.mxu0 0.0
        %1834 = vmatpush1.msra.mxu0 0.0
        %1835 = vmatprep.subr.mxu0 0.0
        %1836 = vmatpush1.msra.mxu0 0.0
        %1837 = vmatprep.subr.mxu0 0.0
        %1838 = vmatpush1.msra.mxu0 0.0
        %1839 = vmatprep.subr.mxu0 0.0
        %1840 = vmatpush1.msra.mxu0 0.0
        %1841 = vmatprep.subr.mxu0 0.0
        %1842 = vmatpush1.msra.mxu0 0.0
        %1843 = vmatprep.subr.mxu0 0.0
        %1844 = vmatpush1.msra.mxu0 0.0
        %1845 = vmatprep.subr.mxu0 0.0
        %1846 = vmatpush1.msra.mxu0 0.0
        %1847 = vmatprep.subr.mxu0 0.0
        %1848 = vmatpush1.msra.mxu0 0.0
        %1849 = vmatprep.subr.mxu0 0.0
        %1850 = vmatpush1.msra.mxu0 0.0
        %1851 = vmatprep.subr.mxu0 0.0
        %1852 = vmatpush1.msra.mxu0 0.0
        %1853 = vmatprep.subr.mxu0 0.0
        %1854 = vmatpush1.msra.mxu0 0.0
        %1855 = vmatprep.subr.mxu0 0.0
        %1856 = vmatpush1.msra.mxu0 0.0
        %1857 = vmatprep.subr.mxu0 0.0
        %1858 = vmatpush1.msra.mxu0 0.0
        %1859 = vmatprep.mubr.f32.mxu0 0.0
        %1860 = vmatmul.mubr.f32.gmra.mrb[0].mxu0 %v1793
        %v1861 = vpop.f32.mrb[0].mxu0
        %v1862 = vadd.f32 0.0, %v1861
        %v1863 = vpop.f32.mrb[0].mxu0
        %1864 = vdwg.mxu0
        %v1866 = vsel %vm1645, %v1245, 0
        %1868 = vmatprep.subr.mxu0 0.0
        %1869 = vmatpush1.msra.mxu0 %v974
        %1870 = vmatprep.subr.mxu0 0.0
        %1871 = vmatpush1.msra.mxu0 0.0
        %1872 = vmatprep.subr.mxu0 0.0
        %1873 = vmatpush1.msra.mxu0 0.0
        %1874 = vmatprep.subr.mxu0 0.0
        %1875 = vmatpush1.msra.mxu0 0.0
        %1876 = vmatprep.subr.mxu0 0.0
        %1877 = vmatpush1.msra.mxu0 0.0
        %1878 = vmatprep.subr.mxu0 0.0
        %1879 = vmatpush1.msra.mxu0 0.0
        %1880 = vmatprep.subr.mxu0 0.0
        %1881 = vmatpush1.msra.mxu0 0.0
        %1882 = vmatprep.subr.mxu0 0.0
        %1883 = vmatpush1.msra.mxu0 0.0
        %1884 = vmatprep.subr.mxu0 0.0
        %1885 = vmatpush1.msra.mxu0 0.0
        %1886 = vmatprep.subr.mxu0 0.0
        %1887 = vmatpush1.msra.mxu0 0.0
        %1888 = vmatprep.subr.mxu0 0.0
        %1889 = vmatpush1.msra.mxu0 0.0
        %1890 = vmatprep.subr.mxu0 0.0
        %1891 = vmatpush1.msra.mxu0 0.0
        %1892 = vmatprep.subr.mxu0 0.0
        %1893 = vmatpush1.msra.mxu0 0.0
        %1894 = vmatprep.subr.mxu0 0.0
        %1895 = vmatpush1.msra.mxu0 0.0
        %1896 = vmatprep.subr.mxu0 0.0
        %1897 = vmatpush1.msra.mxu0 0.0
        %1898 = vmatprep.subr.mxu0 0.0
        %1899 = vmatpush1.msra.mxu0 0.0
        %1900 = vmatprep.subr.mxu0 0.0
        %1901 = vmatpush1.msra.mxu0 0.0
        %1902 = vmatprep.subr.mxu0 0.0
        %1903 = vmatpush1.msra.mxu0 0.0
        %1904 = vmatprep.subr.mxu0 0.0
        %1905 = vmatpush1.msra.mxu0 0.0
        %1906 = vmatprep.subr.mxu0 0.0
        %1907 = vmatpush1.msra.mxu0 0.0
        %1908 = vmatprep.subr.mxu0 0.0
        %1909 = vmatpush1.msra.mxu0 0.0
        %1910 = vmatprep.subr.mxu0 0.0
        %1911 = vmatpush1.msra.mxu0 0.0
        %1912 = vmatprep.subr.mxu0 0.0
        %1913 = vmatpush1.msra.mxu0 0.0
        %1914 = vmatprep.subr.mxu0 0.0
        %1915 = vmatpush1.msra.mxu0 0.0
        %1916 = vmatprep.subr.mxu0 0.0
        %1917 = vmatpush1.msra.mxu0 0.0
        %1918 = vmatprep.subr.mxu0 0.0
        %1919 = vmatpush1.msra.mxu0 0.0
        %1920 = vmatprep.subr.mxu0 0.0
        %1921 = vmatpush1.msra.mxu0 0.0
        %1922 = vmatprep.subr.mxu0 0.0
        %1923 = vmatpush1.msra.mxu0 0.0
        %1924 = vmatprep.subr.mxu0 0.0
        %1925 = vmatpush1.msra.mxu0 0.0
        %1926 = vmatprep.subr.mxu0 0.0
        %1927 = vmatpush1.msra.mxu0 0.0
        %1928 = vmatprep.subr.mxu0 0.0
        %1929 = vmatpush1.msra.mxu0 0.0
        %1930 = vmatprep.subr.mxu0 0.0
        %1931 = vmatpush1.msra.mxu0 0.0
        %1932 = vmatprep.mubr.f32.mxu0 0.0
        %1933 = vmatmul.mubr.f32.gmra.mrb[0].mxu0 %v1866
        %v1934 = vpop.f32.mrb[0].mxu0
        %v1935 = vadd.f32 0.0, %v1934
        %v1936 = vpop.f32.mrb[0].mxu0
        %1937 = vdwg.mxu0
        %v1939 = vsel %vm1645, %v1277, 0
        %1941 = vmatprep.subr.mxu0 0.0
        %1942 = vmatpush1.msra.mxu0 %v979
        %1943 = vmatprep.subr.mxu0 0.0
        %1944 = vmatpush1.msra.mxu0 0.0
        %1945 = vmatprep.subr.mxu0 0.0
        %1946 = vmatpush1.msra.mxu0 0.0
        %1947 = vmatprep.subr.mxu0 0.0
        %1948 = vmatpush1.msra.mxu0 0.0
        %1949 = vmatprep.subr.mxu0 0.0
        %1950 = vmatpush1.msra.mxu0 0.0
        %1951 = vmatprep.subr.mxu0 0.0
        %1952 = vmatpush1.msra.mxu0 0.0
        %1953 = vmatprep.subr.mxu0 0.0
        %1954 = vmatpush1.msra.mxu0 0.0
        %1955 = vmatprep.subr.mxu0 0.0
        %1956 = vmatpush1.msra.mxu0 0.0
        %1957 = vmatprep.subr.mxu0 0.0
        %1958 = vmatpush1.msra.mxu0 0.0
        %1959 = vmatprep.subr.mxu0 0.0
        %1960 = vmatpush1.msra.mxu0 0.0
        %1961 = vmatprep.subr.mxu0 0.0
        %1962 = vmatpush1.msra.mxu0 0.0
        %1963 = vmatprep.subr.mxu0 0.0
        %1964 = vmatpush1.msra.mxu0 0.0
        %1965 = vmatprep.subr.mxu0 0.0
        %1966 = vmatpush1.msra.mxu0 0.0
        %1967 = vmatprep.subr.mxu0 0.0
        %1968 = vmatpush1.msra.mxu0 0.0
        %1969 = vmatprep.subr.mxu0 0.0
        %1970 = vmatpush1.msra.mxu0 0.0
        %1971 = vmatprep.subr.mxu0 0.0
        %1972 = vmatpush1.msra.mxu0 0.0
        %1973 = vmatprep.subr.mxu0 0.0
        %1974 = vmatpush1.msra.mxu0 0.0
        %1975 = vmatprep.subr.mxu0 0.0
        %1976 = vmatpush1.msra.mxu0 0.0
        %1977 = vmatprep.subr.mxu0 0.0
        %1978 = vmatpush1.msra.mxu0 0.0
        %1979 = vmatprep.subr.mxu0 0.0
        %1980 = vmatpush1.msra.mxu0 0.0
        %1981 = vmatprep.subr.mxu0 0.0
        %1982 = vmatpush1.msra.mxu0 0.0
        %1983 = vmatprep.subr.mxu0 0.0
        %1984 = vmatpush1.msra.mxu0 0.0
        %1985 = vmatprep.subr.mxu0 0.0
        %1986 = vmatpush1.msra.mxu0 0.0
        %1987 = vmatprep.subr.mxu0 0.0
        %1988 = vmatpush1.msra.mxu0 0.0
        %1989 = vmatprep.subr.mxu0 0.0
        %1990 = vmatpush1.msra.mxu0 0.0
        %1991 = vmatprep.subr.mxu0 0.0
        %1992 = vmatpush1.msra.mxu0 0.0
        %1993 = vmatprep.subr.mxu0 0.0
        %1994 = vmatpush1.msra.mxu0 0.0
        %1995 = vmatprep.subr.mxu0 0.0
        %1996 = vmatpush1.msra.mxu0 0.0
        %1997 = vmatprep.subr.mxu0 0.0
        %1998 = vmatpush1.msra.mxu0 0.0
        %1999 = vmatprep.subr.mxu0 0.0
        %2000 = vmatpush1.msra.mxu0 0.0
        %2001 = vmatprep.subr.mxu0 0.0
        %2002 = vmatpush1.msra.mxu0 0.0
        %2003 = vmatprep.subr.mxu0 0.0
        %2004 = vmatpush1.msra.mxu0 0.0
        %2005 = vmatprep.mubr.f32.mxu0 0.0
        %2006 = vmatmul.mubr.f32.gmra.mrb[0].mxu0 %v1939
        %v2007 = vpop.f32.mrb[0].mxu0
        %v2008 = vadd.f32 0.0, %v2007
        %v2009 = vpop.f32.mrb[0].mxu0
        %2010 = vdwg.mxu0
        %v2012 = vsel %vm1645, %v1309, 0
        %2014 = vmatprep.subr.mxu0 0.0
        %2015 = vmatpush1.msra.mxu0 %v984
        %2016 = vmatprep.subr.mxu0 0.0
        %2017 = vmatpush1.msra.mxu0 0.0
        %2018 = vmatprep.subr.mxu0 0.0
        %2019 = vmatpush1.msra.mxu0 0.0
        %2020 = vmatprep.subr.mxu0 0.0
        %2021 = vmatpush1.msra.mxu0 0.0
        %2022 = vmatprep.subr.mxu0 0.0
        %2023 = vmatpush1.msra.mxu0 0.0
        %2024 = vmatprep.subr.mxu0 0.0
        %2025 = vmatpush1.msra.mxu0 0.0
        %2026 = vmatprep.subr.mxu0 0.0
        %2027 = vmatpush1.msra.mxu0 0.0
        %2028 = vmatprep.subr.mxu0 0.0
        %2029 = vmatpush1.msra.mxu0 0.0
        %2030 = vmatprep.subr.mxu0 0.0
        %2031 = vmatpush1.msra.mxu0 0.0
        %2032 = vmatprep.subr.mxu0 0.0
        %2033 = vmatpush1.msra.mxu0 0.0
        %2034 = vmatprep.subr.mxu0 0.0
        %2035 = vmatpush1.msra.mxu0 0.0
        %2036 = vmatprep.subr.mxu0 0.0
        %2037 = vmatpush1.msra.mxu0 0.0
        %2038 = vmatprep.subr.mxu0 0.0
        %2039 = vmatpush1.msra.mxu0 0.0
        %2040 = vmatprep.subr.mxu0 0.0
        %2041 = vmatpush1.msra.mxu0 0.0
        %2042 = vmatprep.subr.mxu0 0.0
        %2043 = vmatpush1.msra.mxu0 0.0
        %2044 = vmatprep.subr.mxu0 0.0
        %2045 = vmatpush1.msra.mxu0 0.0
        %2046 = vmatprep.subr.mxu0 0.0
        %2047 = vmatpush1.msra.mxu0 0.0
        %2048 = vmatprep.subr.mxu0 0.0
        %2049 = vmatpush1.msra.mxu0 0.0
        %2050 = vmatprep.subr.mxu0 0.0
        %2051 = vmatpush1.msra.mxu0 0.0
        %2052 = vmatprep.subr.mxu0 0.0
        %2053 = vmatpush1.msra.mxu0 0.0
        %2054 = vmatprep.subr.mxu0 0.0
        %2055 = vmatpush1.msra.mxu0 0.0
        %2056 = vmatprep.subr.mxu0 0.0
        %2057 = vmatpush1.msra.mxu0 0.0
        %2058 = vmatprep.subr.mxu0 0.0
        %2059 = vmatpush1.msra.mxu0 0.0
        %2060 = vmatprep.subr.mxu0 0.0
        %2061 = vmatpush1.msra.mxu0 0.0
        %2062 = vmatprep.subr.mxu0 0.0
        %2063 = vmatpush1.msra.mxu0 0.0
        %2064 = vmatprep.subr.mxu0 0.0
        %2065 = vmatpush1.msra.mxu0 0.0
        %2066 = vmatprep.subr.mxu0 0.0
        %2067 = vmatpush1.msra.mxu0 0.0
        %2068 = vmatprep.subr.mxu0 0.0
        %2069 = vmatpush1.msra.mxu0 0.0
        %2070 = vmatprep.subr.mxu0 0.0
        %2071 = vmatpush1.msra.mxu0 0.0
        %2072 = vmatprep.subr.mxu0 0.0
        %2073 = vmatpush1.msra.mxu0 0.0
        %2074 = vmatprep.subr.mxu0 0.0
        %2075 = vmatpush1.msra.mxu0 0.0
        %2076 = vmatprep.subr.mxu0 0.0
        %2077 = vmatpush1.msra.mxu0 0.0
        %2078 = vmatprep.mubr.f32.mxu0 0.0
        %2079 = vmatmul.mubr.f32.gmra.mrb[0].mxu0 %v2012
        %v2080 = vpop.f32.mrb[0].mxu0
        %v2081 = vadd.f32 0.0, %v2080
        %v2082 = vpop.f32.mrb[0].mxu0
        %2083 = vdwg.mxu0
        %v2085 = vsel %vm1645, %v1341, 0
        %2087 = vmatprep.subr.mxu0 0.0
        %2088 = vmatpush1.msra.mxu0 %v989
        %2089 = vmatprep.subr.mxu0 0.0
        %2090 = vmatpush1.msra.mxu0 0.0
        %2091 = vmatprep.subr.mxu0 0.0
        %2092 = vmatpush1.msra.mxu0 0.0
        %2093 = vmatprep.subr.mxu0 0.0
        %2094 = vmatpush1.msra.mxu0 0.0
        %2095 = vmatprep.subr.mxu0 0.0
        %2096 = vmatpush1.msra.mxu0 0.0
        %2097 = vmatprep.subr.mxu0 0.0
        %2098 = vmatpush1.msra.mxu0 0.0
        %2099 = vmatprep.subr.mxu0 0.0
        %2100 = vmatpush1.msra.mxu0 0.0
        %2101 = vmatprep.subr.mxu0 0.0
        %2102 = vmatpush1.msra.mxu0 0.0
        %2103 = vmatprep.subr.mxu0 0.0
        %2104 = vmatpush1.msra.mxu0 0.0
        %2105 = vmatprep.subr.mxu0 0.0
        %2106 = vmatpush1.msra.mxu0 0.0
        %2107 = vmatprep.subr.mxu0 0.0
        %2108 = vmatpush1.msra.mxu0 0.0
        %2109 = vmatprep.subr.mxu0 0.0
        %2110 = vmatpush1.msra.mxu0 0.0
        %2111 = vmatprep.subr.mxu0 0.0
        %2112 = vmatpush1.msra.mxu0 0.0
        %2113 = vmatprep.subr.mxu0 0.0
        %2114 = vmatpush1.msra.mxu0 0.0
        %2115 = vmatprep.subr.mxu0 0.0
        %2116 = vmatpush1.msra.mxu0 0.0
        %2117 = vmatprep.subr.mxu0 0.0
        %2118 = vmatpush1.msra.mxu0 0.0
        %2119 = vmatprep.subr.mxu0 0.0
        %2120 = vmatpush1.msra.mxu0 0.0
        %2121 = vmatprep.subr.mxu0 0.0
        %2122 = vmatpush1.msra.mxu0 0.0
        %2123 = vmatprep.subr.mxu0 0.0
        %2124 = vmatpush1.msra.mxu0 0.0
        %2125 = vmatprep.subr.mxu0 0.0
        %2126 = vmatpush1.msra.mxu0 0.0
        %2127 = vmatprep.subr.mxu0 0.0
        %2128 = vmatpush1.msra.mxu0 0.0
        %2129 = vmatprep.subr.mxu0 0.0
        %2130 = vmatpush1.msra.mxu0 0.0
        %2131 = vmatprep.subr.mxu0 0.0
        %2132 = vmatpush1.msra.mxu0 0.0
        %2133 = vmatprep.subr.mxu0 0.0
        %2134 = vmatpush1.msra.mxu0 0.0
        %2135 = vmatprep.subr.mxu0 0.0
        %2136 = vmatpush1.msra.mxu0 0.0
        %2137 = vmatprep.subr.mxu0 0.0
        %2138 = vmatpush1.msra.mxu0 0.0
        %2139 = vmatprep.subr.mxu0 0.0
        %2140 = vmatpush1.msra.mxu0 0.0
        %2141 = vmatprep.subr.mxu0 0.0
        %2142 = vmatpush1.msra.mxu0 0.0
        %2143 = vmatprep.subr.mxu0 0.0
        %2144 = vmatpush1.msra.mxu0 0.0
        %2145 = vmatprep.subr.mxu0 0.0
        %2146 = vmatpush1.msra.mxu0 0.0
        %2147 = vmatprep.subr.mxu0 0.0
        %2148 = vmatpush1.msra.mxu0 0.0
        %2149 = vmatprep.subr.mxu0 0.0
        %2150 = vmatpush1.msra.mxu0 0.0
        %2151 = vmatprep.mubr.f32.mxu0 0.0
        %2152 = vmatmul.mubr.f32.gmra.mrb[0].mxu0 %v2085
        %v2153 = vpop.f32.mrb[0].mxu0
        %v2154 = vadd.f32 0.0, %v2153
        %v2155 = vpop.f32.mrb[0].mxu0
        %2156 = vdwg.mxu0
        %v2158 = vsel %vm1645, %v1373, 0
        %2160 = vmatprep.subr.mxu0 0.0
        %2161 = vmatpush1.msra.mxu0 %v994
        %2162 = vmatprep.subr.mxu0 0.0
        %2163 = vmatpush1.msra.mxu0 0.0
        %2164 = vmatprep.subr.mxu0 0.0
        %2165 = vmatpush1.msra.mxu0 0.0
        %2166 = vmatprep.subr.mxu0 0.0
        %2167 = vmatpush1.msra.mxu0 0.0
        %2168 = vmatprep.subr.mxu0 0.0
        %2169 = vmatpush1.msra.mxu0 0.0
        %2170 = vmatprep.subr.mxu0 0.0
        %2171 = vmatpush1.msra.mxu0 0.0
        %2172 = vmatprep.subr.mxu0 0.0
        %2173 = vmatpush1.msra.mxu0 0.0
        %2174 = vmatprep.subr.mxu0 0.0
        %2175 = vmatpush1.msra.mxu0 0.0
        %2176 = vmatprep.subr.mxu0 0.0
        %2177 = vmatpush1.msra.mxu0 0.0
        %2178 = vmatprep.subr.mxu0 0.0
        %2179 = vmatpush1.msra.mxu0 0.0
        %2180 = vmatprep.subr.mxu0 0.0
        %2181 = vmatpush1.msra.mxu0 0.0
        %2182 = vmatprep.subr.mxu0 0.0
        %2183 = vmatpush1.msra.mxu0 0.0
        %2184 = vmatprep.subr.mxu0 0.0
        %2185 = vmatpush1.msra.mxu0 0.0
        %2186 = vmatprep.subr.mxu0 0.0
        %2187 = vmatpush1.msra.mxu0 0.0
        %2188 = vmatprep.subr.mxu0 0.0
        %2189 = vmatpush1.msra.mxu0 0.0
        %2190 = vmatprep.subr.mxu0 0.0
        %2191 = vmatpush1.msra.mxu0 0.0
        %2192 = vmatprep.subr.mxu0 0.0
        %2193 = vmatpush1.msra.mxu0 0.0
        %2194 = vmatprep.subr.mxu0 0.0
        %2195 = vmatpush1.msra.mxu0 0.0
        %2196 = vmatprep.subr.mxu0 0.0
        %2197 = vmatpush1.msra.mxu0 0.0
        %2198 = vmatprep.subr.mxu0 0.0
        %2199 = vmatpush1.msra.mxu0 0.0
        %2200 = vmatprep.subr.mxu0 0.0
        %2201 = vmatpush1.msra.mxu0 0.0
        %2202 = vmatprep.subr.mxu0 0.0
        %2203 = vmatpush1.msra.mxu0 0.0
        %2204 = vmatprep.subr.mxu0 0.0
        %2205 = vmatpush1.msra.mxu0 0.0
        %2206 = vmatprep.subr.mxu0 0.0
        %2207 = vmatpush1.msra.mxu0 0.0
        %2208 = vmatprep.subr.mxu0 0.0
        %2209 = vmatpush1.msra.mxu0 0.0
        %2210 = vmatprep.subr.mxu0 0.0
        %2211 = vmatpush1.msra.mxu0 0.0
        %2212 = vmatprep.subr.mxu0 0.0
        %2213 = vmatpush1.msra.mxu0 0.0
        %2214 = vmatprep.subr.mxu0 0.0
        %2215 = vmatpush1.msra.mxu0 0.0
        %2216 = vmatprep.subr.mxu0 0.0
        %2217 = vmatpush1.msra.mxu0 0.0
        %2218 = vmatprep.subr.mxu0 0.0
        %2219 = vmatpush1.msra.mxu0 0.0
        %2220 = vmatprep.subr.mxu0 0.0
        %2221 = vmatpush1.msra.mxu0 0.0
        %2222 = vmatprep.subr.mxu0 0.0
        %2223 = vmatpush1.msra.mxu0 0.0
        %2224 = vmatprep.mubr.f32.mxu0 0.0
        %2225 = vmatmul.mubr.f32.gmra.mrb[0].mxu0 %v2158
        %v2226 = vpop.f32.mrb[0].mxu0
        %v2227 = vadd.f32 0.0, %v2226
        %v2228 = vpop.f32.mrb[0].mxu0
        %2229 = vdwg.mxu0
        %v2231 = vsel %vm1645, %v1405, 0
        %2233 = vmatprep.subr.mxu0 0.0
        %2234 = vmatpush1.msra.mxu0 %v999
        %2235 = vmatprep.subr.mxu0 0.0
        %2236 = vmatpush1.msra.mxu0 0.0
        %2237 = vmatprep.subr.mxu0 0.0
        %2238 = vmatpush1.msra.mxu0 0.0
        %2239 = vmatprep.subr.mxu0 0.0
        %2240 = vmatpush1.msra.mxu0 0.0
        %2241 = vmatprep.subr.mxu0 0.0
        %2242 = vmatpush1.msra.mxu0 0.0
        %2243 = vmatprep.subr.mxu0 0.0
        %2244 = vmatpush1.msra.mxu0 0.0
        %2245 = vmatprep.subr.mxu0 0.0
        %2246 = vmatpush1.msra.mxu0 0.0
        %2247 = vmatprep.subr.mxu0 0.0
        %2248 = vmatpush1.msra.mxu0 0.0
        %2249 = vmatprep.subr.mxu0 0.0
        %2250 = vmatpush1.msra.mxu0 0.0
        %2251 = vmatprep.subr.mxu0 0.0
        %2252 = vmatpush1.msra.mxu0 0.0
        %2253 = vmatprep.subr.mxu0 0.0
        %2254 = vmatpush1.msra.mxu0 0.0
        %2255 = vmatprep.subr.mxu0 0.0
        %2256 = vmatpush1.msra.mxu0 0.0
        %2257 = vmatprep.subr.mxu0 0.0
        %2258 = vmatpush1.msra.mxu0 0.0
        %2259 = vmatprep.subr.mxu0 0.0
        %2260 = vmatpush1.msra.mxu0 0.0
        %2261 = vmatprep.subr.mxu0 0.0
        %2262 = vmatpush1.msra.mxu0 0.0
        %2263 = vmatprep.subr.mxu0 0.0
        %2264 = vmatpush1.msra.mxu0 0.0
        %2265 = vmatprep.subr.mxu0 0.0
        %2266 = vmatpush1.msra.mxu0 0.0
        %2267 = vmatprep.subr.mxu0 0.0
        %2268 = vmatpush1.msra.mxu0 0.0
        %2269 = vmatprep.subr.mxu0 0.0
        %2270 = vmatpush1.msra.mxu0 0.0
        %2271 = vmatprep.subr.mxu0 0.0
        %2272 = vmatpush1.msra.mxu0 0.0
        %2273 = vmatprep.subr.mxu0 0.0
        %2274 = vmatpush1.msra.mxu0 0.0
        %2275 = vmatprep.subr.mxu0 0.0
        %2276 = vmatpush1.msra.mxu0 0.0
        %2277 = vmatprep.subr.mxu0 0.0
        %2278 = vmatpush1.msra.mxu0 0.0
        %2279 = vmatprep.subr.mxu0 0.0
        %2280 = vmatpush1.msra.mxu0 0.0
        %2281 = vmatprep.subr.mxu0 0.0
        %2282 = vmatpush1.msra.mxu0 0.0
        %2283 = vmatprep.subr.mxu0 0.0
        %2284 = vmatpush1.msra.mxu0 0.0
        %2285 = vmatprep.subr.mxu0 0.0
        %2286 = vmatpush1.msra.mxu0 0.0
        %2287 = vmatprep.subr.mxu0 0.0
        %2288 = vmatpush1.msra.mxu0 0.0
        %2289 = vmatprep.subr.mxu0 0.0
        %2290 = vmatpush1.msra.mxu0 0.0
        %2291 = vmatprep.subr.mxu0 0.0
        %2292 = vmatpush1.msra.mxu0 0.0
        %2293 = vmatprep.subr.mxu0 0.0
        %2294 = vmatpush1.msra.mxu0 0.0
        %2295 = vmatprep.subr.mxu0 0.0
        %2296 = vmatpush1.msra.mxu0 0.0
        %2297 = vmatprep.mubr.f32.mxu0 0.0
        %2298 = vmatmul.mubr.f32.gmra.mrb[0].mxu0 %v2231
        %v2299 = vpop.f32.mrb[0].mxu0
        %v2300 = vadd.f32 0.0, %v2299
        %v2301 = vpop.f32.mrb[0].mxu0
        %2302 = vdwg.mxu0
        %v2304 = vsel %vm1645, %v1437, 0
        %2306 = vmatprep.subr.mxu0 0.0
        %2307 = vmatpush1.msra.mxu0 %v1004
        %2308 = vmatprep.subr.mxu0 0.0
        %2309 = vmatpush1.msra.mxu0 0.0
        %2310 = vmatprep.subr.mxu0 0.0
        %2311 = vmatpush1.msra.mxu0 0.0
        %2312 = vmatprep.subr.mxu0 0.0
        %2313 = vmatpush1.msra.mxu0 0.0
        %2314 = vmatprep.subr.mxu0 0.0
        %2315 = vmatpush1.msra.mxu0 0.0
        %2316 = vmatprep.subr.mxu0 0.0
        %2317 = vmatpush1.msra.mxu0 0.0
        %2318 = vmatprep.subr.mxu0 0.0
        %2319 = vmatpush1.msra.mxu0 0.0
        %2320 = vmatprep.subr.mxu0 0.0
        %2321 = vmatpush1.msra.mxu0 0.0
        %2322 = vmatprep.subr.mxu0 0.0
        %2323 = vmatpush1.msra.mxu0 0.0
        %2324 = vmatprep.subr.mxu0 0.0
        %2325 = vmatpush1.msra.mxu0 0.0
        %2326 = vmatprep.subr.mxu0 0.0
        %2327 = vmatpush1.msra.mxu0 0.0
        %2328 = vmatprep.subr.mxu0 0.0
        %2329 = vmatpush1.msra.mxu0 0.0
        %2330 = vmatprep.subr.mxu0 0.0
        %2331 = vmatpush1.msra.mxu0 0.0
        %2332 = vmatprep.subr.mxu0 0.0
        %2333 = vmatpush1.msra.mxu0 0.0
        %2334 = vmatprep.subr.mxu0 0.0
        %2335 = vmatpush1.msra.mxu0 0.0
        %2336 = vmatprep.subr.mxu0 0.0
        %2337 = vmatpush1.msra.mxu0 0.0
        %2338 = vmatprep.subr.mxu0 0.0
        %2339 = vmatpush1.msra.mxu0 0.0
        %2340 = vmatprep.subr.mxu0 0.0
        %2341 = vmatpush1.msra.mxu0 0.0
        %2342 = vmatprep.subr.mxu0 0.0
        %2343 = vmatpush1.msra.mxu0 0.0
        %2344 = vmatprep.subr.mxu0 0.0
        %2345 = vmatpush1.msra.mxu0 0.0
        %2346 = vmatprep.subr.mxu0 0.0
        %2347 = vmatpush1.msra.mxu0 0.0
        %2348 = vmatprep.subr.mxu0 0.0
        %2349 = vmatpush1.msra.mxu0 0.0
        %2350 = vmatprep.subr.mxu0 0.0
        %2351 = vmatpush1.msra.mxu0 0.0
        %2352 = vmatprep.subr.mxu0 0.0
        %2353 = vmatpush1.msra.mxu0 0.0
        %2354 = vmatprep.subr.mxu0 0.0
        %2355 = vmatpush1.msra.mxu0 0.0
        %2356 = vmatprep.subr.mxu0 0.0
        %2357 = vmatpush1.msra.mxu0 0.0
        %2358 = vmatprep.subr.mxu0 0.0
        %2359 = vmatpush1.msra.mxu0 0.0
        %2360 = vmatprep.subr.mxu0 0.0
        %2361 = vmatpush1.msra.mxu0 0.0
        %2362 = vmatprep.subr.mxu0 0.0
        %2363 = vmatpush1.msra.mxu0 0.0
        %2364 = vmatprep.subr.mxu0 0.0
        %2365 = vmatpush1.msra.mxu0 0.0
        %2366 = vmatprep.subr.mxu0 0.0
        %2367 = vmatpush1.msra.mxu0 0.0
        %2368 = vmatprep.subr.mxu0 0.0
        %2369 = vmatpush1.msra.mxu0 0.0
        %2370 = vmatprep.mubr.f32.mxu0 0.0
        %2371 = vmatmul.mubr.f32.gmra.mrb[0].mxu0 %v2304
        %v2372 = vpop.f32.mrb[0].mxu0
        %v2373 = vadd.f32 0.0, %v2372
        %v2374 = vpop.f32.mrb[0].mxu0
        %2375 = vdwg.mxu0
        %v2377 = vsel %vm1645, %v1469, 0
        %2379 = vmatprep.subr.mxu0 0.0
        %2380 = vmatpush1.msra.mxu0 %v1009
        %2381 = vmatprep.subr.mxu0 0.0
        %2382 = vmatpush1.msra.mxu0 0.0
        %2383 = vmatprep.subr.mxu0 0.0
        %2384 = vmatpush1.msra.mxu0 0.0
        %2385 = vmatprep.subr.mxu0 0.0
        %2386 = vmatpush1.msra.mxu0 0.0
        %2387 = vmatprep.subr.mxu0 0.0
        %2388 = vmatpush1.msra.mxu0 0.0
        %2389 = vmatprep.subr.mxu0 0.0
        %2390 = vmatpush1.msra.mxu0 0.0
        %2391 = vmatprep.subr.mxu0 0.0
        %2392 = vmatpush1.msra.mxu0 0.0
        %2393 = vmatprep.subr.mxu0 0.0
        %2394 = vmatpush1.msra.mxu0 0.0
        %2395 = vmatprep.subr.mxu0 0.0
        %2396 = vmatpush1.msra.mxu0 0.0
        %2397 = vmatprep.subr.mxu0 0.0
        %2398 = vmatpush1.msra.mxu0 0.0
        %2399 = vmatprep.subr.mxu0 0.0
        %2400 = vmatpush1.msra.mxu0 0.0
        %2401 = vmatprep.subr.mxu0 0.0
        %2402 = vmatpush1.msra.mxu0 0.0
        %2403 = vmatprep.subr.mxu0 0.0
        %2404 = vmatpush1.msra.mxu0 0.0
        %2405 = vmatprep.subr.mxu0 0.0
        %2406 = vmatpush1.msra.mxu0 0.0
        %2407 = vmatprep.subr.mxu0 0.0
        %2408 = vmatpush1.msra.mxu0 0.0
        %2409 = vmatprep.subr.mxu0 0.0
        %2410 = vmatpush1.msra.mxu0 0.0
        %2411 = vmatprep.subr.mxu0 0.0
        %2412 = vmatpush1.msra.mxu0 0.0
        %2413 = vmatprep.subr.mxu0 0.0
        %2414 = vmatpush1.msra.mxu0 0.0
        %2415 = vmatprep.subr.mxu0 0.0
        %2416 = vmatpush1.msra.mxu0 0.0
        %2417 = vmatprep.subr.mxu0 0.0
        %2418 = vmatpush1.msra.mxu0 0.0
        %2419 = vmatprep.subr.mxu0 0.0
        %2420 = vmatpush1.msra.mxu0 0.0
        %2421 = vmatprep.subr.mxu0 0.0
        %2422 = vmatpush1.msra.mxu0 0.0
        %2423 = vmatprep.subr.mxu0 0.0
        %2424 = vmatpush1.msra.mxu0 0.0
        %2425 = vmatprep.subr.mxu0 0.0
        %2426 = vmatpush1.msra.mxu0 0.0
        %2427 = vmatprep.subr.mxu0 0.0
        %2428 = vmatpush1.msra.mxu0 0.0
        %2429 = vmatprep.subr.mxu0 0.0
        %2430 = vmatpush1.msra.mxu0 0.0
        %2431 = vmatprep.subr.mxu0 0.0
        %2432 = vmatpush1.msra.mxu0 0.0
        %2433 = vmatprep.subr.mxu0 0.0
        %2434 = vmatpush1.msra.mxu0 0.0
        %2435 = vmatprep.subr.mxu0 0.0
        %2436 = vmatpush1.msra.mxu0 0.0
        %2437 = vmatprep.subr.mxu0 0.0
        %2438 = vmatpush1.msra.mxu0 0.0
        %2439 = vmatprep.subr.mxu0 0.0
        %2440 = vmatpush1.msra.mxu0 0.0
        %2441 = vmatprep.subr.mxu0 0.0
        %2442 = vmatpush1.msra.mxu0 0.0
        %2443 = vmatprep.mubr.f32.mxu0 0.0
        %2444 = vmatmul.mubr.f32.gmra.mrb[0].mxu0 %v2377
        %v2445 = vpop.f32.mrb[0].mxu0
        %v2446 = vadd.f32 0.0, %v2445
        %v2447 = vpop.f32.mrb[0].mxu0
        %2448 = vdwg.mxu0
        %v2450 = vsel %vm1645, %v1501, 0
        %2452 = vmatprep.subr.mxu0 0.0
        %2453 = vmatpush1.msra.mxu0 %v1014
        %2454 = vmatprep.subr.mxu0 0.0
        %2455 = vmatpush1.msra.mxu0 0.0
        %2456 = vmatprep.subr.mxu0 0.0
        %2457 = vmatpush1.msra.mxu0 0.0
        %2458 = vmatprep.subr.mxu0 0.0
        %2459 = vmatpush1.msra.mxu0 0.0
        %2460 = vmatprep.subr.mxu0 0.0
        %2461 = vmatpush1.msra.mxu0 0.0
        %2462 = vmatprep.subr.mxu0 0.0
        %2463 = vmatpush1.msra.mxu0 0.0
        %2464 = vmatprep.subr.mxu0 0.0
        %2465 = vmatpush1.msra.mxu0 0.0
        %2466 = vmatprep.subr.mxu0 0.0
        %2467 = vmatpush1.msra.mxu0 0.0
        %2468 = vmatprep.subr.mxu0 0.0
        %2469 = vmatpush1.msra.mxu0 0.0
        %2470 = vmatprep.subr.mxu0 0.0
        %2471 = vmatpush1.msra.mxu0 0.0
        %2472 = vmatprep.subr.mxu0 0.0
        %2473 = vmatpush1.msra.mxu0 0.0
        %2474 = vmatprep.subr.mxu0 0.0
        %2475 = vmatpush1.msra.mxu0 0.0
        %2476 = vmatprep.subr.mxu0 0.0
        %2477 = vmatpush1.msra.mxu0 0.0
        %2478 = vmatprep.subr.mxu0 0.0
        %2479 = vmatpush1.msra.mxu0 0.0
        %2480 = vmatprep.subr.mxu0 0.0
        %2481 = vmatpush1.msra.mxu0 0.0
        %2482 = vmatprep.subr.mxu0 0.0
        %2483 = vmatpush1.msra.mxu0 0.0
        %2484 = vmatprep.subr.mxu0 0.0
        %2485 = vmatpush1.msra.mxu0 0.0
        %2486 = vmatprep.subr.mxu0 0.0
        %2487 = vmatpush1.msra.mxu0 0.0
        %2488 = vmatprep.subr.mxu0 0.0
        %2489 = vmatpush1.msra.mxu0 0.0
        %2490 = vmatprep.subr.mxu0 0.0
        %2491 = vmatpush1.msra.mxu0 0.0
        %2492 = vmatprep.subr.mxu0 0.0
        %2493 = vmatpush1.msra.mxu0 0.0
        %2494 = vmatprep.subr.mxu0 0.0
        %2495 = vmatpush1.msra.mxu0 0.0
        %2496 = vmatprep.subr.mxu0 0.0
        %2497 = vmatpush1.msra.mxu0 0.0
        %2498 = vmatprep.subr.mxu0 0.0
        %2499 = vmatpush1.msra.mxu0 0.0
        %2500 = vmatprep.subr.mxu0 0.0
        %2501 = vmatpush1.msra.mxu0 0.0
        %2502 = vmatprep.subr.mxu0 0.0
        %2503 = vmatpush1.msra.mxu0 0.0
        %2504 = vmatprep.subr.mxu0 0.0
        %2505 = vmatpush1.msra.mxu0 0.0
        %2506 = vmatprep.subr.mxu0 0.0
        %2507 = vmatpush1.msra.mxu0 0.0
        %2508 = vmatprep.subr.mxu0 0.0
        %2509 = vmatpush1.msra.mxu0 0.0
        %2510 = vmatprep.subr.mxu0 0.0
        %2511 = vmatpush1.msra.mxu0 0.0
        %2512 = vmatprep.subr.mxu0 0.0
        %2513 = vmatpush1.msra.mxu0 0.0
        %2514 = vmatprep.subr.mxu0 0.0
        %2515 = vmatpush1.msra.mxu0 0.0
        %2516 = vmatprep.mubr.f32.mxu0 0.0
        %2517 = vmatmul.mubr.f32.gmra.mrb[0].mxu0 %v2450
        %v2518 = vpop.f32.mrb[0].mxu0
        %v2519 = vadd.f32 0.0, %v2518
        %v2520 = vpop.f32.mrb[0].mxu0
        %2521 = vdwg.mxu0
        %v2523 = vsel %vm1645, %v1533, 0
        %2525 = vmatprep.subr.mxu0 0.0
        %2526 = vmatpush1.msra.mxu0 %v1019
        %2527 = vmatprep.subr.mxu0 0.0
        %2528 = vmatpush1.msra.mxu0 0.0
        %2529 = vmatprep.subr.mxu0 0.0
        %2530 = vmatpush1.msra.mxu0 0.0
        %2531 = vmatprep.subr.mxu0 0.0
        %2532 = vmatpush1.msra.mxu0 0.0
        %2533 = vmatprep.subr.mxu0 0.0
        %2534 = vmatpush1.msra.mxu0 0.0
        %2535 = vmatprep.subr.mxu0 0.0
        %2536 = vmatpush1.msra.mxu0 0.0
        %2537 = vmatprep.subr.mxu0 0.0
        %2538 = vmatpush1.msra.mxu0 0.0
        %2539 = vmatprep.subr.mxu0 0.0
        %2540 = vmatpush1.msra.mxu0 0.0
        %2541 = vmatprep.subr.mxu0 0.0
        %2542 = vmatpush1.msra.mxu0 0.0
        %2543 = vmatprep.subr.mxu0 0.0
        %2544 = vmatpush1.msra.mxu0 0.0
        %2545 = vmatprep.subr.mxu0 0.0
        %2546 = vmatpush1.msra.mxu0 0.0
        %2547 = vmatprep.subr.mxu0 0.0
        %2548 = vmatpush1.msra.mxu0 0.0
        %2549 = vmatprep.subr.mxu0 0.0
        %2550 = vmatpush1.msra.mxu0 0.0
        %2551 = vmatprep.subr.mxu0 0.0
        %2552 = vmatpush1.msra.mxu0 0.0
        %2553 = vmatprep.subr.mxu0 0.0
        %2554 = vmatpush1.msra.mxu0 0.0
        %2555 = vmatprep.subr.mxu0 0.0
        %2556 = vmatpush1.msra.mxu0 0.0
        %2557 = vmatprep.subr.mxu0 0.0
        %2558 = vmatpush1.msra.mxu0 0.0
        %2559 = vmatprep.subr.mxu0 0.0
        %2560 = vmatpush1.msra.mxu0 0.0
        %2561 = vmatprep.subr.mxu0 0.0
        %2562 = vmatpush1.msra.mxu0 0.0
        %2563 = vmatprep.subr.mxu0 0.0
        %2564 = vmatpush1.msra.mxu0 0.0
        %2565 = vmatprep.subr.mxu0 0.0
        %2566 = vmatpush1.msra.mxu0 0.0
        %2567 = vmatprep.subr.mxu0 0.0
        %2568 = vmatpush1.msra.mxu0 0.0
        %2569 = vmatprep.subr.mxu0 0.0
        %2570 = vmatpush1.msra.mxu0 0.0
        %2571 = vmatprep.subr.mxu0 0.0
        %2572 = vmatpush1.msra.mxu0 0.0
        %2573 = vmatprep.subr.mxu0 0.0
        %2574 = vmatpush1.msra.mxu0 0.0
        %2575 = vmatprep.subr.mxu0 0.0
        %2576 = vmatpush1.msra.mxu0 0.0
        %2577 = vmatprep.subr.mxu0 0.0
        %2578 = vmatpush1.msra.mxu0 0.0
        %2579 = vmatprep.subr.mxu0 0.0
        %2580 = vmatpush1.msra.mxu0 0.0
        %2581 = vmatprep.subr.mxu0 0.0
        %2582 = vmatpush1.msra.mxu0 0.0
        %2583 = vmatprep.subr.mxu0 0.0
        %2584 = vmatpush1.msra.mxu0 0.0
        %2585 = vmatprep.subr.mxu0 0.0
        %2586 = vmatpush1.msra.mxu0 0.0
        %2587 = vmatprep.subr.mxu0 0.0
        %2588 = vmatpush1.msra.mxu0 0.0
        %2589 = vmatprep.mubr.f32.mxu0 0.0
        %2590 = vmatmul.mubr.f32.gmra.mrb[0].mxu0 %v2523
        %v2591 = vpop.f32.mrb[0].mxu0
        %v2592 = vadd.f32 0.0, %v2591
        %v2593 = vpop.f32.mrb[0].mxu0
        %2594 = vdwg.mxu0
        %v2596 = vsel %vm1645, %v1565, 0
        %2598 = vmatprep.subr.mxu0 0.0
        %2599 = vmatpush1.msra.mxu0 %v1024
        %2600 = vmatprep.subr.mxu0 0.0
        %2601 = vmatpush1.msra.mxu0 0.0
        %2602 = vmatprep.subr.mxu0 0.0
        %2603 = vmatpush1.msra.mxu0 0.0
        %2604 = vmatprep.subr.mxu0 0.0
        %2605 = vmatpush1.msra.mxu0 0.0
        %2606 = vmatprep.subr.mxu0 0.0
        %2607 = vmatpush1.msra.mxu0 0.0
        %2608 = vmatprep.subr.mxu0 0.0
        %2609 = vmatpush1.msra.mxu0 0.0
        %2610 = vmatprep.subr.mxu0 0.0
        %2611 = vmatpush1.msra.mxu0 0.0
        %2612 = vmatprep.subr.mxu0 0.0
        %2613 = vmatpush1.msra.mxu0 0.0
        %2614 = vmatprep.subr.mxu0 0.0
        %2615 = vmatpush1.msra.mxu0 0.0
        %2616 = vmatprep.subr.mxu0 0.0
        %2617 = vmatpush1.msra.mxu0 0.0
        %2618 = vmatprep.subr.mxu0 0.0
        %2619 = vmatpush1.msra.mxu0 0.0
        %2620 = vmatprep.subr.mxu0 0.0
        %2621 = vmatpush1.msra.mxu0 0.0
        %2622 = vmatprep.subr.mxu0 0.0
        %2623 = vmatpush1.msra.mxu0 0.0
        %2624 = vmatprep.subr.mxu0 0.0
        %2625 = vmatpush1.msra.mxu0 0.0
        %2626 = vmatprep.subr.mxu0 0.0
        %2627 = vmatpush1.msra.mxu0 0.0
        %2628 = vmatprep.subr.mxu0 0.0
        %2629 = vmatpush1.msra.mxu0 0.0
        %2630 = vmatprep.subr.mxu0 0.0
        %2631 = vmatpush1.msra.mxu0 0.0
        %2632 = vmatprep.subr.mxu0 0.0
        %2633 = vmatpush1.msra.mxu0 0.0
        %2634 = vmatprep.subr.mxu0 0.0
        %2635 = vmatpush1.msra.mxu0 0.0
        %2636 = vmatprep.subr.mxu0 0.0
        %2637 = vmatpush1.msra.mxu0 0.0
        %2638 = vmatprep.subr.mxu0 0.0
        %2639 = vmatpush1.msra.mxu0 0.0
        %2640 = vmatprep.subr.mxu0 0.0
        %2641 = vmatpush1.msra.mxu0 0.0
        %2642 = vmatprep.subr.mxu0 0.0
        %2643 = vmatpush1.msra.mxu0 0.0
        %2644 = vmatprep.subr.mxu0 0.0
        %2645 = vmatpush1.msra.mxu0 0.0
        %2646 = vmatprep.subr.mxu0 0.0
        %2647 = vmatpush1.msra.mxu0 0.0
        %2648 = vmatprep.subr.mxu0 0.0
        %2649 = vmatpush1.msra.mxu0 0.0
        %2650 = vmatprep.subr.mxu0 0.0
        %2651 = vmatpush1.msra.mxu0 0.0
        %2652 = vmatprep.subr.mxu0 0.0
        %2653 = vmatpush1.msra.mxu0 0.0
        %2654 = vmatprep.subr.mxu0 0.0
        %2655 = vmatpush1.msra.mxu0 0.0
        %2656 = vmatprep.subr.mxu0 0.0
        %2657 = vmatpush1.msra.mxu0 0.0
        %2658 = vmatprep.subr.mxu0 0.0
        %2659 = vmatpush1.msra.mxu0 0.0
        %2660 = vmatprep.subr.mxu0 0.0
        %2661 = vmatpush1.msra.mxu0 0.0
        %2662 = vmatprep.mubr.f32.mxu0 0.0
        %2663 = vmatmul.mubr.f32.gmra.mrb[0].mxu0 %v2596
        %v2664 = vpop.f32.mrb[0].mxu0
        %v2665 = vadd.f32 0.0, %v2664
        %v2666 = vpop.f32.mrb[0].mxu0
        %2667 = vdwg.mxu0
        %v2669 = vsel %vm1645, %v1597, 0
        %2671 = vmatprep.subr.mxu0 0.0
        %2672 = vmatpush1.msra.mxu0 %v1029
        %2673 = vmatprep.subr.mxu0 0.0
        %2674 = vmatpush1.msra.mxu0 0.0
        %2675 = vmatprep.subr.mxu0 0.0
        %2676 = vmatpush1.msra.mxu0 0.0
        %2677 = vmatprep.subr.mxu0 0.0
        %2678 = vmatpush1.msra.mxu0 0.0
        %2679 = vmatprep.subr.mxu0 0.0
        %2680 = vmatpush1.msra.mxu0 0.0
        %2681 = vmatprep.subr.mxu0 0.0
        %2682 = vmatpush1.msra.mxu0 0.0
        %2683 = vmatprep.subr.mxu0 0.0
        %2684 = vmatpush1.msra.mxu0 0.0
        %2685 = vmatprep.subr.mxu0 0.0
        %2686 = vmatpush1.msra.mxu0 0.0
        %2687 = vmatprep.subr.mxu0 0.0
        %2688 = vmatpush1.msra.mxu0 0.0
        %2689 = vmatprep.subr.mxu0 0.0
        %2690 = vmatpush1.msra.mxu0 0.0
        %2691 = vmatprep.subr.mxu0 0.0
        %2692 = vmatpush1.msra.mxu0 0.0
        %2693 = vmatprep.subr.mxu0 0.0
        %2694 = vmatpush1.msra.mxu0 0.0
        %2695 = vmatprep.subr.mxu0 0.0
        %2696 = vmatpush1.msra.mxu0 0.0
        %2697 = vmatprep.subr.mxu0 0.0
        %2698 = vmatpush1.msra.mxu0 0.0
        %2699 = vmatprep.subr.mxu0 0.0
        %2700 = vmatpush1.msra.mxu0 0.0
        %2701 = vmatprep.subr.mxu0 0.0
        %2702 = vmatpush1.msra.mxu0 0.0
        %2703 = vmatprep.subr.mxu0 0.0
        %2704 = vmatpush1.msra.mxu0 0.0
        %2705 = vmatprep.subr.mxu0 0.0
        %2706 = vmatpush1.msra.mxu0 0.0
        %2707 = vmatprep.subr.mxu0 0.0
        %2708 = vmatpush1.msra.mxu0 0.0
        %2709 = vmatprep.subr.mxu0 0.0
        %2710 = vmatpush1.msra.mxu0 0.0
        %2711 = vmatprep.subr.mxu0 0.0
        %2712 = vmatpush1.msra.mxu0 0.0
        %2713 = vmatprep.subr.mxu0 0.0
        %2714 = vmatpush1.msra.mxu0 0.0
        %2715 = vmatprep.subr.mxu0 0.0
        %2716 = vmatpush1.msra.mxu0 0.0
        %2717 = vmatprep.subr.mxu0 0.0
        %2718 = vmatpush1.msra.mxu0 0.0
        %2719 = vmatprep.subr.mxu0 0.0
        %2720 = vmatpush1.msra.mxu0 0.0
        %2721 = vmatprep.subr.mxu0 0.0
        %2722 = vmatpush1.msra.mxu0 0.0
        %2723 = vmatprep.subr.mxu0 0.0
        %2724 = vmatpush1.msra.mxu0 0.0
        %2725 = vmatprep.subr.mxu0 0.0
        %2726 = vmatpush1.msra.mxu0 0.0
        %2727 = vmatprep.subr.mxu0 0.0
        %2728 = vmatpush1.msra.mxu0 0.0
        %2729 = vmatprep.subr.mxu0 0.0
        %2730 = vmatpush1.msra.mxu0 0.0
        %2731 = vmatprep.subr.mxu0 0.0
        %2732 = vmatpush1.msra.mxu0 0.0
        %2733 = vmatprep.subr.mxu0 0.0
        %2734 = vmatpush1.msra.mxu0 0.0
        %2735 = vmatprep.mubr.f32.mxu0 0.0
        %2736 = vmatmul.mubr.f32.gmra.mrb[0].mxu0 %v2669
        %v2737 = vpop.f32.mrb[0].mxu0
        %v2738 = vadd.f32 0.0, %v2737
        %v2739 = vpop.f32.mrb[0].mxu0
        %2740 = vdwg.mxu0
        %v2742 = vsel %vm1645, %v1629, 0
        %2744 = vmatprep.subr.mxu0 0.0
        %2745 = vmatpush1.msra.mxu0 %v1034
        %2746 = vmatprep.subr.mxu0 0.0
        %2747 = vmatpush1.msra.mxu0 0.0
        %2748 = vmatprep.subr.mxu0 0.0
        %2749 = vmatpush1.msra.mxu0 0.0
        %2750 = vmatprep.subr.mxu0 0.0
        %2751 = vmatpush1.msra.mxu0 0.0
        %2752 = vmatprep.subr.mxu0 0.0
        %2753 = vmatpush1.msra.mxu0 0.0
        %2754 = vmatprep.subr.mxu0 0.0
        %2755 = vmatpush1.msra.mxu0 0.0
        %2756 = vmatprep.subr.mxu0 0.0
        %2757 = vmatpush1.msra.mxu0 0.0
        %2758 = vmatprep.subr.mxu0 0.0
        %2759 = vmatpush1.msra.mxu0 0.0
        %2760 = vmatprep.subr.mxu0 0.0
        %2761 = vmatpush1.msra.mxu0 0.0
        %2762 = vmatprep.subr.mxu0 0.0
        %2763 = vmatpush1.msra.mxu0 0.0
        %2764 = vmatprep.subr.mxu0 0.0
        %2765 = vmatpush1.msra.mxu0 0.0
        %2766 = vmatprep.subr.mxu0 0.0
        %2767 = vmatpush1.msra.mxu0 0.0
        %2768 = vmatprep.subr.mxu0 0.0
        %2769 = vmatpush1.msra.mxu0 0.0
        %2770 = vmatprep.subr.mxu0 0.0
        %2771 = vmatpush1.msra.mxu0 0.0
        %2772 = vmatprep.subr.mxu0 0.0
        %2773 = vmatpush1.msra.mxu0 0.0
        %2774 = vmatprep.subr.mxu0 0.0
        %2775 = vmatpush1.msra.mxu0 0.0
        %2776 = vmatprep.subr.mxu0 0.0
        %2777 = vmatpush1.msra.mxu0 0.0
        %2778 = vmatprep.subr.mxu0 0.0
        %2779 = vmatpush1.msra.mxu0 0.0
        %2780 = vmatprep.subr.mxu0 0.0
        %2781 = vmatpush1.msra.mxu0 0.0
        %2782 = vmatprep.subr.mxu0 0.0
        %2783 = vmatpush1.msra.mxu0 0.0
        %2784 = vmatprep.subr.mxu0 0.0
        %2785 = vmatpush1.msra.mxu0 0.0
        %2786 = vmatprep.subr.mxu0 0.0
        %2787 = vmatpush1.msra.mxu0 0.0
        %2788 = vmatprep.subr.mxu0 0.0
        %2789 = vmatpush1.msra.mxu0 0.0
        %2790 = vmatprep.subr.mxu0 0.0
        %2791 = vmatpush1.msra.mxu0 0.0
        %2792 = vmatprep.subr.mxu0 0.0
        %2793 = vmatpush1.msra.mxu0 0.0
        %2794 = vmatprep.subr.mxu0 0.0
        %2795 = vmatpush1.msra.mxu0 0.0
        %2796 = vmatprep.subr.mxu0 0.0
        %2797 = vmatpush1.msra.mxu0 0.0
        %2798 = vmatprep.subr.mxu0 0.0
        %2799 = vmatpush1.msra.mxu0 0.0
        %2800 = vmatprep.subr.mxu0 0.0
        %2801 = vmatpush1.msra.mxu0 0.0
        %2802 = vmatprep.subr.mxu0 0.0
        %2803 = vmatpush1.msra.mxu0 0.0
        %2804 = vmatprep.subr.mxu0 0.0
        %2805 = vmatpush1.msra.mxu0 0.0
        %2806 = vmatprep.subr.mxu0 0.0
        %2807 = vmatpush1.msra.mxu0 0.0
        %2808 = vmatprep.mubr.f32.mxu0 0.0
        %2809 = vmatmul.mubr.f32.gmra.mrb[0].mxu0 %v2742
        %v2810 = vpop.f32.mrb[0].mxu0
        %v2811 = vadd.f32 0.0, %v2810
        %v2812 = vpop.f32.mrb[0].mxu0
        %2813 = vdwg.mxu0
        %vm2814 = vcmask 130048
        %v2815 = vsel %vm2814, %v1716, -inf
        %2816 = vmax.xlane.f32.xlu0 %v2815
        %v2817 = vpop.xlane.xlu0 %2816
        %v2818 = vsel %vm2814, %v1789, -inf
        %2819 = vmax.xlane.f32.xlu0 %v2818
        %v2820 = vpop.xlane.xlu0 %2819
        %v2821 = vsel %vm2814, %v1862, -inf
        %2822 = vmax.xlane.f32.xlu0 %v2821
        %v2823 = vpop.xlane.xlu0 %2822
        %v2824 = vsel %vm2814, %v1935, -inf
        %2825 = vmax.xlane.f32.xlu0 %v2824
        %v2826 = vpop.xlane.xlu0 %2825
        %v2827 = vsel %vm2814, %v2008, -inf
        %2828 = vmax.xlane.f32.xlu0 %v2827
        %v2829 = vpop.xlane.xlu0 %2828
        %v2830 = vsel %vm2814, %v2081, -inf
        %2831 = vmax.xlane.f32.xlu0 %v2830
        %v2832 = vpop.xlane.xlu0 %2831
        %v2833 = vsel %vm2814, %v2154, -inf
        %2834 = vmax.xlane.f32.xlu0 %v2833
        %v2835 = vpop.xlane.xlu0 %2834
        %v2836 = vsel %vm2814, %v2227, -inf
        %2837 = vmax.xlane.f32.xlu0 %v2836
        %v2838 = vpop.xlane.xlu0 %2837
        %v2839 = vsel %vm2814, %v2300, -inf
        %2840 = vmax.xlane.f32.xlu0 %v2839
        %v2841 = vpop.xlane.xlu0 %2840
        %v2842 = vsel %vm2814, %v2373, -inf
        %2843 = vmax.xlane.f32.xlu0 %v2842
        %v2844 = vpop.xlane.xlu0 %2843
        %v2845 = vsel %vm2814, %v2446, -inf
        %2846 = vmax.xlane.f32.xlu0 %v2845
        %v2847 = vpop.xlane.xlu0 %2846
        %v2848 = vsel %vm2814, %v2519, -inf
        %2849 = vmax.xlane.f32.xlu0 %v2848
        %v2850 = vpop.xlane.xlu0 %2849
        %v2851 = vsel %vm2814, %v2592, -inf
        %2852 = vmax.xlane.f32.xlu0 %v2851
        %v2853 = vpop.xlane.xlu0 %2852
        %v2854 = vsel %vm2814, %v2665, -inf
        %2855 = vmax.xlane.f32.xlu0 %v2854
        %v2856 = vpop.xlane.xlu0 %2855
        %v2857 = vsel %vm2814, %v2738, -inf
        %2858 = vmax.xlane.f32.xlu0 %v2857
        %v2859 = vpop.xlane.xlu0 %2858
        %v2860 = vsel %vm2814, %v2811, -inf
        %2861 = vmax.xlane.f32.xlu0 %v2860
        %v2862 = vpop.xlane.xlu0 %2861
        %v2863 = vsub.f32 %v1716, %v2817
        %v2864 = vsub.f32 %v1789, %v2820
        %v2865 = vsub.f32 %v1862, %v2823
        %v2866 = vsub.f32 %v1935, %v2826
        %v2867 = vsub.f32 %v2008, %v2829
        %v2868 = vsub.f32 %v2081, %v2832
        %v2869 = vsub.f32 %v2154, %v2835
        %v2870 = vsub.f32 %v2227, %v2838
        %v2871 = vsub.f32 %v2300, %v2841
        %v2872 = vsub.f32 %v2373, %v2844
        %v2873 = vsub.f32 %v2446, %v2847
        %v2874 = vsub.f32 %v2519, %v2850
        %v2875 = vsub.f32 %v2592, %v2853
        %v2876 = vsub.f32 %v2665, %v2856
        %v2877 = vsub.f32 %v2738, %v2859
        %v2878 = vsub.f32 %v2811, %v2862
        %v2879 = vmul.f32 %v2863, 1.442695
        %v2880 = vpow.pop %v2879
        %v2881 = vmul.f32 %v2864, 1.442695
        %v2882 = vpow.pop %v2881
        %v2883 = vmul.f32 %v2865, 1.442695
        %v2884 = vpow.pop %v2883
        %v2885 = vmul.f32 %v2866, 1.442695
        %v2886 = vpow.pop %v2885
        %v2887 = vmul.f32 %v2867, 1.442695
        %v2888 = vpow.pop %v2887
        %v2889 = vmul.f32 %v2868, 1.442695
        %v2890 = vpow.pop %v2889
        %v2891 = vmul.f32 %v2869, 1.442695
        %v2892 = vpow.pop %v2891
        %v2893 = vmul.f32 %v2870, 1.442695
        %v2894 = vpow.pop %v2893
        %v2895 = vmul.f32 %v2871, 1.442695
        %v2896 = vpow.pop %v2895
        %v2897 = vmul.f32 %v2872, 1.442695
        %v2898 = vpow.pop %v2897
        %v2899 = vmul.f32 %v2873, 1.442695
        %v2900 = vpow.pop %v2899
        %v2901 = vmul.f32 %v2874, 1.442695
        %v2902 = vpow.pop %v2901
        %v2903 = vmul.f32 %v2875, 1.442695
        %v2904 = vpow.pop %v2903
        %v2905 = vmul.f32 %v2876, 1.442695
        %v2906 = vpow.pop %v2905
        %v2907 = vmul.f32 %v2877, 1.442695
        %v2908 = vpow.pop %v2907
        %v2909 = vmul.f32 %v2878, 1.442695
        %v2910 = vpow.pop %v2909
        %v2911 = vsel %vm2814, %v2880, 0.0
        %2912 = vadd.xlane.f32.xlu0 %v2911
        %v2913 = vpop.xlane.xlu0 %2912
        %v2914 = vsel %vm2814, %v2882, 0.0
        %2915 = vadd.xlane.f32.xlu0 %v2914
        %v2916 = vpop.xlane.xlu0 %2915
        %v2917 = vsel %vm2814, %v2884, 0.0
        %2918 = vadd.xlane.f32.xlu0 %v2917
        %v2919 = vpop.xlane.xlu0 %2918
        %v2920 = vsel %vm2814, %v2886, 0.0
        %2921 = vadd.xlane.f32.xlu0 %v2920
        %v2922 = vpop.xlane.xlu0 %2921
        %v2923 = vsel %vm2814, %v2888, 0.0
        %2924 = vadd.xlane.f32.xlu0 %v2923
        %v2925 = vpop.xlane.xlu0 %2924
        %v2926 = vsel %vm2814, %v2890, 0.0
        %2927 = vadd.xlane.f32.xlu0 %v2926
        %v2928 = vpop.xlane.xlu0 %2927
        %v2929 = vsel %vm2814, %v2892, 0.0
        %2930 = vadd.xlane.f32.xlu0 %v2929
        %v2931 = vpop.xlane.xlu0 %2930
        %v2932 = vsel %vm2814, %v2894, 0.0
        %2933 = vadd.xlane.f32.xlu0 %v2932
        %v2934 = vpop.xlane.xlu0 %2933
        %v2935 = vsel %vm2814, %v2896, 0.0
        %2936 = vadd.xlane.f32.xlu0 %v2935
        %v2937 = vpop.xlane.xlu0 %2936
        %v2938 = vsel %vm2814, %v2898, 0.0
        %2939 = vadd.xlane.f32.xlu0 %v2938
        %v2940 = vpop.xlane.xlu0 %2939
        %v2941 = vsel %vm2814, %v2900, 0.0
        %2942 = vadd.xlane.f32.xlu0 %v2941
        %v2943 = vpop.xlane.xlu0 %2942
        %v2944 = vsel %vm2814, %v2902, 0.0
        %2945 = vadd.xlane.f32.xlu0 %v2944
        %v2946 = vpop.xlane.xlu0 %2945
        %v2947 = vsel %vm2814, %v2904, 0.0
        %2948 = vadd.xlane.f32.xlu0 %v2947
        %v2949 = vpop.xlane.xlu0 %2948
        %v2950 = vsel %vm2814, %v2906, 0.0
        %2951 = vadd.xlane.f32.xlu0 %v2950
        %v2952 = vpop.xlane.xlu0 %2951
        %v2953 = vsel %vm2814, %v2908, 0.0
        %2954 = vadd.xlane.f32.xlu0 %v2953
        %v2955 = vpop.xlane.xlu0 %2954
        %v2956 = vsel %vm2814, %v2910, 0.0
        %2957 = vadd.xlane.f32.xlu0 %v2956
        %v2958 = vpop.xlane.xlu0 %2957
        %v2959 = vrcp.pop %v2913
        %v2960 = vrcp.pop %v2916
        %v2961 = vrcp.pop %v2919
        %v2962 = vrcp.pop %v2922
        %v2963 = vrcp.pop %v2925
        %v2964 = vrcp.pop %v2928
        %v2965 = vrcp.pop %v2931
        %v2966 = vrcp.pop %v2934
        %v2967 = vrcp.pop %v2937
        %v2968 = vrcp.pop %v2940
        %v2969 = vrcp.pop %v2943
        %v2970 = vrcp.pop %v2946
        %v2971 = vrcp.pop %v2949
        %v2972 = vrcp.pop %v2952
        %v2973 = vrcp.pop %v2955
        %v2974 = vrcp.pop %v2958
        %v2975 = vmul.f32 %v2880, %v2959
        %v2976 = vmul.f32 %v2882, %v2960
        %v2977 = vmul.f32 %v2884, %v2961
        %v2978 = vmul.f32 %v2886, %v2962
        %v2979 = vmul.f32 %v2888, %v2963
        %v2980 = vmul.f32 %v2890, %v2964
        %v2981 = vmul.f32 %v2892, %v2965
        %v2982 = vmul.f32 %v2894, %v2966
        %v2983 = vmul.f32 %v2896, %v2967
        %v2984 = vmul.f32 %v2898, %v2968
        %v2985 = vmul.f32 %v2900, %v2969
        %v2986 = vmul.f32 %v2902, %v2970
        %v2987 = vmul.f32 %v2904, %v2971
        %v2988 = vmul.f32 %v2906, %v2972
        %v2989 = vmul.f32 %v2908, %v2973
        %v2990 = vmul.f32 %v2910, %v2974
        %v2992 = vsel %vm2814, %v1039, 0
        %v2995 = vsel %vm2814, %v2975, 0
        %2997 = vmatprep.subr.mxu0 0.0
        %2998 = vmatpush1.xpose.msra.mxu0 %v2995
        %2999 = vmatprep.subr.mxu0 0.0
        %3000 = vmatpush1.xpose.msra.mxu0 0.0
        %3001 = vmatprep.subr.mxu0 0.0
        %3002 = vmatpush1.xpose.msra.mxu0 0.0
        %3003 = vmatprep.subr.mxu0 0.0
        %3004 = vmatpush1.xpose.msra.mxu0 0.0
        %3005 = vmatprep.subr.mxu0 0.0
        %3006 = vmatpush1.xpose.msra.mxu0 0.0
        %3007 = vmatprep.subr.mxu0 0.0
        %3008 = vmatpush1.xpose.msra.mxu0 0.0
        %3009 = vmatprep.subr.mxu0 0.0
        %3010 = vmatpush1.xpose.msra.mxu0 0.0
        %3011 = vmatprep.subr.mxu0 0.0
        %3012 = vmatpush1.xpose.msra.mxu0 0.0
        %3013 = vmatprep.subr.mxu0 0.0
        %3014 = vmatpush1.xpose.msra.mxu0 0.0
        %3015 = vmatprep.subr.mxu0 0.0
        %3016 = vmatpush1.xpose.msra.mxu0 0.0
        %3017 = vmatprep.subr.mxu0 0.0
        %3018 = vmatpush1.xpose.msra.mxu0 0.0
        %3019 = vmatprep.subr.mxu0 0.0
        %3020 = vmatpush1.xpose.msra.mxu0 0.0
        %3021 = vmatprep.subr.mxu0 0.0
        %3022 = vmatpush1.xpose.msra.mxu0 0.0
        %3023 = vmatprep.subr.mxu0 0.0
        %3024 = vmatpush1.xpose.msra.mxu0 0.0
        %3025 = vmatprep.subr.mxu0 0.0
        %3026 = vmatpush1.xpose.msra.mxu0 0.0
        %3027 = vmatprep.subr.mxu0 0.0
        %3028 = vmatpush1.xpose.msra.mxu0 0.0
        %3029 = vmatprep.subr.mxu0 0.0
        %3030 = vmatpush1.xpose.msra.mxu0 0.0
        %3031 = vmatprep.subr.mxu0 0.0
        %3032 = vmatpush1.xpose.msra.mxu0 0.0
        %3033 = vmatprep.subr.mxu0 0.0
        %3034 = vmatpush1.xpose.msra.mxu0 0.0
        %3035 = vmatprep.subr.mxu0 0.0
        %3036 = vmatpush1.xpose.msra.mxu0 0.0
        %3037 = vmatprep.subr.mxu0 0.0
        %3038 = vmatpush1.xpose.msra.mxu0 0.0
        %3039 = vmatprep.subr.mxu0 0.0
        %3040 = vmatpush1.xpose.msra.mxu0 0.0
        %3041 = vmatprep.subr.mxu0 0.0
        %3042 = vmatpush1.xpose.msra.mxu0 0.0
        %3043 = vmatprep.subr.mxu0 0.0
        %3044 = vmatpush1.xpose.msra.mxu0 0.0
        %3045 = vmatprep.subr.mxu0 0.0
        %3046 = vmatpush1.xpose.msra.mxu0 0.0
        %3047 = vmatprep.subr.mxu0 0.0
        %3048 = vmatpush1.xpose.msra.mxu0 0.0
        %3049 = vmatprep.subr.mxu0 0.0
        %3050 = vmatpush1.xpose.msra.mxu0 0.0
        %3051 = vmatprep.subr.mxu0 0.0
        %3052 = vmatpush1.xpose.msra.mxu0 0.0
        %3053 = vmatprep.subr.mxu0 0.0
        %3054 = vmatpush1.xpose.msra.mxu0 0.0
        %3055 = vmatprep.subr.mxu0 0.0
        %3056 = vmatpush1.xpose.msra.mxu0 0.0
        %3057 = vmatprep.subr.mxu0 0.0
        %3058 = vmatpush1.xpose.msra.mxu0 0.0
        %3059 = vmatprep.subr.mxu0 0.0
        %3060 = vmatpush1.xpose.msra.mxu0 0.0
        %3061 = vmatprep.mubr.f32.mxu0 0.0
        %3062 = vmatmul.mubr.f32.gmra.mrb[0].mxu0 %v2992
        %v3063 = vpop.f32.mrb[0].mxu0
        %v3064 = vadd.f32 0.0, %v3063
        %v3065 = vpop.f32.mrb[0].mxu0
        %3066 = vdwg.mxu0
        %v3068 = vsel %vm2814, %v1044, 0
        %v3071 = vsel %vm2814, %v2976, 0
        %3073 = vmatprep.subr.mxu0 0.0
        %3074 = vmatpush1.xpose.msra.mxu0 %v3071
        %3075 = vmatprep.subr.mxu0 0.0
        %3076 = vmatpush1.xpose.msra.mxu0 0.0
        %3077 = vmatprep.subr.mxu0 0.0
        %3078 = vmatpush1.xpose.msra.mxu0 0.0
        %3079 = vmatprep.subr.mxu0 0.0
        %3080 = vmatpush1.xpose.msra.mxu0 0.0
        %3081 = vmatprep.subr.mxu0 0.0
        %3082 = vmatpush1.xpose.msra.mxu0 0.0
        %3083 = vmatprep.subr.mxu0 0.0
        %3084 = vmatpush1.xpose.msra.mxu0 0.0
        %3085 = vmatprep.subr.mxu0 0.0
        %3086 = vmatpush1.xpose.msra.mxu0 0.0
        %3087 = vmatprep.subr.mxu0 0.0
        %3088 = vmatpush1.xpose.msra.mxu0 0.0
        %3089 = vmatprep.subr.mxu0 0.0
        %3090 = vmatpush1.xpose.msra.mxu0 0.0
        %3091 = vmatprep.subr.mxu0 0.0
        %3092 = vmatpush1.xpose.msra.mxu0 0.0
        %3093 = vmatprep.subr.mxu0 0.0
        %3094 = vmatpush1.xpose.msra.mxu0 0.0
        %3095 = vmatprep.subr.mxu0 0.0
        %3096 = vmatpush1.xpose.msra.mxu0 0.0
        %3097 = vmatprep.subr.mxu0 0.0
        %3098 = vmatpush1.xpose.msra.mxu0 0.0
        %3099 = vmatprep.subr.mxu0 0.0
        %3100 = vmatpush1.xpose.msra.mxu0 0.0
        %3101 = vmatprep.subr.mxu0 0.0
        %3102 = vmatpush1.xpose.msra.mxu0 0.0
        %3103 = vmatprep.subr.mxu0 0.0
        %3104 = vmatpush1.xpose.msra.mxu0 0.0
        %3105 = vmatprep.subr.mxu0 0.0
        %3106 = vmatpush1.xpose.msra.mxu0 0.0
        %3107 = vmatprep.subr.mxu0 0.0
        %3108 = vmatpush1.xpose.msra.mxu0 0.0
        %3109 = vmatprep.subr.mxu0 0.0
        %3110 = vmatpush1.xpose.msra.mxu0 0.0
        %3111 = vmatprep.subr.mxu0 0.0
        %3112 = vmatpush1.xpose.msra.mxu0 0.0
        %3113 = vmatprep.subr.mxu0 0.0
        %3114 = vmatpush1.xpose.msra.mxu0 0.0
        %3115 = vmatprep.subr.mxu0 0.0
        %3116 = vmatpush1.xpose.msra.mxu0 0.0
        %3117 = vmatprep.subr.mxu0 0.0
        %3118 = vmatpush1.xpose.msra.mxu0 0.0
        %3119 = vmatprep.subr.mxu0 0.0
        %3120 = vmatpush1.xpose.msra.mxu0 0.0
        %3121 = vmatprep.subr.mxu0 0.0
        %3122 = vmatpush1.xpose.msra.mxu0 0.0
        %3123 = vmatprep.subr.mxu0 0.0
        %3124 = vmatpush1.xpose.msra.mxu0 0.0
        %3125 = vmatprep.subr.mxu0 0.0
        %3126 = vmatpush1.xpose.msra.mxu0 0.0
        %3127 = vmatprep.subr.mxu0 0.0
        %3128 = vmatpush1.xpose.msra.mxu0 0.0
        %3129 = vmatprep.subr.mxu0 0.0
        %3130 = vmatpush1.xpose.msra.mxu0 0.0
        %3131 = vmatprep.subr.mxu0 0.0
        %3132 = vmatpush1.xpose.msra.mxu0 0.0
        %3133 = vmatprep.subr.mxu0 0.0
        %3134 = vmatpush1.xpose.msra.mxu0 0.0
        %3135 = vmatprep.subr.mxu0 0.0
        %3136 = vmatpush1.xpose.msra.mxu0 0.0
        %3137 = vmatprep.mubr.f32.mxu0 0.0
        %3138 = vmatmul.mubr.f32.gmra.mrb[0].mxu0 %v3068
        %v3139 = vpop.f32.mrb[0].mxu0
        %v3140 = vadd.f32 0.0, %v3139
        %v3141 = vpop.f32.mrb[0].mxu0
        %3142 = vdwg.mxu0
        %v3144 = vsel %vm2814, %v1049, 0
        %v3147 = vsel %vm2814, %v2977, 0
        %3149 = vmatprep.subr.mxu0 0.0
        %3150 = vmatpush1.xpose.msra.mxu0 %v3147
        %3151 = vmatprep.subr.mxu0 0.0
        %3152 = vmatpush1.xpose.msra.mxu0 0.0
        %3153 = vmatprep.subr.mxu0 0.0
        %3154 = vmatpush1.xpose.msra.mxu0 0.0
        %3155 = vmatprep.subr.mxu0 0.0
        %3156 = vmatpush1.xpose.msra.mxu0 0.0
        %3157 = vmatprep.subr.mxu0 0.0
        %3158 = vmatpush1.xpose.msra.mxu0 0.0
        %3159 = vmatprep.subr.mxu0 0.0
        %3160 = vmatpush1.xpose.msra.mxu0 0.0
        %3161 = vmatprep.subr.mxu0 0.0
        %3162 = vmatpush1.xpose.msra.mxu0 0.0
        %3163 = vmatprep.subr.mxu0 0.0
        %3164 = vmatpush1.xpose.msra.mxu0 0.0
        %3165 = vmatprep.subr.mxu0 0.0
        %3166 = vmatpush1.xpose.msra.mxu0 0.0
        %3167 = vmatprep.subr.mxu0 0.0
        %3168 = vmatpush1.xpose.msra.mxu0 0.0
        %3169 = vmatprep.subr.mxu0 0.0
        %3170 = vmatpush1.xpose.msra.mxu0 0.0
        %3171 = vmatprep.subr.mxu0 0.0
        %3172 = vmatpush1.xpose.msra.mxu0 0.0
        %3173 = vmatprep.subr.mxu0 0.0
        %3174 = vmatpush1.xpose.msra.mxu0 0.0
        %3175 = vmatprep.subr.mxu0 0.0
        %3176 = vmatpush1.xpose.msra.mxu0 0.0
        %3177 = vmatprep.subr.mxu0 0.0
        %3178 = vmatpush1.xpose.msra.mxu0 0.0
        %3179 = vmatprep.subr.mxu0 0.0
        %3180 = vmatpush1.xpose.msra.mxu0 0.0
        %3181 = vmatprep.subr.mxu0 0.0
        %3182 = vmatpush1.xpose.msra.mxu0 0.0
        %3183 = vmatprep.subr.mxu0 0.0
        %3184 = vmatpush1.xpose.msra.mxu0 0.0
        %3185 = vmatprep.subr.mxu0 0.0
        %3186 = vmatpush1.xpose.msra.mxu0 0.0
        %3187 = vmatprep.subr.mxu0 0.0
        %3188 = vmatpush1.xpose.msra.mxu0 0.0
        %3189 = vmatprep.subr.mxu0 0.0
        %3190 = vmatpush1.xpose.msra.mxu0 0.0
        %3191 = vmatprep.subr.mxu0 0.0
        %3192 = vmatpush1.xpose.msra.mxu0 0.0
        %3193 = vmatprep.subr.mxu0 0.0
        %3194 = vmatpush1.xpose.msra.mxu0 0.0
        %3195 = vmatprep.subr.mxu0 0.0
        %3196 = vmatpush1.xpose.msra.mxu0 0.0
        %3197 = vmatprep.subr.mxu0 0.0
        %3198 = vmatpush1.xpose.msra.mxu0 0.0
        %3199 = vmatprep.subr.mxu0 0.0
        %3200 = vmatpush1.xpose.msra.mxu0 0.0
        %3201 = vmatprep.subr.mxu0 0.0
        %3202 = vmatpush1.xpose.msra.mxu0 0.0
        %3203 = vmatprep.subr.mxu0 0.0
        %3204 = vmatpush1.xpose.msra.mxu0 0.0
        %3205 = vmatprep.subr.mxu0 0.0
        %3206 = vmatpush1.xpose.msra.mxu0 0.0
        %3207 = vmatprep.subr.mxu0 0.0
        %3208 = vmatpush1.xpose.msra.mxu0 0.0
        %3209 = vmatprep.subr.mxu0 0.0
        %3210 = vmatpush1.xpose.msra.mxu0 0.0
        %3211 = vmatprep.subr.mxu0 0.0
        %3212 = vmatpush1.xpose.msra.mxu0 0.0
        %3213 = vmatprep.mubr.f32.mxu0 0.0
        %3214 = vmatmul.mubr.f32.gmra.mrb[0].mxu0 %v3144
        %v3215 = vpop.f32.mrb[0].mxu0
        %v3216 = vadd.f32 0.0, %v3215
        %v3217 = vpop.f32.mrb[0].mxu0
        %3218 = vdwg.mxu0
        %v3220 = vsel %vm2814, %v1054, 0
        %v3223 = vsel %vm2814, %v2978, 0
        %3225 = vmatprep.subr.mxu0 0.0
        %3226 = vmatpush1.xpose.msra.mxu0 %v3223
        %3227 = vmatprep.subr.mxu0 0.0
        %3228 = vmatpush1.xpose.msra.mxu0 0.0
        %3229 = vmatprep.subr.mxu0 0.0
        %3230 = vmatpush1.xpose.msra.mxu0 0.0
        %3231 = vmatprep.subr.mxu0 0.0
        %3232 = vmatpush1.xpose.msra.mxu0 0.0
        %3233 = vmatprep.subr.mxu0 0.0
        %3234 = vmatpush1.xpose.msra.mxu0 0.0
        %3235 = vmatprep.subr.mxu0 0.0
        %3236 = vmatpush1.xpose.msra.mxu0 0.0
        %3237 = vmatprep.subr.mxu0 0.0
        %3238 = vmatpush1.xpose.msra.mxu0 0.0
        %3239 = vmatprep.subr.mxu0 0.0
        %3240 = vmatpush1.xpose.msra.mxu0 0.0
        %3241 = vmatprep.subr.mxu0 0.0
        %3242 = vmatpush1.xpose.msra.mxu0 0.0
        %3243 = vmatprep.subr.mxu0 0.0
        %3244 = vmatpush1.xpose.msra.mxu0 0.0
        %3245 = vmatprep.subr.mxu0 0.0
        %3246 = vmatpush1.xpose.msra.mxu0 0.0
        %3247 = vmatprep.subr.mxu0 0.0
        %3248 = vmatpush1.xpose.msra.mxu0 0.0
        %3249 = vmatprep.subr.mxu0 0.0
        %3250 = vmatpush1.xpose.msra.mxu0 0.0
        %3251 = vmatprep.subr.mxu0 0.0
        %3252 = vmatpush1.xpose.msra.mxu0 0.0
        %3253 = vmatprep.subr.mxu0 0.0
        %3254 = vmatpush1.xpose.msra.mxu0 0.0
        %3255 = vmatprep.subr.mxu0 0.0
        %3256 = vmatpush1.xpose.msra.mxu0 0.0
        %3257 = vmatprep.subr.mxu0 0.0
        %3258 = vmatpush1.xpose.msra.mxu0 0.0
        %3259 = vmatprep.subr.mxu0 0.0
        %3260 = vmatpush1.xpose.msra.mxu0 0.0
        %3261 = vmatprep.subr.mxu0 0.0
        %3262 = vmatpush1.xpose.msra.mxu0 0.0
        %3263 = vmatprep.subr.mxu0 0.0
        %3264 = vmatpush1.xpose.msra.mxu0 0.0
        %3265 = vmatprep.subr.mxu0 0.0
        %3266 = vmatpush1.xpose.msra.mxu0 0.0
        %3267 = vmatprep.subr.mxu0 0.0
        %3268 = vmatpush1.xpose.msra.mxu0 0.0
        %3269 = vmatprep.subr.mxu0 0.0
        %3270 = vmatpush1.xpose.msra.mxu0 0.0
        %3271 = vmatprep.subr.mxu0 0.0
        %3272 = vmatpush1.xpose.msra.mxu0 0.0
        %3273 = vmatprep.subr.mxu0 0.0
        %3274 = vmatpush1.xpose.msra.mxu0 0.0
        %3275 = vmatprep.subr.mxu0 0.0
        %3276 = vmatpush1.xpose.msra.mxu0 0.0
        %3277 = vmatprep.subr.mxu0 0.0
        %3278 = vmatpush1.xpose.msra.mxu0 0.0
        %3279 = vmatprep.subr.mxu0 0.0
        %3280 = vmatpush1.xpose.msra.mxu0 0.0
        %3281 = vmatprep.subr.mxu0 0.0
        %3282 = vmatpush1.xpose.msra.mxu0 0.0
        %3283 = vmatprep.subr.mxu0 0.0
        %3284 = vmatpush1.xpose.msra.mxu0 0.0
        %3285 = vmatprep.subr.mxu0 0.0
        %3286 = vmatpush1.xpose.msra.mxu0 0.0
        %3287 = vmatprep.subr.mxu0 0.0
        %3288 = vmatpush1.xpose.msra.mxu0 0.0
        %3289 = vmatprep.mubr.f32.mxu0 0.0
        %3290 = vmatmul.mubr.f32.gmra.mrb[0].mxu0 %v3220
        %v3291 = vpop.f32.mrb[0].mxu0
        %v3292 = vadd.f32 0.0, %v3291
        %v3293 = vpop.f32.mrb[0].mxu0
        %3294 = vdwg.mxu0
        %v3296 = vsel %vm2814, %v1059, 0
        %v3299 = vsel %vm2814, %v2979, 0
        %3301 = vmatprep.subr.mxu0 0.0
        %3302 = vmatpush1.xpose.msra.mxu0 %v3299
        %3303 = vmatprep.subr.mxu0 0.0
        %3304 = vmatpush1.xpose.msra.mxu0 0.0
        %3305 = vmatprep.subr.mxu0 0.0
        %3306 = vmatpush1.xpose.msra.mxu0 0.0
        %3307 = vmatprep.subr.mxu0 0.0
        %3308 = vmatpush1.xpose.msra.mxu0 0.0
        %3309 = vmatprep.subr.mxu0 0.0
        %3310 = vmatpush1.xpose.msra.mxu0 0.0
        %3311 = vmatprep.subr.mxu0 0.0
        %3312 = vmatpush1.xpose.msra.mxu0 0.0
        %3313 = vmatprep.subr.mxu0 0.0
        %3314 = vmatpush1.xpose.msra.mxu0 0.0
        %3315 = vmatprep.subr.mxu0 0.0
        %3316 = vmatpush1.xpose.msra.mxu0 0.0
        %3317 = vmatprep.subr.mxu0 0.0
        %3318 = vmatpush1.xpose.msra.mxu0 0.0
        %3319 = vmatprep.subr.mxu0 0.0
        %3320 = vmatpush1.xpose.msra.mxu0 0.0
        %3321 = vmatprep.subr.mxu0 0.0
        %3322 = vmatpush1.xpose.msra.mxu0 0.0
        %3323 = vmatprep.subr.mxu0 0.0
        %3324 = vmatpush1.xpose.msra.mxu0 0.0
        %3325 = vmatprep.subr.mxu0 0.0
        %3326 = vmatpush1.xpose.msra.mxu0 0.0
        %3327 = vmatprep.subr.mxu0 0.0
        %3328 = vmatpush1.xpose.msra.mxu0 0.0
        %3329 = vmatprep.subr.mxu0 0.0
        %3330 = vmatpush1.xpose.msra.mxu0 0.0
        %3331 = vmatprep.subr.mxu0 0.0
        %3332 = vmatpush1.xpose.msra.mxu0 0.0
        %3333 = vmatprep.subr.mxu0 0.0
        %3334 = vmatpush1.xpose.msra.mxu0 0.0
        %3335 = vmatprep.subr.mxu0 0.0
        %3336 = vmatpush1.xpose.msra.mxu0 0.0
        %3337 = vmatprep.subr.mxu0 0.0
        %3338 = vmatpush1.xpose.msra.mxu0 0.0
        %3339 = vmatprep.subr.mxu0 0.0
        %3340 = vmatpush1.xpose.msra.mxu0 0.0
        %3341 = vmatprep.subr.mxu0 0.0
        %3342 = vmatpush1.xpose.msra.mxu0 0.0
        %3343 = vmatprep.subr.mxu0 0.0
        %3344 = vmatpush1.xpose.msra.mxu0 0.0
        %3345 = vmatprep.subr.mxu0 0.0
        %3346 = vmatpush1.xpose.msra.mxu0 0.0
        %3347 = vmatprep.subr.mxu0 0.0
        %3348 = vmatpush1.xpose.msra.mxu0 0.0
        %3349 = vmatprep.subr.mxu0 0.0
        %3350 = vmatpush1.xpose.msra.mxu0 0.0
        %3351 = vmatprep.subr.mxu0 0.0
        %3352 = vmatpush1.xpose.msra.mxu0 0.0
        %3353 = vmatprep.subr.mxu0 0.0
        %3354 = vmatpush1.xpose.msra.mxu0 0.0
        %3355 = vmatprep.subr.mxu0 0.0
        %3356 = vmatpush1.xpose.msra.mxu0 0.0
        %3357 = vmatprep.subr.mxu0 0.0
        %3358 = vmatpush1.xpose.msra.mxu0 0.0
        %3359 = vmatprep.subr.mxu0 0.0
        %3360 = vmatpush1.xpose.msra.mxu0 0.0
        %3361 = vmatprep.subr.mxu0 0.0
        %3362 = vmatpush1.xpose.msra.mxu0 0.0
        %3363 = vmatprep.subr.mxu0 0.0
        %3364 = vmatpush1.xpose.msra.mxu0 0.0
        %3365 = vmatprep.mubr.f32.mxu0 0.0
        %3366 = vmatmul.mubr.f32.gmra.mrb[0].mxu0 %v3296
        %v3367 = vpop.f32.mrb[0].mxu0
        %v3368 = vadd.f32 0.0, %v3367
        %v3369 = vpop.f32.mrb[0].mxu0
        %3370 = vdwg.mxu0
        %v3372 = vsel %vm2814, %v1064, 0
        %v3375 = vsel %vm2814, %v2980, 0
        %3377 = vmatprep.subr.mxu0 0.0
        %3378 = vmatpush1.xpose.msra.mxu0 %v3375
        %3379 = vmatprep.subr.mxu0 0.0
        %3380 = vmatpush1.xpose.msra.mxu0 0.0
        %3381 = vmatprep.subr.mxu0 0.0
        %3382 = vmatpush1.xpose.msra.mxu0 0.0
        %3383 = vmatprep.subr.mxu0 0.0
        %3384 = vmatpush1.xpose.msra.mxu0 0.0
        %3385 = vmatprep.subr.mxu0 0.0
        %3386 = vmatpush1.xpose.msra.mxu0 0.0
        %3387 = vmatprep.subr.mxu0 0.0
        %3388 = vmatpush1.xpose.msra.mxu0 0.0
        %3389 = vmatprep.subr.mxu0 0.0
        %3390 = vmatpush1.xpose.msra.mxu0 0.0
        %3391 = vmatprep.subr.mxu0 0.0
        %3392 = vmatpush1.xpose.msra.mxu0 0.0
        %3393 = vmatprep.subr.mxu0 0.0
        %3394 = vmatpush1.xpose.msra.mxu0 0.0
        %3395 = vmatprep.subr.mxu0 0.0
        %3396 = vmatpush1.xpose.msra.mxu0 0.0
        %3397 = vmatprep.subr.mxu0 0.0
        %3398 = vmatpush1.xpose.msra.mxu0 0.0
        %3399 = vmatprep.subr.mxu0 0.0
        %3400 = vmatpush1.xpose.msra.mxu0 0.0
        %3401 = vmatprep.subr.mxu0 0.0
        %3402 = vmatpush1.xpose.msra.mxu0 0.0
        %3403 = vmatprep.subr.mxu0 0.0
        %3404 = vmatpush1.xpose.msra.mxu0 0.0
        %3405 = vmatprep.subr.mxu0 0.0
        %3406 = vmatpush1.xpose.msra.mxu0 0.0
        %3407 = vmatprep.subr.mxu0 0.0
        %3408 = vmatpush1.xpose.msra.mxu0 0.0
        %3409 = vmatprep.subr.mxu0 0.0
        %3410 = vmatpush1.xpose.msra.mxu0 0.0
        %3411 = vmatprep.subr.mxu0 0.0
        %3412 = vmatpush1.xpose.msra.mxu0 0.0
        %3413 = vmatprep.subr.mxu0 0.0
        %3414 = vmatpush1.xpose.msra.mxu0 0.0
        %3415 = vmatprep.subr.mxu0 0.0
        %3416 = vmatpush1.xpose.msra.mxu0 0.0
        %3417 = vmatprep.subr.mxu0 0.0
        %3418 = vmatpush1.xpose.msra.mxu0 0.0
        %3419 = vmatprep.subr.mxu0 0.0
        %3420 = vmatpush1.xpose.msra.mxu0 0.0
        %3421 = vmatprep.subr.mxu0 0.0
        %3422 = vmatpush1.xpose.msra.mxu0 0.0
        %3423 = vmatprep.subr.mxu0 0.0
        %3424 = vmatpush1.xpose.msra.mxu0 0.0
        %3425 = vmatprep.subr.mxu0 0.0
        %3426 = vmatpush1.xpose.msra.mxu0 0.0
        %3427 = vmatprep.subr.mxu0 0.0
        %3428 = vmatpush1.xpose.msra.mxu0 0.0
        %3429 = vmatprep.subr.mxu0 0.0
        %3430 = vmatpush1.xpose.msra.mxu0 0.0
        %3431 = vmatprep.subr.mxu0 0.0
        %3432 = vmatpush1.xpose.msra.mxu0 0.0
        %3433 = vmatprep.subr.mxu0 0.0
        %3434 = vmatpush1.xpose.msra.mxu0 0.0
        %3435 = vmatprep.subr.mxu0 0.0
        %3436 = vmatpush1.xpose.msra.mxu0 0.0
        %3437 = vmatprep.subr.mxu0 0.0
        %3438 = vmatpush1.xpose.msra.mxu0 0.0
        %3439 = vmatprep.subr.mxu0 0.0
        %3440 = vmatpush1.xpose.msra.mxu0 0.0
        %3441 = vmatprep.mubr.f32.mxu0 0.0
        %3442 = vmatmul.mubr.f32.gmra.mrb[0].mxu0 %v3372
        %v3443 = vpop.f32.mrb[0].mxu0
        %v3444 = vadd.f32 0.0, %v3443
        %v3445 = vpop.f32.mrb[0].mxu0
        %3446 = vdwg.mxu0
        %v3448 = vsel %vm2814, %v1069, 0
        %v3451 = vsel %vm2814, %v2981, 0
        %3453 = vmatprep.subr.mxu0 0.0
        %3454 = vmatpush1.xpose.msra.mxu0 %v3451
        %3455 = vmatprep.subr.mxu0 0.0
        %3456 = vmatpush1.xpose.msra.mxu0 0.0
        %3457 = vmatprep.subr.mxu0 0.0
        %3458 = vmatpush1.xpose.msra.mxu0 0.0
        %3459 = vmatprep.subr.mxu0 0.0
        %3460 = vmatpush1.xpose.msra.mxu0 0.0
        %3461 = vmatprep.subr.mxu0 0.0
        %3462 = vmatpush1.xpose.msra.mxu0 0.0
        %3463 = vmatprep.subr.mxu0 0.0
        %3464 = vmatpush1.xpose.msra.mxu0 0.0
        %3465 = vmatprep.subr.mxu0 0.0
        %3466 = vmatpush1.xpose.msra.mxu0 0.0
        %3467 = vmatprep.subr.mxu0 0.0
        %3468 = vmatpush1.xpose.msra.mxu0 0.0
        %3469 = vmatprep.subr.mxu0 0.0
        %3470 = vmatpush1.xpose.msra.mxu0 0.0
        %3471 = vmatprep.subr.mxu0 0.0
        %3472 = vmatpush1.xpose.msra.mxu0 0.0
        %3473 = vmatprep.subr.mxu0 0.0
        %3474 = vmatpush1.xpose.msra.mxu0 0.0
        %3475 = vmatprep.subr.mxu0 0.0
        %3476 = vmatpush1.xpose.msra.mxu0 0.0
        %3477 = vmatprep.subr.mxu0 0.0
        %3478 = vmatpush1.xpose.msra.mxu0 0.0
        %3479 = vmatprep.subr.mxu0 0.0
        %3480 = vmatpush1.xpose.msra.mxu0 0.0
        %3481 = vmatprep.subr.mxu0 0.0
        %3482 = vmatpush1.xpose.msra.mxu0 0.0
        %3483 = vmatprep.subr.mxu0 0.0
        %3484 = vmatpush1.xpose.msra.mxu0 0.0
        %3485 = vmatprep.subr.mxu0 0.0
        %3486 = vmatpush1.xpose.msra.mxu0 0.0
        %3487 = vmatprep.subr.mxu0 0.0
        %3488 = vmatpush1.xpose.msra.mxu0 0.0
        %3489 = vmatprep.subr.mxu0 0.0
        %3490 = vmatpush1.xpose.msra.mxu0 0.0
        %3491 = vmatprep.subr.mxu0 0.0
        %3492 = vmatpush1.xpose.msra.mxu0 0.0
        %3493 = vmatprep.subr.mxu0 0.0
        %3494 = vmatpush1.xpose.msra.mxu0 0.0
        %3495 = vmatprep.subr.mxu0 0.0
        %3496 = vmatpush1.xpose.msra.mxu0 0.0
        %3497 = vmatprep.subr.mxu0 0.0
        %3498 = vmatpush1.xpose.msra.mxu0 0.0
        %3499 = vmatprep.subr.mxu0 0.0
        %3500 = vmatpush1.xpose.msra.mxu0 0.0
        %3501 = vmatprep.subr.mxu0 0.0
        %3502 = vmatpush1.xpose.msra.mxu0 0.0
        %3503 = vmatprep.subr.mxu0 0.0
        %3504 = vmatpush1.xpose.msra.mxu0 0.0
        %3505 = vmatprep.subr.mxu0 0.0
        %3506 = vmatpush1.xpose.msra.mxu0 0.0
        %3507 = vmatprep.subr.mxu0 0.0
        %3508 = vmatpush1.xpose.msra.mxu0 0.0
        %3509 = vmatprep.subr.mxu0 0.0
        %3510 = vmatpush1.xpose.msra.mxu0 0.0
        %3511 = vmatprep.subr.mxu0 0.0
        %3512 = vmatpush1.xpose.msra.mxu0 0.0
        %3513 = vmatprep.subr.mxu0 0.0
        %3514 = vmatpush1.xpose.msra.mxu0 0.0
        %3515 = vmatprep.subr.mxu0 0.0
        %3516 = vmatpush1.xpose.msra.mxu0 0.0
        %3517 = vmatprep.mubr.f32.mxu0 0.0
        %3518 = vmatmul.mubr.f32.gmra.mrb[0].mxu0 %v3448
        %v3519 = vpop.f32.mrb[0].mxu0
        %v3520 = vadd.f32 0.0, %v3519
        %v3521 = vpop.f32.mrb[0].mxu0
        %3522 = vdwg.mxu0
        %v3524 = vsel %vm2814, %v1074, 0
        %v3527 = vsel %vm2814, %v2982, 0
        %3529 = vmatprep.subr.mxu0 0.0
        %3530 = vmatpush1.xpose.msra.mxu0 %v3527
        %3531 = vmatprep.subr.mxu0 0.0
        %3532 = vmatpush1.xpose.msra.mxu0 0.0
        %3533 = vmatprep.subr.mxu0 0.0
        %3534 = vmatpush1.xpose.msra.mxu0 0.0
        %3535 = vmatprep.subr.mxu0 0.0
        %3536 = vmatpush1.xpose.msra.mxu0 0.0
        %3537 = vmatprep.subr.mxu0 0.0
        %3538 = vmatpush1.xpose.msra.mxu0 0.0
        %3539 = vmatprep.subr.mxu0 0.0
        %3540 = vmatpush1.xpose.msra.mxu0 0.0
        %3541 = vmatprep.subr.mxu0 0.0
        %3542 = vmatpush1.xpose.msra.mxu0 0.0
        %3543 = vmatprep.subr.mxu0 0.0
        %3544 = vmatpush1.xpose.msra.mxu0 0.0
        %3545 = vmatprep.subr.mxu0 0.0
        %3546 = vmatpush1.xpose.msra.mxu0 0.0
        %3547 = vmatprep.subr.mxu0 0.0
        %3548 = vmatpush1.xpose.msra.mxu0 0.0
        %3549 = vmatprep.subr.mxu0 0.0
        %3550 = vmatpush1.xpose.msra.mxu0 0.0
        %3551 = vmatprep.subr.mxu0 0.0
        %3552 = vmatpush1.xpose.msra.mxu0 0.0
        %3553 = vmatprep.subr.mxu0 0.0
        %3554 = vmatpush1.xpose.msra.mxu0 0.0
        %3555 = vmatprep.subr.mxu0 0.0
        %3556 = vmatpush1.xpose.msra.mxu0 0.0
        %3557 = vmatprep.subr.mxu0 0.0
        %3558 = vmatpush1.xpose.msra.mxu0 0.0
        %3559 = vmatprep.subr.mxu0 0.0
        %3560 = vmatpush1.xpose.msra.mxu0 0.0
        %3561 = vmatprep.subr.mxu0 0.0
        %3562 = vmatpush1.xpose.msra.mxu0 0.0
        %3563 = vmatprep.subr.mxu0 0.0
        %3564 = vmatpush1.xpose.msra.mxu0 0.0
        %3565 = vmatprep.subr.mxu0 0.0
        %3566 = vmatpush1.xpose.msra.mxu0 0.0
        %3567 = vmatprep.subr.mxu0 0.0
        %3568 = vmatpush1.xpose.msra.mxu0 0.0
        %3569 = vmatprep.subr.mxu0 0.0
        %3570 = vmatpush1.xpose.msra.mxu0 0.0
        %3571 = vmatprep.subr.mxu0 0.0
        %3572 = vmatpush1.xpose.msra.mxu0 0.0
        %3573 = vmatprep.subr.mxu0 0.0
        %3574 = vmatpush1.xpose.msra.mxu0 0.0
        %3575 = vmatprep.subr.mxu0 0.0
        %3576 = vmatpush1.xpose.msra.mxu0 0.0
        %3577 = vmatprep.subr.mxu0 0.0
        %3578 = vmatpush1.xpose.msra.mxu0 0.0
        %3579 = vmatprep.subr.mxu0 0.0
        %3580 = vmatpush1.xpose.msra.mxu0 0.0
        %3581 = vmatprep.subr.mxu0 0.0
        %3582 = vmatpush1.xpose.msra.mxu0 0.0
        %3583 = vmatprep.subr.mxu0 0.0
        %3584 = vmatpush1.xpose.msra.mxu0 0.0
        %3585 = vmatprep.subr.mxu0 0.0
        %3586 = vmatpush1.xpose.msra.mxu0 0.0
        %3587 = vmatprep.subr.mxu0 0.0
        %3588 = vmatpush1.xpose.msra.mxu0 0.0
        %3589 = vmatprep.subr.mxu0 0.0
        %3590 = vmatpush1.xpose.msra.mxu0 0.0
        %3591 = vmatprep.subr.mxu0 0.0
        %3592 = vmatpush1.xpose.msra.mxu0 0.0
        %3593 = vmatprep.mubr.f32.mxu0 0.0
        %3594 = vmatmul.mubr.f32.gmra.mrb[0].mxu0 %v3524
        %v3595 = vpop.f32.mrb[0].mxu0
        %v3596 = vadd.f32 0.0, %v3595
        %v3597 = vpop.f32.mrb[0].mxu0
        %3598 = vdwg.mxu0
        %v3600 = vsel %vm2814, %v1079, 0
        %v3603 = vsel %vm2814, %v2983, 0
        %3605 = vmatprep.subr.mxu0 0.0
        %3606 = vmatpush1.xpose.msra.mxu0 %v3603
        %3607 = vmatprep.subr.mxu0 0.0
        %3608 = vmatpush1.xpose.msra.mxu0 0.0
        %3609 = vmatprep.subr.mxu0 0.0
        %3610 = vmatpush1.xpose.msra.mxu0 0.0
        %3611 = vmatprep.subr.mxu0 0.0
        %3612 = vmatpush1.xpose.msra.mxu0 0.0
        %3613 = vmatprep.subr.mxu0 0.0
        %3614 = vmatpush1.xpose.msra.mxu0 0.0
        %3615 = vmatprep.subr.mxu0 0.0
        %3616 = vmatpush1.xpose.msra.mxu0 0.0
        %3617 = vmatprep.subr.mxu0 0.0
        %3618 = vmatpush1.xpose.msra.mxu0 0.0
        %3619 = vmatprep.subr.mxu0 0.0
        %3620 = vmatpush1.xpose.msra.mxu0 0.0
        %3621 = vmatprep.subr.mxu0 0.0
        %3622 = vmatpush1.xpose.msra.mxu0 0.0
        %3623 = vmatprep.subr.mxu0 0.0
        %3624 = vmatpush1.xpose.msra.mxu0 0.0
        %3625 = vmatprep.subr.mxu0 0.0
        %3626 = vmatpush1.xpose.msra.mxu0 0.0
        %3627 = vmatprep.subr.mxu0 0.0
        %3628 = vmatpush1.xpose.msra.mxu0 0.0
        %3629 = vmatprep.subr.mxu0 0.0
        %3630 = vmatpush1.xpose.msra.mxu0 0.0
        %3631 = vmatprep.subr.mxu0 0.0
        %3632 = vmatpush1.xpose.msra.mxu0 0.0
        %3633 = vmatprep.subr.mxu0 0.0
        %3634 = vmatpush1.xpose.msra.mxu0 0.0
        %3635 = vmatprep.subr.mxu0 0.0
        %3636 = vmatpush1.xpose.msra.mxu0 0.0
        %3637 = vmatprep.subr.mxu0 0.0
        %3638 = vmatpush1.xpose.msra.mxu0 0.0
        %3639 = vmatprep.subr.mxu0 0.0
        %3640 = vmatpush1.xpose.msra.mxu0 0.0
        %3641 = vmatprep.subr.mxu0 0.0
        %3642 = vmatpush1.xpose.msra.mxu0 0.0
        %3643 = vmatprep.subr.mxu0 0.0
        %3644 = vmatpush1.xpose.msra.mxu0 0.0
        %3645 = vmatprep.subr.mxu0 0.0
        %3646 = vmatpush1.xpose.msra.mxu0 0.0
        %3647 = vmatprep.subr.mxu0 0.0
        %3648 = vmatpush1.xpose.msra.mxu0 0.0
        %3649 = vmatprep.subr.mxu0 0.0
        %3650 = vmatpush1.xpose.msra.mxu0 0.0
        %3651 = vmatprep.subr.mxu0 0.0
        %3652 = vmatpush1.xpose.msra.mxu0 0.0
        %3653 = vmatprep.subr.mxu0 0.0
        %3654 = vmatpush1.xpose.msra.mxu0 0.0
        %3655 = vmatprep.subr.mxu0 0.0
        %3656 = vmatpush1.xpose.msra.mxu0 0.0
        %3657 = vmatprep.subr.mxu0 0.0
        %3658 = vmatpush1.xpose.msra.mxu0 0.0
        %3659 = vmatprep.subr.mxu0 0.0
        %3660 = vmatpush1.xpose.msra.mxu0 0.0
        %3661 = vmatprep.subr.mxu0 0.0
        %3662 = vmatpush1.xpose.msra.mxu0 0.0
        %3663 = vmatprep.subr.mxu0 0.0
        %3664 = vmatpush1.xpose.msra.mxu0 0.0
        %3665 = vmatprep.subr.mxu0 0.0
        %3666 = vmatpush1.xpose.msra.mxu0 0.0
        %3667 = vmatprep.subr.mxu0 0.0
        %3668 = vmatpush1.xpose.msra.mxu0 0.0
        %3669 = vmatprep.mubr.f32.mxu0 0.0
        %3670 = vmatmul.mubr.f32.gmra.mrb[0].mxu0 %v3600
        %v3671 = vpop.f32.mrb[0].mxu0
        %v3672 = vadd.f32 0.0, %v3671
        %v3673 = vpop.f32.mrb[0].mxu0
        %3674 = vdwg.mxu0
        %v3676 = vsel %vm2814, %v1084, 0
        %v3679 = vsel %vm2814, %v2984, 0
        %3681 = vmatprep.subr.mxu0 0.0
        %3682 = vmatpush1.xpose.msra.mxu0 %v3679
        %3683 = vmatprep.subr.mxu0 0.0
        %3684 = vmatpush1.xpose.msra.mxu0 0.0
        %3685 = vmatprep.subr.mxu0 0.0
        %3686 = vmatpush1.xpose.msra.mxu0 0.0
        %3687 = vmatprep.subr.mxu0 0.0
        %3688 = vmatpush1.xpose.msra.mxu0 0.0
        %3689 = vmatprep.subr.mxu0 0.0
        %3690 = vmatpush1.xpose.msra.mxu0 0.0
        %3691 = vmatprep.subr.mxu0 0.0
        %3692 = vmatpush1.xpose.msra.mxu0 0.0
        %3693 = vmatprep.subr.mxu0 0.0
        %3694 = vmatpush1.xpose.msra.mxu0 0.0
        %3695 = vmatprep.subr.mxu0 0.0
        %3696 = vmatpush1.xpose.msra.mxu0 0.0
        %3697 = vmatprep.subr.mxu0 0.0
        %3698 = vmatpush1.xpose.msra.mxu0 0.0
        %3699 = vmatprep.subr.mxu0 0.0
        %3700 = vmatpush1.xpose.msra.mxu0 0.0
        %3701 = vmatprep.subr.mxu0 0.0
        %3702 = vmatpush1.xpose.msra.mxu0 0.0
        %3703 = vmatprep.subr.mxu0 0.0
        %3704 = vmatpush1.xpose.msra.mxu0 0.0
        %3705 = vmatprep.subr.mxu0 0.0
        %3706 = vmatpush1.xpose.msra.mxu0 0.0
        %3707 = vmatprep.subr.mxu0 0.0
        %3708 = vmatpush1.xpose.msra.mxu0 0.0
        %3709 = vmatprep.subr.mxu0 0.0
        %3710 = vmatpush1.xpose.msra.mxu0 0.0
        %3711 = vmatprep.subr.mxu0 0.0
        %3712 = vmatpush1.xpose.msra.mxu0 0.0
        %3713 = vmatprep.subr.mxu0 0.0
        %3714 = vmatpush1.xpose.msra.mxu0 0.0
        %3715 = vmatprep.subr.mxu0 0.0
        %3716 = vmatpush1.xpose.msra.mxu0 0.0
        %3717 = vmatprep.subr.mxu0 0.0
        %3718 = vmatpush1.xpose.msra.mxu0 0.0
        %3719 = vmatprep.subr.mxu0 0.0
        %3720 = vmatpush1.xpose.msra.mxu0 0.0
        %3721 = vmatprep.subr.mxu0 0.0
        %3722 = vmatpush1.xpose.msra.mxu0 0.0
        %3723 = vmatprep.subr.mxu0 0.0
        %3724 = vmatpush1.xpose.msra.mxu0 0.0
        %3725 = vmatprep.subr.mxu0 0.0
        %3726 = vmatpush1.xpose.msra.mxu0 0.0
        %3727 = vmatprep.subr.mxu0 0.0
        %3728 = vmatpush1.xpose.msra.mxu0 0.0
        %3729 = vmatprep.subr.mxu0 0.0
        %3730 = vmatpush1.xpose.msra.mxu0 0.0
        %3731 = vmatprep.subr.mxu0 0.0
        %3732 = vmatpush1.xpose.msra.mxu0 0.0
        %3733 = vmatprep.subr.mxu0 0.0
        %3734 = vmatpush1.xpose.msra.mxu0 0.0
        %3735 = vmatprep.subr.mxu0 0.0
        %3736 = vmatpush1.xpose.msra.mxu0 0.0
        %3737 = vmatprep.subr.mxu0 0.0
        %3738 = vmatpush1.xpose.msra.mxu0 0.0
        %3739 = vmatprep.subr.mxu0 0.0
        %3740 = vmatpush1.xpose.msra.mxu0 0.0
        %3741 = vmatprep.subr.mxu0 0.0
        %3742 = vmatpush1.xpose.msra.mxu0 0.0
        %3743 = vmatprep.subr.mxu0 0.0
        %3744 = vmatpush1.xpose.msra.mxu0 0.0
        %3745 = vmatprep.mubr.f32.mxu0 0.0
        %3746 = vmatmul.mubr.f32.gmra.mrb[0].mxu0 %v3676
        %v3747 = vpop.f32.mrb[0].mxu0
        %v3748 = vadd.f32 0.0, %v3747
        %v3749 = vpop.f32.mrb[0].mxu0
        %3750 = vdwg.mxu0
        %v3752 = vsel %vm2814, %v1089, 0
        %v3755 = vsel %vm2814, %v2985, 0
        %3757 = vmatprep.subr.mxu0 0.0
        %3758 = vmatpush1.xpose.msra.mxu0 %v3755
        %3759 = vmatprep.subr.mxu0 0.0
        %3760 = vmatpush1.xpose.msra.mxu0 0.0
        %3761 = vmatprep.subr.mxu0 0.0
        %3762 = vmatpush1.xpose.msra.mxu0 0.0
        %3763 = vmatprep.subr.mxu0 0.0
        %3764 = vmatpush1.xpose.msra.mxu0 0.0
        %3765 = vmatprep.subr.mxu0 0.0
        %3766 = vmatpush1.xpose.msra.mxu0 0.0
        %3767 = vmatprep.subr.mxu0 0.0
        %3768 = vmatpush1.xpose.msra.mxu0 0.0
        %3769 = vmatprep.subr.mxu0 0.0
        %3770 = vmatpush1.xpose.msra.mxu0 0.0
        %3771 = vmatprep.subr.mxu0 0.0
        %3772 = vmatpush1.xpose.msra.mxu0 0.0
        %3773 = vmatprep.subr.mxu0 0.0
        %3774 = vmatpush1.xpose.msra.mxu0 0.0
        %3775 = vmatprep.subr.mxu0 0.0
        %3776 = vmatpush1.xpose.msra.mxu0 0.0
        %3777 = vmatprep.subr.mxu0 0.0
        %3778 = vmatpush1.xpose.msra.mxu0 0.0
        %3779 = vmatprep.subr.mxu0 0.0
        %3780 = vmatpush1.xpose.msra.mxu0 0.0
        %3781 = vmatprep.subr.mxu0 0.0
        %3782 = vmatpush1.xpose.msra.mxu0 0.0
        %3783 = vmatprep.subr.mxu0 0.0
        %3784 = vmatpush1.xpose.msra.mxu0 0.0
        %3785 = vmatprep.subr.mxu0 0.0
        %3786 = vmatpush1.xpose.msra.mxu0 0.0
        %3787 = vmatprep.subr.mxu0 0.0
        %3788 = vmatpush1.xpose.msra.mxu0 0.0
        %3789 = vmatprep.subr.mxu0 0.0
        %3790 = vmatpush1.xpose.msra.mxu0 0.0
        %3791 = vmatprep.subr.mxu0 0.0
        %3792 = vmatpush1.xpose.msra.mxu0 0.0
        %3793 = vmatprep.subr.mxu0 0.0
        %3794 = vmatpush1.xpose.msra.mxu0 0.0
        %3795 = vmatprep.subr.mxu0 0.0
        %3796 = vmatpush1.xpose.msra.mxu0 0.0
        %3797 = vmatprep.subr.mxu0 0.0
        %3798 = vmatpush1.xpose.msra.mxu0 0.0
        %3799 = vmatprep.subr.mxu0 0.0
        %3800 = vmatpush1.xpose.msra.mxu0 0.0
        %3801 = vmatprep.subr.mxu0 0.0
        %3802 = vmatpush1.xpose.msra.mxu0 0.0
        %3803 = vmatprep.subr.mxu0 0.0
        %3804 = vmatpush1.xpose.msra.mxu0 0.0
        %3805 = vmatprep.subr.mxu0 0.0
        %3806 = vmatpush1.xpose.msra.mxu0 0.0
        %3807 = vmatprep.subr.mxu0 0.0
        %3808 = vmatpush1.xpose.msra.mxu0 0.0
        %3809 = vmatprep.subr.mxu0 0.0
        %3810 = vmatpush1.xpose.msra.mxu0 0.0
        %3811 = vmatprep.subr.mxu0 0.0
        %3812 = vmatpush1.xpose.msra.mxu0 0.0
        %3813 = vmatprep.subr.mxu0 0.0
        %3814 = vmatpush1.xpose.msra.mxu0 0.0
        %3815 = vmatprep.subr.mxu0 0.0
        %3816 = vmatpush1.xpose.msra.mxu0 0.0
        %3817 = vmatprep.subr.mxu0 0.0
        %3818 = vmatpush1.xpose.msra.mxu0 0.0
        %3819 = vmatprep.subr.mxu0 0.0
        %3820 = vmatpush1.xpose.msra.mxu0 0.0
        %3821 = vmatprep.mubr.f32.mxu0 0.0
        %3822 = vmatmul.mubr.f32.gmra.mrb[0].mxu0 %v3752
        %v3823 = vpop.f32.mrb[0].mxu0
        %v3824 = vadd.f32 0.0, %v3823
        %v3825 = vpop.f32.mrb[0].mxu0
        %3826 = vdwg.mxu0
        %v3828 = vsel %vm2814, %v1094, 0
        %v3831 = vsel %vm2814, %v2986, 0
        %3833 = vmatprep.subr.mxu0 0.0
        %3834 = vmatpush1.xpose.msra.mxu0 %v3831
        %3835 = vmatprep.subr.mxu0 0.0
        %3836 = vmatpush1.xpose.msra.mxu0 0.0
        %3837 = vmatprep.subr.mxu0 0.0
        %3838 = vmatpush1.xpose.msra.mxu0 0.0
        %3839 = vmatprep.subr.mxu0 0.0
        %3840 = vmatpush1.xpose.msra.mxu0 0.0
        %3841 = vmatprep.subr.mxu0 0.0
        %3842 = vmatpush1.xpose.msra.mxu0 0.0
        %3843 = vmatprep.subr.mxu0 0.0
        %3844 = vmatpush1.xpose.msra.mxu0 0.0
        %3845 = vmatprep.subr.mxu0 0.0
        %3846 = vmatpush1.xpose.msra.mxu0 0.0
        %3847 = vmatprep.subr.mxu0 0.0
        %3848 = vmatpush1.xpose.msra.mxu0 0.0
        %3849 = vmatprep.subr.mxu0 0.0
        %3850 = vmatpush1.xpose.msra.mxu0 0.0
        %3851 = vmatprep.subr.mxu0 0.0
        %3852 = vmatpush1.xpose.msra.mxu0 0.0
        %3853 = vmatprep.subr.mxu0 0.0
        %3854 = vmatpush1.xpose.msra.mxu0 0.0
        %3855 = vmatprep.subr.mxu0 0.0
        %3856 = vmatpush1.xpose.msra.mxu0 0.0
        %3857 = vmatprep.subr.mxu0 0.0
        %3858 = vmatpush1.xpose.msra.mxu0 0.0
        %3859 = vmatprep.subr.mxu0 0.0
        %3860 = vmatpush1.xpose.msra.mxu0 0.0
        %3861 = vmatprep.subr.mxu0 0.0
        %3862 = vmatpush1.xpose.msra.mxu0 0.0
        %3863 = vmatprep.subr.mxu0 0.0
        %3864 = vmatpush1.xpose.msra.mxu0 0.0
        %3865 = vmatprep.subr.mxu0 0.0
        %3866 = vmatpush1.xpose.msra.mxu0 0.0
        %3867 = vmatprep.subr.mxu0 0.0
        %3868 = vmatpush1.xpose.msra.mxu0 0.0
        %3869 = vmatprep.subr.mxu0 0.0
        %3870 = vmatpush1.xpose.msra.mxu0 0.0
        %3871 = vmatprep.subr.mxu0 0.0
        %3872 = vmatpush1.xpose.msra.mxu0 0.0
        %3873 = vmatprep.subr.mxu0 0.0
        %3874 = vmatpush1.xpose.msra.mxu0 0.0
        %3875 = vmatprep.subr.mxu0 0.0
        %3876 = vmatpush1.xpose.msra.mxu0 0.0
        %3877 = vmatprep.subr.mxu0 0.0
        %3878 = vmatpush1.xpose.msra.mxu0 0.0
        %3879 = vmatprep.subr.mxu0 0.0
        %3880 = vmatpush1.xpose.msra.mxu0 0.0
        %3881 = vmatprep.subr.mxu0 0.0
        %3882 = vmatpush1.xpose.msra.mxu0 0.0
        %3883 = vmatprep.subr.mxu0 0.0
        %3884 = vmatpush1.xpose.msra.mxu0 0.0
        %3885 = vmatprep.subr.mxu0 0.0
        %3886 = vmatpush1.xpose.msra.mxu0 0.0
        %3887 = vmatprep.subr.mxu0 0.0
        %3888 = vmatpush1.xpose.msra.mxu0 0.0
        %3889 = vmatprep.subr.mxu0 0.0
        %3890 = vmatpush1.xpose.msra.mxu0 0.0
        %3891 = vmatprep.subr.mxu0 0.0
        %3892 = vmatpush1.xpose.msra.mxu0 0.0
        %3893 = vmatprep.subr.mxu0 0.0
        %3894 = vmatpush1.xpose.msra.mxu0 0.0
        %3895 = vmatprep.subr.mxu0 0.0
        %3896 = vmatpush1.xpose.msra.mxu0 0.0
        %3897 = vmatprep.mubr.f32.mxu0 0.0
        %3898 = vmatmul.mubr.f32.gmra.mrb[0].mxu0 %v3828
        %v3899 = vpop.f32.mrb[0].mxu0
        %v3900 = vadd.f32 0.0, %v3899
        %v3901 = vpop.f32.mrb[0].mxu0
        %3902 = vdwg.mxu0
        %v3904 = vsel %vm2814, %v1099, 0
        %v3907 = vsel %vm2814, %v2987, 0
        %3909 = vmatprep.subr.mxu0 0.0
        %3910 = vmatpush1.xpose.msra.mxu0 %v3907
        %3911 = vmatprep.subr.mxu0 0.0
        %3912 = vmatpush1.xpose.msra.mxu0 0.0
        %3913 = vmatprep.subr.mxu0 0.0
        %3914 = vmatpush1.xpose.msra.mxu0 0.0
        %3915 = vmatprep.subr.mxu0 0.0
        %3916 = vmatpush1.xpose.msra.mxu0 0.0
        %3917 = vmatprep.subr.mxu0 0.0
        %3918 = vmatpush1.xpose.msra.mxu0 0.0
        %3919 = vmatprep.subr.mxu0 0.0
        %3920 = vmatpush1.xpose.msra.mxu0 0.0
        %3921 = vmatprep.subr.mxu0 0.0
        %3922 = vmatpush1.xpose.msra.mxu0 0.0
        %3923 = vmatprep.subr.mxu0 0.0
        %3924 = vmatpush1.xpose.msra.mxu0 0.0
        %3925 = vmatprep.subr.mxu0 0.0
        %3926 = vmatpush1.xpose.msra.mxu0 0.0
        %3927 = vmatprep.subr.mxu0 0.0
        %3928 = vmatpush1.xpose.msra.mxu0 0.0
        %3929 = vmatprep.subr.mxu0 0.0
        %3930 = vmatpush1.xpose.msra.mxu0 0.0
        %3931 = vmatprep.subr.mxu0 0.0
        %3932 = vmatpush1.xpose.msra.mxu0 0.0
        %3933 = vmatprep.subr.mxu0 0.0
        %3934 = vmatpush1.xpose.msra.mxu0 0.0
        %3935 = vmatprep.subr.mxu0 0.0
        %3936 = vmatpush1.xpose.msra.mxu0 0.0
        %3937 = vmatprep.subr.mxu0 0.0
        %3938 = vmatpush1.xpose.msra.mxu0 0.0
        %3939 = vmatprep.subr.mxu0 0.0
        %3940 = vmatpush1.xpose.msra.mxu0 0.0
        %3941 = vmatprep.subr.mxu0 0.0
        %3942 = vmatpush1.xpose.msra.mxu0 0.0
        %3943 = vmatprep.subr.mxu0 0.0
        %3944 = vmatpush1.xpose.msra.mxu0 0.0
        %3945 = vmatprep.subr.mxu0 0.0
        %3946 = vmatpush1.xpose.msra.mxu0 0.0
        %3947 = vmatprep.subr.mxu0 0.0
        %3948 = vmatpush1.xpose.msra.mxu0 0.0
        %3949 = vmatprep.subr.mxu0 0.0
        %3950 = vmatpush1.xpose.msra.mxu0 0.0
        %3951 = vmatprep.subr.mxu0 0.0
        %3952 = vmatpush1.xpose.msra.mxu0 0.0
        %3953 = vmatprep.subr.mxu0 0.0
        %3954 = vmatpush1.xpose.msra.mxu0 0.0
        %3955 = vmatprep.subr.mxu0 0.0
        %3956 = vmatpush1.xpose.msra.mxu0 0.0
        %3957 = vmatprep.subr.mxu0 0.0
        %3958 = vmatpush1.xpose.msra.mxu0 0.0
        %3959 = vmatprep.subr.mxu0 0.0
        %3960 = vmatpush1.xpose.msra.mxu0 0.0
        %3961 = vmatprep.subr.mxu0 0.0
        %3962 = vmatpush1.xpose.msra.mxu0 0.0
        %3963 = vmatprep.subr.mxu0 0.0
        %3964 = vmatpush1.xpose.msra.mxu0 0.0
        %3965 = vmatprep.subr.mxu0 0.0
        %3966 = vmatpush1.xpose.msra.mxu0 0.0
        %3967 = vmatprep.subr.mxu0 0.0
        %3968 = vmatpush1.xpose.msra.mxu0 0.0
        %3969 = vmatprep.subr.mxu0 0.0
        %3970 = vmatpush1.xpose.msra.mxu0 0.0
        %3971 = vmatprep.subr.mxu0 0.0
        %3972 = vmatpush1.xpose.msra.mxu0 0.0
        %3973 = vmatprep.mubr.f32.mxu0 0.0
        %3974 = vmatmul.mubr.f32.gmra.mrb[0].mxu0 %v3904
        %v3975 = vpop.f32.mrb[0].mxu0
        %v3976 = vadd.f32 0.0, %v3975
        %v3977 = vpop.f32.mrb[0].mxu0
        %3978 = vdwg.mxu0
        %v3980 = vsel %vm2814, %v1104, 0
        %v3983 = vsel %vm2814, %v2988, 0
        %3985 = vmatprep.subr.mxu0 0.0
        %3986 = vmatpush1.xpose.msra.mxu0 %v3983
        %3987 = vmatprep.subr.mxu0 0.0
        %3988 = vmatpush1.xpose.msra.mxu0 0.0
        %3989 = vmatprep.subr.mxu0 0.0
        %3990 = vmatpush1.xpose.msra.mxu0 0.0
        %3991 = vmatprep.subr.mxu0 0.0
        %3992 = vmatpush1.xpose.msra.mxu0 0.0
        %3993 = vmatprep.subr.mxu0 0.0
        %3994 = vmatpush1.xpose.msra.mxu0 0.0
        %3995 = vmatprep.subr.mxu0 0.0
        %3996 = vmatpush1.xpose.msra.mxu0 0.0
        %3997 = vmatprep.subr.mxu0 0.0
        %3998 = vmatpush1.xpose.msra.mxu0 0.0
        %3999 = vmatprep.subr.mxu0 0.0
        %4000 = vmatpush1.xpose.msra.mxu0 0.0
        %4001 = vmatprep.subr.mxu0 0.0
        %4002 = vmatpush1.xpose.msra.mxu0 0.0
        %4003 = vmatprep.subr.mxu0 0.0
        %4004 = vmatpush1.xpose.msra.mxu0 0.0
        %4005 = vmatprep.subr.mxu0 0.0
        %4006 = vmatpush1.xpose.msra.mxu0 0.0
        %4007 = vmatprep.subr.mxu0 0.0
        %4008 = vmatpush1.xpose.msra.mxu0 0.0
        %4009 = vmatprep.subr.mxu0 0.0
        %4010 = vmatpush1.xpose.msra.mxu0 0.0
        %4011 = vmatprep.subr.mxu0 0.0
        %4012 = vmatpush1.xpose.msra.mxu0 0.0
        %4013 = vmatprep.subr.mxu0 0.0
        %4014 = vmatpush1.xpose.msra.mxu0 0.0
        %4015 = vmatprep.subr.mxu0 0.0
        %4016 = vmatpush1.xpose.msra.mxu0 0.0
        %4017 = vmatprep.subr.mxu0 0.0
        %4018 = vmatpush1.xpose.msra.mxu0 0.0
        %4019 = vmatprep.subr.mxu0 0.0
        %4020 = vmatpush1.xpose.msra.mxu0 0.0
        %4021 = vmatprep.subr.mxu0 0.0
        %4022 = vmatpush1.xpose.msra.mxu0 0.0
        %4023 = vmatprep.subr.mxu0 0.0
        %4024 = vmatpush1.xpose.msra.mxu0 0.0
        %4025 = vmatprep.subr.mxu0 0.0
        %4026 = vmatpush1.xpose.msra.mxu0 0.0
        %4027 = vmatprep.subr.mxu0 0.0
        %4028 = vmatpush1.xpose.msra.mxu0 0.0
        %4029 = vmatprep.subr.mxu0 0.0
        %4030 = vmatpush1.xpose.msra.mxu0 0.0
        %4031 = vmatprep.subr.mxu0 0.0
        %4032 = vmatpush1.xpose.msra.mxu0 0.0
        %4033 = vmatprep.subr.mxu0 0.0
        %4034 = vmatpush1.xpose.msra.mxu0 0.0
        %4035 = vmatprep.subr.mxu0 0.0
        %4036 = vmatpush1.xpose.msra.mxu0 0.0
        %4037 = vmatprep.subr.mxu0 0.0
        %4038 = vmatpush1.xpose.msra.mxu0 0.0
        %4039 = vmatprep.subr.mxu0 0.0
        %4040 = vmatpush1.xpose.msra.mxu0 0.0
        %4041 = vmatprep.subr.mxu0 0.0
        %4042 = vmatpush1.xpose.msra.mxu0 0.0
        %4043 = vmatprep.subr.mxu0 0.0
        %4044 = vmatpush1.xpose.msra.mxu0 0.0
        %4045 = vmatprep.subr.mxu0 0.0
        %4046 = vmatpush1.xpose.msra.mxu0 0.0
        %4047 = vmatprep.subr.mxu0 0.0
        %4048 = vmatpush1.xpose.msra.mxu0 0.0
        %4049 = vmatprep.mubr.f32.mxu0 0.0
        %4050 = vmatmul.mubr.f32.gmra.mrb[0].mxu0 %v3980
        %v4051 = vpop.f32.mrb[0].mxu0
        %v4052 = vadd.f32 0.0, %v4051
        %v4053 = vpop.f32.mrb[0].mxu0
        %4054 = vdwg.mxu0
        %v4056 = vsel %vm2814, %v1109, 0
        %v4059 = vsel %vm2814, %v2989, 0
        %4061 = vmatprep.subr.mxu0 0.0
        %4062 = vmatpush1.xpose.msra.mxu0 %v4059
        %4063 = vmatprep.subr.mxu0 0.0
        %4064 = vmatpush1.xpose.msra.mxu0 0.0
        %4065 = vmatprep.subr.mxu0 0.0
        %4066 = vmatpush1.xpose.msra.mxu0 0.0
        %4067 = vmatprep.subr.mxu0 0.0
        %4068 = vmatpush1.xpose.msra.mxu0 0.0
        %4069 = vmatprep.subr.mxu0 0.0
        %4070 = vmatpush1.xpose.msra.mxu0 0.0
        %4071 = vmatprep.subr.mxu0 0.0
        %4072 = vmatpush1.xpose.msra.mxu0 0.0
        %4073 = vmatprep.subr.mxu0 0.0
        %4074 = vmatpush1.xpose.msra.mxu0 0.0
        %4075 = vmatprep.subr.mxu0 0.0
        %4076 = vmatpush1.xpose.msra.mxu0 0.0
        %4077 = vmatprep.subr.mxu0 0.0
        %4078 = vmatpush1.xpose.msra.mxu0 0.0
        %4079 = vmatprep.subr.mxu0 0.0
        %4080 = vmatpush1.xpose.msra.mxu0 0.0
        %4081 = vmatprep.subr.mxu0 0.0
        %4082 = vmatpush1.xpose.msra.mxu0 0.0
        %4083 = vmatprep.subr.mxu0 0.0
        %4084 = vmatpush1.xpose.msra.mxu0 0.0
        %4085 = vmatprep.subr.mxu0 0.0
        %4086 = vmatpush1.xpose.msra.mxu0 0.0
        %4087 = vmatprep.subr.mxu0 0.0
        %4088 = vmatpush1.xpose.msra.mxu0 0.0
        %4089 = vmatprep.subr.mxu0 0.0
        %4090 = vmatpush1.xpose.msra.mxu0 0.0
        %4091 = vmatprep.subr.mxu0 0.0
        %4092 = vmatpush1.xpose.msra.mxu0 0.0
        %4093 = vmatprep.subr.mxu0 0.0
        %4094 = vmatpush1.xpose.msra.mxu0 0.0
        %4095 = vmatprep.subr.mxu0 0.0
        %4096 = vmatpush1.xpose.msra.mxu0 0.0
        %4097 = vmatprep.subr.mxu0 0.0
        %4098 = vmatpush1.xpose.msra.mxu0 0.0
        %4099 = vmatprep.subr.mxu0 0.0
        %4100 = vmatpush1.xpose.msra.mxu0 0.0
        %4101 = vmatprep.subr.mxu0 0.0
        %4102 = vmatpush1.xpose.msra.mxu0 0.0
        %4103 = vmatprep.subr.mxu0 0.0
        %4104 = vmatpush1.xpose.msra.mxu0 0.0
        %4105 = vmatprep.subr.mxu0 0.0
        %4106 = vmatpush1.xpose.msra.mxu0 0.0
        %4107 = vmatprep.subr.mxu0 0.0
        %4108 = vmatpush1.xpose.msra.mxu0 0.0
        %4109 = vmatprep.subr.mxu0 0.0
        %4110 = vmatpush1.xpose.msra.mxu0 0.0
        %4111 = vmatprep.subr.mxu0 0.0
        %4112 = vmatpush1.xpose.msra.mxu0 0.0
        %4113 = vmatprep.subr.mxu0 0.0
        %4114 = vmatpush1.xpose.msra.mxu0 0.0
        %4115 = vmatprep.subr.mxu0 0.0
        %4116 = vmatpush1.xpose.msra.mxu0 0.0
        %4117 = vmatprep.subr.mxu0 0.0
        %4118 = vmatpush1.xpose.msra.mxu0 0.0
        %4119 = vmatprep.subr.mxu0 0.0
        %4120 = vmatpush1.xpose.msra.mxu0 0.0
        %4121 = vmatprep.subr.mxu0 0.0
        %4122 = vmatpush1.xpose.msra.mxu0 0.0
        %4123 = vmatprep.subr.mxu0 0.0
        %4124 = vmatpush1.xpose.msra.mxu0 0.0
        %4125 = vmatprep.mubr.f32.mxu0 0.0
        %4126 = vmatmul.mubr.f32.gmra.mrb[0].mxu0 %v4056
        %v4127 = vpop.f32.mrb[0].mxu0
        %v4128 = vadd.f32 0.0, %v4127
        %v4129 = vpop.f32.mrb[0].mxu0
        %4130 = vdwg.mxu0
        %v4132 = vsel %vm2814, %v1114, 0
        %v4135 = vsel %vm2814, %v2990, 0
        %4137 = vmatprep.subr.mxu0 0.0
        %4138 = vmatpush1.xpose.msra.mxu0 %v4135
        %4139 = vmatprep.subr.mxu0 0.0
        %4140 = vmatpush1.xpose.msra.mxu0 0.0
        %4141 = vmatprep.subr.mxu0 0.0
        %4142 = vmatpush1.xpose.msra.mxu0 0.0
        %4143 = vmatprep.subr.mxu0 0.0
        %4144 = vmatpush1.xpose.msra.mxu0 0.0
        %4145 = vmatprep.subr.mxu0 0.0
        %4146 = vmatpush1.xpose.msra.mxu0 0.0
        %4147 = vmatprep.subr.mxu0 0.0
        %4148 = vmatpush1.xpose.msra.mxu0 0.0
        %4149 = vmatprep.subr.mxu0 0.0
        %4150 = vmatpush1.xpose.msra.mxu0 0.0
        %4151 = vmatprep.subr.mxu0 0.0
        %4152 = vmatpush1.xpose.msra.mxu0 0.0
        %4153 = vmatprep.subr.mxu0 0.0
        %4154 = vmatpush1.xpose.msra.mxu0 0.0
        %4155 = vmatprep.subr.mxu0 0.0
        %4156 = vmatpush1.xpose.msra.mxu0 0.0
        %4157 = vmatprep.subr.mxu0 0.0
        %4158 = vmatpush1.xpose.msra.mxu0 0.0
        %4159 = vmatprep.subr.mxu0 0.0
        %4160 = vmatpush1.xpose.msra.mxu0 0.0
        %4161 = vmatprep.subr.mxu0 0.0
        %4162 = vmatpush1.xpose.msra.mxu0 0.0
        %4163 = vmatprep.subr.mxu0 0.0
        %4164 = vmatpush1.xpose.msra.mxu0 0.0
        %4165 = vmatprep.subr.mxu0 0.0
        %4166 = vmatpush1.xpose.msra.mxu0 0.0
        %4167 = vmatprep.subr.mxu0 0.0
        %4168 = vmatpush1.xpose.msra.mxu0 0.0
        %4169 = vmatprep.subr.mxu0 0.0
        %4170 = vmatpush1.xpose.msra.mxu0 0.0
        %4171 = vmatprep.subr.mxu0 0.0
        %4172 = vmatpush1.xpose.msra.mxu0 0.0
        %4173 = vmatprep.subr.mxu0 0.0
        %4174 = vmatpush1.xpose.msra.mxu0 0.0
        %4175 = vmatprep.subr.mxu0 0.0
        %4176 = vmatpush1.xpose.msra.mxu0 0.0
        %4177 = vmatprep.subr.mxu0 0.0
        %4178 = vmatpush1.xpose.msra.mxu0 0.0
        %4179 = vmatprep.subr.mxu0 0.0
        %4180 = vmatpush1.xpose.msra.mxu0 0.0
        %4181 = vmatprep.subr.mxu0 0.0
        %4182 = vmatpush1.xpose.msra.mxu0 0.0
        %4183 = vmatprep.subr.mxu0 0.0
        %4184 = vmatpush1.xpose.msra.mxu0 0.0
        %4185 = vmatprep.subr.mxu0 0.0
        %4186 = vmatpush1.xpose.msra.mxu0 0.0
        %4187 = vmatprep.subr.mxu0 0.0
        %4188 = vmatpush1.xpose.msra.mxu0 0.0
        %4189 = vmatprep.subr.mxu0 0.0
        %4190 = vmatpush1.xpose.msra.mxu0 0.0
        %4191 = vmatprep.subr.mxu0 0.0
        %4192 = vmatpush1.xpose.msra.mxu0 0.0
        %4193 = vmatprep.subr.mxu0 0.0
        %4194 = vmatpush1.xpose.msra.mxu0 0.0
        %4195 = vmatprep.subr.mxu0 0.0
        %4196 = vmatpush1.xpose.msra.mxu0 0.0
        %4197 = vmatprep.subr.mxu0 0.0
        %4198 = vmatpush1.xpose.msra.mxu0 0.0
        %4199 = vmatprep.subr.mxu0 0.0
        %4200 = vmatpush1.xpose.msra.mxu0 0.0
        %4201 = vmatprep.mubr.f32.mxu0 0.0
        %4202 = vmatmul.mubr.f32.gmra.mrb[0].mxu0 %v4132
        %v4203 = vpop.f32.mrb[0].mxu0
        %v4204 = vadd.f32 0.0, %v4203
        %v4205 = vpop.f32.mrb[0].mxu0
        %4206 = vdwg.mxu0
        %4207 = vxpose.xlu0.b32.start [1/16] %v3064, 128
        %4208 = vxpose.xlu0.b32.cont [2/16] %v3140, 128
        %4209 = vxpose.xlu0.b32.cont [3/16] %v3216, 128
        %4210 = vxpose.xlu0.b32.cont [4/16] %v3292, 128
        %4211 = vxpose.xlu0.b32.cont [5/16] %v3368, 128
        %4212 = vxpose.xlu0.b32.cont [6/16] %v3444, 128
        %4213 = vxpose.xlu0.b32.cont [7/16] %v3520, 128
        %4214 = vxpose.xlu0.b32.cont [8/16] %v3596, 128
        %4215 = vxpose.xlu0.b32.cont [9/16] %v3672, 128
        %4216 = vxpose.xlu0.b32.cont [10/16] %v3748, 128
        %4217 = vxpose.xlu0.b32.cont [11/16] %v3824, 128
        %4218 = vxpose.xlu0.b32.cont [12/16] %v3900, 128
        %4219 = vxpose.xlu0.b32.cont [13/16] %v3976, 128
        %4220 = vxpose.xlu0.b32.cont [14/16] %v4052, 128
        %4221 = vxpose.xlu0.b32.cont [15/16] %v4128, 128
        %4222 = vxpose.xlu0.b32.end [16/16] %v4204, 128
        %v4223 = vpop.trf.xlu0
        %v4224 = vpop.trf.xlu0
        %v4225 = vpop.trf.xlu0
        %v4226 = vpop.trf.xlu0
        %v4227 = vpop.trf.xlu0
        %v4228 = vpop.trf.xlu0
        %v4229 = vpop.trf.xlu0
        %v4230 = vpop.trf.xlu0
        %v4231 = vpop.trf.xlu0
        %v4232 = vpop.trf.xlu0
        %v4233 = vpop.trf.xlu0
        %v4234 = vpop.trf.xlu0
        %v4235 = vpop.trf.xlu0
        %v4236 = vpop.trf.xlu0
        %v4237 = vpop.trf.xlu0
        %v4238 = vpop.trf.xlu0
        %v4239 = vadd.f32 %v593, %v4223
        %v4240 = vld [vmem:[%s5] sm:$0x1]
        %v4241 = vld [vmem:[%s6] sm:$0x1]
        %4242 = vadd.xlane.f32.xlu0 %v4239
        %v4243 = vpop.xlane.xlu0 %4242
        %v4244 = vrcp.pop 128.0
        %v4245 = vmul.f32 %v4243, %v4244
        %v4246 = vsub.f32 %v4239, %v4245
        %v4247 = vmul.f32 %v4246, %v4246
        %4248 = vadd.xlane.f32.xlu0 %v4247
        %v4249 = vpop.xlane.xlu0 %4248
        %v4250 = vmul.f32 %v4249, %v4244
        %v4251 = vadd.f32 %v4250, 1e-05
        %v4252 = vrsqrt.pop %v4251
        %v4253 = vmul.f32 %v4246, %v4252
        %v4255 = vlaneseq
        %v4256 = vshrl.u32 %v4255, 7
        %v4257 = vsub.s32 0, %v4256
        %v4258 = vrot.slane %v4240, %v4257
        %v4260 = vmul.f32 %v4253, %v4258
        %v4262 = vlaneseq
        %v4263 = vshrl.u32 %v4262, 7
        %v4264 = vsub.s32 0, %v4263
        %v4265 = vrot.slane %v4241, %v4264
        %v4267 = vadd.f32 %v4260, %v4265
        %v4268 = vld [vmem:[%s4] sm:$0xff]
        %v4269 = vld [vmem:[%s4 + $0x8] sm:$0xff]
        %v4270 = vld [vmem:[%s4 + $0x10] sm:$0xff]
        %v4271 = vld [vmem:[%s4 + $0x18] sm:$0xff]
        %v4272 = vld [vmem:[%s4 + $0x20] sm:$0xff]
        %v4273 = vld [vmem:[%s4 + $0x28] sm:$0xff]
        %v4274 = vld [vmem:[%s4 + $0x30] sm:$0xff]
        %v4275 = vld [vmem:[%s4 + $0x38] sm:$0xff]
        %v4276 = vld [vmem:[%s4 + $0x40] sm:$0xff]
        %v4277 = vld [vmem:[%s4 + $0x48] sm:$0xff]
        %v4278 = vld [vmem:[%s4 + $0x50] sm:$0xff]
        %v4279 = vld [vmem:[%s4 + $0x58] sm:$0xff]
        %v4280 = vld [vmem:[%s4 + $0x60] sm:$0xff]
        %v4281 = vld [vmem:[%s4 + $0x68] sm:$0xff]
        %v4282 = vld [vmem:[%s4 + $0x70] sm:$0xff]
        %v4283 = vld [vmem:[%s4 + $0x78] sm:$0xff]
        %v4284 = vld [vmem:[%s4 + $0x80] sm:$0xff]
        %v4285 = vld [vmem:[%s4 + $0x88] sm:$0xff]
        %v4286 = vld [vmem:[%s4 + $0x90] sm:$0xff]
        %v4287 = vld [vmem:[%s4 + $0x98] sm:$0xff]
        %v4288 = vld [vmem:[%s4 + $0xa0] sm:$0xff]
        %v4289 = vld [vmem:[%s4 + $0xa8] sm:$0xff]
        %v4290 = vld [vmem:[%s4 + $0xb0] sm:$0xff]
        %v4291 = vld [vmem:[%s4 + $0xb8] sm:$0xff]
        %v4292 = vld [vmem:[%s4 + $0xc0] sm:$0xff]
        %v4293 = vld [vmem:[%s4 + $0xc8] sm:$0xff]
        %v4294 = vld [vmem:[%s4 + $0xd0] sm:$0xff]
        %v4295 = vld [vmem:[%s4 + $0xd8] sm:$0xff]
        %v4296 = vld [vmem:[%s4 + $0xe0] sm:$0xff]
        %v4297 = vld [vmem:[%s4 + $0xe8] sm:$0xff]
        %v4298 = vld [vmem:[%s4 + $0xf0] sm:$0xff]
        %v4299 = vld [vmem:[%s4 + $0xf8] sm:$0xff]
        %v4300 = vld [vmem:[%s4 + $0x100] sm:$0xff]
        %v4301 = vld [vmem:[%s4 + $0x108] sm:$0xff]
        %v4302 = vld [vmem:[%s4 + $0x110] sm:$0xff]
        %v4303 = vld [vmem:[%s4 + $0x118] sm:$0xff]
        %v4304 = vld [vmem:[%s4 + $0x120] sm:$0xff]
        %v4305 = vld [vmem:[%s4 + $0x128] sm:$0xff]
        %v4306 = vld [vmem:[%s4 + $0x130] sm:$0xff]
        %v4307 = vld [vmem:[%s4 + $0x138] sm:$0xff]
        %v4308 = vld [vmem:[%s4 + $0x140] sm:$0xff]
        %v4309 = vld [vmem:[%s4 + $0x148] sm:$0xff]
        %v4310 = vld [vmem:[%s4 + $0x150] sm:$0xff]
        %v4311 = vld [vmem:[%s4 + $0x158] sm:$0xff]
        %v4312 = vld [vmem:[%s4 + $0x160] sm:$0xff]
        %v4313 = vld [vmem:[%s4 + $0x168] sm:$0xff]
        %v4314 = vld [vmem:[%s4 + $0x170] sm:$0xff]
        %v4315 = vld [vmem:[%s4 + $0x178] sm:$0xff]
        %4316 = vmatprep.subr.mxu0 0.0
        %4317 = vmatpush1.xpose.msra.mxu0 %v4267
        %4318 = vmatprep.subr.mxu0 0.0
        %4319 = vmatpush1.xpose.msra.mxu0 0.0
        %4320 = vmatprep.subr.mxu0 0.0
        %4321 = vmatpush1.xpose.msra.mxu0 0.0
        %4322 = vmatprep.subr.mxu0 0.0
        %4323 = vmatpush1.xpose.msra.mxu0 0.0
        %4324 = vmatprep.subr.mxu0 0.0
        %4325 = vmatpush1.xpose.msra.mxu0 0.0
        %4326 = vmatprep.subr.mxu0 0.0
        %4327 = vmatpush1.xpose.msra.mxu0 0.0
        %4328 = vmatprep.subr.mxu0 0.0
        %4329 = vmatpush1.xpose.msra.mxu0 0.0
        %4330 = vmatprep.subr.mxu0 0.0
        %4331 = vmatpush1.xpose.msra.mxu0 0.0
        %4332 = vmatprep.subr.mxu0 0.0
        %4333 = vmatpush1.xpose.msra.mxu0 0.0
        %4334 = vmatprep.subr.mxu0 0.0
        %4335 = vmatpush1.xpose.msra.mxu0 0.0
        %4336 = vmatprep.subr.mxu0 0.0
        %4337 = vmatpush1.xpose.msra.mxu0 0.0
        %4338 = vmatprep.subr.mxu0 0.0
        %4339 = vmatpush1.xpose.msra.mxu0 0.0
        %4340 = vmatprep.subr.mxu0 0.0
        %4341 = vmatpush1.xpose.msra.mxu0 0.0
        %4342 = vmatprep.subr.mxu0 0.0
        %4343 = vmatpush1.xpose.msra.mxu0 0.0
        %4344 = vmatprep.subr.mxu0 0.0
        %4345 = vmatpush1.xpose.msra.mxu0 0.0
        %4346 = vmatprep.subr.mxu0 0.0
        %4347 = vmatpush1.xpose.msra.mxu0 0.0
        %4348 = vmatprep.subr.mxu0 0.0
        %4349 = vmatpush1.xpose.msra.mxu0 0.0
        %4350 = vmatprep.subr.mxu0 0.0
        %4351 = vmatpush1.xpose.msra.mxu0 0.0
        %4352 = vmatprep.subr.mxu0 0.0
        %4353 = vmatpush1.xpose.msra.mxu0 0.0
        %4354 = vmatprep.subr.mxu0 0.0
        %4355 = vmatpush1.xpose.msra.mxu0 0.0
        %4356 = vmatprep.subr.mxu0 0.0
        %4357 = vmatpush1.xpose.msra.mxu0 0.0
        %4358 = vmatprep.subr.mxu0 0.0
        %4359 = vmatpush1.xpose.msra.mxu0 0.0
        %4360 = vmatprep.subr.mxu0 0.0
        %4361 = vmatpush1.xpose.msra.mxu0 0.0
        %4362 = vmatprep.subr.mxu0 0.0
        %4363 = vmatpush1.xpose.msra.mxu0 0.0
        %4364 = vmatprep.subr.mxu0 0.0
        %4365 = vmatpush1.xpose.msra.mxu0 0.0
        %4366 = vmatprep.subr.mxu0 0.0
        %4367 = vmatpush1.xpose.msra.mxu0 0.0
        %4368 = vmatprep.subr.mxu0 0.0
        %4369 = vmatpush1.xpose.msra.mxu0 0.0
        %4370 = vmatprep.subr.mxu0 0.0
        %4371 = vmatpush1.xpose.msra.mxu0 0.0
        %4372 = vmatprep.subr.mxu0 0.0
        %4373 = vmatpush1.xpose.msra.mxu0 0.0
        %4374 = vmatprep.subr.mxu0 0.0
        %4375 = vmatpush1.xpose.msra.mxu0 0.0
        %4376 = vmatprep.subr.mxu0 0.0
        %4377 = vmatpush1.xpose.msra.mxu0 0.0
        %4378 = vmatprep.subr.mxu0 0.0
        %4379 = vmatpush1.xpose.msra.mxu0 0.0
        %4380 = vmatprep.mubr.f32.mxu0 0.0
        %4381 = vmatmul.mubr.f32.gmra.mrb[0].mxu0 %v4268
        %v4382 = vpop.f32.mrb[0].mxu0
        %v4383 = vadd.f32 0.0, %v4382
        %v4384 = vpop.f32.mrb[0].mxu0
        %4385 = vmatprep.mubr.f32.mxu0 0.0
        %4386 = vmatmul.mubr.f32.gmra.mrb[0].mxu0 %v4269
        %v4387 = vpop.f32.mrb[0].mxu0
        %v4388 = vadd.f32 0.0, %v4387
        %v4389 = vpop.f32.mrb[0].mxu0
        %4390 = vmatprep.mubr.f32.mxu0 0.0
        %4391 = vmatmul.mubr.f32.gmra.mrb[0].mxu0 %v4270
        %v4392 = vpop.f32.mrb[0].mxu0
        %v4393 = vadd.f32 0.0, %v4392
        %v4394 = vpop.f32.mrb[0].mxu0
        %4395 = vmatprep.mubr.f32.mxu0 0.0
        %4396 = vmatmul.mubr.f32.gmra.mrb[0].mxu0 %v4271
        %v4397 = vpop.f32.mrb[0].mxu0
        %v4398 = vadd.f32 0.0, %v4397
        %v4399 = vpop.f32.mrb[0].mxu0
        %4400 = vmatprep.mubr.f32.mxu0 0.0
        %4401 = vmatmul.mubr.f32.gmra.mrb[0].mxu0 %v4272
        %v4402 = vpop.f32.mrb[0].mxu0
        %v4403 = vadd.f32 0.0, %v4402
        %v4404 = vpop.f32.mrb[0].mxu0
        %4405 = vmatprep.mubr.f32.mxu0 0.0
        %4406 = vmatmul.mubr.f32.gmra.mrb[0].mxu0 %v4273
        %v4407 = vpop.f32.mrb[0].mxu0
        %v4408 = vadd.f32 0.0, %v4407
        %v4409 = vpop.f32.mrb[0].mxu0
        %4410 = vmatprep.mubr.f32.mxu0 0.0
        %4411 = vmatmul.mubr.f32.gmra.mrb[0].mxu0 %v4274
        %v4412 = vpop.f32.mrb[0].mxu0
        %v4413 = vadd.f32 0.0, %v4412
        %v4414 = vpop.f32.mrb[0].mxu0
        %4415 = vmatprep.mubr.f32.mxu0 0.0
        %4416 = vmatmul.mubr.f32.gmra.mrb[0].mxu0 %v4275
        %v4417 = vpop.f32.mrb[0].mxu0
        %v4418 = vadd.f32 0.0, %v4417
        %v4419 = vpop.f32.mrb[0].mxu0
        %4420 = vmatprep.mubr.f32.mxu0 0.0
        %4421 = vmatmul.mubr.f32.gmra.mrb[0].mxu0 %v4276
        %v4422 = vpop.f32.mrb[0].mxu0
        %v4423 = vadd.f32 0.0, %v4422
        %v4424 = vpop.f32.mrb[0].mxu0
        %4425 = vmatprep.mubr.f32.mxu0 0.0
        %4426 = vmatmul.mubr.f32.gmra.mrb[0].mxu0 %v4277
        %v4427 = vpop.f32.mrb[0].mxu0
        %v4428 = vadd.f32 0.0, %v4427
        %v4429 = vpop.f32.mrb[0].mxu0
        %4430 = vmatprep.mubr.f32.mxu0 0.0
        %4431 = vmatmul.mubr.f32.gmra.mrb[0].mxu0 %v4278
        %v4432 = vpop.f32.mrb[0].mxu0
        %v4433 = vadd.f32 0.0, %v4432
        %v4434 = vpop.f32.mrb[0].mxu0
        %4435 = vmatprep.mubr.f32.mxu0 0.0
        %4436 = vmatmul.mubr.f32.gmra.mrb[0].mxu0 %v4279
        %v4437 = vpop.f32.mrb[0].mxu0
        %v4438 = vadd.f32 0.0, %v4437
        %v4439 = vpop.f32.mrb[0].mxu0
        %4440 = vmatprep.mubr.f32.mxu0 0.0
        %4441 = vmatmul.mubr.f32.gmra.mrb[0].mxu0 %v4280
        %v4442 = vpop.f32.mrb[0].mxu0
        %v4443 = vadd.f32 0.0, %v4442
        %v4444 = vpop.f32.mrb[0].mxu0
        %4445 = vmatprep.mubr.f32.mxu0 0.0
        %4446 = vmatmul.mubr.f32.gmra.mrb[0].mxu0 %v4281
        %v4447 = vpop.f32.mrb[0].mxu0
        %v4448 = vadd.f32 0.0, %v4447
        %v4449 = vpop.f32.mrb[0].mxu0
        %4450 = vmatprep.mubr.f32.mxu0 0.0
        %4451 = vmatmul.mubr.f32.gmra.mrb[0].mxu0 %v4282
        %v4452 = vpop.f32.mrb[0].mxu0
        %v4453 = vadd.f32 0.0, %v4452
        %v4454 = vpop.f32.mrb[0].mxu0
        %4455 = vmatprep.mubr.f32.mxu0 0.0
        %4456 = vmatmul.mubr.f32.gmra.mrb[0].mxu0 %v4283
        %v4457 = vpop.f32.mrb[0].mxu0
        %v4458 = vadd.f32 0.0, %v4457
        %v4459 = vpop.f32.mrb[0].mxu0
        %4460 = vmatprep.mubr.f32.mxu0 0.0
        %4461 = vmatmul.mubr.f32.gmra.mrb[0].mxu0 %v4284
        %v4462 = vpop.f32.mrb[0].mxu0
        %v4463 = vadd.f32 0.0, %v4462
        %v4464 = vpop.f32.mrb[0].mxu0
        %4465 = vmatprep.mubr.f32.mxu0 0.0
        %4466 = vmatmul.mubr.f32.gmra.mrb[0].mxu0 %v4285
        %v4467 = vpop.f32.mrb[0].mxu0
        %v4468 = vadd.f32 0.0, %v4467
        %v4469 = vpop.f32.mrb[0].mxu0
        %4470 = vmatprep.mubr.f32.mxu0 0.0
        %4471 = vmatmul.mubr.f32.gmra.mrb[0].mxu0 %v4286
        %v4472 = vpop.f32.mrb[0].mxu0
        %v4473 = vadd.f32 0.0, %v4472
        %v4474 = vpop.f32.mrb[0].mxu0
        %4475 = vmatprep.mubr.f32.mxu0 0.0
        %4476 = vmatmul.mubr.f32.gmra.mrb[0].mxu0 %v4287
        %v4477 = vpop.f32.mrb[0].mxu0
        %v4478 = vadd.f32 0.0, %v4477
        %v4479 = vpop.f32.mrb[0].mxu0
        %4480 = vmatprep.mubr.f32.mxu0 0.0
        %4481 = vmatmul.mubr.f32.gmra.mrb[0].mxu0 %v4288
        %v4482 = vpop.f32.mrb[0].mxu0
        %v4483 = vadd.f32 0.0, %v4482
        %v4484 = vpop.f32.mrb[0].mxu0
        %4485 = vmatprep.mubr.f32.mxu0 0.0
        %4486 = vmatmul.mubr.f32.gmra.mrb[0].mxu0 %v4289
        %v4487 = vpop.f32.mrb[0].mxu0
        %v4488 = vadd.f32 0.0, %v4487
        %v4489 = vpop.f32.mrb[0].mxu0
        %4490 = vmatprep.mubr.f32.mxu0 0.0
        %4491 = vmatmul.mubr.f32.gmra.mrb[0].mxu0 %v4290
        %v4492 = vpop.f32.mrb[0].mxu0
        %v4493 = vadd.f32 0.0, %v4492
        %v4494 = vpop.f32.mrb[0].mxu0
        %4495 = vmatprep.mubr.f32.mxu0 0.0
        %4496 = vmatmul.mubr.f32.gmra.mrb[0].mxu0 %v4291
        %v4497 = vpop.f32.mrb[0].mxu0
        %v4498 = vadd.f32 0.0, %v4497
        %v4499 = vpop.f32.mrb[0].mxu0
        %4500 = vmatprep.mubr.f32.mxu0 0.0
        %4501 = vmatmul.mubr.f32.gmra.mrb[0].mxu0 %v4292
        %v4502 = vpop.f32.mrb[0].mxu0
        %v4503 = vadd.f32 0.0, %v4502
        %v4504 = vpop.f32.mrb[0].mxu0
        %4505 = vmatprep.mubr.f32.mxu0 0.0
        %4506 = vmatmul.mubr.f32.gmra.mrb[0].mxu0 %v4293
        %v4507 = vpop.f32.mrb[0].mxu0
        %v4508 = vadd.f32 0.0, %v4507
        %v4509 = vpop.f32.mrb[0].mxu0
        %4510 = vmatprep.mubr.f32.mxu0 0.0
        %4511 = vmatmul.mubr.f32.gmra.mrb[0].mxu0 %v4294
        %v4512 = vpop.f32.mrb[0].mxu0
        %v4513 = vadd.f32 0.0, %v4512
        %v4514 = vpop.f32.mrb[0].mxu0
        %4515 = vmatprep.mubr.f32.mxu0 0.0
        %4516 = vmatmul.mubr.f32.gmra.mrb[0].mxu0 %v4295
        %v4517 = vpop.f32.mrb[0].mxu0
        %v4518 = vadd.f32 0.0, %v4517
        %v4519 = vpop.f32.mrb[0].mxu0
        %4520 = vmatprep.mubr.f32.mxu0 0.0
        %4521 = vmatmul.mubr.f32.gmra.mrb[0].mxu0 %v4296
        %v4522 = vpop.f32.mrb[0].mxu0
        %v4523 = vadd.f32 0.0, %v4522
        %v4524 = vpop.f32.mrb[0].mxu0
        %4525 = vmatprep.mubr.f32.mxu0 0.0
        %4526 = vmatmul.mubr.f32.gmra.mrb[0].mxu0 %v4297
        %v4527 = vpop.f32.mrb[0].mxu0
        %v4528 = vadd.f32 0.0, %v4527
        %v4529 = vpop.f32.mrb[0].mxu0
        %4530 = vmatprep.mubr.f32.mxu0 0.0
        %4531 = vmatmul.mubr.f32.gmra.mrb[0].mxu0 %v4298
        %v4532 = vpop.f32.mrb[0].mxu0
        %v4533 = vadd.f32 0.0, %v4532
        %v4534 = vpop.f32.mrb[0].mxu0
        %4535 = vmatprep.mubr.f32.mxu0 0.0
        %4536 = vmatmul.mubr.f32.gmra.mrb[0].mxu0 %v4299
        %v4537 = vpop.f32.mrb[0].mxu0
        %v4538 = vadd.f32 0.0, %v4537
        %v4539 = vpop.f32.mrb[0].mxu0
        %4540 = vmatprep.mubr.f32.mxu0 0.0
        %4541 = vmatmul.mubr.f32.gmra.mrb[0].mxu0 %v4300
        %v4542 = vpop.f32.mrb[0].mxu0
        %v4543 = vadd.f32 0.0, %v4542
        %v4544 = vpop.f32.mrb[0].mxu0
        %4545 = vmatprep.mubr.f32.mxu0 0.0
        %4546 = vmatmul.mubr.f32.gmra.mrb[0].mxu0 %v4301
        %v4547 = vpop.f32.mrb[0].mxu0
        %v4548 = vadd.f32 0.0, %v4547
        %v4549 = vpop.f32.mrb[0].mxu0
        %4550 = vmatprep.mubr.f32.mxu0 0.0
        %4551 = vmatmul.mubr.f32.gmra.mrb[0].mxu0 %v4302
        %v4552 = vpop.f32.mrb[0].mxu0
        %v4553 = vadd.f32 0.0, %v4552
        %v4554 = vpop.f32.mrb[0].mxu0
        %4555 = vmatprep.mubr.f32.mxu0 0.0
        %4556 = vmatmul.mubr.f32.gmra.mrb[0].mxu0 %v4303
        %v4557 = vpop.f32.mrb[0].mxu0
        %v4558 = vadd.f32 0.0, %v4557
        %v4559 = vpop.f32.mrb[0].mxu0
        %4560 = vmatprep.mubr.f32.mxu0 0.0
        %4561 = vmatmul.mubr.f32.gmra.mrb[0].mxu0 %v4304
        %v4562 = vpop.f32.mrb[0].mxu0
        %v4563 = vadd.f32 0.0, %v4562
        %v4564 = vpop.f32.mrb[0].mxu0
        %4565 = vmatprep.mubr.f32.mxu0 0.0
        %4566 = vmatmul.mubr.f32.gmra.mrb[0].mxu0 %v4305
        %v4567 = vpop.f32.mrb[0].mxu0
        %v4568 = vadd.f32 0.0, %v4567
        %v4569 = vpop.f32.mrb[0].mxu0
        %4570 = vmatprep.mubr.f32.mxu0 0.0
        %4571 = vmatmul.mubr.f32.gmra.mrb[0].mxu0 %v4306
        %v4572 = vpop.f32.mrb[0].mxu0
        %v4573 = vadd.f32 0.0, %v4572
        %v4574 = vpop.f32.mrb[0].mxu0
        %4575 = vmatprep.mubr.f32.mxu0 0.0
        %4576 = vmatmul.mubr.f32.gmra.mrb[0].mxu0 %v4307
        %v4577 = vpop.f32.mrb[0].mxu0
        %v4578 = vadd.f32 0.0, %v4577
        %v4579 = vpop.f32.mrb[0].mxu0
        %4580 = vmatprep.mubr.f32.mxu0 0.0
        %4581 = vmatmul.mubr.f32.gmra.mrb[0].mxu0 %v4308
        %v4582 = vpop.f32.mrb[0].mxu0
        %v4583 = vadd.f32 0.0, %v4582
        %v4584 = vpop.f32.mrb[0].mxu0
        %4585 = vmatprep.mubr.f32.mxu0 0.0
        %4586 = vmatmul.mubr.f32.gmra.mrb[0].mxu0 %v4309
        %v4587 = vpop.f32.mrb[0].mxu0
        %v4588 = vadd.f32 0.0, %v4587
        %v4589 = vpop.f32.mrb[0].mxu0
        %4590 = vmatprep.mubr.f32.mxu0 0.0
        %4591 = vmatmul.mubr.f32.gmra.mrb[0].mxu0 %v4310
        %v4592 = vpop.f32.mrb[0].mxu0
        %v4593 = vadd.f32 0.0, %v4592
        %v4594 = vpop.f32.mrb[0].mxu0
        %4595 = vmatprep.mubr.f32.mxu0 0.0
        %4596 = vmatmul.mubr.f32.gmra.mrb[0].mxu0 %v4311
        %v4597 = vpop.f32.mrb[0].mxu0
        %v4598 = vadd.f32 0.0, %v4597
        %v4599 = vpop.f32.mrb[0].mxu0
        %4600 = vmatprep.mubr.f32.mxu0 0.0
        %4601 = vmatmul.mubr.f32.gmra.mrb[0].mxu0 %v4312
        %v4602 = vpop.f32.mrb[0].mxu0
        %v4603 = vadd.f32 0.0, %v4602
        %v4604 = vpop.f32.mrb[0].mxu0
        %4605 = vmatprep.mubr.f32.mxu0 0.0
        %4606 = vmatmul.mubr.f32.gmra.mrb[0].mxu0 %v4313
        %v4607 = vpop.f32.mrb[0].mxu0
        %v4608 = vadd.f32 0.0, %v4607
        %v4609 = vpop.f32.mrb[0].mxu0
        %4610 = vmatprep.mubr.f32.mxu0 0.0
        %4611 = vmatmul.mubr.f32.gmra.mrb[0].mxu0 %v4314
        %v4612 = vpop.f32.mrb[0].mxu0
        %v4613 = vadd.f32 0.0, %v4612
        %v4614 = vpop.f32.mrb[0].mxu0
        %4615 = vmatprep.mubr.f32.mxu0 0.0
        %4616 = vmatmul.mubr.f32.gmra.mrb[0].mxu0 %v4315
        %v4617 = vpop.f32.mrb[0].mxu0
        %v4618 = vadd.f32 0.0, %v4617
        %v4619 = vpop.f32.mrb[0].mxu0
        %4620 = vdwg.mxu0
        %v4621 = vmul.f32 %v4383, 0.35355338
        %v4622 = vmul.f32 %v4388, 0.35355338
        %v4623 = vmul.f32 %v4393, 0.35355338
        %v4624 = vmul.f32 %v4398, 0.35355338
        %v4625 = vmul.f32 %v4403, 0.35355338
        %v4626 = vmul.f32 %v4408, 0.35355338
        %v4627 = vmul.f32 %v4413, 0.35355338
        %v4628 = vmul.f32 %v4418, 0.35355338
        %v4629 = vmul.f32 %v4423, 0.35355338
        %v4630 = vmul.f32 %v4428, 0.35355338
        %v4631 = vmul.f32 %v4433, 0.35355338
        %v4632 = vmul.f32 %v4438, 0.35355338
        %v4633 = vmul.f32 %v4443, 0.35355338
        %v4634 = vmul.f32 %v4448, 0.35355338
        %v4635 = vmul.f32 %v4453, 0.35355338
        %v4636 = vmul.f32 %v4458, 0.35355338
        %4637 = vxpose.xlu0.b32.start [1/16] %v4621, 128
        %4638 = vxpose.xlu0.b32.cont [2/16] 0.0, 128
        %4639 = vxpose.xlu0.b32.cont [3/16] 0.0, 128
        %4640 = vxpose.xlu0.b32.cont [4/16] 0.0, 128
        %4641 = vxpose.xlu0.b32.cont [5/16] 0.0, 128
        %4642 = vxpose.xlu0.b32.cont [6/16] 0.0, 128
        %4643 = vxpose.xlu0.b32.cont [7/16] 0.0, 128
        %4644 = vxpose.xlu0.b32.cont [8/16] 0.0, 128
        %4645 = vxpose.xlu0.b32.cont [9/16] 0.0, 128
        %4646 = vxpose.xlu0.b32.cont [10/16] 0.0, 128
        %4647 = vxpose.xlu0.b32.cont [11/16] 0.0, 128
        %4648 = vxpose.xlu0.b32.cont [12/16] 0.0, 128
        %4649 = vxpose.xlu0.b32.cont [13/16] 0.0, 128
        %4650 = vxpose.xlu0.b32.cont [14/16] 0.0, 128
        %4651 = vxpose.xlu0.b32.cont [15/16] 0.0, 128
        %4652 = vxpose.xlu0.b32.end [16/16] 0.0, 128
        %v4653 = vpop.trf.xlu0
        %v4654 = vpop.trf.xlu0
        %v4655 = vpop.trf.xlu0
        %v4656 = vpop.trf.xlu0
        %v4657 = vpop.trf.xlu0
        %v4658 = vpop.trf.xlu0
        %v4659 = vpop.trf.xlu0
        %v4660 = vpop.trf.xlu0
        %v4661 = vpop.trf.xlu0
        %v4662 = vpop.trf.xlu0
        %v4663 = vpop.trf.xlu0
        %v4664 = vpop.trf.xlu0
        %v4665 = vpop.trf.xlu0
        %v4666 = vpop.trf.xlu0
        %v4667 = vpop.trf.xlu0
        %v4668 = vpop.trf.xlu0
        %4669 = vxpose.xlu0.b32.start [1/16] %v4622, 128
        %4670 = vxpose.xlu0.b32.cont [2/16] 0.0, 128
        %4671 = vxpose.xlu0.b32.cont [3/16] 0.0, 128
        %4672 = vxpose.xlu0.b32.cont [4/16] 0.0, 128
        %4673 = vxpose.xlu0.b32.cont [5/16] 0.0, 128
        %4674 = vxpose.xlu0.b32.cont [6/16] 0.0, 128
        %4675 = vxpose.xlu0.b32.cont [7/16] 0.0, 128
        %4676 = vxpose.xlu0.b32.cont [8/16] 0.0, 128
        %4677 = vxpose.xlu0.b32.cont [9/16] 0.0, 128
        %4678 = vxpose.xlu0.b32.cont [10/16] 0.0, 128
        %4679 = vxpose.xlu0.b32.cont [11/16] 0.0, 128
        %4680 = vxpose.xlu0.b32.cont [12/16] 0.0, 128
        %4681 = vxpose.xlu0.b32.cont [13/16] 0.0, 128
        %4682 = vxpose.xlu0.b32.cont [14/16] 0.0, 128
        %4683 = vxpose.xlu0.b32.cont [15/16] 0.0, 128
        %4684 = vxpose.xlu0.b32.end [16/16] 0.0, 128
        %v4685 = vpop.trf.xlu0
        %v4686 = vpop.trf.xlu0
        %v4687 = vpop.trf.xlu0
        %v4688 = vpop.trf.xlu0
        %v4689 = vpop.trf.xlu0
        %v4690 = vpop.trf.xlu0
        %v4691 = vpop.trf.xlu0
        %v4692 = vpop.trf.xlu0
        %v4693 = vpop.trf.xlu0
        %v4694 = vpop.trf.xlu0
        %v4695 = vpop.trf.xlu0
        %v4696 = vpop.trf.xlu0
        %v4697 = vpop.trf.xlu0
        %v4698 = vpop.trf.xlu0
        %v4699 = vpop.trf.xlu0
        %v4700 = vpop.trf.xlu0
        %4701 = vxpose.xlu0.b32.start [1/16] %v4623, 128
        %4702 = vxpose.xlu0.b32.cont [2/16] 0.0, 128
        %4703 = vxpose.xlu0.b32.cont [3/16] 0.0, 128
        %4704 = vxpose.xlu0.b32.cont [4/16] 0.0, 128
        %4705 = vxpose.xlu0.b32.cont [5/16] 0.0, 128
        %4706 = vxpose.xlu0.b32.cont [6/16] 0.0, 128
        %4707 = vxpose.xlu0.b32.cont [7/16] 0.0, 128
        %4708 = vxpose.xlu0.b32.cont [8/16] 0.0, 128
        %4709 = vxpose.xlu0.b32.cont [9/16] 0.0, 128
        %4710 = vxpose.xlu0.b32.cont [10/16] 0.0, 128
        %4711 = vxpose.xlu0.b32.cont [11/16] 0.0, 128
        %4712 = vxpose.xlu0.b32.cont [12/16] 0.0, 128
        %4713 = vxpose.xlu0.b32.cont [13/16] 0.0, 128
        %4714 = vxpose.xlu0.b32.cont [14/16] 0.0, 128
        %4715 = vxpose.xlu0.b32.cont [15/16] 0.0, 128
        %4716 = vxpose.xlu0.b32.end [16/16] 0.0, 128
        %v4717 = vpop.trf.xlu0
        %v4718 = vpop.trf.xlu0
        %v4719 = vpop.trf.xlu0
        %v4720 = vpop.trf.xlu0
        %v4721 = vpop.trf.xlu0
        %v4722 = vpop.trf.xlu0
        %v4723 = vpop.trf.xlu0
        %v4724 = vpop.trf.xlu0
        %v4725 = vpop.trf.xlu0
        %v4726 = vpop.trf.xlu0
        %v4727 = vpop.trf.xlu0
        %v4728 = vpop.trf.xlu0
        %v4729 = vpop.trf.xlu0
        %v4730 = vpop.trf.xlu0
        %v4731 = vpop.trf.xlu0
        %v4732 = vpop.trf.xlu0
        %4733 = vxpose.xlu0.b32.start [1/16] %v4624, 128
        %4734 = vxpose.xlu0.b32.cont [2/16] 0.0, 128
        %4735 = vxpose.xlu0.b32.cont [3/16] 0.0, 128
        %4736 = vxpose.xlu0.b32.cont [4/16] 0.0, 128
        %4737 = vxpose.xlu0.b32.cont [5/16] 0.0, 128
        %4738 = vxpose.xlu0.b32.cont [6/16] 0.0, 128
        %4739 = vxpose.xlu0.b32.cont [7/16] 0.0, 128
        %4740 = vxpose.xlu0.b32.cont [8/16] 0.0, 128
        %4741 = vxpose.xlu0.b32.cont [9/16] 0.0, 128
        %4742 = vxpose.xlu0.b32.cont [10/16] 0.0, 128
        %4743 = vxpose.xlu0.b32.cont [11/16] 0.0, 128
        %4744 = vxpose.xlu0.b32.cont [12/16] 0.0, 128
        %4745 = vxpose.xlu0.b32.cont [13/16] 0.0, 128
        %4746 = vxpose.xlu0.b32.cont [14/16] 0.0, 128
        %4747 = vxpose.xlu0.b32.cont [15/16] 0.0, 128
        %4748 = vxpose.xlu0.b32.end [16/16] 0.0, 128
        %v4749 = vpop.trf.xlu0
        %v4750 = vpop.trf.xlu0
        %v4751 = vpop.trf.xlu0
        %v4752 = vpop.trf.xlu0
        %v4753 = vpop.trf.xlu0
        %v4754 = vpop.trf.xlu0
        %v4755 = vpop.trf.xlu0
        %v4756 = vpop.trf.xlu0
        %v4757 = vpop.trf.xlu0
        %v4758 = vpop.trf.xlu0
        %v4759 = vpop.trf.xlu0
        %v4760 = vpop.trf.xlu0
        %v4761 = vpop.trf.xlu0
        %v4762 = vpop.trf.xlu0
        %v4763 = vpop.trf.xlu0
        %v4764 = vpop.trf.xlu0
        %4765 = vxpose.xlu0.b32.start [1/16] %v4625, 128
        %4766 = vxpose.xlu0.b32.cont [2/16] 0.0, 128
        %4767 = vxpose.xlu0.b32.cont [3/16] 0.0, 128
        %4768 = vxpose.xlu0.b32.cont [4/16] 0.0, 128
        %4769 = vxpose.xlu0.b32.cont [5/16] 0.0, 128
        %4770 = vxpose.xlu0.b32.cont [6/16] 0.0, 128
        %4771 = vxpose.xlu0.b32.cont [7/16] 0.0, 128
        %4772 = vxpose.xlu0.b32.cont [8/16] 0.0, 128
        %4773 = vxpose.xlu0.b32.cont [9/16] 0.0, 128
        %4774 = vxpose.xlu0.b32.cont [10/16] 0.0, 128
        %4775 = vxpose.xlu0.b32.cont [11/16] 0.0, 128
        %4776 = vxpose.xlu0.b32.cont [12/16] 0.0, 128
        %4777 = vxpose.xlu0.b32.cont [13/16] 0.0, 128
        %4778 = vxpose.xlu0.b32.cont [14/16] 0.0, 128
        %4779 = vxpose.xlu0.b32.cont [15/16] 0.0, 128
        %4780 = vxpose.xlu0.b32.end [16/16] 0.0, 128
        %v4781 = vpop.trf.xlu0
        %v4782 = vpop.trf.xlu0
        %v4783 = vpop.trf.xlu0
        %v4784 = vpop.trf.xlu0
        %v4785 = vpop.trf.xlu0
        %v4786 = vpop.trf.xlu0
        %v4787 = vpop.trf.xlu0
        %v4788 = vpop.trf.xlu0
        %v4789 = vpop.trf.xlu0
        %v4790 = vpop.trf.xlu0
        %v4791 = vpop.trf.xlu0
        %v4792 = vpop.trf.xlu0
        %v4793 = vpop.trf.xlu0
        %v4794 = vpop.trf.xlu0
        %v4795 = vpop.trf.xlu0
        %v4796 = vpop.trf.xlu0
        %4797 = vxpose.xlu0.b32.start [1/16] %v4626, 128
        %4798 = vxpose.xlu0.b32.cont [2/16] 0.0, 128
        %4799 = vxpose.xlu0.b32.cont [3/16] 0.0, 128
        %4800 = vxpose.xlu0.b32.cont [4/16] 0.0, 128
        %4801 = vxpose.xlu0.b32.cont [5/16] 0.0, 128
        %4802 = vxpose.xlu0.b32.cont [6/16] 0.0, 128
        %4803 = vxpose.xlu0.b32.cont [7/16] 0.0, 128
        %4804 = vxpose.xlu0.b32.cont [8/16] 0.0, 128
        %4805 = vxpose.xlu0.b32.cont [9/16] 0.0, 128
        %4806 = vxpose.xlu0.b32.cont [10/16] 0.0, 128
        %4807 = vxpose.xlu0.b32.cont [11/16] 0.0, 128
        %4808 = vxpose.xlu0.b32.cont [12/16] 0.0, 128
        %4809 = vxpose.xlu0.b32.cont [13/16] 0.0, 128
        %4810 = vxpose.xlu0.b32.cont [14/16] 0.0, 128
        %4811 = vxpose.xlu0.b32.cont [15/16] 0.0, 128
        %4812 = vxpose.xlu0.b32.end [16/16] 0.0, 128
        %v4813 = vpop.trf.xlu0
        %v4814 = vpop.trf.xlu0
        %v4815 = vpop.trf.xlu0
        %v4816 = vpop.trf.xlu0
        %v4817 = vpop.trf.xlu0
        %v4818 = vpop.trf.xlu0
        %v4819 = vpop.trf.xlu0
        %v4820 = vpop.trf.xlu0
        %v4821 = vpop.trf.xlu0
        %v4822 = vpop.trf.xlu0
        %v4823 = vpop.trf.xlu0
        %v4824 = vpop.trf.xlu0
        %v4825 = vpop.trf.xlu0
        %v4826 = vpop.trf.xlu0
        %v4827 = vpop.trf.xlu0
        %v4828 = vpop.trf.xlu0
        %4829 = vxpose.xlu0.b32.start [1/16] %v4627, 128
        %4830 = vxpose.xlu0.b32.cont [2/16] 0.0, 128
        %4831 = vxpose.xlu0.b32.cont [3/16] 0.0, 128
        %4832 = vxpose.xlu0.b32.cont [4/16] 0.0, 128
        %4833 = vxpose.xlu0.b32.cont [5/16] 0.0, 128
        %4834 = vxpose.xlu0.b32.cont [6/16] 0.0, 128
        %4835 = vxpose.xlu0.b32.cont [7/16] 0.0, 128
        %4836 = vxpose.xlu0.b32.cont [8/16] 0.0, 128
        %4837 = vxpose.xlu0.b32.cont [9/16] 0.0, 128
        %4838 = vxpose.xlu0.b32.cont [10/16] 0.0, 128
        %4839 = vxpose.xlu0.b32.cont [11/16] 0.0, 128
        %4840 = vxpose.xlu0.b32.cont [12/16] 0.0, 128
        %4841 = vxpose.xlu0.b32.cont [13/16] 0.0, 128
        %4842 = vxpose.xlu0.b32.cont [14/16] 0.0, 128
        %4843 = vxpose.xlu0.b32.cont [15/16] 0.0, 128
        %4844 = vxpose.xlu0.b32.end [16/16] 0.0, 128
        %v4845 = vpop.trf.xlu0
        %v4846 = vpop.trf.xlu0
        %v4847 = vpop.trf.xlu0
        %v4848 = vpop.trf.xlu0
        %v4849 = vpop.trf.xlu0
        %v4850 = vpop.trf.xlu0
        %v4851 = vpop.trf.xlu0
        %v4852 = vpop.trf.xlu0
        %v4853 = vpop.trf.xlu0
        %v4854 = vpop.trf.xlu0
        %v4855 = vpop.trf.xlu0
        %v4856 = vpop.trf.xlu0
        %v4857 = vpop.trf.xlu0
        %v4858 = vpop.trf.xlu0
        %v4859 = vpop.trf.xlu0
        %v4860 = vpop.trf.xlu0
        %4861 = vxpose.xlu0.b32.start [1/16] %v4628, 128
        %4862 = vxpose.xlu0.b32.cont [2/16] 0.0, 128
        %4863 = vxpose.xlu0.b32.cont [3/16] 0.0, 128
        %4864 = vxpose.xlu0.b32.cont [4/16] 0.0, 128
        %4865 = vxpose.xlu0.b32.cont [5/16] 0.0, 128
        %4866 = vxpose.xlu0.b32.cont [6/16] 0.0, 128
        %4867 = vxpose.xlu0.b32.cont [7/16] 0.0, 128
        %4868 = vxpose.xlu0.b32.cont [8/16] 0.0, 128
        %4869 = vxpose.xlu0.b32.cont [9/16] 0.0, 128
        %4870 = vxpose.xlu0.b32.cont [10/16] 0.0, 128
        %4871 = vxpose.xlu0.b32.cont [11/16] 0.0, 128
        %4872 = vxpose.xlu0.b32.cont [12/16] 0.0, 128
        %4873 = vxpose.xlu0.b32.cont [13/16] 0.0, 128
        %4874 = vxpose.xlu0.b32.cont [14/16] 0.0, 128
        %4875 = vxpose.xlu0.b32.cont [15/16] 0.0, 128
        %4876 = vxpose.xlu0.b32.end [16/16] 0.0, 128
        %v4877 = vpop.trf.xlu0
        %v4878 = vpop.trf.xlu0
        %v4879 = vpop.trf.xlu0
        %v4880 = vpop.trf.xlu0
        %v4881 = vpop.trf.xlu0
        %v4882 = vpop.trf.xlu0
        %v4883 = vpop.trf.xlu0
        %v4884 = vpop.trf.xlu0
        %v4885 = vpop.trf.xlu0
        %v4886 = vpop.trf.xlu0
        %v4887 = vpop.trf.xlu0
        %v4888 = vpop.trf.xlu0
        %v4889 = vpop.trf.xlu0
        %v4890 = vpop.trf.xlu0
        %v4891 = vpop.trf.xlu0
        %v4892 = vpop.trf.xlu0
        %4893 = vxpose.xlu0.b32.start [1/16] %v4629, 128
        %4894 = vxpose.xlu0.b32.cont [2/16] 0.0, 128
        %4895 = vxpose.xlu0.b32.cont [3/16] 0.0, 128
        %4896 = vxpose.xlu0.b32.cont [4/16] 0.0, 128
        %4897 = vxpose.xlu0.b32.cont [5/16] 0.0, 128
        %4898 = vxpose.xlu0.b32.cont [6/16] 0.0, 128
        %4899 = vxpose.xlu0.b32.cont [7/16] 0.0, 128
        %4900 = vxpose.xlu0.b32.cont [8/16] 0.0, 128
        %4901 = vxpose.xlu0.b32.cont [9/16] 0.0, 128
        %4902 = vxpose.xlu0.b32.cont [10/16] 0.0, 128
        %4903 = vxpose.xlu0.b32.cont [11/16] 0.0, 128
        %4904 = vxpose.xlu0.b32.cont [12/16] 0.0, 128
        %4905 = vxpose.xlu0.b32.cont [13/16] 0.0, 128
        %4906 = vxpose.xlu0.b32.cont [14/16] 0.0, 128
        %4907 = vxpose.xlu0.b32.cont [15/16] 0.0, 128
        %4908 = vxpose.xlu0.b32.end [16/16] 0.0, 128
        %v4909 = vpop.trf.xlu0
        %v4910 = vpop.trf.xlu0
        %v4911 = vpop.trf.xlu0
        %v4912 = vpop.trf.xlu0
        %v4913 = vpop.trf.xlu0
        %v4914 = vpop.trf.xlu0
        %v4915 = vpop.trf.xlu0
        %v4916 = vpop.trf.xlu0
        %v4917 = vpop.trf.xlu0
        %v4918 = vpop.trf.xlu0
        %v4919 = vpop.trf.xlu0
        %v4920 = vpop.trf.xlu0
        %v4921 = vpop.trf.xlu0
        %v4922 = vpop.trf.xlu0
        %v4923 = vpop.trf.xlu0
        %v4924 = vpop.trf.xlu0
        %4925 = vxpose.xlu0.b32.start [1/16] %v4630, 128
        %4926 = vxpose.xlu0.b32.cont [2/16] 0.0, 128
        %4927 = vxpose.xlu0.b32.cont [3/16] 0.0, 128
        %4928 = vxpose.xlu0.b32.cont [4/16] 0.0, 128
        %4929 = vxpose.xlu0.b32.cont [5/16] 0.0, 128
        %4930 = vxpose.xlu0.b32.cont [6/16] 0.0, 128
        %4931 = vxpose.xlu0.b32.cont [7/16] 0.0, 128
        %4932 = vxpose.xlu0.b32.cont [8/16] 0.0, 128
        %4933 = vxpose.xlu0.b32.cont [9/16] 0.0, 128
        %4934 = vxpose.xlu0.b32.cont [10/16] 0.0, 128
        %4935 = vxpose.xlu0.b32.cont [11/16] 0.0, 128
        %4936 = vxpose.xlu0.b32.cont [12/16] 0.0, 128
        %4937 = vxpose.xlu0.b32.cont [13/16] 0.0, 128
        %4938 = vxpose.xlu0.b32.cont [14/16] 0.0, 128
        %4939 = vxpose.xlu0.b32.cont [15/16] 0.0, 128
        %4940 = vxpose.xlu0.b32.end [16/16] 0.0, 128
        %v4941 = vpop.trf.xlu0
        %v4942 = vpop.trf.xlu0
        %v4943 = vpop.trf.xlu0
        %v4944 = vpop.trf.xlu0
        %v4945 = vpop.trf.xlu0
        %v4946 = vpop.trf.xlu0
        %v4947 = vpop.trf.xlu0
        %v4948 = vpop.trf.xlu0
        %v4949 = vpop.trf.xlu0
        %v4950 = vpop.trf.xlu0
        %v4951 = vpop.trf.xlu0
        %v4952 = vpop.trf.xlu0
        %v4953 = vpop.trf.xlu0
        %v4954 = vpop.trf.xlu0
        %v4955 = vpop.trf.xlu0
        %v4956 = vpop.trf.xlu0
        %4957 = vxpose.xlu0.b32.start [1/16] %v4631, 128
        %4958 = vxpose.xlu0.b32.cont [2/16] 0.0, 128
        %4959 = vxpose.xlu0.b32.cont [3/16] 0.0, 128
        %4960 = vxpose.xlu0.b32.cont [4/16] 0.0, 128
        %4961 = vxpose.xlu0.b32.cont [5/16] 0.0, 128
        %4962 = vxpose.xlu0.b32.cont [6/16] 0.0, 128
        %4963 = vxpose.xlu0.b32.cont [7/16] 0.0, 128
        %4964 = vxpose.xlu0.b32.cont [8/16] 0.0, 128
        %4965 = vxpose.xlu0.b32.cont [9/16] 0.0, 128
        %4966 = vxpose.xlu0.b32.cont [10/16] 0.0, 128
        %4967 = vxpose.xlu0.b32.cont [11/16] 0.0, 128
        %4968 = vxpose.xlu0.b32.cont [12/16] 0.0, 128
        %4969 = vxpose.xlu0.b32.cont [13/16] 0.0, 128
        %4970 = vxpose.xlu0.b32.cont [14/16] 0.0, 128
        %4971 = vxpose.xlu0.b32.cont [15/16] 0.0, 128
        %4972 = vxpose.xlu0.b32.end [16/16] 0.0, 128
        %v4973 = vpop.trf.xlu0
        %v4974 = vpop.trf.xlu0
        %v4975 = vpop.trf.xlu0
        %v4976 = vpop.trf.xlu0
        %v4977 = vpop.trf.xlu0
        %v4978 = vpop.trf.xlu0
        %v4979 = vpop.trf.xlu0
        %v4980 = vpop.trf.xlu0
        %v4981 = vpop.trf.xlu0
        %v4982 = vpop.trf.xlu0
        %v4983 = vpop.trf.xlu0
        %v4984 = vpop.trf.xlu0
        %v4985 = vpop.trf.xlu0
        %v4986 = vpop.trf.xlu0
        %v4987 = vpop.trf.xlu0
        %v4988 = vpop.trf.xlu0
        %4989 = vxpose.xlu0.b32.start [1/16] %v4632, 128
        %4990 = vxpose.xlu0.b32.cont [2/16] 0.0, 128
        %4991 = vxpose.xlu0.b32.cont [3/16] 0.0, 128
        %4992 = vxpose.xlu0.b32.cont [4/16] 0.0, 128
        %4993 = vxpose.xlu0.b32.cont [5/16] 0.0, 128
        %4994 = vxpose.xlu0.b32.cont [6/16] 0.0, 128
        %4995 = vxpose.xlu0.b32.cont [7/16] 0.0, 128
        %4996 = vxpose.xlu0.b32.cont [8/16] 0.0, 128
        %4997 = vxpose.xlu0.b32.cont [9/16] 0.0, 128
        %4998 = vxpose.xlu0.b32.cont [10/16] 0.0, 128
        %4999 = vxpose.xlu0.b32.cont [11/16] 0.0, 128
        %5000 = vxpose.xlu0.b32.cont [12/16] 0.0, 128
        %5001 = vxpose.xlu0.b32.cont [13/16] 0.0, 128
        %5002 = vxpose.xlu0.b32.cont [14/16] 0.0, 128
        %5003 = vxpose.xlu0.b32.cont [15/16] 0.0, 128
        %5004 = vxpose.xlu0.b32.end [16/16] 0.0, 128
        %v5005 = vpop.trf.xlu0
        %v5006 = vpop.trf.xlu0
        %v5007 = vpop.trf.xlu0
        %v5008 = vpop.trf.xlu0
        %v5009 = vpop.trf.xlu0
        %v5010 = vpop.trf.xlu0
        %v5011 = vpop.trf.xlu0
        %v5012 = vpop.trf.xlu0
        %v5013 = vpop.trf.xlu0
        %v5014 = vpop.trf.xlu0
        %v5015 = vpop.trf.xlu0
        %v5016 = vpop.trf.xlu0
        %v5017 = vpop.trf.xlu0
        %v5018 = vpop.trf.xlu0
        %v5019 = vpop.trf.xlu0
        %v5020 = vpop.trf.xlu0
        %5021 = vxpose.xlu0.b32.start [1/16] %v4633, 128
        %5022 = vxpose.xlu0.b32.cont [2/16] 0.0, 128
        %5023 = vxpose.xlu0.b32.cont [3/16] 0.0, 128
        %5024 = vxpose.xlu0.b32.cont [4/16] 0.0, 128
        %5025 = vxpose.xlu0.b32.cont [5/16] 0.0, 128
        %5026 = vxpose.xlu0.b32.cont [6/16] 0.0, 128
        %5027 = vxpose.xlu0.b32.cont [7/16] 0.0, 128
        %5028 = vxpose.xlu0.b32.cont [8/16] 0.0, 128
        %5029 = vxpose.xlu0.b32.cont [9/16] 0.0, 128
        %5030 = vxpose.xlu0.b32.cont [10/16] 0.0, 128
        %5031 = vxpose.xlu0.b32.cont [11/16] 0.0, 128
        %5032 = vxpose.xlu0.b32.cont [12/16] 0.0, 128
        %5033 = vxpose.xlu0.b32.cont [13/16] 0.0, 128
        %5034 = vxpose.xlu0.b32.cont [14/16] 0.0, 128
        %5035 = vxpose.xlu0.b32.cont [15/16] 0.0, 128
        %5036 = vxpose.xlu0.b32.end [16/16] 0.0, 128
        %v5037 = vpop.trf.xlu0
        %v5038 = vpop.trf.xlu0
        %v5039 = vpop.trf.xlu0
        %v5040 = vpop.trf.xlu0
        %v5041 = vpop.trf.xlu0
        %v5042 = vpop.trf.xlu0
        %v5043 = vpop.trf.xlu0
        %v5044 = vpop.trf.xlu0
        %v5045 = vpop.trf.xlu0
        %v5046 = vpop.trf.xlu0
        %v5047 = vpop.trf.xlu0
        %v5048 = vpop.trf.xlu0
        %v5049 = vpop.trf.xlu0
        %v5050 = vpop.trf.xlu0
        %v5051 = vpop.trf.xlu0
        %v5052 = vpop.trf.xlu0
        %5053 = vxpose.xlu0.b32.start [1/16] %v4634, 128
        %5054 = vxpose.xlu0.b32.cont [2/16] 0.0, 128
        %5055 = vxpose.xlu0.b32.cont [3/16] 0.0, 128
        %5056 = vxpose.xlu0.b32.cont [4/16] 0.0, 128
        %5057 = vxpose.xlu0.b32.cont [5/16] 0.0, 128
        %5058 = vxpose.xlu0.b32.cont [6/16] 0.0, 128
        %5059 = vxpose.xlu0.b32.cont [7/16] 0.0, 128
        %5060 = vxpose.xlu0.b32.cont [8/16] 0.0, 128
        %5061 = vxpose.xlu0.b32.cont [9/16] 0.0, 128
        %5062 = vxpose.xlu0.b32.cont [10/16] 0.0, 128
        %5063 = vxpose.xlu0.b32.cont [11/16] 0.0, 128
        %5064 = vxpose.xlu0.b32.cont [12/16] 0.0, 128
        %5065 = vxpose.xlu0.b32.cont [13/16] 0.0, 128
        %5066 = vxpose.xlu0.b32.cont [14/16] 0.0, 128
        %5067 = vxpose.xlu0.b32.cont [15/16] 0.0, 128
        %5068 = vxpose.xlu0.b32.end [16/16] 0.0, 128
        %v5069 = vpop.trf.xlu0
        %v5070 = vpop.trf.xlu0
        %v5071 = vpop.trf.xlu0
        %v5072 = vpop.trf.xlu0
        %v5073 = vpop.trf.xlu0
        %v5074 = vpop.trf.xlu0
        %v5075 = vpop.trf.xlu0
        %v5076 = vpop.trf.xlu0
        %v5077 = vpop.trf.xlu0
        %v5078 = vpop.trf.xlu0
        %v5079 = vpop.trf.xlu0
        %v5080 = vpop.trf.xlu0
        %v5081 = vpop.trf.xlu0
        %v5082 = vpop.trf.xlu0
        %v5083 = vpop.trf.xlu0
        %v5084 = vpop.trf.xlu0
        %5085 = vxpose.xlu0.b32.start [1/16] %v4635, 128
        %5086 = vxpose.xlu0.b32.cont [2/16] 0.0, 128
        %5087 = vxpose.xlu0.b32.cont [3/16] 0.0, 128
        %5088 = vxpose.xlu0.b32.cont [4/16] 0.0, 128
        %5089 = vxpose.xlu0.b32.cont [5/16] 0.0, 128
        %5090 = vxpose.xlu0.b32.cont [6/16] 0.0, 128
        %5091 = vxpose.xlu0.b32.cont [7/16] 0.0, 128
        %5092 = vxpose.xlu0.b32.cont [8/16] 0.0, 128
        %5093 = vxpose.xlu0.b32.cont [9/16] 0.0, 128
        %5094 = vxpose.xlu0.b32.cont [10/16] 0.0, 128
        %5095 = vxpose.xlu0.b32.cont [11/16] 0.0, 128
        %5096 = vxpose.xlu0.b32.cont [12/16] 0.0, 128
        %5097 = vxpose.xlu0.b32.cont [13/16] 0.0, 128
        %5098 = vxpose.xlu0.b32.cont [14/16] 0.0, 128
        %5099 = vxpose.xlu0.b32.cont [15/16] 0.0, 128
        %5100 = vxpose.xlu0.b32.end [16/16] 0.0, 128
        %v5101 = vpop.trf.xlu0
        %v5102 = vpop.trf.xlu0
        %v5103 = vpop.trf.xlu0
        %v5104 = vpop.trf.xlu0
        %v5105 = vpop.trf.xlu0
        %v5106 = vpop.trf.xlu0
        %v5107 = vpop.trf.xlu0
        %v5108 = vpop.trf.xlu0
        %v5109 = vpop.trf.xlu0
        %v5110 = vpop.trf.xlu0
        %v5111 = vpop.trf.xlu0
        %v5112 = vpop.trf.xlu0
        %v5113 = vpop.trf.xlu0
        %v5114 = vpop.trf.xlu0
        %v5115 = vpop.trf.xlu0
        %v5116 = vpop.trf.xlu0
        %5117 = vxpose.xlu0.b32.start [1/16] %v4636, 128
        %5118 = vxpose.xlu0.b32.cont [2/16] 0.0, 128
        %5119 = vxpose.xlu0.b32.cont [3/16] 0.0, 128
        %5120 = vxpose.xlu0.b32.cont [4/16] 0.0, 128
        %5121 = vxpose.xlu0.b32.cont [5/16] 0.0, 128
        %5122 = vxpose.xlu0.b32.cont [6/16] 0.0, 128
        %5123 = vxpose.xlu0.b32.cont [7/16] 0.0, 128
        %5124 = vxpose.xlu0.b32.cont [8/16] 0.0, 128
        %5125 = vxpose.xlu0.b32.cont [9/16] 0.0, 128
        %5126 = vxpose.xlu0.b32.cont [10/16] 0.0, 128
        %5127 = vxpose.xlu0.b32.cont [11/16] 0.0, 128
        %5128 = vxpose.xlu0.b32.cont [12/16] 0.0, 128
        %5129 = vxpose.xlu0.b32.cont [13/16] 0.0, 128
        %5130 = vxpose.xlu0.b32.cont [14/16] 0.0, 128
        %5131 = vxpose.xlu0.b32.cont [15/16] 0.0, 128
        %5132 = vxpose.xlu0.b32.end [16/16] 0.0, 128
        %v5133 = vpop.trf.xlu0
        %v5134 = vpop.trf.xlu0
        %v5135 = vpop.trf.xlu0
        %v5136 = vpop.trf.xlu0
        %v5137 = vpop.trf.xlu0
        %v5138 = vpop.trf.xlu0
        %v5139 = vpop.trf.xlu0
        %v5140 = vpop.trf.xlu0
        %v5141 = vpop.trf.xlu0
        %v5142 = vpop.trf.xlu0
        %v5143 = vpop.trf.xlu0
        %v5144 = vpop.trf.xlu0
        %v5145 = vpop.trf.xlu0
        %v5146 = vpop.trf.xlu0
        %v5147 = vpop.trf.xlu0
        %v5148 = vpop.trf.xlu0
        %v5150 = vsel %vm1645, %v4653, 0
        %5152 = vmatprep.subr.mxu0 0.0
        %5153 = vmatpush1.msra.mxu0 %v4463
        %5154 = vmatprep.subr.mxu0 0.0
        %5155 = vmatpush1.msra.mxu0 0.0
        %5156 = vmatprep.subr.mxu0 0.0
        %5157 = vmatpush1.msra.mxu0 0.0
        %5158 = vmatprep.subr.mxu0 0.0
        %5159 = vmatpush1.msra.mxu0 0.0
        %5160 = vmatprep.subr.mxu0 0.0
        %5161 = vmatpush1.msra.mxu0 0.0
        %5162 = vmatprep.subr.mxu0 0.0
        %5163 = vmatpush1.msra.mxu0 0.0
        %5164 = vmatprep.subr.mxu0 0.0
        %5165 = vmatpush1.msra.mxu0 0.0
        %5166 = vmatprep.subr.mxu0 0.0
        %5167 = vmatpush1.msra.mxu0 0.0
        %5168 = vmatprep.subr.mxu0 0.0
        %5169 = vmatpush1.msra.mxu0 0.0
        %5170 = vmatprep.subr.mxu0 0.0
        %5171 = vmatpush1.msra.mxu0 0.0
        %5172 = vmatprep.subr.mxu0 0.0
        %5173 = vmatpush1.msra.mxu0 0.0
        %5174 = vmatprep.subr.mxu0 0.0
        %5175 = vmatpush1.msra.mxu0 0.0
        %5176 = vmatprep.subr.mxu0 0.0
        %5177 = vmatpush1.msra.mxu0 0.0
        %5178 = vmatprep.subr.mxu0 0.0
        %5179 = vmatpush1.msra.mxu0 0.0
        %5180 = vmatprep.subr.mxu0 0.0
        %5181 = vmatpush1.msra.mxu0 0.0
        %5182 = vmatprep.subr.mxu0 0.0
        %5183 = vmatpush1.msra.mxu0 0.0
        %5184 = vmatprep.subr.mxu0 0.0
        %5185 = vmatpush1.msra.mxu0 0.0
        %5186 = vmatprep.subr.mxu0 0.0
        %5187 = vmatpush1.msra.mxu0 0.0
        %5188 = vmatprep.subr.mxu0 0.0
        %5189 = vmatpush1.msra.mxu0 0.0
        %5190 = vmatprep.subr.mxu0 0.0
        %5191 = vmatpush1.msra.mxu0 0.0
        %5192 = vmatprep.subr.mxu0 0.0
        %5193 = vmatpush1.msra.mxu0 0.0
        %5194 = vmatprep.subr.mxu0 0.0
        %5195 = vmatpush1.msra.mxu0 0.0
        %5196 = vmatprep.subr.mxu0 0.0
        %5197 = vmatpush1.msra.mxu0 0.0
        %5198 = vmatprep.subr.mxu0 0.0
        %5199 = vmatpush1.msra.mxu0 0.0
        %5200 = vmatprep.subr.mxu0 0.0
        %5201 = vmatpush1.msra.mxu0 0.0
        %5202 = vmatprep.subr.mxu0 0.0
        %5203 = vmatpush1.msra.mxu0 0.0
        %5204 = vmatprep.subr.mxu0 0.0
        %5205 = vmatpush1.msra.mxu0 0.0
        %5206 = vmatprep.subr.mxu0 0.0
        %5207 = vmatpush1.msra.mxu0 0.0
        %5208 = vmatprep.subr.mxu0 0.0
        %5209 = vmatpush1.msra.mxu0 0.0
        %5210 = vmatprep.subr.mxu0 0.0
        %5211 = vmatpush1.msra.mxu0 0.0
        %5212 = vmatprep.subr.mxu0 0.0
        %5213 = vmatpush1.msra.mxu0 0.0
        %5214 = vmatprep.subr.mxu0 0.0
        %5215 = vmatpush1.msra.mxu0 0.0
        %5216 = vmatprep.mubr.f32.mxu0 0.0
        %5217 = vmatmul.mubr.f32.gmra.mrb[0].mxu0 %v5150
        %v5218 = vpop.f32.mrb[0].mxu0
        %v5219 = vadd.f32 0.0, %v5218
        %v5220 = vpop.f32.mrb[0].mxu0
        %5221 = vdwg.mxu0
        %v5223 = vsel %vm1645, %v4685, 0
        %5225 = vmatprep.subr.mxu0 0.0
        %5226 = vmatpush1.msra.mxu0 %v4468
        %5227 = vmatprep.subr.mxu0 0.0
        %5228 = vmatpush1.msra.mxu0 0.0
        %5229 = vmatprep.subr.mxu0 0.0
        %5230 = vmatpush1.msra.mxu0 0.0
        %5231 = vmatprep.subr.mxu0 0.0
        %5232 = vmatpush1.msra.mxu0 0.0
        %5233 = vmatprep.subr.mxu0 0.0
        %5234 = vmatpush1.msra.mxu0 0.0
        %5235 = vmatprep.subr.mxu0 0.0
        %5236 = vmatpush1.msra.mxu0 0.0
        %5237 = vmatprep.subr.mxu0 0.0
        %5238 = vmatpush1.msra.mxu0 0.0
        %5239 = vmatprep.subr.mxu0 0.0
        %5240 = vmatpush1.msra.mxu0 0.0
        %5241 = vmatprep.subr.mxu0 0.0
        %5242 = vmatpush1.msra.mxu0 0.0
        %5243 = vmatprep.subr.mxu0 0.0
        %5244 = vmatpush1.msra.mxu0 0.0
        %5245 = vmatprep.subr.mxu0 0.0
        %5246 = vmatpush1.msra.mxu0 0.0
        %5247 = vmatprep.subr.mxu0 0.0
        %5248 = vmatpush1.msra.mxu0 0.0
        %5249 = vmatprep.subr.mxu0 0.0
        %5250 = vmatpush1.msra.mxu0 0.0
        %5251 = vmatprep.subr.mxu0 0.0
        %5252 = vmatpush1.msra.mxu0 0.0
        %5253 = vmatprep.subr.mxu0 0.0
        %5254 = vmatpush1.msra.mxu0 0.0
        %5255 = vmatprep.subr.mxu0 0.0
        %5256 = vmatpush1.msra.mxu0 0.0
        %5257 = vmatprep.subr.mxu0 0.0
        %5258 = vmatpush1.msra.mxu0 0.0
        %5259 = vmatprep.subr.mxu0 0.0
        %5260 = vmatpush1.msra.mxu0 0.0
        %5261 = vmatprep.subr.mxu0 0.0
        %5262 = vmatpush1.msra.mxu0 0.0
        %5263 = vmatprep.subr.mxu0 0.0
        %5264 = vmatpush1.msra.mxu0 0.0
        %5265 = vmatprep.subr.mxu0 0.0
        %5266 = vmatpush1.msra.mxu0 0.0
        %5267 = vmatprep.subr.mxu0 0.0
        %5268 = vmatpush1.msra.mxu0 0.0
        %5269 = vmatprep.subr.mxu0 0.0
        %5270 = vmatpush1.msra.mxu0 0.0
        %5271 = vmatprep.subr.mxu0 0.0
        %5272 = vmatpush1.msra.mxu0 0.0
        %5273 = vmatprep.subr.mxu0 0.0
        %5274 = vmatpush1.msra.mxu0 0.0
        %5275 = vmatprep.subr.mxu0 0.0
        %5276 = vmatpush1.msra.mxu0 0.0
        %5277 = vmatprep.subr.mxu0 0.0
        %5278 = vmatpush1.msra.mxu0 0.0
        %5279 = vmatprep.subr.mxu0 0.0
        %5280 = vmatpush1.msra.mxu0 0.0
        %5281 = vmatprep.subr.mxu0 0.0
        %5282 = vmatpush1.msra.mxu0 0.0
        %5283 = vmatprep.subr.mxu0 0.0
        %5284 = vmatpush1.msra.mxu0 0.0
        %5285 = vmatprep.subr.mxu0 0.0
        %5286 = vmatpush1.msra.mxu0 0.0
        %5287 = vmatprep.subr.mxu0 0.0
        %5288 = vmatpush1.msra.mxu0 0.0
        %5289 = vmatprep.mubr.f32.mxu0 0.0
        %5290 = vmatmul.mubr.f32.gmra.mrb[0].mxu0 %v5223
        %v5291 = vpop.f32.mrb[0].mxu0
        %v5292 = vadd.f32 0.0, %v5291
        %v5293 = vpop.f32.mrb[0].mxu0
        %5294 = vdwg.mxu0
        %v5296 = vsel %vm1645, %v4717, 0
        %5298 = vmatprep.subr.mxu0 0.0
        %5299 = vmatpush1.msra.mxu0 %v4473
        %5300 = vmatprep.subr.mxu0 0.0
        %5301 = vmatpush1.msra.mxu0 0.0
        %5302 = vmatprep.subr.mxu0 0.0
        %5303 = vmatpush1.msra.mxu0 0.0
        %5304 = vmatprep.subr.mxu0 0.0
        %5305 = vmatpush1.msra.mxu0 0.0
        %5306 = vmatprep.subr.mxu0 0.0
        %5307 = vmatpush1.msra.mxu0 0.0
        %5308 = vmatprep.subr.mxu0 0.0
        %5309 = vmatpush1.msra.mxu0 0.0
        %5310 = vmatprep.subr.mxu0 0.0
        %5311 = vmatpush1.msra.mxu0 0.0
        %5312 = vmatprep.subr.mxu0 0.0
        %5313 = vmatpush1.msra.mxu0 0.0
        %5314 = vmatprep.subr.mxu0 0.0
        %5315 = vmatpush1.msra.mxu0 0.0
        %5316 = vmatprep.subr.mxu0 0.0
        %5317 = vmatpush1.msra.mxu0 0.0
        %5318 = vmatprep.subr.mxu0 0.0
        %5319 = vmatpush1.msra.mxu0 0.0
        %5320 = vmatprep.subr.mxu0 0.0
        %5321 = vmatpush1.msra.mxu0 0.0
        %5322 = vmatprep.subr.mxu0 0.0
        %5323 = vmatpush1.msra.mxu0 0.0
        %5324 = vmatprep.subr.mxu0 0.0
        %5325 = vmatpush1.msra.mxu0 0.0
        %5326 = vmatprep.subr.mxu0 0.0
        %5327 = vmatpush1.msra.mxu0 0.0
        %5328 = vmatprep.subr.mxu0 0.0
        %5329 = vmatpush1.msra.mxu0 0.0
        %5330 = vmatprep.subr.mxu0 0.0
        %5331 = vmatpush1.msra.mxu0 0.0
        %5332 = vmatprep.subr.mxu0 0.0
        %5333 = vmatpush1.msra.mxu0 0.0
        %5334 = vmatprep.subr.mxu0 0.0
        %5335 = vmatpush1.msra.mxu0 0.0
        %5336 = vmatprep.subr.mxu0 0.0
        %5337 = vmatpush1.msra.mxu0 0.0
        %5338 = vmatprep.subr.mxu0 0.0
        %5339 = vmatpush1.msra.mxu0 0.0
        %5340 = vmatprep.subr.mxu0 0.0
        %5341 = vmatpush1.msra.mxu0 0.0
        %5342 = vmatprep.subr.mxu0 0.0
        %5343 = vmatpush1.msra.mxu0 0.0
        %5344 = vmatprep.subr.mxu0 0.0
        %5345 = vmatpush1.msra.mxu0 0.0
        %5346 = vmatprep.subr.mxu0 0.0
        %5347 = vmatpush1.msra.mxu0 0.0
        %5348 = vmatprep.subr.mxu0 0.0
        %5349 = vmatpush1.msra.mxu0 0.0
        %5350 = vmatprep.subr.mxu0 0.0
        %5351 = vmatpush1.msra.mxu0 0.0
        %5352 = vmatprep.subr.mxu0 0.0
        %5353 = vmatpush1.msra.mxu0 0.0
        %5354 = vmatprep.subr.mxu0 0.0
        %5355 = vmatpush1.msra.mxu0 0.0
        %5356 = vmatprep.subr.mxu0 0.0
        %5357 = vmatpush1.msra.mxu0 0.0
        %5358 = vmatprep.subr.mxu0 0.0
        %5359 = vmatpush1.msra.mxu0 0.0
        %5360 = vmatprep.subr.mxu0 0.0
        %5361 = vmatpush1.msra.mxu0 0.0
        %5362 = vmatprep.mubr.f32.mxu0 0.0
        %5363 = vmatmul.mubr.f32.gmra.mrb[0].mxu0 %v5296
        %v5364 = vpop.f32.mrb[0].mxu0
        %v5365 = vadd.f32 0.0, %v5364
        %v5366 = vpop.f32.mrb[0].mxu0
        %5367 = vdwg.mxu0
        %v5369 = vsel %vm1645, %v4749, 0
        %5371 = vmatprep.subr.mxu0 0.0
        %5372 = vmatpush1.msra.mxu0 %v4478
        %5373 = vmatprep.subr.mxu0 0.0
        %5374 = vmatpush1.msra.mxu0 0.0
        %5375 = vmatprep.subr.mxu0 0.0
        %5376 = vmatpush1.msra.mxu0 0.0
        %5377 = vmatprep.subr.mxu0 0.0
        %5378 = vmatpush1.msra.mxu0 0.0
        %5379 = vmatprep.subr.mxu0 0.0
        %5380 = vmatpush1.msra.mxu0 0.0
        %5381 = vmatprep.subr.mxu0 0.0
        %5382 = vmatpush1.msra.mxu0 0.0
        %5383 = vmatprep.subr.mxu0 0.0
        %5384 = vmatpush1.msra.mxu0 0.0
        %5385 = vmatprep.subr.mxu0 0.0
        %5386 = vmatpush1.msra.mxu0 0.0
        %5387 = vmatprep.subr.mxu0 0.0
        %5388 = vmatpush1.msra.mxu0 0.0
        %5389 = vmatprep.subr.mxu0 0.0
        %5390 = vmatpush1.msra.mxu0 0.0
        %5391 = vmatprep.subr.mxu0 0.0
        %5392 = vmatpush1.msra.mxu0 0.0
        %5393 = vmatprep.subr.mxu0 0.0
        %5394 = vmatpush1.msra.mxu0 0.0
        %5395 = vmatprep.subr.mxu0 0.0
        %5396 = vmatpush1.msra.mxu0 0.0
        %5397 = vmatprep.subr.mxu0 0.0
        %5398 = vmatpush1.msra.mxu0 0.0
        %5399 = vmatprep.subr.mxu0 0.0
        %5400 = vmatpush1.msra.mxu0 0.0
        %5401 = vmatprep.subr.mxu0 0.0
        %5402 = vmatpush1.msra.mxu0 0.0
        %5403 = vmatprep.subr.mxu0 0.0
        %5404 = vmatpush1.msra.mxu0 0.0
        %5405 = vmatprep.subr.mxu0 0.0
        %5406 = vmatpush1.msra.mxu0 0.0
        %5407 = vmatprep.subr.mxu0 0.0
        %5408 = vmatpush1.msra.mxu0 0.0
        %5409 = vmatprep.subr.mxu0 0.0
        %5410 = vmatpush1.msra.mxu0 0.0
        %5411 = vmatprep.subr.mxu0 0.0
        %5412 = vmatpush1.msra.mxu0 0.0
        %5413 = vmatprep.subr.mxu0 0.0
        %5414 = vmatpush1.msra.mxu0 0.0
        %5415 = vmatprep.subr.mxu0 0.0
        %5416 = vmatpush1.msra.mxu0 0.0
        %5417 = vmatprep.subr.mxu0 0.0
        %5418 = vmatpush1.msra.mxu0 0.0
        %5419 = vmatprep.subr.mxu0 0.0
        %5420 = vmatpush1.msra.mxu0 0.0
        %5421 = vmatprep.subr.mxu0 0.0
        %5422 = vmatpush1.msra.mxu0 0.0
        %5423 = vmatprep.subr.mxu0 0.0
        %5424 = vmatpush1.msra.mxu0 0.0
        %5425 = vmatprep.subr.mxu0 0.0
        %5426 = vmatpush1.msra.mxu0 0.0
        %5427 = vmatprep.subr.mxu0 0.0
        %5428 = vmatpush1.msra.mxu0 0.0
        %5429 = vmatprep.subr.mxu0 0.0
        %5430 = vmatpush1.msra.mxu0 0.0
        %5431 = vmatprep.subr.mxu0 0.0
        %5432 = vmatpush1.msra.mxu0 0.0
        %5433 = vmatprep.subr.mxu0 0.0
        %5434 = vmatpush1.msra.mxu0 0.0
        %5435 = vmatprep.mubr.f32.mxu0 0.0
        %5436 = vmatmul.mubr.f32.gmra.mrb[0].mxu0 %v5369
        %v5437 = vpop.f32.mrb[0].mxu0
        %v5438 = vadd.f32 0.0, %v5437
        %v5439 = vpop.f32.mrb[0].mxu0
        %5440 = vdwg.mxu0
        %v5442 = vsel %vm1645, %v4781, 0
        %5444 = vmatprep.subr.mxu0 0.0
        %5445 = vmatpush1.msra.mxu0 %v4483
        %5446 = vmatprep.subr.mxu0 0.0
        %5447 = vmatpush1.msra.mxu0 0.0
        %5448 = vmatprep.subr.mxu0 0.0
        %5449 = vmatpush1.msra.mxu0 0.0
        %5450 = vmatprep.subr.mxu0 0.0
        %5451 = vmatpush1.msra.mxu0 0.0
        %5452 = vmatprep.subr.mxu0 0.0
        %5453 = vmatpush1.msra.mxu0 0.0
        %5454 = vmatprep.subr.mxu0 0.0
        %5455 = vmatpush1.msra.mxu0 0.0
        %5456 = vmatprep.subr.mxu0 0.0
        %5457 = vmatpush1.msra.mxu0 0.0
        %5458 = vmatprep.subr.mxu0 0.0
        %5459 = vmatpush1.msra.mxu0 0.0
        %5460 = vmatprep.subr.mxu0 0.0
        %5461 = vmatpush1.msra.mxu0 0.0
        %5462 = vmatprep.subr.mxu0 0.0
        %5463 = vmatpush1.msra.mxu0 0.0
        %5464 = vmatprep.subr.mxu0 0.0
        %5465 = vmatpush1.msra.mxu0 0.0
        %5466 = vmatprep.subr.mxu0 0.0
        %5467 = vmatpush1.msra.mxu0 0.0
        %5468 = vmatprep.subr.mxu0 0.0
        %5469 = vmatpush1.msra.mxu0 0.0
        %5470 = vmatprep.subr.mxu0 0.0
        %5471 = vmatpush1.msra.mxu0 0.0
        %5472 = vmatprep.subr.mxu0 0.0
        %5473 = vmatpush1.msra.mxu0 0.0
        %5474 = vmatprep.subr.mxu0 0.0
        %5475 = vmatpush1.msra.mxu0 0.0
        %5476 = vmatprep.subr.mxu0 0.0
        %5477 = vmatpush1.msra.mxu0 0.0
        %5478 = vmatprep.subr.mxu0 0.0
        %5479 = vmatpush1.msra.mxu0 0.0
        %5480 = vmatprep.subr.mxu0 0.0
        %5481 = vmatpush1.msra.mxu0 0.0
        %5482 = vmatprep.subr.mxu0 0.0
        %5483 = vmatpush1.msra.mxu0 0.0
        %5484 = vmatprep.subr.mxu0 0.0
        %5485 = vmatpush1.msra.mxu0 0.0
        %5486 = vmatprep.subr.mxu0 0.0
        %5487 = vmatpush1.msra.mxu0 0.0
        %5488 = vmatprep.subr.mxu0 0.0
        %5489 = vmatpush1.msra.mxu0 0.0
        %5490 = vmatprep.subr.mxu0 0.0
        %5491 = vmatpush1.msra.mxu0 0.0
        %5492 = vmatprep.subr.mxu0 0.0
        %5493 = vmatpush1.msra.mxu0 0.0
        %5494 = vmatprep.subr.mxu0 0.0
        %5495 = vmatpush1.msra.mxu0 0.0
        %5496 = vmatprep.subr.mxu0 0.0
        %5497 = vmatpush1.msra.mxu0 0.0
        %5498 = vmatprep.subr.mxu0 0.0
        %5499 = vmatpush1.msra.mxu0 0.0
        %5500 = vmatprep.subr.mxu0 0.0
        %5501 = vmatpush1.msra.mxu0 0.0
        %5502 = vmatprep.subr.mxu0 0.0
        %5503 = vmatpush1.msra.mxu0 0.0
        %5504 = vmatprep.subr.mxu0 0.0
        %5505 = vmatpush1.msra.mxu0 0.0
        %5506 = vmatprep.subr.mxu0 0.0
        %5507 = vmatpush1.msra.mxu0 0.0
        %5508 = vmatprep.mubr.f32.mxu0 0.0
        %5509 = vmatmul.mubr.f32.gmra.mrb[0].mxu0 %v5442
        %v5510 = vpop.f32.mrb[0].mxu0
        %v5511 = vadd.f32 0.0, %v5510
        %v5512 = vpop.f32.mrb[0].mxu0
        %5513 = vdwg.mxu0
        %v5515 = vsel %vm1645, %v4813, 0
        %5517 = vmatprep.subr.mxu0 0.0
        %5518 = vmatpush1.msra.mxu0 %v4488
        %5519 = vmatprep.subr.mxu0 0.0
        %5520 = vmatpush1.msra.mxu0 0.0
        %5521 = vmatprep.subr.mxu0 0.0
        %5522 = vmatpush1.msra.mxu0 0.0
        %5523 = vmatprep.subr.mxu0 0.0
        %5524 = vmatpush1.msra.mxu0 0.0
        %5525 = vmatprep.subr.mxu0 0.0
        %5526 = vmatpush1.msra.mxu0 0.0
        %5527 = vmatprep.subr.mxu0 0.0
        %5528 = vmatpush1.msra.mxu0 0.0
        %5529 = vmatprep.subr.mxu0 0.0
        %5530 = vmatpush1.msra.mxu0 0.0
        %5531 = vmatprep.subr.mxu0 0.0
        %5532 = vmatpush1.msra.mxu0 0.0
        %5533 = vmatprep.subr.mxu0 0.0
        %5534 = vmatpush1.msra.mxu0 0.0
        %5535 = vmatprep.subr.mxu0 0.0
        %5536 = vmatpush1.msra.mxu0 0.0
        %5537 = vmatprep.subr.mxu0 0.0
        %5538 = vmatpush1.msra.mxu0 0.0
        %5539 = vmatprep.subr.mxu0 0.0
        %5540 = vmatpush1.msra.mxu0 0.0
        %5541 = vmatprep.subr.mxu0 0.0
        %5542 = vmatpush1.msra.mxu0 0.0
        %5543 = vmatprep.subr.mxu0 0.0
        %5544 = vmatpush1.msra.mxu0 0.0
        %5545 = vmatprep.subr.mxu0 0.0
        %5546 = vmatpush1.msra.mxu0 0.0
        %5547 = vmatprep.subr.mxu0 0.0
        %5548 = vmatpush1.msra.mxu0 0.0
        %5549 = vmatprep.subr.mxu0 0.0
        %5550 = vmatpush1.msra.mxu0 0.0
        %5551 = vmatprep.subr.mxu0 0.0
        %5552 = vmatpush1.msra.mxu0 0.0
        %5553 = vmatprep.subr.mxu0 0.0
        %5554 = vmatpush1.msra.mxu0 0.0
        %5555 = vmatprep.subr.mxu0 0.0
        %5556 = vmatpush1.msra.mxu0 0.0
        %5557 = vmatprep.subr.mxu0 0.0
        %5558 = vmatpush1.msra.mxu0 0.0
        %5559 = vmatprep.subr.mxu0 0.0
        %5560 = vmatpush1.msra.mxu0 0.0
        %5561 = vmatprep.subr.mxu0 0.0
        %5562 = vmatpush1.msra.mxu0 0.0
        %5563 = vmatprep.subr.mxu0 0.0
        %5564 = vmatpush1.msra.mxu0 0.0
        %5565 = vmatprep.subr.mxu0 0.0
        %5566 = vmatpush1.msra.mxu0 0.0
        %5567 = vmatprep.subr.mxu0 0.0
        %5568 = vmatpush1.msra.mxu0 0.0
        %5569 = vmatprep.subr.mxu0 0.0
        %5570 = vmatpush1.msra.mxu0 0.0
        %5571 = vmatprep.subr.mxu0 0.0
        %5572 = vmatpush1.msra.mxu0 0.0
        %5573 = vmatprep.subr.mxu0 0.0
        %5574 = vmatpush1.msra.mxu0 0.0
        %5575 = vmatprep.subr.mxu0 0.0
        %5576 = vmatpush1.msra.mxu0 0.0
        %5577 = vmatprep.subr.mxu0 0.0
        %5578 = vmatpush1.msra.mxu0 0.0
        %5579 = vmatprep.subr.mxu0 0.0
        %5580 = vmatpush1.msra.mxu0 0.0
        %5581 = vmatprep.mubr.f32.mxu0 0.0
        %5582 = vmatmul.mubr.f32.gmra.mrb[0].mxu0 %v5515
        %v5583 = vpop.f32.mrb[0].mxu0
        %v5584 = vadd.f32 0.0, %v5583
        %v5585 = vpop.f32.mrb[0].mxu0
        %5586 = vdwg.mxu0
        %v5588 = vsel %vm1645, %v4845, 0
        %5590 = vmatprep.subr.mxu0 0.0
        %5591 = vmatpush1.msra.mxu0 %v4493
        %5592 = vmatprep.subr.mxu0 0.0
        %5593 = vmatpush1.msra.mxu0 0.0
        %5594 = vmatprep.subr.mxu0 0.0
        %5595 = vmatpush1.msra.mxu0 0.0
        %5596 = vmatprep.subr.mxu0 0.0
        %5597 = vmatpush1.msra.mxu0 0.0
        %5598 = vmatprep.subr.mxu0 0.0
        %5599 = vmatpush1.msra.mxu0 0.0
        %5600 = vmatprep.subr.mxu0 0.0
        %5601 = vmatpush1.msra.mxu0 0.0
        %5602 = vmatprep.subr.mxu0 0.0
        %5603 = vmatpush1.msra.mxu0 0.0
        %5604 = vmatprep.subr.mxu0 0.0
        %5605 = vmatpush1.msra.mxu0 0.0
        %5606 = vmatprep.subr.mxu0 0.0
        %5607 = vmatpush1.msra.mxu0 0.0
        %5608 = vmatprep.subr.mxu0 0.0
        %5609 = vmatpush1.msra.mxu0 0.0
        %5610 = vmatprep.subr.mxu0 0.0
        %5611 = vmatpush1.msra.mxu0 0.0
        %5612 = vmatprep.subr.mxu0 0.0
        %5613 = vmatpush1.msra.mxu0 0.0
        %5614 = vmatprep.subr.mxu0 0.0
        %5615 = vmatpush1.msra.mxu0 0.0
        %5616 = vmatprep.subr.mxu0 0.0
        %5617 = vmatpush1.msra.mxu0 0.0
        %5618 = vmatprep.subr.mxu0 0.0
        %5619 = vmatpush1.msra.mxu0 0.0
        %5620 = vmatprep.subr.mxu0 0.0
        %5621 = vmatpush1.msra.mxu0 0.0
        %5622 = vmatprep.subr.mxu0 0.0
        %5623 = vmatpush1.msra.mxu0 0.0
        %5624 = vmatprep.subr.mxu0 0.0
        %5625 = vmatpush1.msra.mxu0 0.0
        %5626 = vmatprep.subr.mxu0 0.0
        %5627 = vmatpush1.msra.mxu0 0.0
        %5628 = vmatprep.subr.mxu0 0.0
        %5629 = vmatpush1.msra.mxu0 0.0
        %5630 = vmatprep.subr.mxu0 0.0
        %5631 = vmatpush1.msra.mxu0 0.0
        %5632 = vmatprep.subr.mxu0 0.0
        %5633 = vmatpush1.msra.mxu0 0.0
        %5634 = vmatprep.subr.mxu0 0.0
        %5635 = vmatpush1.msra.mxu0 0.0
        %5636 = vmatprep.subr.mxu0 0.0
        %5637 = vmatpush1.msra.mxu0 0.0
        %5638 = vmatprep.subr.mxu0 0.0
        %5639 = vmatpush1.msra.mxu0 0.0
        %5640 = vmatprep.subr.mxu0 0.0
        %5641 = vmatpush1.msra.mxu0 0.0
        %5642 = vmatprep.subr.mxu0 0.0
        %5643 = vmatpush1.msra.mxu0 0.0
        %5644 = vmatprep.subr.mxu0 0.0
        %5645 = vmatpush1.msra.mxu0 0.0
        %5646 = vmatprep.subr.mxu0 0.0
        %5647 = vmatpush1.msra.mxu0 0.0
        %5648 = vmatprep.subr.mxu0 0.0
        %5649 = vmatpush1.msra.mxu0 0.0
        %5650 = vmatprep.subr.mxu0 0.0
        %5651 = vmatpush1.msra.mxu0 0.0
        %5652 = vmatprep.subr.mxu0 0.0
        %5653 = vmatpush1.msra.mxu0 0.0
        %5654 = vmatprep.mubr.f32.mxu0 0.0
        %5655 = vmatmul.mubr.f32.gmra.mrb[0].mxu0 %v5588
        %v5656 = vpop.f32.mrb[0].mxu0
        %v5657 = vadd.f32 0.0, %v5656
        %v5658 = vpop.f32.mrb[0].mxu0
        %5659 = vdwg.mxu0
        %v5661 = vsel %vm1645, %v4877, 0
        %5663 = vmatprep.subr.mxu0 0.0
        %5664 = vmatpush1.msra.mxu0 %v4498
        %5665 = vmatprep.subr.mxu0 0.0
        %5666 = vmatpush1.msra.mxu0 0.0
        %5667 = vmatprep.subr.mxu0 0.0
        %5668 = vmatpush1.msra.mxu0 0.0
        %5669 = vmatprep.subr.mxu0 0.0
        %5670 = vmatpush1.msra.mxu0 0.0
        %5671 = vmatprep.subr.mxu0 0.0
        %5672 = vmatpush1.msra.mxu0 0.0
        %5673 = vmatprep.subr.mxu0 0.0
        %5674 = vmatpush1.msra.mxu0 0.0
        %5675 = vmatprep.subr.mxu0 0.0
        %5676 = vmatpush1.msra.mxu0 0.0
        %5677 = vmatprep.subr.mxu0 0.0
        %5678 = vmatpush1.msra.mxu0 0.0
        %5679 = vmatprep.subr.mxu0 0.0
        %5680 = vmatpush1.msra.mxu0 0.0
        %5681 = vmatprep.subr.mxu0 0.0
        %5682 = vmatpush1.msra.mxu0 0.0
        %5683 = vmatprep.subr.mxu0 0.0
        %5684 = vmatpush1.msra.mxu0 0.0
        %5685 = vmatprep.subr.mxu0 0.0
        %5686 = vmatpush1.msra.mxu0 0.0
        %5687 = vmatprep.subr.mxu0 0.0
        %5688 = vmatpush1.msra.mxu0 0.0
        %5689 = vmatprep.subr.mxu0 0.0
        %5690 = vmatpush1.msra.mxu0 0.0
        %5691 = vmatprep.subr.mxu0 0.0
        %5692 = vmatpush1.msra.mxu0 0.0
        %5693 = vmatprep.subr.mxu0 0.0
        %5694 = vmatpush1.msra.mxu0 0.0
        %5695 = vmatprep.subr.mxu0 0.0
        %5696 = vmatpush1.msra.mxu0 0.0
        %5697 = vmatprep.subr.mxu0 0.0
        %5698 = vmatpush1.msra.mxu0 0.0
        %5699 = vmatprep.subr.mxu0 0.0
        %5700 = vmatpush1.msra.mxu0 0.0
        %5701 = vmatprep.subr.mxu0 0.0
        %5702 = vmatpush1.msra.mxu0 0.0
        %5703 = vmatprep.subr.mxu0 0.0
        %5704 = vmatpush1.msra.mxu0 0.0
        %5705 = vmatprep.subr.mxu0 0.0
        %5706 = vmatpush1.msra.mxu0 0.0
        %5707 = vmatprep.subr.mxu0 0.0
        %5708 = vmatpush1.msra.mxu0 0.0
        %5709 = vmatprep.subr.mxu0 0.0
        %5710 = vmatpush1.msra.mxu0 0.0
        %5711 = vmatprep.subr.mxu0 0.0
        %5712 = vmatpush1.msra.mxu0 0.0
        %5713 = vmatprep.subr.mxu0 0.0
        %5714 = vmatpush1.msra.mxu0 0.0
        %5715 = vmatprep.subr.mxu0 0.0
        %5716 = vmatpush1.msra.mxu0 0.0
        %5717 = vmatprep.subr.mxu0 0.0
        %5718 = vmatpush1.msra.mxu0 0.0
        %5719 = vmatprep.subr.mxu0 0.0
        %5720 = vmatpush1.msra.mxu0 0.0
        %5721 = vmatprep.subr.mxu0 0.0
        %5722 = vmatpush1.msra.mxu0 0.0
        %5723 = vmatprep.subr.mxu0 0.0
        %5724 = vmatpush1.msra.mxu0 0.0
        %5725 = vmatprep.subr.mxu0 0.0
        %5726 = vmatpush1.msra.mxu0 0.0
        %5727 = vmatprep.mubr.f32.mxu0 0.0
        %5728 = vmatmul.mubr.f32.gmra.mrb[0].mxu0 %v5661
        %v5729 = vpop.f32.mrb[0].mxu0
        %v5730 = vadd.f32 0.0, %v5729
        %v5731 = vpop.f32.mrb[0].mxu0
        %5732 = vdwg.mxu0
        %v5734 = vsel %vm1645, %v4909, 0
        %5736 = vmatprep.subr.mxu0 0.0
        %5737 = vmatpush1.msra.mxu0 %v4503
        %5738 = vmatprep.subr.mxu0 0.0
        %5739 = vmatpush1.msra.mxu0 0.0
        %5740 = vmatprep.subr.mxu0 0.0
        %5741 = vmatpush1.msra.mxu0 0.0
        %5742 = vmatprep.subr.mxu0 0.0
        %5743 = vmatpush1.msra.mxu0 0.0
        %5744 = vmatprep.subr.mxu0 0.0
        %5745 = vmatpush1.msra.mxu0 0.0
        %5746 = vmatprep.subr.mxu0 0.0
        %5747 = vmatpush1.msra.mxu0 0.0
        %5748 = vmatprep.subr.mxu0 0.0
        %5749 = vmatpush1.msra.mxu0 0.0
        %5750 = vmatprep.subr.mxu0 0.0
        %5751 = vmatpush1.msra.mxu0 0.0
        %5752 = vmatprep.subr.mxu0 0.0
        %5753 = vmatpush1.msra.mxu0 0.0
        %5754 = vmatprep.subr.mxu0 0.0
        %5755 = vmatpush1.msra.mxu0 0.0
        %5756 = vmatprep.subr.mxu0 0.0
        %5757 = vmatpush1.msra.mxu0 0.0
        %5758 = vmatprep.subr.mxu0 0.0
        %5759 = vmatpush1.msra.mxu0 0.0
        %5760 = vmatprep.subr.mxu0 0.0
        %5761 = vmatpush1.msra.mxu0 0.0
        %5762 = vmatprep.subr.mxu0 0.0
        %5763 = vmatpush1.msra.mxu0 0.0
        %5764 = vmatprep.subr.mxu0 0.0
        %5765 = vmatpush1.msra.mxu0 0.0
        %5766 = vmatprep.subr.mxu0 0.0
        %5767 = vmatpush1.msra.mxu0 0.0
        %5768 = vmatprep.subr.mxu0 0.0
        %5769 = vmatpush1.msra.mxu0 0.0
        %5770 = vmatprep.subr.mxu0 0.0
        %5771 = vmatpush1.msra.mxu0 0.0
        %5772 = vmatprep.subr.mxu0 0.0
        %5773 = vmatpush1.msra.mxu0 0.0
        %5774 = vmatprep.subr.mxu0 0.0
        %5775 = vmatpush1.msra.mxu0 0.0
        %5776 = vmatprep.subr.mxu0 0.0
        %5777 = vmatpush1.msra.mxu0 0.0
        %5778 = vmatprep.subr.mxu0 0.0
        %5779 = vmatpush1.msra.mxu0 0.0
        %5780 = vmatprep.subr.mxu0 0.0
        %5781 = vmatpush1.msra.mxu0 0.0
        %5782 = vmatprep.subr.mxu0 0.0
        %5783 = vmatpush1.msra.mxu0 0.0
        %5784 = vmatprep.subr.mxu0 0.0
        %5785 = vmatpush1.msra.mxu0 0.0
        %5786 = vmatprep.subr.mxu0 0.0
        %5787 = vmatpush1.msra.mxu0 0.0
        %5788 = vmatprep.subr.mxu0 0.0
        %5789 = vmatpush1.msra.mxu0 0.0
        %5790 = vmatprep.subr.mxu0 0.0
        %5791 = vmatpush1.msra.mxu0 0.0
        %5792 = vmatprep.subr.mxu0 0.0
        %5793 = vmatpush1.msra.mxu0 0.0
        %5794 = vmatprep.subr.mxu0 0.0
        %5795 = vmatpush1.msra.mxu0 0.0
        %5796 = vmatprep.subr.mxu0 0.0
        %5797 = vmatpush1.msra.mxu0 0.0
        %5798 = vmatprep.subr.mxu0 0.0
        %5799 = vmatpush1.msra.mxu0 0.0
        %5800 = vmatprep.mubr.f32.mxu0 0.0
        %5801 = vmatmul.mubr.f32.gmra.mrb[0].mxu0 %v5734
        %v5802 = vpop.f32.mrb[0].mxu0
        %v5803 = vadd.f32 0.0, %v5802
        %v5804 = vpop.f32.mrb[0].mxu0
        %5805 = vdwg.mxu0
        %v5807 = vsel %vm1645, %v4941, 0
        %5809 = vmatprep.subr.mxu0 0.0
        %5810 = vmatpush1.msra.mxu0 %v4508
        %5811 = vmatprep.subr.mxu0 0.0
        %5812 = vmatpush1.msra.mxu0 0.0
        %5813 = vmatprep.subr.mxu0 0.0
        %5814 = vmatpush1.msra.mxu0 0.0
        %5815 = vmatprep.subr.mxu0 0.0
        %5816 = vmatpush1.msra.mxu0 0.0
        %5817 = vmatprep.subr.mxu0 0.0
        %5818 = vmatpush1.msra.mxu0 0.0
        %5819 = vmatprep.subr.mxu0 0.0
        %5820 = vmatpush1.msra.mxu0 0.0
        %5821 = vmatprep.subr.mxu0 0.0
        %5822 = vmatpush1.msra.mxu0 0.0
        %5823 = vmatprep.subr.mxu0 0.0
        %5824 = vmatpush1.msra.mxu0 0.0
        %5825 = vmatprep.subr.mxu0 0.0
        %5826 = vmatpush1.msra.mxu0 0.0
        %5827 = vmatprep.subr.mxu0 0.0
        %5828 = vmatpush1.msra.mxu0 0.0
        %5829 = vmatprep.subr.mxu0 0.0
        %5830 = vmatpush1.msra.mxu0 0.0
        %5831 = vmatprep.subr.mxu0 0.0
        %5832 = vmatpush1.msra.mxu0 0.0
        %5833 = vmatprep.subr.mxu0 0.0
        %5834 = vmatpush1.msra.mxu0 0.0
        %5835 = vmatprep.subr.mxu0 0.0
        %5836 = vmatpush1.msra.mxu0 0.0
        %5837 = vmatprep.subr.mxu0 0.0
        %5838 = vmatpush1.msra.mxu0 0.0
        %5839 = vmatprep.subr.mxu0 0.0
        %5840 = vmatpush1.msra.mxu0 0.0
        %5841 = vmatprep.subr.mxu0 0.0
        %5842 = vmatpush1.msra.mxu0 0.0
        %5843 = vmatprep.subr.mxu0 0.0
        %5844 = vmatpush1.msra.mxu0 0.0
        %5845 = vmatprep.subr.mxu0 0.0
        %5846 = vmatpush1.msra.mxu0 0.0
        %5847 = vmatprep.subr.mxu0 0.0
        %5848 = vmatpush1.msra.mxu0 0.0
        %5849 = vmatprep.subr.mxu0 0.0
        %5850 = vmatpush1.msra.mxu0 0.0
        %5851 = vmatprep.subr.mxu0 0.0
        %5852 = vmatpush1.msra.mxu0 0.0
        %5853 = vmatprep.subr.mxu0 0.0
        %5854 = vmatpush1.msra.mxu0 0.0
        %5855 = vmatprep.subr.mxu0 0.0
        %5856 = vmatpush1.msra.mxu0 0.0
        %5857 = vmatprep.subr.mxu0 0.0
        %5858 = vmatpush1.msra.mxu0 0.0
        %5859 = vmatprep.subr.mxu0 0.0
        %5860 = vmatpush1.msra.mxu0 0.0
        %5861 = vmatprep.subr.mxu0 0.0
        %5862 = vmatpush1.msra.mxu0 0.0
        %5863 = vmatprep.subr.mxu0 0.0
        %5864 = vmatpush1.msra.mxu0 0.0
        %5865 = vmatprep.subr.mxu0 0.0
        %5866 = vmatpush1.msra.mxu0 0.0
        %5867 = vmatprep.subr.mxu0 0.0
        %5868 = vmatpush1.msra.mxu0 0.0
        %5869 = vmatprep.subr.mxu0 0.0
        %5870 = vmatpush1.msra.mxu0 0.0
        %5871 = vmatprep.subr.mxu0 0.0
        %5872 = vmatpush1.msra.mxu0 0.0
        %5873 = vmatprep.mubr.f32.mxu0 0.0
        %5874 = vmatmul.mubr.f32.gmra.mrb[0].mxu0 %v5807
        %v5875 = vpop.f32.mrb[0].mxu0
        %v5876 = vadd.f32 0.0, %v5875
        %v5877 = vpop.f32.mrb[0].mxu0
        %5878 = vdwg.mxu0
        %v5880 = vsel %vm1645, %v4973, 0
        %5882 = vmatprep.subr.mxu0 0.0
        %5883 = vmatpush1.msra.mxu0 %v4513
        %5884 = vmatprep.subr.mxu0 0.0
        %5885 = vmatpush1.msra.mxu0 0.0
        %5886 = vmatprep.subr.mxu0 0.0
        %5887 = vmatpush1.msra.mxu0 0.0
        %5888 = vmatprep.subr.mxu0 0.0
        %5889 = vmatpush1.msra.mxu0 0.0
        %5890 = vmatprep.subr.mxu0 0.0
        %5891 = vmatpush1.msra.mxu0 0.0
        %5892 = vmatprep.subr.mxu0 0.0
        %5893 = vmatpush1.msra.mxu0 0.0
        %5894 = vmatprep.subr.mxu0 0.0
        %5895 = vmatpush1.msra.mxu0 0.0
        %5896 = vmatprep.subr.mxu0 0.0
        %5897 = vmatpush1.msra.mxu0 0.0
        %5898 = vmatprep.subr.mxu0 0.0
        %5899 = vmatpush1.msra.mxu0 0.0
        %5900 = vmatprep.subr.mxu0 0.0
        %5901 = vmatpush1.msra.mxu0 0.0
        %5902 = vmatprep.subr.mxu0 0.0
        %5903 = vmatpush1.msra.mxu0 0.0
        %5904 = vmatprep.subr.mxu0 0.0
        %5905 = vmatpush1.msra.mxu0 0.0
        %5906 = vmatprep.subr.mxu0 0.0
        %5907 = vmatpush1.msra.mxu0 0.0
        %5908 = vmatprep.subr.mxu0 0.0
        %5909 = vmatpush1.msra.mxu0 0.0
        %5910 = vmatprep.subr.mxu0 0.0
        %5911 = vmatpush1.msra.mxu0 0.0
        %5912 = vmatprep.subr.mxu0 0.0
        %5913 = vmatpush1.msra.mxu0 0.0
        %5914 = vmatprep.subr.mxu0 0.0
        %5915 = vmatpush1.msra.mxu0 0.0
        %5916 = vmatprep.subr.mxu0 0.0
        %5917 = vmatpush1.msra.mxu0 0.0
        %5918 = vmatprep.subr.mxu0 0.0
        %5919 = vmatpush1.msra.mxu0 0.0
        %5920 = vmatprep.subr.mxu0 0.0
        %5921 = vmatpush1.msra.mxu0 0.0
        %5922 = vmatprep.subr.mxu0 0.0
        %5923 = vmatpush1.msra.mxu0 0.0
        %5924 = vmatprep.subr.mxu0 0.0
        %5925 = vmatpush1.msra.mxu0 0.0
        %5926 = vmatprep.subr.mxu0 0.0
        %5927 = vmatpush1.msra.mxu0 0.0
        %5928 = vmatprep.subr.mxu0 0.0
        %5929 = vmatpush1.msra.mxu0 0.0
        %5930 = vmatprep.subr.mxu0 0.0
        %5931 = vmatpush1.msra.mxu0 0.0
        %5932 = vmatprep.subr.mxu0 0.0
        %5933 = vmatpush1.msra.mxu0 0.0
        %5934 = vmatprep.subr.mxu0 0.0
        %5935 = vmatpush1.msra.mxu0 0.0
        %5936 = vmatprep.subr.mxu0 0.0
        %5937 = vmatpush1.msra.mxu0 0.0
        %5938 = vmatprep.subr.mxu0 0.0
        %5939 = vmatpush1.msra.mxu0 0.0
        %5940 = vmatprep.subr.mxu0 0.0
        %5941 = vmatpush1.msra.mxu0 0.0
        %5942 = vmatprep.subr.mxu0 0.0
        %5943 = vmatpush1.msra.mxu0 0.0
        %5944 = vmatprep.subr.mxu0 0.0
        %5945 = vmatpush1.msra.mxu0 0.0
        %5946 = vmatprep.mubr.f32.mxu0 0.0
        %5947 = vmatmul.mubr.f32.gmra.mrb[0].mxu0 %v5880
        %v5948 = vpop.f32.mrb[0].mxu0
        %v5949 = vadd.f32 0.0, %v5948
        %v5950 = vpop.f32.mrb[0].mxu0
        %5951 = vdwg.mxu0
        %v5953 = vsel %vm1645, %v5005, 0
        %5955 = vmatprep.subr.mxu0 0.0
        %5956 = vmatpush1.msra.mxu0 %v4518
        %5957 = vmatprep.subr.mxu0 0.0
        %5958 = vmatpush1.msra.mxu0 0.0
        %5959 = vmatprep.subr.mxu0 0.0
        %5960 = vmatpush1.msra.mxu0 0.0
        %5961 = vmatprep.subr.mxu0 0.0
        %5962 = vmatpush1.msra.mxu0 0.0
        %5963 = vmatprep.subr.mxu0 0.0
        %5964 = vmatpush1.msra.mxu0 0.0
        %5965 = vmatprep.subr.mxu0 0.0
        %5966 = vmatpush1.msra.mxu0 0.0
        %5967 = vmatprep.subr.mxu0 0.0
        %5968 = vmatpush1.msra.mxu0 0.0
        %5969 = vmatprep.subr.mxu0 0.0
        %5970 = vmatpush1.msra.mxu0 0.0
        %5971 = vmatprep.subr.mxu0 0.0
        %5972 = vmatpush1.msra.mxu0 0.0
        %5973 = vmatprep.subr.mxu0 0.0
        %5974 = vmatpush1.msra.mxu0 0.0
        %5975 = vmatprep.subr.mxu0 0.0
        %5976 = vmatpush1.msra.mxu0 0.0
        %5977 = vmatprep.subr.mxu0 0.0
        %5978 = vmatpush1.msra.mxu0 0.0
        %5979 = vmatprep.subr.mxu0 0.0
        %5980 = vmatpush1.msra.mxu0 0.0
        %5981 = vmatprep.subr.mxu0 0.0
        %5982 = vmatpush1.msra.mxu0 0.0
        %5983 = vmatprep.subr.mxu0 0.0
        %5984 = vmatpush1.msra.mxu0 0.0
        %5985 = vmatprep.subr.mxu0 0.0
        %5986 = vmatpush1.msra.mxu0 0.0
        %5987 = vmatprep.subr.mxu0 0.0
        %5988 = vmatpush1.msra.mxu0 0.0
        %5989 = vmatprep.subr.mxu0 0.0
        %5990 = vmatpush1.msra.mxu0 0.0
        %5991 = vmatprep.subr.mxu0 0.0
        %5992 = vmatpush1.msra.mxu0 0.0
        %5993 = vmatprep.subr.mxu0 0.0
        %5994 = vmatpush1.msra.mxu0 0.0
        %5995 = vmatprep.subr.mxu0 0.0
        %5996 = vmatpush1.msra.mxu0 0.0
        %5997 = vmatprep.subr.mxu0 0.0
        %5998 = vmatpush1.msra.mxu0 0.0
        %5999 = vmatprep.subr.mxu0 0.0
        %6000 = vmatpush1.msra.mxu0 0.0
        %6001 = vmatprep.subr.mxu0 0.0
        %6002 = vmatpush1.msra.mxu0 0.0
        %6003 = vmatprep.subr.mxu0 0.0
        %6004 = vmatpush1.msra.mxu0 0.0
        %6005 = vmatprep.subr.mxu0 0.0
        %6006 = vmatpush1.msra.mxu0 0.0
        %6007 = vmatprep.subr.mxu0 0.0
        %6008 = vmatpush1.msra.mxu0 0.0
        %6009 = vmatprep.subr.mxu0 0.0
        %6010 = vmatpush1.msra.mxu0 0.0
        %6011 = vmatprep.subr.mxu0 0.0
        %6012 = vmatpush1.msra.mxu0 0.0
        %6013 = vmatprep.subr.mxu0 0.0
        %6014 = vmatpush1.msra.mxu0 0.0
        %6015 = vmatprep.subr.mxu0 0.0
        %6016 = vmatpush1.msra.mxu0 0.0
        %6017 = vmatprep.subr.mxu0 0.0
        %6018 = vmatpush1.msra.mxu0 0.0
        %6019 = vmatprep.mubr.f32.mxu0 0.0
        %6020 = vmatmul.mubr.f32.gmra.mrb[0].mxu0 %v5953
        %v6021 = vpop.f32.mrb[0].mxu0
        %v6022 = vadd.f32 0.0, %v6021
        %v6023 = vpop.f32.mrb[0].mxu0
        %6024 = vdwg.mxu0
        %v6026 = vsel %vm1645, %v5037, 0
        %6028 = vmatprep.subr.mxu0 0.0
        %6029 = vmatpush1.msra.mxu0 %v4523
        %6030 = vmatprep.subr.mxu0 0.0
        %6031 = vmatpush1.msra.mxu0 0.0
        %6032 = vmatprep.subr.mxu0 0.0
        %6033 = vmatpush1.msra.mxu0 0.0
        %6034 = vmatprep.subr.mxu0 0.0
        %6035 = vmatpush1.msra.mxu0 0.0
        %6036 = vmatprep.subr.mxu0 0.0
        %6037 = vmatpush1.msra.mxu0 0.0
        %6038 = vmatprep.subr.mxu0 0.0
        %6039 = vmatpush1.msra.mxu0 0.0
        %6040 = vmatprep.subr.mxu0 0.0
        %6041 = vmatpush1.msra.mxu0 0.0
        %6042 = vmatprep.subr.mxu0 0.0
        %6043 = vmatpush1.msra.mxu0 0.0
        %6044 = vmatprep.subr.mxu0 0.0
        %6045 = vmatpush1.msra.mxu0 0.0
        %6046 = vmatprep.subr.mxu0 0.0
        %6047 = vmatpush1.msra.mxu0 0.0
        %6048 = vmatprep.subr.mxu0 0.0
        %6049 = vmatpush1.msra.mxu0 0.0
        %6050 = vmatprep.subr.mxu0 0.0
        %6051 = vmatpush1.msra.mxu0 0.0
        %6052 = vmatprep.subr.mxu0 0.0
        %6053 = vmatpush1.msra.mxu0 0.0
        %6054 = vmatprep.subr.mxu0 0.0
        %6055 = vmatpush1.msra.mxu0 0.0
        %6056 = vmatprep.subr.mxu0 0.0
        %6057 = vmatpush1.msra.mxu0 0.0
        %6058 = vmatprep.subr.mxu0 0.0
        %6059 = vmatpush1.msra.mxu0 0.0
        %6060 = vmatprep.subr.mxu0 0.0
        %6061 = vmatpush1.msra.mxu0 0.0
        %6062 = vmatprep.subr.mxu0 0.0
        %6063 = vmatpush1.msra.mxu0 0.0
        %6064 = vmatprep.subr.mxu0 0.0
        %6065 = vmatpush1.msra.mxu0 0.0
        %6066 = vmatprep.subr.mxu0 0.0
        %6067 = vmatpush1.msra.mxu0 0.0
        %6068 = vmatprep.subr.mxu0 0.0
        %6069 = vmatpush1.msra.mxu0 0.0
        %6070 = vmatprep.subr.mxu0 0.0
        %6071 = vmatpush1.msra.mxu0 0.0
        %6072 = vmatprep.subr.mxu0 0.0
        %6073 = vmatpush1.msra.mxu0 0.0
        %6074 = vmatprep.subr.mxu0 0.0
        %6075 = vmatpush1.msra.mxu0 0.0
        %6076 = vmatprep.subr.mxu0 0.0
        %6077 = vmatpush1.msra.mxu0 0.0
        %6078 = vmatprep.subr.mxu0 0.0
        %6079 = vmatpush1.msra.mxu0 0.0
        %6080 = vmatprep.subr.mxu0 0.0
        %6081 = vmatpush1.msra.mxu0 0.0
        %6082 = vmatprep.subr.mxu0 0.0
        %6083 = vmatpush1.msra.mxu0 0.0
        %6084 = vmatprep.subr.mxu0 0.0
        %6085 = vmatpush1.msra.mxu0 0.0
        %6086 = vmatprep.subr.mxu0 0.0
        %6087 = vmatpush1.msra.mxu0 0.0
        %6088 = vmatprep.subr.mxu0 0.0
        %6089 = vmatpush1.msra.mxu0 0.0
        %6090 = vmatprep.subr.mxu0 0.0
        %6091 = vmatpush1.msra.mxu0 0.0
        %6092 = vmatprep.mubr.f32.mxu0 0.0
        %6093 = vmatmul.mubr.f32.gmra.mrb[0].mxu0 %v6026
        %v6094 = vpop.f32.mrb[0].mxu0
        %v6095 = vadd.f32 0.0, %v6094
        %v6096 = vpop.f32.mrb[0].mxu0
        %6097 = vdwg.mxu0
        %v6099 = vsel %vm1645, %v5069, 0
        %6101 = vmatprep.subr.mxu0 0.0
        %6102 = vmatpush1.msra.mxu0 %v4528
        %6103 = vmatprep.subr.mxu0 0.0
        %6104 = vmatpush1.msra.mxu0 0.0
        %6105 = vmatprep.subr.mxu0 0.0
        %6106 = vmatpush1.msra.mxu0 0.0
        %6107 = vmatprep.subr.mxu0 0.0
        %6108 = vmatpush1.msra.mxu0 0.0
        %6109 = vmatprep.subr.mxu0 0.0
        %6110 = vmatpush1.msra.mxu0 0.0
        %6111 = vmatprep.subr.mxu0 0.0
        %6112 = vmatpush1.msra.mxu0 0.0
        %6113 = vmatprep.subr.mxu0 0.0
        %6114 = vmatpush1.msra.mxu0 0.0
        %6115 = vmatprep.subr.mxu0 0.0
        %6116 = vmatpush1.msra.mxu0 0.0
        %6117 = vmatprep.subr.mxu0 0.0
        %6118 = vmatpush1.msra.mxu0 0.0
        %6119 = vmatprep.subr.mxu0 0.0
        %6120 = vmatpush1.msra.mxu0 0.0
        %6121 = vmatprep.subr.mxu0 0.0
        %6122 = vmatpush1.msra.mxu0 0.0
        %6123 = vmatprep.subr.mxu0 0.0
        %6124 = vmatpush1.msra.mxu0 0.0
        %6125 = vmatprep.subr.mxu0 0.0
        %6126 = vmatpush1.msra.mxu0 0.0
        %6127 = vmatprep.subr.mxu0 0.0
        %6128 = vmatpush1.msra.mxu0 0.0
        %6129 = vmatprep.subr.mxu0 0.0
        %6130 = vmatpush1.msra.mxu0 0.0
        %6131 = vmatprep.subr.mxu0 0.0
        %6132 = vmatpush1.msra.mxu0 0.0
        %6133 = vmatprep.subr.mxu0 0.0
        %6134 = vmatpush1.msra.mxu0 0.0
        %6135 = vmatprep.subr.mxu0 0.0
        %6136 = vmatpush1.msra.mxu0 0.0
        %6137 = vmatprep.subr.mxu0 0.0
        %6138 = vmatpush1.msra.mxu0 0.0
        %6139 = vmatprep.subr.mxu0 0.0
        %6140 = vmatpush1.msra.mxu0 0.0
        %6141 = vmatprep.subr.mxu0 0.0
        %6142 = vmatpush1.msra.mxu0 0.0
        %6143 = vmatprep.subr.mxu0 0.0
        %6144 = vmatpush1.msra.mxu0 0.0
        %6145 = vmatprep.subr.mxu0 0.0
        %6146 = vmatpush1.msra.mxu0 0.0
        %6147 = vmatprep.subr.mxu0 0.0
        %6148 = vmatpush1.msra.mxu0 0.0
        %6149 = vmatprep.subr.mxu0 0.0
        %6150 = vmatpush1.msra.mxu0 0.0
        %6151 = vmatprep.subr.mxu0 0.0
        %6152 = vmatpush1.msra.mxu0 0.0
        %6153 = vmatprep.subr.mxu0 0.0
        %6154 = vmatpush1.msra.mxu0 0.0
        %6155 = vmatprep.subr.mxu0 0.0
        %6156 = vmatpush1.msra.mxu0 0.0
        %6157 = vmatprep.subr.mxu0 0.0
        %6158 = vmatpush1.msra.mxu0 0.0
        %6159 = vmatprep.subr.mxu0 0.0
        %6160 = vmatpush1.msra.mxu0 0.0
        %6161 = vmatprep.subr.mxu0 0.0
        %6162 = vmatpush1.msra.mxu0 0.0
        %6163 = vmatprep.subr.mxu0 0.0
        %6164 = vmatpush1.msra.mxu0 0.0
        %6165 = vmatprep.mubr.f32.mxu0 0.0
        %6166 = vmatmul.mubr.f32.gmra.mrb[0].mxu0 %v6099
        %v6167 = vpop.f32.mrb[0].mxu0
        %v6168 = vadd.f32 0.0, %v6167
        %v6169 = vpop.f32.mrb[0].mxu0
        %6170 = vdwg.mxu0
        %v6172 = vsel %vm1645, %v5101, 0
        %6174 = vmatprep.subr.mxu0 0.0
        %6175 = vmatpush1.msra.mxu0 %v4533
        %6176 = vmatprep.subr.mxu0 0.0
        %6177 = vmatpush1.msra.mxu0 0.0
        %6178 = vmatprep.subr.mxu0 0.0
        %6179 = vmatpush1.msra.mxu0 0.0
        %6180 = vmatprep.subr.mxu0 0.0
        %6181 = vmatpush1.msra.mxu0 0.0
        %6182 = vmatprep.subr.mxu0 0.0
        %6183 = vmatpush1.msra.mxu0 0.0
        %6184 = vmatprep.subr.mxu0 0.0
        %6185 = vmatpush1.msra.mxu0 0.0
        %6186 = vmatprep.subr.mxu0 0.0
        %6187 = vmatpush1.msra.mxu0 0.0
        %6188 = vmatprep.subr.mxu0 0.0
        %6189 = vmatpush1.msra.mxu0 0.0
        %6190 = vmatprep.subr.mxu0 0.0
        %6191 = vmatpush1.msra.mxu0 0.0
        %6192 = vmatprep.subr.mxu0 0.0
        %6193 = vmatpush1.msra.mxu0 0.0
        %6194 = vmatprep.subr.mxu0 0.0
        %6195 = vmatpush1.msra.mxu0 0.0
        %6196 = vmatprep.subr.mxu0 0.0
        %6197 = vmatpush1.msra.mxu0 0.0
        %6198 = vmatprep.subr.mxu0 0.0
        %6199 = vmatpush1.msra.mxu0 0.0
        %6200 = vmatprep.subr.mxu0 0.0
        %6201 = vmatpush1.msra.mxu0 0.0
        %6202 = vmatprep.subr.mxu0 0.0
        %6203 = vmatpush1.msra.mxu0 0.0
        %6204 = vmatprep.subr.mxu0 0.0
        %6205 = vmatpush1.msra.mxu0 0.0
        %6206 = vmatprep.subr.mxu0 0.0
        %6207 = vmatpush1.msra.mxu0 0.0
        %6208 = vmatprep.subr.mxu0 0.0
        %6209 = vmatpush1.msra.mxu0 0.0
        %6210 = vmatprep.subr.mxu0 0.0
        %6211 = vmatpush1.msra.mxu0 0.0
        %6212 = vmatprep.subr.mxu0 0.0
        %6213 = vmatpush1.msra.mxu0 0.0
        %6214 = vmatprep.subr.mxu0 0.0
        %6215 = vmatpush1.msra.mxu0 0.0
        %6216 = vmatprep.subr.mxu0 0.0
        %6217 = vmatpush1.msra.mxu0 0.0
        %6218 = vmatprep.subr.mxu0 0.0
        %6219 = vmatpush1.msra.mxu0 0.0
        %6220 = vmatprep.subr.mxu0 0.0
        %6221 = vmatpush1.msra.mxu0 0.0
        %6222 = vmatprep.subr.mxu0 0.0
        %6223 = vmatpush1.msra.mxu0 0.0
        %6224 = vmatprep.subr.mxu0 0.0
        %6225 = vmatpush1.msra.mxu0 0.0
        %6226 = vmatprep.subr.mxu0 0.0
        %6227 = vmatpush1.msra.mxu0 0.0
        %6228 = vmatprep.subr.mxu0 0.0
        %6229 = vmatpush1.msra.mxu0 0.0
        %6230 = vmatprep.subr.mxu0 0.0
        %6231 = vmatpush1.msra.mxu0 0.0
        %6232 = vmatprep.subr.mxu0 0.0
        %6233 = vmatpush1.msra.mxu0 0.0
        %6234 = vmatprep.subr.mxu0 0.0
        %6235 = vmatpush1.msra.mxu0 0.0
        %6236 = vmatprep.subr.mxu0 0.0
        %6237 = vmatpush1.msra.mxu0 0.0
        %6238 = vmatprep.mubr.f32.mxu0 0.0
        %6239 = vmatmul.mubr.f32.gmra.mrb[0].mxu0 %v6172
        %v6240 = vpop.f32.mrb[0].mxu0
        %v6241 = vadd.f32 0.0, %v6240
        %v6242 = vpop.f32.mrb[0].mxu0
        %6243 = vdwg.mxu0
        %v6245 = vsel %vm1645, %v5133, 0
        %6247 = vmatprep.subr.mxu0 0.0
        %6248 = vmatpush1.msra.mxu0 %v4538
        %6249 = vmatprep.subr.mxu0 0.0
        %6250 = vmatpush1.msra.mxu0 0.0
        %6251 = vmatprep.subr.mxu0 0.0
        %6252 = vmatpush1.msra.mxu0 0.0
        %6253 = vmatprep.subr.mxu0 0.0
        %6254 = vmatpush1.msra.mxu0 0.0
        %6255 = vmatprep.subr.mxu0 0.0
        %6256 = vmatpush1.msra.mxu0 0.0
        %6257 = vmatprep.subr.mxu0 0.0
        %6258 = vmatpush1.msra.mxu0 0.0
        %6259 = vmatprep.subr.mxu0 0.0
        %6260 = vmatpush1.msra.mxu0 0.0
        %6261 = vmatprep.subr.mxu0 0.0
        %6262 = vmatpush1.msra.mxu0 0.0
        %6263 = vmatprep.subr.mxu0 0.0
        %6264 = vmatpush1.msra.mxu0 0.0
        %6265 = vmatprep.subr.mxu0 0.0
        %6266 = vmatpush1.msra.mxu0 0.0
        %6267 = vmatprep.subr.mxu0 0.0
        %6268 = vmatpush1.msra.mxu0 0.0
        %6269 = vmatprep.subr.mxu0 0.0
        %6270 = vmatpush1.msra.mxu0 0.0
        %6271 = vmatprep.subr.mxu0 0.0
        %6272 = vmatpush1.msra.mxu0 0.0
        %6273 = vmatprep.subr.mxu0 0.0
        %6274 = vmatpush1.msra.mxu0 0.0
        %6275 = vmatprep.subr.mxu0 0.0
        %6276 = vmatpush1.msra.mxu0 0.0
        %6277 = vmatprep.subr.mxu0 0.0
        %6278 = vmatpush1.msra.mxu0 0.0
        %6279 = vmatprep.subr.mxu0 0.0
        %6280 = vmatpush1.msra.mxu0 0.0
        %6281 = vmatprep.subr.mxu0 0.0
        %6282 = vmatpush1.msra.mxu0 0.0
        %6283 = vmatprep.subr.mxu0 0.0
        %6284 = vmatpush1.msra.mxu0 0.0
        %6285 = vmatprep.subr.mxu0 0.0
        %6286 = vmatpush1.msra.mxu0 0.0
        %6287 = vmatprep.subr.mxu0 0.0
        %6288 = vmatpush1.msra.mxu0 0.0
        %6289 = vmatprep.subr.mxu0 0.0
        %6290 = vmatpush1.msra.mxu0 0.0
        %6291 = vmatprep.subr.mxu0 0.0
        %6292 = vmatpush1.msra.mxu0 0.0
        %6293 = vmatprep.subr.mxu0 0.0
        %6294 = vmatpush1.msra.mxu0 0.0
        %6295 = vmatprep.subr.mxu0 0.0
        %6296 = vmatpush1.msra.mxu0 0.0
        %6297 = vmatprep.subr.mxu0 0.0
        %6298 = vmatpush1.msra.mxu0 0.0
        %6299 = vmatprep.subr.mxu0 0.0
        %6300 = vmatpush1.msra.mxu0 0.0
        %6301 = vmatprep.subr.mxu0 0.0
        %6302 = vmatpush1.msra.mxu0 0.0
        %6303 = vmatprep.subr.mxu0 0.0
        %6304 = vmatpush1.msra.mxu0 0.0
        %6305 = vmatprep.subr.mxu0 0.0
        %6306 = vmatpush1.msra.mxu0 0.0
        %6307 = vmatprep.subr.mxu0 0.0
        %6308 = vmatpush1.msra.mxu0 0.0
        %6309 = vmatprep.subr.mxu0 0.0
        %6310 = vmatpush1.msra.mxu0 0.0
        %6311 = vmatprep.mubr.f32.mxu0 0.0
        %6312 = vmatmul.mubr.f32.gmra.mrb[0].mxu0 %v6245
        %v6313 = vpop.f32.mrb[0].mxu0
        %v6314 = vadd.f32 0.0, %v6313
        %v6315 = vpop.f32.mrb[0].mxu0
        %6316 = vdwg.mxu0
        %v6317 = vsel %vm1645, %v5219, -inf
        %6318 = vmax.xlane.f32.xlu0 %v6317
        %v6319 = vpop.xlane.xlu0 %6318
        %v6320 = vsel %vm1645, %v5292, -inf
        %6321 = vmax.xlane.f32.xlu0 %v6320
        %v6322 = vpop.xlane.xlu0 %6321
        %v6323 = vsel %vm1645, %v5365, -inf
        %6324 = vmax.xlane.f32.xlu0 %v6323
        %v6325 = vpop.xlane.xlu0 %6324
        %v6326 = vsel %vm1645, %v5438, -inf
        %6327 = vmax.xlane.f32.xlu0 %v6326
        %v6328 = vpop.xlane.xlu0 %6327
        %v6329 = vsel %vm1645, %v5511, -inf
        %6330 = vmax.xlane.f32.xlu0 %v6329
        %v6331 = vpop.xlane.xlu0 %6330
        %v6332 = vsel %vm1645, %v5584, -inf
        %6333 = vmax.xlane.f32.xlu0 %v6332
        %v6334 = vpop.xlane.xlu0 %6333
        %v6335 = vsel %vm1645, %v5657, -inf
        %6336 = vmax.xlane.f32.xlu0 %v6335
        %v6337 = vpop.xlane.xlu0 %6336
        %v6338 = vsel %vm1645, %v5730, -inf
        %6339 = vmax.xlane.f32.xlu0 %v6338
        %v6340 = vpop.xlane.xlu0 %6339
        %v6341 = vsel %vm1645, %v5803, -inf
        %6342 = vmax.xlane.f32.xlu0 %v6341
        %v6343 = vpop.xlane.xlu0 %6342
        %v6344 = vsel %vm1645, %v5876, -inf
        %6345 = vmax.xlane.f32.xlu0 %v6344
        %v6346 = vpop.xlane.xlu0 %6345
        %v6347 = vsel %vm1645, %v5949, -inf
        %6348 = vmax.xlane.f32.xlu0 %v6347
        %v6349 = vpop.xlane.xlu0 %6348
        %v6350 = vsel %vm1645, %v6022, -inf
        %6351 = vmax.xlane.f32.xlu0 %v6350
        %v6352 = vpop.xlane.xlu0 %6351
        %v6353 = vsel %vm1645, %v6095, -inf
        %6354 = vmax.xlane.f32.xlu0 %v6353
        %v6355 = vpop.xlane.xlu0 %6354
        %v6356 = vsel %vm1645, %v6168, -inf
        %6357 = vmax.xlane.f32.xlu0 %v6356
        %v6358 = vpop.xlane.xlu0 %6357
        %v6359 = vsel %vm1645, %v6241, -inf
        %6360 = vmax.xlane.f32.xlu0 %v6359
        %v6361 = vpop.xlane.xlu0 %6360
        %v6362 = vsel %vm1645, %v6314, -inf
        %6363 = vmax.xlane.f32.xlu0 %v6362
        %v6364 = vpop.xlane.xlu0 %6363
        %v6365 = vsub.f32 %v5219, %v6319
        %v6366 = vsub.f32 %v5292, %v6322
        %v6367 = vsub.f32 %v5365, %v6325
        %v6368 = vsub.f32 %v5438, %v6328
        %v6369 = vsub.f32 %v5511, %v6331
        %v6370 = vsub.f32 %v5584, %v6334
        %v6371 = vsub.f32 %v5657, %v6337
        %v6372 = vsub.f32 %v5730, %v6340
        %v6373 = vsub.f32 %v5803, %v6343
        %v6374 = vsub.f32 %v5876, %v6346
        %v6375 = vsub.f32 %v5949, %v6349
        %v6376 = vsub.f32 %v6022, %v6352
        %v6377 = vsub.f32 %v6095, %v6355
        %v6378 = vsub.f32 %v6168, %v6358
        %v6379 = vsub.f32 %v6241, %v6361
        %v6380 = vsub.f32 %v6314, %v6364
        %v6381 = vmul.f32 %v6365, 1.442695
        %v6382 = vpow.pop %v6381
        %v6383 = vmul.f32 %v6366, 1.442695
        %v6384 = vpow.pop %v6383
        %v6385 = vmul.f32 %v6367, 1.442695
        %v6386 = vpow.pop %v6385
        %v6387 = vmul.f32 %v6368, 1.442695
        %v6388 = vpow.pop %v6387
        %v6389 = vmul.f32 %v6369, 1.442695
        %v6390 = vpow.pop %v6389
        %v6391 = vmul.f32 %v6370, 1.442695
        %v6392 = vpow.pop %v6391
        %v6393 = vmul.f32 %v6371, 1.442695
        %v6394 = vpow.pop %v6393
        %v6395 = vmul.f32 %v6372, 1.442695
        %v6396 = vpow.pop %v6395
        %v6397 = vmul.f32 %v6373, 1.442695
        %v6398 = vpow.pop %v6397
        %v6399 = vmul.f32 %v6374, 1.442695
        %v6400 = vpow.pop %v6399
        %v6401 = vmul.f32 %v6375, 1.442695
        %v6402 = vpow.pop %v6401
        %v6403 = vmul.f32 %v6376, 1.442695
        %v6404 = vpow.pop %v6403
        %v6405 = vmul.f32 %v6377, 1.442695
        %v6406 = vpow.pop %v6405
        %v6407 = vmul.f32 %v6378, 1.442695
        %v6408 = vpow.pop %v6407
        %v6409 = vmul.f32 %v6379, 1.442695
        %v6410 = vpow.pop %v6409
        %v6411 = vmul.f32 %v6380, 1.442695
        %v6412 = vpow.pop %v6411
        %v6413 = vsel %vm1645, %v6382, 0.0
        %6414 = vadd.xlane.f32.xlu0 %v6413
        %v6415 = vpop.xlane.xlu0 %6414
        %v6416 = vsel %vm1645, %v6384, 0.0
        %6417 = vadd.xlane.f32.xlu0 %v6416
        %v6418 = vpop.xlane.xlu0 %6417
        %v6419 = vsel %vm1645, %v6386, 0.0
        %6420 = vadd.xlane.f32.xlu0 %v6419
        %v6421 = vpop.xlane.xlu0 %6420
        %v6422 = vsel %vm1645, %v6388, 0.0
        %6423 = vadd.xlane.f32.xlu0 %v6422
        %v6424 = vpop.xlane.xlu0 %6423
        %v6425 = vsel %vm1645, %v6390, 0.0
        %6426 = vadd.xlane.f32.xlu0 %v6425
        %v6427 = vpop.xlane.xlu0 %6426
        %v6428 = vsel %vm1645, %v6392, 0.0
        %6429 = vadd.xlane.f32.xlu0 %v6428
        %v6430 = vpop.xlane.xlu0 %6429
        %v6431 = vsel %vm1645, %v6394, 0.0
        %6432 = vadd.xlane.f32.xlu0 %v6431
        %v6433 = vpop.xlane.xlu0 %6432
        %v6434 = vsel %vm1645, %v6396, 0.0
        %6435 = vadd.xlane.f32.xlu0 %v6434
        %v6436 = vpop.xlane.xlu0 %6435
        %v6437 = vsel %vm1645, %v6398, 0.0
        %6438 = vadd.xlane.f32.xlu0 %v6437
        %v6439 = vpop.xlane.xlu0 %6438
        %v6440 = vsel %vm1645, %v6400, 0.0
        %6441 = vadd.xlane.f32.xlu0 %v6440
        %v6442 = vpop.xlane.xlu0 %6441
        %v6443 = vsel %vm1645, %v6402, 0.0
        %6444 = vadd.xlane.f32.xlu0 %v6443
        %v6445 = vpop.xlane.xlu0 %6444
        %v6446 = vsel %vm1645, %v6404, 0.0
        %6447 = vadd.xlane.f32.xlu0 %v6446
        %v6448 = vpop.xlane.xlu0 %6447
        %v6449 = vsel %vm1645, %v6406, 0.0
        %6450 = vadd.xlane.f32.xlu0 %v6449
        %v6451 = vpop.xlane.xlu0 %6450
        %v6452 = vsel %vm1645, %v6408, 0.0
        %6453 = vadd.xlane.f32.xlu0 %v6452
        %v6454 = vpop.xlane.xlu0 %6453
        %v6455 = vsel %vm1645, %v6410, 0.0
        %6456 = vadd.xlane.f32.xlu0 %v6455
        %v6457 = vpop.xlane.xlu0 %6456
        %v6458 = vsel %vm1645, %v6412, 0.0
        %6459 = vadd.xlane.f32.xlu0 %v6458
        %v6460 = vpop.xlane.xlu0 %6459
        %v6461 = vrcp.pop %v6415
        %v6462 = vrcp.pop %v6418
        %v6463 = vrcp.pop %v6421
        %v6464 = vrcp.pop %v6424
        %v6465 = vrcp.pop %v6427
        %v6466 = vrcp.pop %v6430
        %v6467 = vrcp.pop %v6433
        %v6468 = vrcp.pop %v6436
        %v6469 = vrcp.pop %v6439
        %v6470 = vrcp.pop %v6442
        %v6471 = vrcp.pop %v6445
        %v6472 = vrcp.pop %v6448
        %v6473 = vrcp.pop %v6451
        %v6474 = vrcp.pop %v6454
        %v6475 = vrcp.pop %v6457
        %v6476 = vrcp.pop %v6460
        %v6477 = vmul.f32 %v6382, %v6461
        %v6478 = vmul.f32 %v6384, %v6462
        %v6479 = vmul.f32 %v6386, %v6463
        %v6480 = vmul.f32 %v6388, %v6464
        %v6481 = vmul.f32 %v6390, %v6465
        %v6482 = vmul.f32 %v6392, %v6466
        %v6483 = vmul.f32 %v6394, %v6467
        %v6484 = vmul.f32 %v6396, %v6468
        %v6485 = vmul.f32 %v6398, %v6469
        %v6486 = vmul.f32 %v6400, %v6470
        %v6487 = vmul.f32 %v6402, %v6471
        %v6488 = vmul.f32 %v6404, %v6472
        %v6489 = vmul.f32 %v6406, %v6473
        %v6490 = vmul.f32 %v6408, %v6474
        %v6491 = vmul.f32 %v6410, %v6475
        %v6492 = vmul.f32 %v6412, %v6476
        %v6494 = vsel %vm1645, %v4543, 0
        %v6497 = vsel %vm1645, %v6477, 0
        %6499 = vmatprep.subr.mxu0 0.0
        %6500 = vmatpush1.xpose.msra.mxu0 %v6497
        %6501 = vmatprep.subr.mxu0 0.0
        %6502 = vmatpush1.xpose.msra.mxu0 0.0
        %6503 = vmatprep.subr.mxu0 0.0
        %6504 = vmatpush1.xpose.msra.mxu0 0.0
        %6505 = vmatprep.subr.mxu0 0.0
        %6506 = vmatpush1.xpose.msra.mxu0 0.0
        %6507 = vmatprep.subr.mxu0 0.0
        %6508 = vmatpush1.xpose.msra.mxu0 0.0
        %6509 = vmatprep.subr.mxu0 0.0
        %6510 = vmatpush1.xpose.msra.mxu0 0.0
        %6511 = vmatprep.subr.mxu0 0.0
        %6512 = vmatpush1.xpose.msra.mxu0 0.0
        %6513 = vmatprep.subr.mxu0 0.0
        %6514 = vmatpush1.xpose.msra.mxu0 0.0
        %6515 = vmatprep.subr.mxu0 0.0
        %6516 = vmatpush1.xpose.msra.mxu0 0.0
        %6517 = vmatprep.subr.mxu0 0.0
        %6518 = vmatpush1.xpose.msra.mxu0 0.0
        %6519 = vmatprep.subr.mxu0 0.0
        %6520 = vmatpush1.xpose.msra.mxu0 0.0
        %6521 = vmatprep.subr.mxu0 0.0
        %6522 = vmatpush1.xpose.msra.mxu0 0.0
        %6523 = vmatprep.subr.mxu0 0.0
        %6524 = vmatpush1.xpose.msra.mxu0 0.0
        %6525 = vmatprep.subr.mxu0 0.0
        %6526 = vmatpush1.xpose.msra.mxu0 0.0
        %6527 = vmatprep.subr.mxu0 0.0
        %6528 = vmatpush1.xpose.msra.mxu0 0.0
        %6529 = vmatprep.subr.mxu0 0.0
        %6530 = vmatpush1.xpose.msra.mxu0 0.0
        %6531 = vmatprep.subr.mxu0 0.0
        %6532 = vmatpush1.xpose.msra.mxu0 0.0
        %6533 = vmatprep.subr.mxu0 0.0
        %6534 = vmatpush1.xpose.msra.mxu0 0.0
        %6535 = vmatprep.subr.mxu0 0.0
        %6536 = vmatpush1.xpose.msra.mxu0 0.0
        %6537 = vmatprep.subr.mxu0 0.0
        %6538 = vmatpush1.xpose.msra.mxu0 0.0
        %6539 = vmatprep.subr.mxu0 0.0
        %6540 = vmatpush1.xpose.msra.mxu0 0.0
        %6541 = vmatprep.subr.mxu0 0.0
        %6542 = vmatpush1.xpose.msra.mxu0 0.0
        %6543 = vmatprep.subr.mxu0 0.0
        %6544 = vmatpush1.xpose.msra.mxu0 0.0
        %6545 = vmatprep.subr.mxu0 0.0
        %6546 = vmatpush1.xpose.msra.mxu0 0.0
        %6547 = vmatprep.subr.mxu0 0.0
        %6548 = vmatpush1.xpose.msra.mxu0 0.0
        %6549 = vmatprep.subr.mxu0 0.0
        %6550 = vmatpush1.xpose.msra.mxu0 0.0
        %6551 = vmatprep.subr.mxu0 0.0
        %6552 = vmatpush1.xpose.msra.mxu0 0.0
        %6553 = vmatprep.subr.mxu0 0.0
        %6554 = vmatpush1.xpose.msra.mxu0 0.0
        %6555 = vmatprep.subr.mxu0 0.0
        %6556 = vmatpush1.xpose.msra.mxu0 0.0
        %6557 = vmatprep.subr.mxu0 0.0
        %6558 = vmatpush1.xpose.msra.mxu0 0.0
        %6559 = vmatprep.subr.mxu0 0.0
        %6560 = vmatpush1.xpose.msra.mxu0 0.0
        %6561 = vmatprep.subr.mxu0 0.0
        %6562 = vmatpush1.xpose.msra.mxu0 0.0
        %6563 = vmatprep.mubr.f32.mxu0 0.0
        %6564 = vmatmul.mubr.f32.gmra.mrb[0].mxu0 %v6494
        %v6565 = vpop.f32.mrb[0].mxu0
        %v6566 = vadd.f32 0.0, %v6565
        %v6567 = vpop.f32.mrb[0].mxu0
        %6568 = vdwg.mxu0
        %v6570 = vsel %vm1645, %v4548, 0
        %v6573 = vsel %vm1645, %v6478, 0
        %6575 = vmatprep.subr.mxu0 0.0
        %6576 = vmatpush1.xpose.msra.mxu0 %v6573
        %6577 = vmatprep.subr.mxu0 0.0
        %6578 = vmatpush1.xpose.msra.mxu0 0.0
        %6579 = vmatprep.subr.mxu0 0.0
        %6580 = vmatpush1.xpose.msra.mxu0 0.0
        %6581 = vmatprep.subr.mxu0 0.0
        %6582 = vmatpush1.xpose.msra.mxu0 0.0
        %6583 = vmatprep.subr.mxu0 0.0
        %6584 = vmatpush1.xpose.msra.mxu0 0.0
        %6585 = vmatprep.subr.mxu0 0.0
        %6586 = vmatpush1.xpose.msra.mxu0 0.0
        %6587 = vmatprep.subr.mxu0 0.0
        %6588 = vmatpush1.xpose.msra.mxu0 0.0
        %6589 = vmatprep.subr.mxu0 0.0
        %6590 = vmatpush1.xpose.msra.mxu0 0.0
        %6591 = vmatprep.subr.mxu0 0.0
        %6592 = vmatpush1.xpose.msra.mxu0 0.0
        %6593 = vmatprep.subr.mxu0 0.0
        %6594 = vmatpush1.xpose.msra.mxu0 0.0
        %6595 = vmatprep.subr.mxu0 0.0
        %6596 = vmatpush1.xpose.msra.mxu0 0.0
        %6597 = vmatprep.subr.mxu0 0.0
        %6598 = vmatpush1.xpose.msra.mxu0 0.0
        %6599 = vmatprep.subr.mxu0 0.0
        %6600 = vmatpush1.xpose.msra.mxu0 0.0
        %6601 = vmatprep.subr.mxu0 0.0
        %6602 = vmatpush1.xpose.msra.mxu0 0.0
        %6603 = vmatprep.subr.mxu0 0.0
        %6604 = vmatpush1.xpose.msra.mxu0 0.0
        %6605 = vmatprep.subr.mxu0 0.0
        %6606 = vmatpush1.xpose.msra.mxu0 0.0
        %6607 = vmatprep.subr.mxu0 0.0
        %6608 = vmatpush1.xpose.msra.mxu0 0.0
        %6609 = vmatprep.subr.mxu0 0.0
        %6610 = vmatpush1.xpose.msra.mxu0 0.0
        %6611 = vmatprep.subr.mxu0 0.0
        %6612 = vmatpush1.xpose.msra.mxu0 0.0
        %6613 = vmatprep.subr.mxu0 0.0
        %6614 = vmatpush1.xpose.msra.mxu0 0.0
        %6615 = vmatprep.subr.mxu0 0.0
        %6616 = vmatpush1.xpose.msra.mxu0 0.0
        %6617 = vmatprep.subr.mxu0 0.0
        %6618 = vmatpush1.xpose.msra.mxu0 0.0
        %6619 = vmatprep.subr.mxu0 0.0
        %6620 = vmatpush1.xpose.msra.mxu0 0.0
        %6621 = vmatprep.subr.mxu0 0.0
        %6622 = vmatpush1.xpose.msra.mxu0 0.0
        %6623 = vmatprep.subr.mxu0 0.0
        %6624 = vmatpush1.xpose.msra.mxu0 0.0
        %6625 = vmatprep.subr.mxu0 0.0
        %6626 = vmatpush1.xpose.msra.mxu0 0.0
        %6627 = vmatprep.subr.mxu0 0.0
        %6628 = vmatpush1.xpose.msra.mxu0 0.0
        %6629 = vmatprep.subr.mxu0 0.0
        %6630 = vmatpush1.xpose.msra.mxu0 0.0
        %6631 = vmatprep.subr.mxu0 0.0
        %6632 = vmatpush1.xpose.msra.mxu0 0.0
        %6633 = vmatprep.subr.mxu0 0.0
        %6634 = vmatpush1.xpose.msra.mxu0 0.0
        %6635 = vmatprep.subr.mxu0 0.0
        %6636 = vmatpush1.xpose.msra.mxu0 0.0
        %6637 = vmatprep.subr.mxu0 0.0
        %6638 = vmatpush1.xpose.msra.mxu0 0.0
        %6639 = vmatprep.mubr.f32.mxu0 0.0
        %6640 = vmatmul.mubr.f32.gmra.mrb[0].mxu0 %v6570
        %v6641 = vpop.f32.mrb[0].mxu0
        %v6642 = vadd.f32 0.0, %v6641
        %v6643 = vpop.f32.mrb[0].mxu0
        %6644 = vdwg.mxu0
        %v6646 = vsel %vm1645, %v4553, 0
        %v6649 = vsel %vm1645, %v6479, 0
        %6651 = vmatprep.subr.mxu0 0.0
        %6652 = vmatpush1.xpose.msra.mxu0 %v6649
        %6653 = vmatprep.subr.mxu0 0.0
        %6654 = vmatpush1.xpose.msra.mxu0 0.0
        %6655 = vmatprep.subr.mxu0 0.0
        %6656 = vmatpush1.xpose.msra.mxu0 0.0
        %6657 = vmatprep.subr.mxu0 0.0
        %6658 = vmatpush1.xpose.msra.mxu0 0.0
        %6659 = vmatprep.subr.mxu0 0.0
        %6660 = vmatpush1.xpose.msra.mxu0 0.0
        %6661 = vmatprep.subr.mxu0 0.0
        %6662 = vmatpush1.xpose.msra.mxu0 0.0
        %6663 = vmatprep.subr.mxu0 0.0
        %6664 = vmatpush1.xpose.msra.mxu0 0.0
        %6665 = vmatprep.subr.mxu0 0.0
        %6666 = vmatpush1.xpose.msra.mxu0 0.0
        %6667 = vmatprep.subr.mxu0 0.0
        %6668 = vmatpush1.xpose.msra.mxu0 0.0
        %6669 = vmatprep.subr.mxu0 0.0
        %6670 = vmatpush1.xpose.msra.mxu0 0.0
        %6671 = vmatprep.subr.mxu0 0.0
        %6672 = vmatpush1.xpose.msra.mxu0 0.0
        %6673 = vmatprep.subr.mxu0 0.0
        %6674 = vmatpush1.xpose.msra.mxu0 0.0
        %6675 = vmatprep.subr.mxu0 0.0
        %6676 = vmatpush1.xpose.msra.mxu0 0.0
        %6677 = vmatprep.subr.mxu0 0.0
        %6678 = vmatpush1.xpose.msra.mxu0 0.0
        %6679 = vmatprep.subr.mxu0 0.0
        %6680 = vmatpush1.xpose.msra.mxu0 0.0
        %6681 = vmatprep.subr.mxu0 0.0
        %6682 = vmatpush1.xpose.msra.mxu0 0.0
        %6683 = vmatprep.subr.mxu0 0.0
        %6684 = vmatpush1.xpose.msra.mxu0 0.0
        %6685 = vmatprep.subr.mxu0 0.0
        %6686 = vmatpush1.xpose.msra.mxu0 0.0
        %6687 = vmatprep.subr.mxu0 0.0
        %6688 = vmatpush1.xpose.msra.mxu0 0.0
        %6689 = vmatprep.subr.mxu0 0.0
        %6690 = vmatpush1.xpose.msra.mxu0 0.0
        %6691 = vmatprep.subr.mxu0 0.0
        %6692 = vmatpush1.xpose.msra.mxu0 0.0
        %6693 = vmatprep.subr.mxu0 0.0
        %6694 = vmatpush1.xpose.msra.mxu0 0.0
        %6695 = vmatprep.subr.mxu0 0.0
        %6696 = vmatpush1.xpose.msra.mxu0 0.0
        %6697 = vmatprep.subr.mxu0 0.0
        %6698 = vmatpush1.xpose.msra.mxu0 0.0
        %6699 = vmatprep.subr.mxu0 0.0
        %6700 = vmatpush1.xpose.msra.mxu0 0.0
        %6701 = vmatprep.subr.mxu0 0.0
        %6702 = vmatpush1.xpose.msra.mxu0 0.0
        %6703 = vmatprep.subr.mxu0 0.0
        %6704 = vmatpush1.xpose.msra.mxu0 0.0
        %6705 = vmatprep.subr.mxu0 0.0
        %6706 = vmatpush1.xpose.msra.mxu0 0.0
        %6707 = vmatprep.subr.mxu0 0.0
        %6708 = vmatpush1.xpose.msra.mxu0 0.0
        %6709 = vmatprep.subr.mxu0 0.0
        %6710 = vmatpush1.xpose.msra.mxu0 0.0
        %6711 = vmatprep.subr.mxu0 0.0
        %6712 = vmatpush1.xpose.msra.mxu0 0.0
        %6713 = vmatprep.subr.mxu0 0.0
        %6714 = vmatpush1.xpose.msra.mxu0 0.0
        %6715 = vmatprep.mubr.f32.mxu0 0.0
        %6716 = vmatmul.mubr.f32.gmra.mrb[0].mxu0 %v6646
        %v6717 = vpop.f32.mrb[0].mxu0
        %v6718 = vadd.f32 0.0, %v6717
        %v6719 = vpop.f32.mrb[0].mxu0
        %6720 = vdwg.mxu0
        %v6722 = vsel %vm1645, %v4558, 0
        %v6725 = vsel %vm1645, %v6480, 0
        %6727 = vmatprep.subr.mxu0 0.0
        %6728 = vmatpush1.xpose.msra.mxu0 %v6725
        %6729 = vmatprep.subr.mxu0 0.0
        %6730 = vmatpush1.xpose.msra.mxu0 0.0
        %6731 = vmatprep.subr.mxu0 0.0
        %6732 = vmatpush1.xpose.msra.mxu0 0.0
        %6733 = vmatprep.subr.mxu0 0.0
        %6734 = vmatpush1.xpose.msra.mxu0 0.0
        %6735 = vmatprep.subr.mxu0 0.0
        %6736 = vmatpush1.xpose.msra.mxu0 0.0
        %6737 = vmatprep.subr.mxu0 0.0
        %6738 = vmatpush1.xpose.msra.mxu0 0.0
        %6739 = vmatprep.subr.mxu0 0.0
        %6740 = vmatpush1.xpose.msra.mxu0 0.0
        %6741 = vmatprep.subr.mxu0 0.0
        %6742 = vmatpush1.xpose.msra.mxu0 0.0
        %6743 = vmatprep.subr.mxu0 0.0
        %6744 = vmatpush1.xpose.msra.mxu0 0.0
        %6745 = vmatprep.subr.mxu0 0.0
        %6746 = vmatpush1.xpose.msra.mxu0 0.0
        %6747 = vmatprep.subr.mxu0 0.0
        %6748 = vmatpush1.xpose.msra.mxu0 0.0
        %6749 = vmatprep.subr.mxu0 0.0
        %6750 = vmatpush1.xpose.msra.mxu0 0.0
        %6751 = vmatprep.subr.mxu0 0.0
        %6752 = vmatpush1.xpose.msra.mxu0 0.0
        %6753 = vmatprep.subr.mxu0 0.0
        %6754 = vmatpush1.xpose.msra.mxu0 0.0
        %6755 = vmatprep.subr.mxu0 0.0
        %6756 = vmatpush1.xpose.msra.mxu0 0.0
        %6757 = vmatprep.subr.mxu0 0.0
        %6758 = vmatpush1.xpose.msra.mxu0 0.0
        %6759 = vmatprep.subr.mxu0 0.0
        %6760 = vmatpush1.xpose.msra.mxu0 0.0
        %6761 = vmatprep.subr.mxu0 0.0
        %6762 = vmatpush1.xpose.msra.mxu0 0.0
        %6763 = vmatprep.subr.mxu0 0.0
        %6764 = vmatpush1.xpose.msra.mxu0 0.0
        %6765 = vmatprep.subr.mxu0 0.0
        %6766 = vmatpush1.xpose.msra.mxu0 0.0
        %6767 = vmatprep.subr.mxu0 0.0
        %6768 = vmatpush1.xpose.msra.mxu0 0.0
        %6769 = vmatprep.subr.mxu0 0.0
        %6770 = vmatpush1.xpose.msra.mxu0 0.0
        %6771 = vmatprep.subr.mxu0 0.0
        %6772 = vmatpush1.xpose.msra.mxu0 0.0
        %6773 = vmatprep.subr.mxu0 0.0
        %6774 = vmatpush1.xpose.msra.mxu0 0.0
        %6775 = vmatprep.subr.mxu0 0.0
        %6776 = vmatpush1.xpose.msra.mxu0 0.0
        %6777 = vmatprep.subr.mxu0 0.0
        %6778 = vmatpush1.xpose.msra.mxu0 0.0
        %6779 = vmatprep.subr.mxu0 0.0
        %6780 = vmatpush1.xpose.msra.mxu0 0.0
        %6781 = vmatprep.subr.mxu0 0.0
        %6782 = vmatpush1.xpose.msra.mxu0 0.0
        %6783 = vmatprep.subr.mxu0 0.0
        %6784 = vmatpush1.xpose.msra.mxu0 0.0
        %6785 = vmatprep.subr.mxu0 0.0
        %6786 = vmatpush1.xpose.msra.mxu0 0.0
        %6787 = vmatprep.subr.mxu0 0.0
        %6788 = vmatpush1.xpose.msra.mxu0 0.0
        %6789 = vmatprep.subr.mxu0 0.0
        %6790 = vmatpush1.xpose.msra.mxu0 0.0
        %6791 = vmatprep.mubr.f32.mxu0 0.0
        %6792 = vmatmul.mubr.f32.gmra.mrb[0].mxu0 %v6722
        %v6793 = vpop.f32.mrb[0].mxu0
        %v6794 = vadd.f32 0.0, %v6793
        %v6795 = vpop.f32.mrb[0].mxu0
        %6796 = vdwg.mxu0
        %v6798 = vsel %vm1645, %v4563, 0
        %v6801 = vsel %vm1645, %v6481, 0
        %6803 = vmatprep.subr.mxu0 0.0
        %6804 = vmatpush1.xpose.msra.mxu0 %v6801
        %6805 = vmatprep.subr.mxu0 0.0
        %6806 = vmatpush1.xpose.msra.mxu0 0.0
        %6807 = vmatprep.subr.mxu0 0.0
        %6808 = vmatpush1.xpose.msra.mxu0 0.0
        %6809 = vmatprep.subr.mxu0 0.0
        %6810 = vmatpush1.xpose.msra.mxu0 0.0
        %6811 = vmatprep.subr.mxu0 0.0
        %6812 = vmatpush1.xpose.msra.mxu0 0.0
        %6813 = vmatprep.subr.mxu0 0.0
        %6814 = vmatpush1.xpose.msra.mxu0 0.0
        %6815 = vmatprep.subr.mxu0 0.0
        %6816 = vmatpush1.xpose.msra.mxu0 0.0
        %6817 = vmatprep.subr.mxu0 0.0
        %6818 = vmatpush1.xpose.msra.mxu0 0.0
        %6819 = vmatprep.subr.mxu0 0.0
        %6820 = vmatpush1.xpose.msra.mxu0 0.0
        %6821 = vmatprep.subr.mxu0 0.0
        %6822 = vmatpush1.xpose.msra.mxu0 0.0
        %6823 = vmatprep.subr.mxu0 0.0
        %6824 = vmatpush1.xpose.msra.mxu0 0.0
        %6825 = vmatprep.subr.mxu0 0.0
        %6826 = vmatpush1.xpose.msra.mxu0 0.0
        %6827 = vmatprep.subr.mxu0 0.0
        %6828 = vmatpush1.xpose.msra.mxu0 0.0
        %6829 = vmatprep.subr.mxu0 0.0
        %6830 = vmatpush1.xpose.msra.mxu0 0.0
        %6831 = vmatprep.subr.mxu0 0.0
        %6832 = vmatpush1.xpose.msra.mxu0 0.0
        %6833 = vmatprep.subr.mxu0 0.0
        %6834 = vmatpush1.xpose.msra.mxu0 0.0
        %6835 = vmatprep.subr.mxu0 0.0
        %6836 = vmatpush1.xpose.msra.mxu0 0.0
        %6837 = vmatprep.subr.mxu0 0.0
        %6838 = vmatpush1.xpose.msra.mxu0 0.0
        %6839 = vmatprep.subr.mxu0 0.0
        %6840 = vmatpush1.xpose.msra.mxu0 0.0
        %6841 = vmatprep.subr.mxu0 0.0
        %6842 = vmatpush1.xpose.msra.mxu0 0.0
        %6843 = vmatprep.subr.mxu0 0.0
        %6844 = vmatpush1.xpose.msra.mxu0 0.0
        %6845 = vmatprep.subr.mxu0 0.0
        %6846 = vmatpush1.xpose.msra.mxu0 0.0
        %6847 = vmatprep.subr.mxu0 0.0
        %6848 = vmatpush1.xpose.msra.mxu0 0.0
        %6849 = vmatprep.subr.mxu0 0.0
        %6850 = vmatpush1.xpose.msra.mxu0 0.0
        %6851 = vmatprep.subr.mxu0 0.0
        %6852 = vmatpush1.xpose.msra.mxu0 0.0
        %6853 = vmatprep.subr.mxu0 0.0
        %6854 = vmatpush1.xpose.msra.mxu0 0.0
        %6855 = vmatprep.subr.mxu0 0.0
        %6856 = vmatpush1.xpose.msra.mxu0 0.0
        %6857 = vmatprep.subr.mxu0 0.0
        %6858 = vmatpush1.xpose.msra.mxu0 0.0
        %6859 = vmatprep.subr.mxu0 0.0
        %6860 = vmatpush1.xpose.msra.mxu0 0.0
        %6861 = vmatprep.subr.mxu0 0.0
        %6862 = vmatpush1.xpose.msra.mxu0 0.0
        %6863 = vmatprep.subr.mxu0 0.0
        %6864 = vmatpush1.xpose.msra.mxu0 0.0
        %6865 = vmatprep.subr.mxu0 0.0
        %6866 = vmatpush1.xpose.msra.mxu0 0.0
        %6867 = vmatprep.mubr.f32.mxu0 0.0
        %6868 = vmatmul.mubr.f32.gmra.mrb[0].mxu0 %v6798
        %v6869 = vpop.f32.mrb[0].mxu0
        %v6870 = vadd.f32 0.0, %v6869
        %v6871 = vpop.f32.mrb[0].mxu0
        %6872 = vdwg.mxu0
        %v6874 = vsel %vm1645, %v4568, 0
        %v6877 = vsel %vm1645, %v6482, 0
        %6879 = vmatprep.subr.mxu0 0.0
        %6880 = vmatpush1.xpose.msra.mxu0 %v6877
        %6881 = vmatprep.subr.mxu0 0.0
        %6882 = vmatpush1.xpose.msra.mxu0 0.0
        %6883 = vmatprep.subr.mxu0 0.0
        %6884 = vmatpush1.xpose.msra.mxu0 0.0
        %6885 = vmatprep.subr.mxu0 0.0
        %6886 = vmatpush1.xpose.msra.mxu0 0.0
        %6887 = vmatprep.subr.mxu0 0.0
        %6888 = vmatpush1.xpose.msra.mxu0 0.0
        %6889 = vmatprep.subr.mxu0 0.0
        %6890 = vmatpush1.xpose.msra.mxu0 0.0
        %6891 = vmatprep.subr.mxu0 0.0
        %6892 = vmatpush1.xpose.msra.mxu0 0.0
        %6893 = vmatprep.subr.mxu0 0.0
        %6894 = vmatpush1.xpose.msra.mxu0 0.0
        %6895 = vmatprep.subr.mxu0 0.0
        %6896 = vmatpush1.xpose.msra.mxu0 0.0
        %6897 = vmatprep.subr.mxu0 0.0
        %6898 = vmatpush1.xpose.msra.mxu0 0.0
        %6899 = vmatprep.subr.mxu0 0.0
        %6900 = vmatpush1.xpose.msra.mxu0 0.0
        %6901 = vmatprep.subr.mxu0 0.0
        %6902 = vmatpush1.xpose.msra.mxu0 0.0
        %6903 = vmatprep.subr.mxu0 0.0
        %6904 = vmatpush1.xpose.msra.mxu0 0.0
        %6905 = vmatprep.subr.mxu0 0.0
        %6906 = vmatpush1.xpose.msra.mxu0 0.0
        %6907 = vmatprep.subr.mxu0 0.0
        %6908 = vmatpush1.xpose.msra.mxu0 0.0
        %6909 = vmatprep.subr.mxu0 0.0
        %6910 = vmatpush1.xpose.msra.mxu0 0.0
        %6911 = vmatprep.subr.mxu0 0.0
        %6912 = vmatpush1.xpose.msra.mxu0 0.0
        %6913 = vmatprep.subr.mxu0 0.0
        %6914 = vmatpush1.xpose.msra.mxu0 0.0
        %6915 = vmatprep.subr.mxu0 0.0
        %6916 = vmatpush1.xpose.msra.mxu0 0.0
        %6917 = vmatprep.subr.mxu0 0.0
        %6918 = vmatpush1.xpose.msra.mxu0 0.0
        %6919 = vmatprep.subr.mxu0 0.0
        %6920 = vmatpush1.xpose.msra.mxu0 0.0
        %6921 = vmatprep.subr.mxu0 0.0
        %6922 = vmatpush1.xpose.msra.mxu0 0.0
        %6923 = vmatprep.subr.mxu0 0.0
        %6924 = vmatpush1.xpose.msra.mxu0 0.0
        %6925 = vmatprep.subr.mxu0 0.0
        %6926 = vmatpush1.xpose.msra.mxu0 0.0
        %6927 = vmatprep.subr.mxu0 0.0
        %6928 = vmatpush1.xpose.msra.mxu0 0.0
        %6929 = vmatprep.subr.mxu0 0.0
        %6930 = vmatpush1.xpose.msra.mxu0 0.0
        %6931 = vmatprep.subr.mxu0 0.0
        %6932 = vmatpush1.xpose.msra.mxu0 0.0
        %6933 = vmatprep.subr.mxu0 0.0
        %6934 = vmatpush1.xpose.msra.mxu0 0.0
        %6935 = vmatprep.subr.mxu0 0.0
        %6936 = vmatpush1.xpose.msra.mxu0 0.0
        %6937 = vmatprep.subr.mxu0 0.0
        %6938 = vmatpush1.xpose.msra.mxu0 0.0
        %6939 = vmatprep.subr.mxu0 0.0
        %6940 = vmatpush1.xpose.msra.mxu0 0.0
        %6941 = vmatprep.subr.mxu0 0.0
        %6942 = vmatpush1.xpose.msra.mxu0 0.0
        %6943 = vmatprep.mubr.f32.mxu0 0.0
        %6944 = vmatmul.mubr.f32.gmra.mrb[0].mxu0 %v6874
        %v6945 = vpop.f32.mrb[0].mxu0
        %v6946 = vadd.f32 0.0, %v6945
        %v6947 = vpop.f32.mrb[0].mxu0
        %6948 = vdwg.mxu0
        %v6950 = vsel %vm1645, %v4573, 0
        %v6953 = vsel %vm1645, %v6483, 0
        %6955 = vmatprep.subr.mxu0 0.0
        %6956 = vmatpush1.xpose.msra.mxu0 %v6953
        %6957 = vmatprep.subr.mxu0 0.0
        %6958 = vmatpush1.xpose.msra.mxu0 0.0
        %6959 = vmatprep.subr.mxu0 0.0
        %6960 = vmatpush1.xpose.msra.mxu0 0.0
        %6961 = vmatprep.subr.mxu0 0.0
        %6962 = vmatpush1.xpose.msra.mxu0 0.0
        %6963 = vmatprep.subr.mxu0 0.0
        %6964 = vmatpush1.xpose.msra.mxu0 0.0
        %6965 = vmatprep.subr.mxu0 0.0
        %6966 = vmatpush1.xpose.msra.mxu0 0.0
        %6967 = vmatprep.subr.mxu0 0.0
        %6968 = vmatpush1.xpose.msra.mxu0 0.0
        %6969 = vmatprep.subr.mxu0 0.0
        %6970 = vmatpush1.xpose.msra.mxu0 0.0
        %6971 = vmatprep.subr.mxu0 0.0
        %6972 = vmatpush1.xpose.msra.mxu0 0.0
        %6973 = vmatprep.subr.mxu0 0.0
        %6974 = vmatpush1.xpose.msra.mxu0 0.0
        %6975 = vmatprep.subr.mxu0 0.0
        %6976 = vmatpush1.xpose.msra.mxu0 0.0
        %6977 = vmatprep.subr.mxu0 0.0
        %6978 = vmatpush1.xpose.msra.mxu0 0.0
        %6979 = vmatprep.subr.mxu0 0.0
        %6980 = vmatpush1.xpose.msra.mxu0 0.0
        %6981 = vmatprep.subr.mxu0 0.0
        %6982 = vmatpush1.xpose.msra.mxu0 0.0
        %6983 = vmatprep.subr.mxu0 0.0
        %6984 = vmatpush1.xpose.msra.mxu0 0.0
        %6985 = vmatprep.subr.mxu0 0.0
        %6986 = vmatpush1.xpose.msra.mxu0 0.0
        %6987 = vmatprep.subr.mxu0 0.0
        %6988 = vmatpush1.xpose.msra.mxu0 0.0
        %6989 = vmatprep.subr.mxu0 0.0
        %6990 = vmatpush1.xpose.msra.mxu0 0.0
        %6991 = vmatprep.subr.mxu0 0.0
        %6992 = vmatpush1.xpose.msra.mxu0 0.0
        %6993 = vmatprep.subr.mxu0 0.0
        %6994 = vmatpush1.xpose.msra.mxu0 0.0
        %6995 = vmatprep.subr.mxu0 0.0
        %6996 = vmatpush1.xpose.msra.mxu0 0.0
        %6997 = vmatprep.subr.mxu0 0.0
        %6998 = vmatpush1.xpose.msra.mxu0 0.0
        %6999 = vmatprep.subr.mxu0 0.0
        %7000 = vmatpush1.xpose.msra.mxu0 0.0
        %7001 = vmatprep.subr.mxu0 0.0
        %7002 = vmatpush1.xpose.msra.mxu0 0.0
        %7003 = vmatprep.subr.mxu0 0.0
        %7004 = vmatpush1.xpose.msra.mxu0 0.0
        %7005 = vmatprep.subr.mxu0 0.0
        %7006 = vmatpush1.xpose.msra.mxu0 0.0
        %7007 = vmatprep.subr.mxu0 0.0
        %7008 = vmatpush1.xpose.msra.mxu0 0.0
        %7009 = vmatprep.subr.mxu0 0.0
        %7010 = vmatpush1.xpose.msra.mxu0 0.0
        %7011 = vmatprep.subr.mxu0 0.0
        %7012 = vmatpush1.xpose.msra.mxu0 0.0
        %7013 = vmatprep.subr.mxu0 0.0
        %7014 = vmatpush1.xpose.msra.mxu0 0.0
        %7015 = vmatprep.subr.mxu0 0.0
        %7016 = vmatpush1.xpose.msra.mxu0 0.0
        %7017 = vmatprep.subr.mxu0 0.0
        %7018 = vmatpush1.xpose.msra.mxu0 0.0
        %7019 = vmatprep.mubr.f32.mxu0 0.0
        %7020 = vmatmul.mubr.f32.gmra.mrb[0].mxu0 %v6950
        %v7021 = vpop.f32.mrb[0].mxu0
        %v7022 = vadd.f32 0.0, %v7021
        %v7023 = vpop.f32.mrb[0].mxu0
        %7024 = vdwg.mxu0
        %v7026 = vsel %vm1645, %v4578, 0
        %v7029 = vsel %vm1645, %v6484, 0
        %7031 = vmatprep.subr.mxu0 0.0
        %7032 = vmatpush1.xpose.msra.mxu0 %v7029
        %7033 = vmatprep.subr.mxu0 0.0
        %7034 = vmatpush1.xpose.msra.mxu0 0.0
        %7035 = vmatprep.subr.mxu0 0.0
        %7036 = vmatpush1.xpose.msra.mxu0 0.0
        %7037 = vmatprep.subr.mxu0 0.0
        %7038 = vmatpush1.xpose.msra.mxu0 0.0
        %7039 = vmatprep.subr.mxu0 0.0
        %7040 = vmatpush1.xpose.msra.mxu0 0.0
        %7041 = vmatprep.subr.mxu0 0.0
        %7042 = vmatpush1.xpose.msra.mxu0 0.0
        %7043 = vmatprep.subr.mxu0 0.0
        %7044 = vmatpush1.xpose.msra.mxu0 0.0
        %7045 = vmatprep.subr.mxu0 0.0
        %7046 = vmatpush1.xpose.msra.mxu0 0.0
        %7047 = vmatprep.subr.mxu0 0.0
        %7048 = vmatpush1.xpose.msra.mxu0 0.0
        %7049 = vmatprep.subr.mxu0 0.0
        %7050 = vmatpush1.xpose.msra.mxu0 0.0
        %7051 = vmatprep.subr.mxu0 0.0
        %7052 = vmatpush1.xpose.msra.mxu0 0.0
        %7053 = vmatprep.subr.mxu0 0.0
        %7054 = vmatpush1.xpose.msra.mxu0 0.0
        %7055 = vmatprep.subr.mxu0 0.0
        %7056 = vmatpush1.xpose.msra.mxu0 0.0
        %7057 = vmatprep.subr.mxu0 0.0
        %7058 = vmatpush1.xpose.msra.mxu0 0.0
        %7059 = vmatprep.subr.mxu0 0.0
        %7060 = vmatpush1.xpose.msra.mxu0 0.0
        %7061 = vmatprep.subr.mxu0 0.0
        %7062 = vmatpush1.xpose.msra.mxu0 0.0
        %7063 = vmatprep.subr.mxu0 0.0
        %7064 = vmatpush1.xpose.msra.mxu0 0.0
        %7065 = vmatprep.subr.mxu0 0.0
        %7066 = vmatpush1.xpose.msra.mxu0 0.0
        %7067 = vmatprep.subr.mxu0 0.0
        %7068 = vmatpush1.xpose.msra.mxu0 0.0
        %7069 = vmatprep.subr.mxu0 0.0
        %7070 = vmatpush1.xpose.msra.mxu0 0.0
        %7071 = vmatprep.subr.mxu0 0.0
        %7072 = vmatpush1.xpose.msra.mxu0 0.0
        %7073 = vmatprep.subr.mxu0 0.0
        %7074 = vmatpush1.xpose.msra.mxu0 0.0
        %7075 = vmatprep.subr.mxu0 0.0
        %7076 = vmatpush1.xpose.msra.mxu0 0.0
        %7077 = vmatprep.subr.mxu0 0.0
        %7078 = vmatpush1.xpose.msra.mxu0 0.0
        %7079 = vmatprep.subr.mxu0 0.0
        %7080 = vmatpush1.xpose.msra.mxu0 0.0
        %7081 = vmatprep.subr.mxu0 0.0
        %7082 = vmatpush1.xpose.msra.mxu0 0.0
        %7083 = vmatprep.subr.mxu0 0.0
        %7084 = vmatpush1.xpose.msra.mxu0 0.0
        %7085 = vmatprep.subr.mxu0 0.0
        %7086 = vmatpush1.xpose.msra.mxu0 0.0
        %7087 = vmatprep.subr.mxu0 0.0
        %7088 = vmatpush1.xpose.msra.mxu0 0.0
        %7089 = vmatprep.subr.mxu0 0.0
        %7090 = vmatpush1.xpose.msra.mxu0 0.0
        %7091 = vmatprep.subr.mxu0 0.0
        %7092 = vmatpush1.xpose.msra.mxu0 0.0
        %7093 = vmatprep.subr.mxu0 0.0
        %7094 = vmatpush1.xpose.msra.mxu0 0.0
        %7095 = vmatprep.mubr.f32.mxu0 0.0
        %7096 = vmatmul.mubr.f32.gmra.mrb[0].mxu0 %v7026
        %v7097 = vpop.f32.mrb[0].mxu0
        %v7098 = vadd.f32 0.0, %v7097
        %v7099 = vpop.f32.mrb[0].mxu0
        %7100 = vdwg.mxu0
        %v7102 = vsel %vm1645, %v4583, 0
        %v7105 = vsel %vm1645, %v6485, 0
        %7107 = vmatprep.subr.mxu0 0.0
        %7108 = vmatpush1.xpose.msra.mxu0 %v7105
        %7109 = vmatprep.subr.mxu0 0.0
        %7110 = vmatpush1.xpose.msra.mxu0 0.0
        %7111 = vmatprep.subr.mxu0 0.0
        %7112 = vmatpush1.xpose.msra.mxu0 0.0
        %7113 = vmatprep.subr.mxu0 0.0
        %7114 = vmatpush1.xpose.msra.mxu0 0.0
        %7115 = vmatprep.subr.mxu0 0.0
        %7116 = vmatpush1.xpose.msra.mxu0 0.0
        %7117 = vmatprep.subr.mxu0 0.0
        %7118 = vmatpush1.xpose.msra.mxu0 0.0
        %7119 = vmatprep.subr.mxu0 0.0
        %7120 = vmatpush1.xpose.msra.mxu0 0.0
        %7121 = vmatprep.subr.mxu0 0.0
        %7122 = vmatpush1.xpose.msra.mxu0 0.0
        %7123 = vmatprep.subr.mxu0 0.0
        %7124 = vmatpush1.xpose.msra.mxu0 0.0
        %7125 = vmatprep.subr.mxu0 0.0
        %7126 = vmatpush1.xpose.msra.mxu0 0.0
        %7127 = vmatprep.subr.mxu0 0.0
        %7128 = vmatpush1.xpose.msra.mxu0 0.0
        %7129 = vmatprep.subr.mxu0 0.0
        %7130 = vmatpush1.xpose.msra.mxu0 0.0
        %7131 = vmatprep.subr.mxu0 0.0
        %7132 = vmatpush1.xpose.msra.mxu0 0.0
        %7133 = vmatprep.subr.mxu0 0.0
        %7134 = vmatpush1.xpose.msra.mxu0 0.0
        %7135 = vmatprep.subr.mxu0 0.0
        %7136 = vmatpush1.xpose.msra.mxu0 0.0
        %7137 = vmatprep.subr.mxu0 0.0
        %7138 = vmatpush1.xpose.msra.mxu0 0.0
        %7139 = vmatprep.subr.mxu0 0.0
        %7140 = vmatpush1.xpose.msra.mxu0 0.0
        %7141 = vmatprep.subr.mxu0 0.0
        %7142 = vmatpush1.xpose.msra.mxu0 0.0
        %7143 = vmatprep.subr.mxu0 0.0
        %7144 = vmatpush1.xpose.msra.mxu0 0.0
        %7145 = vmatprep.subr.mxu0 0.0
        %7146 = vmatpush1.xpose.msra.mxu0 0.0
        %7147 = vmatprep.subr.mxu0 0.0
        %7148 = vmatpush1.xpose.msra.mxu0 0.0
        %7149 = vmatprep.subr.mxu0 0.0
        %7150 = vmatpush1.xpose.msra.mxu0 0.0
        %7151 = vmatprep.subr.mxu0 0.0
        %7152 = vmatpush1.xpose.msra.mxu0 0.0
        %7153 = vmatprep.subr.mxu0 0.0
        %7154 = vmatpush1.xpose.msra.mxu0 0.0
        %7155 = vmatprep.subr.mxu0 0.0
        %7156 = vmatpush1.xpose.msra.mxu0 0.0
        %7157 = vmatprep.subr.mxu0 0.0
        %7158 = vmatpush1.xpose.msra.mxu0 0.0
        %7159 = vmatprep.subr.mxu0 0.0
        %7160 = vmatpush1.xpose.msra.mxu0 0.0
        %7161 = vmatprep.subr.mxu0 0.0
        %7162 = vmatpush1.xpose.msra.mxu0 0.0
        %7163 = vmatprep.subr.mxu0 0.0
        %7164 = vmatpush1.xpose.msra.mxu0 0.0
        %7165 = vmatprep.subr.mxu0 0.0
        %7166 = vmatpush1.xpose.msra.mxu0 0.0
        %7167 = vmatprep.subr.mxu0 0.0
        %7168 = vmatpush1.xpose.msra.mxu0 0.0
        %7169 = vmatprep.subr.mxu0 0.0
        %7170 = vmatpush1.xpose.msra.mxu0 0.0
        %7171 = vmatprep.mubr.f32.mxu0 0.0
        %7172 = vmatmul.mubr.f32.gmra.mrb[0].mxu0 %v7102
        %v7173 = vpop.f32.mrb[0].mxu0
        %v7174 = vadd.f32 0.0, %v7173
        %v7175 = vpop.f32.mrb[0].mxu0
        %7176 = vdwg.mxu0
        %v7178 = vsel %vm1645, %v4588, 0
        %v7181 = vsel %vm1645, %v6486, 0
        %7183 = vmatprep.subr.mxu0 0.0
        %7184 = vmatpush1.xpose.msra.mxu0 %v7181
        %7185 = vmatprep.subr.mxu0 0.0
        %7186 = vmatpush1.xpose.msra.mxu0 0.0
        %7187 = vmatprep.subr.mxu0 0.0
        %7188 = vmatpush1.xpose.msra.mxu0 0.0
        %7189 = vmatprep.subr.mxu0 0.0
        %7190 = vmatpush1.xpose.msra.mxu0 0.0
        %7191 = vmatprep.subr.mxu0 0.0
        %7192 = vmatpush1.xpose.msra.mxu0 0.0
        %7193 = vmatprep.subr.mxu0 0.0
        %7194 = vmatpush1.xpose.msra.mxu0 0.0
        %7195 = vmatprep.subr.mxu0 0.0
        %7196 = vmatpush1.xpose.msra.mxu0 0.0
        %7197 = vmatprep.subr.mxu0 0.0
        %7198 = vmatpush1.xpose.msra.mxu0 0.0
        %7199 = vmatprep.subr.mxu0 0.0
        %7200 = vmatpush1.xpose.msra.mxu0 0.0
        %7201 = vmatprep.subr.mxu0 0.0
        %7202 = vmatpush1.xpose.msra.mxu0 0.0
        %7203 = vmatprep.subr.mxu0 0.0
        %7204 = vmatpush1.xpose.msra.mxu0 0.0
        %7205 = vmatprep.subr.mxu0 0.0
        %7206 = vmatpush1.xpose.msra.mxu0 0.0
        %7207 = vmatprep.subr.mxu0 0.0
        %7208 = vmatpush1.xpose.msra.mxu0 0.0
        %7209 = vmatprep.subr.mxu0 0.0
        %7210 = vmatpush1.xpose.msra.mxu0 0.0
        %7211 = vmatprep.subr.mxu0 0.0
        %7212 = vmatpush1.xpose.msra.mxu0 0.0
        %7213 = vmatprep.subr.mxu0 0.0
        %7214 = vmatpush1.xpose.msra.mxu0 0.0
        %7215 = vmatprep.subr.mxu0 0.0
        %7216 = vmatpush1.xpose.msra.mxu0 0.0
        %7217 = vmatprep.subr.mxu0 0.0
        %7218 = vmatpush1.xpose.msra.mxu0 0.0
        %7219 = vmatprep.subr.mxu0 0.0
        %7220 = vmatpush1.xpose.msra.mxu0 0.0
        %7221 = vmatprep.subr.mxu0 0.0
        %7222 = vmatpush1.xpose.msra.mxu0 0.0
        %7223 = vmatprep.subr.mxu0 0.0
        %7224 = vmatpush1.xpose.msra.mxu0 0.0
        %7225 = vmatprep.subr.mxu0 0.0
        %7226 = vmatpush1.xpose.msra.mxu0 0.0
        %7227 = vmatprep.subr.mxu0 0.0
        %7228 = vmatpush1.xpose.msra.mxu0 0.0
        %7229 = vmatprep.subr.mxu0 0.0
        %7230 = vmatpush1.xpose.msra.mxu0 0.0
        %7231 = vmatprep.subr.mxu0 0.0
        %7232 = vmatpush1.xpose.msra.mxu0 0.0
        %7233 = vmatprep.subr.mxu0 0.0
        %7234 = vmatpush1.xpose.msra.mxu0 0.0
        %7235 = vmatprep.subr.mxu0 0.0
        %7236 = vmatpush1.xpose.msra.mxu0 0.0
        %7237 = vmatprep.subr.mxu0 0.0
        %7238 = vmatpush1.xpose.msra.mxu0 0.0
        %7239 = vmatprep.subr.mxu0 0.0
        %7240 = vmatpush1.xpose.msra.mxu0 0.0
        %7241 = vmatprep.subr.mxu0 0.0
        %7242 = vmatpush1.xpose.msra.mxu0 0.0
        %7243 = vmatprep.subr.mxu0 0.0
        %7244 = vmatpush1.xpose.msra.mxu0 0.0
        %7245 = vmatprep.subr.mxu0 0.0
        %7246 = vmatpush1.xpose.msra.mxu0 0.0
        %7247 = vmatprep.mubr.f32.mxu0 0.0
        %7248 = vmatmul.mubr.f32.gmra.mrb[0].mxu0 %v7178
        %v7249 = vpop.f32.mrb[0].mxu0
        %v7250 = vadd.f32 0.0, %v7249
        %v7251 = vpop.f32.mrb[0].mxu0
        %7252 = vdwg.mxu0
        %v7254 = vsel %vm1645, %v4593, 0
        %v7257 = vsel %vm1645, %v6487, 0
        %7259 = vmatprep.subr.mxu0 0.0
        %7260 = vmatpush1.xpose.msra.mxu0 %v7257
        %7261 = vmatprep.subr.mxu0 0.0
        %7262 = vmatpush1.xpose.msra.mxu0 0.0
        %7263 = vmatprep.subr.mxu0 0.0
        %7264 = vmatpush1.xpose.msra.mxu0 0.0
        %7265 = vmatprep.subr.mxu0 0.0
        %7266 = vmatpush1.xpose.msra.mxu0 0.0
        %7267 = vmatprep.subr.mxu0 0.0
        %7268 = vmatpush1.xpose.msra.mxu0 0.0
        %7269 = vmatprep.subr.mxu0 0.0
        %7270 = vmatpush1.xpose.msra.mxu0 0.0
        %7271 = vmatprep.subr.mxu0 0.0
        %7272 = vmatpush1.xpose.msra.mxu0 0.0
        %7273 = vmatprep.subr.mxu0 0.0
        %7274 = vmatpush1.xpose.msra.mxu0 0.0
        %7275 = vmatprep.subr.mxu0 0.0
        %7276 = vmatpush1.xpose.msra.mxu0 0.0
        %7277 = vmatprep.subr.mxu0 0.0
        %7278 = vmatpush1.xpose.msra.mxu0 0.0
        %7279 = vmatprep.subr.mxu0 0.0
        %7280 = vmatpush1.xpose.msra.mxu0 0.0
        %7281 = vmatprep.subr.mxu0 0.0
        %7282 = vmatpush1.xpose.msra.mxu0 0.0
        %7283 = vmatprep.subr.mxu0 0.0
        %7284 = vmatpush1.xpose.msra.mxu0 0.0
        %7285 = vmatprep.subr.mxu0 0.0
        %7286 = vmatpush1.xpose.msra.mxu0 0.0
        %7287 = vmatprep.subr.mxu0 0.0
        %7288 = vmatpush1.xpose.msra.mxu0 0.0
        %7289 = vmatprep.subr.mxu0 0.0
        %7290 = vmatpush1.xpose.msra.mxu0 0.0
        %7291 = vmatprep.subr.mxu0 0.0
        %7292 = vmatpush1.xpose.msra.mxu0 0.0
        %7293 = vmatprep.subr.mxu0 0.0
        %7294 = vmatpush1.xpose.msra.mxu0 0.0
        %7295 = vmatprep.subr.mxu0 0.0
        %7296 = vmatpush1.xpose.msra.mxu0 0.0
        %7297 = vmatprep.subr.mxu0 0.0
        %7298 = vmatpush1.xpose.msra.mxu0 0.0
        %7299 = vmatprep.subr.mxu0 0.0
        %7300 = vmatpush1.xpose.msra.mxu0 0.0
        %7301 = vmatprep.subr.mxu0 0.0
        %7302 = vmatpush1.xpose.msra.mxu0 0.0
        %7303 = vmatprep.subr.mxu0 0.0
        %7304 = vmatpush1.xpose.msra.mxu0 0.0
        %7305 = vmatprep.subr.mxu0 0.0
        %7306 = vmatpush1.xpose.msra.mxu0 0.0
        %7307 = vmatprep.subr.mxu0 0.0
        %7308 = vmatpush1.xpose.msra.mxu0 0.0
        %7309 = vmatprep.subr.mxu0 0.0
        %7310 = vmatpush1.xpose.msra.mxu0 0.0
        %7311 = vmatprep.subr.mxu0 0.0
        %7312 = vmatpush1.xpose.msra.mxu0 0.0
        %7313 = vmatprep.subr.mxu0 0.0
        %7314 = vmatpush1.xpose.msra.mxu0 0.0
        %7315 = vmatprep.subr.mxu0 0.0
        %7316 = vmatpush1.xpose.msra.mxu0 0.0
        %7317 = vmatprep.subr.mxu0 0.0
        %7318 = vmatpush1.xpose.msra.mxu0 0.0
        %7319 = vmatprep.subr.mxu0 0.0
        %7320 = vmatpush1.xpose.msra.mxu0 0.0
        %7321 = vmatprep.subr.mxu0 0.0
        %7322 = vmatpush1.xpose.msra.mxu0 0.0
        %7323 = vmatprep.mubr.f32.mxu0 0.0
        %7324 = vmatmul.mubr.f32.gmra.mrb[0].mxu0 %v7254
        %v7325 = vpop.f32.mrb[0].mxu0
        %v7326 = vadd.f32 0.0, %v7325
        %v7327 = vpop.f32.mrb[0].mxu0
        %7328 = vdwg.mxu0
        %v7330 = vsel %vm1645, %v4598, 0
        %v7333 = vsel %vm1645, %v6488, 0
        %7335 = vmatprep.subr.mxu0 0.0
        %7336 = vmatpush1.xpose.msra.mxu0 %v7333
        %7337 = vmatprep.subr.mxu0 0.0
        %7338 = vmatpush1.xpose.msra.mxu0 0.0
        %7339 = vmatprep.subr.mxu0 0.0
        %7340 = vmatpush1.xpose.msra.mxu0 0.0
        %7341 = vmatprep.subr.mxu0 0.0
        %7342 = vmatpush1.xpose.msra.mxu0 0.0
        %7343 = vmatprep.subr.mxu0 0.0
        %7344 = vmatpush1.xpose.msra.mxu0 0.0
        %7345 = vmatprep.subr.mxu0 0.0
        %7346 = vmatpush1.xpose.msra.mxu0 0.0
        %7347 = vmatprep.subr.mxu0 0.0
        %7348 = vmatpush1.xpose.msra.mxu0 0.0
        %7349 = vmatprep.subr.mxu0 0.0
        %7350 = vmatpush1.xpose.msra.mxu0 0.0
        %7351 = vmatprep.subr.mxu0 0.0
        %7352 = vmatpush1.xpose.msra.mxu0 0.0
        %7353 = vmatprep.subr.mxu0 0.0
        %7354 = vmatpush1.xpose.msra.mxu0 0.0
        %7355 = vmatprep.subr.mxu0 0.0
        %7356 = vmatpush1.xpose.msra.mxu0 0.0
        %7357 = vmatprep.subr.mxu0 0.0
        %7358 = vmatpush1.xpose.msra.mxu0 0.0
        %7359 = vmatprep.subr.mxu0 0.0
        %7360 = vmatpush1.xpose.msra.mxu0 0.0
        %7361 = vmatprep.subr.mxu0 0.0
        %7362 = vmatpush1.xpose.msra.mxu0 0.0
        %7363 = vmatprep.subr.mxu0 0.0
        %7364 = vmatpush1.xpose.msra.mxu0 0.0
        %7365 = vmatprep.subr.mxu0 0.0
        %7366 = vmatpush1.xpose.msra.mxu0 0.0
        %7367 = vmatprep.subr.mxu0 0.0
        %7368 = vmatpush1.xpose.msra.mxu0 0.0
        %7369 = vmatprep.subr.mxu0 0.0
        %7370 = vmatpush1.xpose.msra.mxu0 0.0
        %7371 = vmatprep.subr.mxu0 0.0
        %7372 = vmatpush1.xpose.msra.mxu0 0.0
        %7373 = vmatprep.subr.mxu0 0.0
        %7374 = vmatpush1.xpose.msra.mxu0 0.0
        %7375 = vmatprep.subr.mxu0 0.0
        %7376 = vmatpush1.xpose.msra.mxu0 0.0
        %7377 = vmatprep.subr.mxu0 0.0
        %7378 = vmatpush1.xpose.msra.mxu0 0.0
        %7379 = vmatprep.subr.mxu0 0.0
        %7380 = vmatpush1.xpose.msra.mxu0 0.0
        %7381 = vmatprep.subr.mxu0 0.0
        %7382 = vmatpush1.xpose.msra.mxu0 0.0
        %7383 = vmatprep.subr.mxu0 0.0
        %7384 = vmatpush1.xpose.msra.mxu0 0.0
        %7385 = vmatprep.subr.mxu0 0.0
        %7386 = vmatpush1.xpose.msra.mxu0 0.0
        %7387 = vmatprep.subr.mxu0 0.0
        %7388 = vmatpush1.xpose.msra.mxu0 0.0
        %7389 = vmatprep.subr.mxu0 0.0
        %7390 = vmatpush1.xpose.msra.mxu0 0.0
        %7391 = vmatprep.subr.mxu0 0.0
        %7392 = vmatpush1.xpose.msra.mxu0 0.0
        %7393 = vmatprep.subr.mxu0 0.0
        %7394 = vmatpush1.xpose.msra.mxu0 0.0
        %7395 = vmatprep.subr.mxu0 0.0
        %7396 = vmatpush1.xpose.msra.mxu0 0.0
        %7397 = vmatprep.subr.mxu0 0.0
        %7398 = vmatpush1.xpose.msra.mxu0 0.0
        %7399 = vmatprep.mubr.f32.mxu0 0.0
        %7400 = vmatmul.mubr.f32.gmra.mrb[0].mxu0 %v7330
        %v7401 = vpop.f32.mrb[0].mxu0
        %v7402 = vadd.f32 0.0, %v7401
        %v7403 = vpop.f32.mrb[0].mxu0
        %7404 = vdwg.mxu0
        %v7406 = vsel %vm1645, %v4603, 0
        %v7409 = vsel %vm1645, %v6489, 0
        %7411 = vmatprep.subr.mxu0 0.0
        %7412 = vmatpush1.xpose.msra.mxu0 %v7409
        %7413 = vmatprep.subr.mxu0 0.0
        %7414 = vmatpush1.xpose.msra.mxu0 0.0
        %7415 = vmatprep.subr.mxu0 0.0
        %7416 = vmatpush1.xpose.msra.mxu0 0.0
        %7417 = vmatprep.subr.mxu0 0.0
        %7418 = vmatpush1.xpose.msra.mxu0 0.0
        %7419 = vmatprep.subr.mxu0 0.0
        %7420 = vmatpush1.xpose.msra.mxu0 0.0
        %7421 = vmatprep.subr.mxu0 0.0
        %7422 = vmatpush1.xpose.msra.mxu0 0.0
        %7423 = vmatprep.subr.mxu0 0.0
        %7424 = vmatpush1.xpose.msra.mxu0 0.0
        %7425 = vmatprep.subr.mxu0 0.0
        %7426 = vmatpush1.xpose.msra.mxu0 0.0
        %7427 = vmatprep.subr.mxu0 0.0
        %7428 = vmatpush1.xpose.msra.mxu0 0.0
        %7429 = vmatprep.subr.mxu0 0.0
        %7430 = vmatpush1.xpose.msra.mxu0 0.0
        %7431 = vmatprep.subr.mxu0 0.0
        %7432 = vmatpush1.xpose.msra.mxu0 0.0
        %7433 = vmatprep.subr.mxu0 0.0
        %7434 = vmatpush1.xpose.msra.mxu0 0.0
        %7435 = vmatprep.subr.mxu0 0.0
        %7436 = vmatpush1.xpose.msra.mxu0 0.0
        %7437 = vmatprep.subr.mxu0 0.0
        %7438 = vmatpush1.xpose.msra.mxu0 0.0
        %7439 = vmatprep.subr.mxu0 0.0
        %7440 = vmatpush1.xpose.msra.mxu0 0.0
        %7441 = vmatprep.subr.mxu0 0.0
        %7442 = vmatpush1.xpose.msra.mxu0 0.0
        %7443 = vmatprep.subr.mxu0 0.0
        %7444 = vmatpush1.xpose.msra.mxu0 0.0
        %7445 = vmatprep.subr.mxu0 0.0
        %7446 = vmatpush1.xpose.msra.mxu0 0.0
        %7447 = vmatprep.subr.mxu0 0.0
        %7448 = vmatpush1.xpose.msra.mxu0 0.0
        %7449 = vmatprep.subr.mxu0 0.0
        %7450 = vmatpush1.xpose.msra.mxu0 0.0
        %7451 = vmatprep.subr.mxu0 0.0
        %7452 = vmatpush1.xpose.msra.mxu0 0.0
        %7453 = vmatprep.subr.mxu0 0.0
        %7454 = vmatpush1.xpose.msra.mxu0 0.0
        %7455 = vmatprep.subr.mxu0 0.0
        %7456 = vmatpush1.xpose.msra.mxu0 0.0
        %7457 = vmatprep.subr.mxu0 0.0
        %7458 = vmatpush1.xpose.msra.mxu0 0.0
        %7459 = vmatprep.subr.mxu0 0.0
        %7460 = vmatpush1.xpose.msra.mxu0 0.0
        %7461 = vmatprep.subr.mxu0 0.0
        %7462 = vmatpush1.xpose.msra.mxu0 0.0
        %7463 = vmatprep.subr.mxu0 0.0
        %7464 = vmatpush1.xpose.msra.mxu0 0.0
        %7465 = vmatprep.subr.mxu0 0.0
        %7466 = vmatpush1.xpose.msra.mxu0 0.0
        %7467 = vmatprep.subr.mxu0 0.0
        %7468 = vmatpush1.xpose.msra.mxu0 0.0
        %7469 = vmatprep.subr.mxu0 0.0
        %7470 = vmatpush1.xpose.msra.mxu0 0.0
        %7471 = vmatprep.subr.mxu0 0.0
        %7472 = vmatpush1.xpose.msra.mxu0 0.0
        %7473 = vmatprep.subr.mxu0 0.0
        %7474 = vmatpush1.xpose.msra.mxu0 0.0
        %7475 = vmatprep.mubr.f32.mxu0 0.0
        %7476 = vmatmul.mubr.f32.gmra.mrb[0].mxu0 %v7406
        %v7477 = vpop.f32.mrb[0].mxu0
        %v7478 = vadd.f32 0.0, %v7477
        %v7479 = vpop.f32.mrb[0].mxu0
        %7480 = vdwg.mxu0
        %v7482 = vsel %vm1645, %v4608, 0
        %v7485 = vsel %vm1645, %v6490, 0
        %7487 = vmatprep.subr.mxu0 0.0
        %7488 = vmatpush1.xpose.msra.mxu0 %v7485
        %7489 = vmatprep.subr.mxu0 0.0
        %7490 = vmatpush1.xpose.msra.mxu0 0.0
        %7491 = vmatprep.subr.mxu0 0.0
        %7492 = vmatpush1.xpose.msra.mxu0 0.0
        %7493 = vmatprep.subr.mxu0 0.0
        %7494 = vmatpush1.xpose.msra.mxu0 0.0
        %7495 = vmatprep.subr.mxu0 0.0
        %7496 = vmatpush1.xpose.msra.mxu0 0.0
        %7497 = vmatprep.subr.mxu0 0.0
        %7498 = vmatpush1.xpose.msra.mxu0 0.0
        %7499 = vmatprep.subr.mxu0 0.0
        %7500 = vmatpush1.xpose.msra.mxu0 0.0
        %7501 = vmatprep.subr.mxu0 0.0
        %7502 = vmatpush1.xpose.msra.mxu0 0.0
        %7503 = vmatprep.subr.mxu0 0.0
        %7504 = vmatpush1.xpose.msra.mxu0 0.0
        %7505 = vmatprep.subr.mxu0 0.0
        %7506 = vmatpush1.xpose.msra.mxu0 0.0
        %7507 = vmatprep.subr.mxu0 0.0
        %7508 = vmatpush1.xpose.msra.mxu0 0.0
        %7509 = vmatprep.subr.mxu0 0.0
        %7510 = vmatpush1.xpose.msra.mxu0 0.0
        %7511 = vmatprep.subr.mxu0 0.0
        %7512 = vmatpush1.xpose.msra.mxu0 0.0
        %7513 = vmatprep.subr.mxu0 0.0
        %7514 = vmatpush1.xpose.msra.mxu0 0.0
        %7515 = vmatprep.subr.mxu0 0.0
        %7516 = vmatpush1.xpose.msra.mxu0 0.0
        %7517 = vmatprep.subr.mxu0 0.0
        %7518 = vmatpush1.xpose.msra.mxu0 0.0
        %7519 = vmatprep.subr.mxu0 0.0
        %7520 = vmatpush1.xpose.msra.mxu0 0.0
        %7521 = vmatprep.subr.mxu0 0.0
        %7522 = vmatpush1.xpose.msra.mxu0 0.0
        %7523 = vmatprep.subr.mxu0 0.0
        %7524 = vmatpush1.xpose.msra.mxu0 0.0
        %7525 = vmatprep.subr.mxu0 0.0
        %7526 = vmatpush1.xpose.msra.mxu0 0.0
        %7527 = vmatprep.subr.mxu0 0.0
        %7528 = vmatpush1.xpose.msra.mxu0 0.0
        %7529 = vmatprep.subr.mxu0 0.0
        %7530 = vmatpush1.xpose.msra.mxu0 0.0
        %7531 = vmatprep.subr.mxu0 0.0
        %7532 = vmatpush1.xpose.msra.mxu0 0.0
        %7533 = vmatprep.subr.mxu0 0.0
        %7534 = vmatpush1.xpose.msra.mxu0 0.0
        %7535 = vmatprep.subr.mxu0 0.0
        %7536 = vmatpush1.xpose.msra.mxu0 0.0
        %7537 = vmatprep.subr.mxu0 0.0
        %7538 = vmatpush1.xpose.msra.mxu0 0.0
        %7539 = vmatprep.subr.mxu0 0.0
        %7540 = vmatpush1.xpose.msra.mxu0 0.0
        %7541 = vmatprep.subr.mxu0 0.0
        %7542 = vmatpush1.xpose.msra.mxu0 0.0
        %7543 = vmatprep.subr.mxu0 0.0
        %7544 = vmatpush1.xpose.msra.mxu0 0.0
        %7545 = vmatprep.subr.mxu0 0.0
        %7546 = vmatpush1.xpose.msra.mxu0 0.0
        %7547 = vmatprep.subr.mxu0 0.0
        %7548 = vmatpush1.xpose.msra.mxu0 0.0
        %7549 = vmatprep.subr.mxu0 0.0
        %7550 = vmatpush1.xpose.msra.mxu0 0.0
        %7551 = vmatprep.mubr.f32.mxu0 0.0
        %7552 = vmatmul.mubr.f32.gmra.mrb[0].mxu0 %v7482
        %v7553 = vpop.f32.mrb[0].mxu0
        %v7554 = vadd.f32 0.0, %v7553
        %v7555 = vpop.f32.mrb[0].mxu0
        %7556 = vdwg.mxu0
        %v7558 = vsel %vm1645, %v4613, 0
        %v7561 = vsel %vm1645, %v6491, 0
        %7563 = vmatprep.subr.mxu0 0.0
        %7564 = vmatpush1.xpose.msra.mxu0 %v7561
        %7565 = vmatprep.subr.mxu0 0.0
        %7566 = vmatpush1.xpose.msra.mxu0 0.0
        %7567 = vmatprep.subr.mxu0 0.0
        %7568 = vmatpush1.xpose.msra.mxu0 0.0
        %7569 = vmatprep.subr.mxu0 0.0
        %7570 = vmatpush1.xpose.msra.mxu0 0.0
        %7571 = vmatprep.subr.mxu0 0.0
        %7572 = vmatpush1.xpose.msra.mxu0 0.0
        %7573 = vmatprep.subr.mxu0 0.0
        %7574 = vmatpush1.xpose.msra.mxu0 0.0
        %7575 = vmatprep.subr.mxu0 0.0
        %7576 = vmatpush1.xpose.msra.mxu0 0.0
        %7577 = vmatprep.subr.mxu0 0.0
        %7578 = vmatpush1.xpose.msra.mxu0 0.0
        %7579 = vmatprep.subr.mxu0 0.0
        %7580 = vmatpush1.xpose.msra.mxu0 0.0
        %7581 = vmatprep.subr.mxu0 0.0
        %7582 = vmatpush1.xpose.msra.mxu0 0.0
        %7583 = vmatprep.subr.mxu0 0.0
        %7584 = vmatpush1.xpose.msra.mxu0 0.0
        %7585 = vmatprep.subr.mxu0 0.0
        %7586 = vmatpush1.xpose.msra.mxu0 0.0
        %7587 = vmatprep.subr.mxu0 0.0
        %7588 = vmatpush1.xpose.msra.mxu0 0.0
        %7589 = vmatprep.subr.mxu0 0.0
        %7590 = vmatpush1.xpose.msra.mxu0 0.0
        %7591 = vmatprep.subr.mxu0 0.0
        %7592 = vmatpush1.xpose.msra.mxu0 0.0
        %7593 = vmatprep.subr.mxu0 0.0
        %7594 = vmatpush1.xpose.msra.mxu0 0.0
        %7595 = vmatprep.subr.mxu0 0.0
        %7596 = vmatpush1.xpose.msra.mxu0 0.0
        %7597 = vmatprep.subr.mxu0 0.0
        %7598 = vmatpush1.xpose.msra.mxu0 0.0
        %7599 = vmatprep.subr.mxu0 0.0
        %7600 = vmatpush1.xpose.msra.mxu0 0.0
        %7601 = vmatprep.subr.mxu0 0.0
        %7602 = vmatpush1.xpose.msra.mxu0 0.0
        %7603 = vmatprep.subr.mxu0 0.0
        %7604 = vmatpush1.xpose.msra.mxu0 0.0
        %7605 = vmatprep.subr.mxu0 0.0
        %7606 = vmatpush1.xpose.msra.mxu0 0.0
        %7607 = vmatprep.subr.mxu0 0.0
        %7608 = vmatpush1.xpose.msra.mxu0 0.0
        %7609 = vmatprep.subr.mxu0 0.0
        %7610 = vmatpush1.xpose.msra.mxu0 0.0
        %7611 = vmatprep.subr.mxu0 0.0
        %7612 = vmatpush1.xpose.msra.mxu0 0.0
        %7613 = vmatprep.subr.mxu0 0.0
        %7614 = vmatpush1.xpose.msra.mxu0 0.0
        %7615 = vmatprep.subr.mxu0 0.0
        %7616 = vmatpush1.xpose.msra.mxu0 0.0
        %7617 = vmatprep.subr.mxu0 0.0
        %7618 = vmatpush1.xpose.msra.mxu0 0.0
        %7619 = vmatprep.subr.mxu0 0.0
        %7620 = vmatpush1.xpose.msra.mxu0 0.0
        %7621 = vmatprep.subr.mxu0 0.0
        %7622 = vmatpush1.xpose.msra.mxu0 0.0
        %7623 = vmatprep.subr.mxu0 0.0
        %7624 = vmatpush1.xpose.msra.mxu0 0.0
        %7625 = vmatprep.subr.mxu0 0.0
        %7626 = vmatpush1.xpose.msra.mxu0 0.0
        %7627 = vmatprep.mubr.f32.mxu0 0.0
        %7628 = vmatmul.mubr.f32.gmra.mrb[0].mxu0 %v7558
        %v7629 = vpop.f32.mrb[0].mxu0
        %v7630 = vadd.f32 0.0, %v7629
        %v7631 = vpop.f32.mrb[0].mxu0
        %7632 = vdwg.mxu0
        %v7634 = vsel %vm1645, %v4618, 0
        %v7637 = vsel %vm1645, %v6492, 0
        %7639 = vmatprep.subr.mxu0 0.0
        %7640 = vmatpush1.xpose.msra.mxu0 %v7637
        %7641 = vmatprep.subr.mxu0 0.0
        %7642 = vmatpush1.xpose.msra.mxu0 0.0
        %7643 = vmatprep.subr.mxu0 0.0
        %7644 = vmatpush1.xpose.msra.mxu0 0.0
        %7645 = vmatprep.subr.mxu0 0.0
        %7646 = vmatpush1.xpose.msra.mxu0 0.0
        %7647 = vmatprep.subr.mxu0 0.0
        %7648 = vmatpush1.xpose.msra.mxu0 0.0
        %7649 = vmatprep.subr.mxu0 0.0
        %7650 = vmatpush1.xpose.msra.mxu0 0.0
        %7651 = vmatprep.subr.mxu0 0.0
        %7652 = vmatpush1.xpose.msra.mxu0 0.0
        %7653 = vmatprep.subr.mxu0 0.0
        %7654 = vmatpush1.xpose.msra.mxu0 0.0
        %7655 = vmatprep.subr.mxu0 0.0
        %7656 = vmatpush1.xpose.msra.mxu0 0.0
        %7657 = vmatprep.subr.mxu0 0.0
        %7658 = vmatpush1.xpose.msra.mxu0 0.0
        %7659 = vmatprep.subr.mxu0 0.0
        %7660 = vmatpush1.xpose.msra.mxu0 0.0
        %7661 = vmatprep.subr.mxu0 0.0
        %7662 = vmatpush1.xpose.msra.mxu0 0.0
        %7663 = vmatprep.subr.mxu0 0.0
        %7664 = vmatpush1.xpose.msra.mxu0 0.0
        %7665 = vmatprep.subr.mxu0 0.0
        %7666 = vmatpush1.xpose.msra.mxu0 0.0
        %7667 = vmatprep.subr.mxu0 0.0
        %7668 = vmatpush1.xpose.msra.mxu0 0.0
        %7669 = vmatprep.subr.mxu0 0.0
        %7670 = vmatpush1.xpose.msra.mxu0 0.0
        %7671 = vmatprep.subr.mxu0 0.0
        %7672 = vmatpush1.xpose.msra.mxu0 0.0
        %7673 = vmatprep.subr.mxu0 0.0
        %7674 = vmatpush1.xpose.msra.mxu0 0.0
        %7675 = vmatprep.subr.mxu0 0.0
        %7676 = vmatpush1.xpose.msra.mxu0 0.0
        %7677 = vmatprep.subr.mxu0 0.0
        %7678 = vmatpush1.xpose.msra.mxu0 0.0
        %7679 = vmatprep.subr.mxu0 0.0
        %7680 = vmatpush1.xpose.msra.mxu0 0.0
        %7681 = vmatprep.subr.mxu0 0.0
        %7682 = vmatpush1.xpose.msra.mxu0 0.0
        %7683 = vmatprep.subr.mxu0 0.0
        %7684 = vmatpush1.xpose.msra.mxu0 0.0
        %7685 = vmatprep.subr.mxu0 0.0
        %7686 = vmatpush1.xpose.msra.mxu0 0.0
        %7687 = vmatprep.subr.mxu0 0.0
        %7688 = vmatpush1.xpose.msra.mxu0 0.0
        %7689 = vmatprep.subr.mxu0 0.0
        %7690 = vmatpush1.xpose.msra.mxu0 0.0
        %7691 = vmatprep.subr.mxu0 0.0
        %7692 = vmatpush1.xpose.msra.mxu0 0.0
        %7693 = vmatprep.subr.mxu0 0.0
        %7694 = vmatpush1.xpose.msra.mxu0 0.0
        %7695 = vmatprep.subr.mxu0 0.0
        %7696 = vmatpush1.xpose.msra.mxu0 0.0
        %7697 = vmatprep.subr.mxu0 0.0
        %7698 = vmatpush1.xpose.msra.mxu0 0.0
        %7699 = vmatprep.subr.mxu0 0.0
        %7700 = vmatpush1.xpose.msra.mxu0 0.0
        %7701 = vmatprep.subr.mxu0 0.0
        %7702 = vmatpush1.xpose.msra.mxu0 0.0
        %7703 = vmatprep.mubr.f32.mxu0 0.0
        %7704 = vmatmul.mubr.f32.gmra.mrb[0].mxu0 %v7634
        %v7705 = vpop.f32.mrb[0].mxu0
        %v7706 = vadd.f32 0.0, %v7705
        %v7707 = vpop.f32.mrb[0].mxu0
        %7708 = vdwg.mxu0
        %7709 = vxpose.xlu0.b32.start [1/16] %v6566, 128
        %7710 = vxpose.xlu0.b32.cont [2/16] %v6642, 128
        %7711 = vxpose.xlu0.b32.cont [3/16] %v6718, 128
        %7712 = vxpose.xlu0.b32.cont [4/16] %v6794, 128
        %7713 = vxpose.xlu0.b32.cont [5/16] %v6870, 128
        %7714 = vxpose.xlu0.b32.cont [6/16] %v6946, 128
        %7715 = vxpose.xlu0.b32.cont [7/16] %v7022, 128
        %7716 = vxpose.xlu0.b32.cont [8/16] %v7098, 128
        %7717 = vxpose.xlu0.b32.cont [9/16] %v7174, 128
        %7718 = vxpose.xlu0.b32.cont [10/16] %v7250, 128
        %7719 = vxpose.xlu0.b32.cont [11/16] %v7326, 128
        %7720 = vxpose.xlu0.b32.cont [12/16] %v7402, 128
        %7721 = vxpose.xlu0.b32.cont [13/16] %v7478, 128
        %7722 = vxpose.xlu0.b32.cont [14/16] %v7554, 128
        %7723 = vxpose.xlu0.b32.cont [15/16] %v7630, 128
        %7724 = vxpose.xlu0.b32.end [16/16] %v7706, 128
        %v7725 = vpop.trf.xlu0
        %v7726 = vpop.trf.xlu0
        %v7727 = vpop.trf.xlu0
        %v7728 = vpop.trf.xlu0
        %v7729 = vpop.trf.xlu0
        %v7730 = vpop.trf.xlu0
        %v7731 = vpop.trf.xlu0
        %v7732 = vpop.trf.xlu0
        %v7733 = vpop.trf.xlu0
        %v7734 = vpop.trf.xlu0
        %v7735 = vpop.trf.xlu0
        %v7736 = vpop.trf.xlu0
        %v7737 = vpop.trf.xlu0
        %v7738 = vpop.trf.xlu0
        %v7739 = vpop.trf.xlu0
        %v7740 = vpop.trf.xlu0
        %v7741 = vadd.f32 %v4267, %v7725
        %v7742 = vld [vmem:[%s7] sm:$0x1]
        %v7743 = vld [vmem:[%s8] sm:$0x1]
        %7744 = vadd.xlane.f32.xlu0 %v7741
        %v7745 = vpop.xlane.xlu0 %7744
        %v7746 = vmul.f32 %v7745, %v4244
        %v7747 = vsub.f32 %v7741, %v7746
        %v7748 = vmul.f32 %v7747, %v7747
        %7749 = vadd.xlane.f32.xlu0 %v7748
        %v7750 = vpop.xlane.xlu0 %7749
        %v7751 = vmul.f32 %v7750, %v4244
        %v7752 = vadd.f32 %v7751, 1e-05
        %v7753 = vrsqrt.pop %v7752
        %v7754 = vmul.f32 %v7747, %v7753
        %v7756 = vlaneseq
        %v7757 = vshrl.u32 %v7756, 7
        %v7758 = vsub.s32 0, %v7757
        %v7759 = vrot.slane %v7742, %v7758
        %v7761 = vmul.f32 %v7754, %v7759
        %v7763 = vlaneseq
        %v7764 = vshrl.u32 %v7763, 7
        %v7765 = vsub.s32 0, %v7764
        %v7766 = vrot.slane %v7743, %v7765
        %v7768 = vadd.f32 %v7761, %v7766
        %v7769 = vld [vmem:[#allocation8] sm:$0xff]
        %v7770 = vld [vmem:[#allocation8 + $0x8] sm:$0xff]
        %v7771 = vld [vmem:[#allocation8 + $0x10] sm:$0xff]
        %v7772 = vld [vmem:[#allocation8 + $0x18] sm:$0xff]
        %v7773 = vld [vmem:[#allocation8 + $0x20] sm:$0xff]
        %v7774 = vld [vmem:[#allocation8 + $0x28] sm:$0xff]
        %v7775 = vld [vmem:[#allocation8 + $0x30] sm:$0xff]
        %v7776 = vld [vmem:[#allocation8 + $0x38] sm:$0xff]
        %v7777 = vld [vmem:[#allocation8 + $0x40] sm:$0xff]
        %v7778 = vld [vmem:[#allocation8 + $0x48] sm:$0xff]
        %v7779 = vld [vmem:[#allocation8 + $0x50] sm:$0xff]
        %v7780 = vld [vmem:[#allocation8 + $0x58] sm:$0xff]
        %v7781 = vld [vmem:[#allocation8 + $0x60] sm:$0xff]
        %v7782 = vld [vmem:[#allocation8 + $0x68] sm:$0xff]
        %v7783 = vld [vmem:[#allocation8 + $0x70] sm:$0xff]
        %v7784 = vld [vmem:[#allocation8 + $0x78] sm:$0xff]
        %v7785 = vld [vmem:[#allocation8 + $0x80] sm:$0xff]
        %v7786 = vld [vmem:[#allocation8 + $0x88] sm:$0xff]
        %v7787 = vld [vmem:[#allocation8 + $0x90] sm:$0xff]
        %v7788 = vld [vmem:[#allocation8 + $0x98] sm:$0xff]
        %v7789 = vld [vmem:[#allocation8 + $0xa0] sm:$0xff]
        %v7790 = vld [vmem:[#allocation8 + $0xa8] sm:$0xff]
        %v7791 = vld [vmem:[#allocation8 + $0xb0] sm:$0xff]
        %v7792 = vld [vmem:[#allocation8 + $0xb8] sm:$0xff]
        %v7793 = vld [vmem:[#allocation8 + $0xc0] sm:$0xff]
        %v7794 = vld [vmem:[#allocation8 + $0xc8] sm:$0xff]
        %v7795 = vld [vmem:[#allocation8 + $0xd0] sm:$0xff]
        %v7796 = vld [vmem:[#allocation8 + $0xd8] sm:$0xff]
        %v7797 = vld [vmem:[#allocation8 + $0xe0] sm:$0xff]
        %v7798 = vld [vmem:[#allocation8 + $0xe8] sm:$0xff]
        %v7799 = vld [vmem:[#allocation8 + $0xf0] sm:$0xff]
        %v7800 = vld [vmem:[#allocation8 + $0xf8] sm:$0xff]
        %v7801 = vld [vmem:[%s12] sm:$0x3]
        %v7803 = vlaneseq
        %v7804 = vshrl.u32 %v7803, 7
        %v7805 = vsub.s32 0, %v7804
        %v7806 = vrot.slane %v7801, %v7805
        %v7807 = vlaneseq
        %v7808 = vshrl.u32 %v7807, 7
        %v7809 = vsub.s32 1, %v7808
        %v7810 = vrot.slane %v7801, %v7809
        %7813 = vmatprep.subr.mxu0 0.0
        %7814 = vmatpush1.xpose.msra.mxu0 %v7769
        %7815 = vmatprep.subr.mxu0 0.0
        %7816 = vmatpush1.xpose.msra.mxu0 %v7770
        %7817 = vmatprep.subr.mxu0 0.0
        %7818 = vmatpush1.xpose.msra.mxu0 %v7771
        %7819 = vmatprep.subr.mxu0 0.0
        %7820 = vmatpush1.xpose.msra.mxu0 %v7772
        %7821 = vmatprep.subr.mxu0 0.0
        %7822 = vmatpush1.xpose.msra.mxu0 %v7773
        %7823 = vmatprep.subr.mxu0 0.0
        %7824 = vmatpush1.xpose.msra.mxu0 %v7774
        %7825 = vmatprep.subr.mxu0 0.0
        %7826 = vmatpush1.xpose.msra.mxu0 %v7775
        %7827 = vmatprep.subr.mxu0 0.0
        %7828 = vmatpush1.xpose.msra.mxu0 %v7776
        %7829 = vmatprep.subr.mxu0 0.0
        %7830 = vmatpush1.xpose.msra.mxu0 %v7777
        %7831 = vmatprep.subr.mxu0 0.0
        %7832 = vmatpush1.xpose.msra.mxu0 %v7778
        %7833 = vmatprep.subr.mxu0 0.0
        %7834 = vmatpush1.xpose.msra.mxu0 %v7779
        %7835 = vmatprep.subr.mxu0 0.0
        %7836 = vmatpush1.xpose.msra.mxu0 %v7780
        %7837 = vmatprep.subr.mxu0 0.0
        %7838 = vmatpush1.xpose.msra.mxu0 %v7781
        %7839 = vmatprep.subr.mxu0 0.0
        %7840 = vmatpush1.xpose.msra.mxu0 %v7782
        %7841 = vmatprep.subr.mxu0 0.0
        %7842 = vmatpush1.xpose.msra.mxu0 %v7783
        %7843 = vmatprep.subr.mxu0 0.0
        %7844 = vmatpush1.xpose.msra.mxu0 %v7784
        %7845 = vmatprep.subr.mxu0 0.0
        %7846 = vmatpush1.xpose.msra.mxu0 %v7785
        %7847 = vmatprep.subr.mxu0 0.0
        %7848 = vmatpush1.xpose.msra.mxu0 %v7786
        %7849 = vmatprep.subr.mxu0 0.0
        %7850 = vmatpush1.xpose.msra.mxu0 %v7787
        %7851 = vmatprep.subr.mxu0 0.0
        %7852 = vmatpush1.xpose.msra.mxu0 %v7788
        %7853 = vmatprep.subr.mxu0 0.0
        %7854 = vmatpush1.xpose.msra.mxu0 %v7789
        %7855 = vmatprep.subr.mxu0 0.0
        %7856 = vmatpush1.xpose.msra.mxu0 %v7790
        %7857 = vmatprep.subr.mxu0 0.0
        %7858 = vmatpush1.xpose.msra.mxu0 %v7791
        %7859 = vmatprep.subr.mxu0 0.0
        %7860 = vmatpush1.xpose.msra.mxu0 %v7792
        %7861 = vmatprep.subr.mxu0 0.0
        %7862 = vmatpush1.xpose.msra.mxu0 %v7793
        %7863 = vmatprep.subr.mxu0 0.0
        %7864 = vmatpush1.xpose.msra.mxu0 %v7794
        %7865 = vmatprep.subr.mxu0 0.0
        %7866 = vmatpush1.xpose.msra.mxu0 %v7795
        %7867 = vmatprep.subr.mxu0 0.0
        %7868 = vmatpush1.xpose.msra.mxu0 %v7796
        %7869 = vmatprep.subr.mxu0 0.0
        %7870 = vmatpush1.xpose.msra.mxu0 %v7797
        %7871 = vmatprep.subr.mxu0 0.0
        %7872 = vmatpush1.xpose.msra.mxu0 %v7798
        %7873 = vmatprep.subr.mxu0 0.0
        %7874 = vmatpush1.xpose.msra.mxu0 %v7799
        %7875 = vmatprep.subr.mxu0 0.0
        %7876 = vmatpush1.xpose.msra.mxu0 %v7800
        %7877 = vmatprep.mubr.f32.mxu0 0.0
        %7878 = vmatmul.mubr.f32.gmra.mrb[0].mxu0 %v7768
        %v7879 = vpop.f32.mrb[0].mxu0
        %v7880 = vadd.f32 %v7806, %v7879
        %v7881 = vpop.f32.mrb[0].mxu0
        %v7882 = vadd.f32 %v7810, %v7881
        %7883 = vdwg.mxu0
        %v7884 = vmul.f32 %v7880, 0.5
        %v7885 = vmul.f32 %v7882, 0.5
        %v7886 = vmul.f32 %v7880, 0.70710677
        %v7887 = vmul.f32 %v7882, 0.70710677
        %v7888 = vmax.f32 %v7886, -3.832507
        %v7889 = vmax.f32 %v7887, -3.832507
        %v7890 = vmin.f32 %v7888, 3.832507
        %v7891 = vmin.f32 %v7889, 3.832507
        %v7892 = vmul.f32 %v7890, %v7890
        %v7893 = vmul.f32 %v7891, %v7891
        %v7894 = vmul.f32 %v7892, -2.7261424e-10
        %v7895 = vmul.f32 %v7893, -2.7261424e-10
        %v7896 = vadd.f32 %v7894, 2.7706815e-08
        %v7897 = vadd.f32 %v7895, 2.7706815e-08
        %v7898 = vmul.f32 %v7896, %v7892
        %v7899 = vmul.f32 %v7897, %v7893
        %v7900 = vadd.f32 %v7898, -2.101024e-06
        %v7901 = vadd.f32 %v7899, -2.101024e-06
        %v7902 = vmul.f32 %v7900, %v7892
        %v7903 = vmul.f32 %v7901, %v7893
        %v7904 = vadd.f32 %v7902, -5.6925062e-05
        %v7905 = vadd.f32 %v7903, -5.6925062e-05
        %v7906 = vmul.f32 %v7904, %v7892
        %v7907 = vmul.f32 %v7905, %v7893
        %v7908 = vadd.f32 %v7906, -0.00073499064
        %v7909 = vadd.f32 %v7907, -0.00073499064
        %v7910 = vmul.f32 %v7908, %v7892
        %v7911 = vmul.f32 %v7909, %v7893
        %v7912 = vadd.f32 %v7910, -0.0029546
        %v7913 = vadd.f32 %v7911, -0.0029546
        %v7914 = vmul.f32 %v7912, %v7892
        %v7915 = vmul.f32 %v7913, %v7893
        %v7916 = vadd.f32 %v7914, -0.016096033
        %v7917 = vadd.f32 %v7915, -0.016096033
        %v7918 = vmul.f32 %v7916, %v7890
        %v7919 = vmul.f32 %v7917, %v7891
        %v7920 = vmul.f32 %v7892, -1.45660715e-05
        %v7921 = vmul.f32 %v7893, -1.45660715e-05
        %v7922 = vadd.f32 %v7920, -0.00021337405
        %v7923 = vadd.f32 %v7921, -0.00021337405
        %v7924 = vmul.f32 %v7922, %v7892
        %v7925 = vmul.f32 %v7923, %v7893
        %v7926 = vadd.f32 %v7924, -0.001682827
        %v7927 = vadd.f32 %v7925, -0.001682827
        %v7928 = vmul.f32 %v7926, %v7892
        %v7929 = vmul.f32 %v7927, %v7893
        %v7930 = vadd.f32 %v7928, -0.0073733293
        %v7931 = vadd.f32 %v7929, -0.0073733293
        %v7932 = vmul.f32 %v7930, %v7892
        %v7933 = vmul.f32 %v7931, %v7893
        %v7934 = vadd.f32 %v7932, -0.014264739
        %v7935 = vadd.f32 %v7933, -0.014264739
        %v7936 = vrcp.pop %v7934
        %v7937 = vmul.f32 %v7918, %v7936
        %v7938 = vrcp.pop %v7935
        %v7939 = vmul.f32 %v7919, %v7938
        %v7940 = vadd.f32 %v7937, 1.0
        %v7941 = vadd.f32 %v7939, 1.0
        %v7942 = vmul.f32 %v7884, %v7940
        %v7943 = vmul.f32 %v7885, %v7941
        %v7944 = vld [vmem:[#allocation10] sm:$0xff]
        %v7945 = vld [vmem:[#allocation10 + $0x8] sm:$0xff]
        %v7946 = vld [vmem:[#allocation10 + $0x10] sm:$0xff]
        %v7947 = vld [vmem:[#allocation10 + $0x18] sm:$0xff]
        %v7948 = vld [vmem:[#allocation10 + $0x20] sm:$0xff]
        %v7949 = vld [vmem:[#allocation10 + $0x28] sm:$0xff]
        %v7950 = vld [vmem:[#allocation10 + $0x30] sm:$0xff]
        %v7951 = vld [vmem:[#allocation10 + $0x38] sm:$0xff]
        %v7952 = vld [vmem:[#allocation10 + $0x40] sm:$0xff]
        %v7953 = vld [vmem:[#allocation10 + $0x48] sm:$0xff]
        %v7954 = vld [vmem:[#allocation10 + $0x50] sm:$0xff]
        %v7955 = vld [vmem:[#allocation10 + $0x58] sm:$0xff]
        %v7956 = vld [vmem:[#allocation10 + $0x60] sm:$0xff]
        %v7957 = vld [vmem:[#allocation10 + $0x68] sm:$0xff]
        %v7958 = vld [vmem:[#allocation10 + $0x70] sm:$0xff]
        %v7959 = vld [vmem:[#allocation10 + $0x78] sm:$0xff]
        %v7960 = vld [vmem:[#allocation10 + $0x80] sm:$0xff]
        %v7961 = vld [vmem:[#allocation10 + $0x88] sm:$0xff]
        %v7962 = vld [vmem:[#allocation10 + $0x90] sm:$0xff]
        %v7963 = vld [vmem:[#allocation10 + $0x98] sm:$0xff]
        %v7964 = vld [vmem:[#allocation10 + $0xa0] sm:$0xff]
        %v7965 = vld [vmem:[#allocation10 + $0xa8] sm:$0xff]
        %v7966 = vld [vmem:[#allocation10 + $0xb0] sm:$0xff]
        %v7967 = vld [vmem:[#allocation10 + $0xb8] sm:$0xff]
        %v7968 = vld [vmem:[#allocation10 + $0xc0] sm:$0xff]
        %v7969 = vld [vmem:[#allocation10 + $0xc8] sm:$0xff]
        %v7970 = vld [vmem:[#allocation10 + $0xd0] sm:$0xff]
        %v7971 = vld [vmem:[#allocation10 + $0xd8] sm:$0xff]
        %v7972 = vld [vmem:[#allocation10 + $0xe0] sm:$0xff]
        %v7973 = vld [vmem:[#allocation10 + $0xe8] sm:$0xff]
        %v7974 = vld [vmem:[#allocation10 + $0xf0] sm:$0xff]
        %v7975 = vld [vmem:[#allocation10 + $0xf8] sm:$0xff]
        %v7976 = vld [vmem:[%s14] sm:$0x1]
        %v7978 = vlaneseq
        %v7979 = vshrl.u32 %v7978, 7
        %v7980 = vsub.s32 0, %v7979
        %v7981 = vrot.slane %v7976, %v7980
        %7983 = vmatprep.subr.mxu0 %v7945
        %7984 = vmatpush1.xpose.msra.mxu0 %v7944
        %7985 = vmatprep.subr.mxu0 %v7947
        %7986 = vmatpush1.xpose.msra.mxu0 %v7946
        %7987 = vmatprep.subr.mxu0 %v7949
        %7988 = vmatpush1.xpose.msra.mxu0 %v7948
        %7989 = vmatprep.subr.mxu0 %v7951
        %7990 = vmatpush1.xpose.msra.mxu0 %v7950
        %7991 = vmatprep.subr.mxu0 %v7953
        %7992 = vmatpush1.xpose.msra.mxu0 %v7952
        %7993 = vmatprep.subr.mxu0 %v7955
        %7994 = vmatpush1.xpose.msra.mxu0 %v7954
        %7995 = vmatprep.subr.mxu0 %v7957
        %7996 = vmatpush1.xpose.msra.mxu0 %v7956
        %7997 = vmatprep.subr.mxu0 %v7959
        %7998 = vmatpush1.xpose.msra.mxu0 %v7958
        %7999 = vmatprep.subr.mxu0 %v7961
        %8000 = vmatpush1.xpose.msra.mxu0 %v7960
        %8001 = vmatprep.subr.mxu0 %v7963
        %8002 = vmatpush1.xpose.msra.mxu0 %v7962
        %8003 = vmatprep.subr.mxu0 %v7965
        %8004 = vmatpush1.xpose.msra.mxu0 %v7964
        %8005 = vmatprep.subr.mxu0 %v7967
        %8006 = vmatpush1.xpose.msra.mxu0 %v7966
        %8007 = vmatprep.subr.mxu0 %v7969
        %8008 = vmatpush1.xpose.msra.mxu0 %v7968
        %8009 = vmatprep.subr.mxu0 %v7971
        %8010 = vmatpush1.xpose.msra.mxu0 %v7970
        %8011 = vmatprep.subr.mxu0 %v7973
        %8012 = vmatpush1.xpose.msra.mxu0 %v7972
        %8013 = vmatprep.subr.mxu0 %v7975
        %8014 = vmatpush1.xpose.msra.mxu0 %v7974
        %8015 = vmatprep.subr.mxu0 0.0
        %8016 = vmatpush1.xpose.msra.mxu0 0.0
        %8017 = vmatprep.subr.mxu0 0.0
        %8018 = vmatpush1.xpose.msra.mxu0 0.0
        %8019 = vmatprep.subr.mxu0 0.0
        %8020 = vmatpush1.xpose.msra.mxu0 0.0
        %8021 = vmatprep.subr.mxu0 0.0
        %8022 = vmatpush1.xpose.msra.mxu0 0.0
        %8023 = vmatprep.subr.mxu0 0.0
        %8024 = vmatpush1.xpose.msra.mxu0 0.0
        %8025 = vmatprep.subr.mxu0 0.0
        %8026 = vmatpush1.xpose.msra.mxu0 0.0
        %8027 = vmatprep.subr.mxu0 0.0
        %8028 = vmatpush1.xpose.msra.mxu0 0.0
        %8029 = vmatprep.subr.mxu0 0.0
        %8030 = vmatpush1.xpose.msra.mxu0 0.0
        %8031 = vmatprep.subr.mxu0 0.0
        %8032 = vmatpush1.xpose.msra.mxu0 0.0
        %8033 = vmatprep.subr.mxu0 0.0
        %8034 = vmatpush1.xpose.msra.mxu0 0.0
        %8035 = vmatprep.subr.mxu0 0.0
        %8036 = vmatpush1.xpose.msra.mxu0 0.0
        %8037 = vmatprep.subr.mxu0 0.0
        %8038 = vmatpush1.xpose.msra.mxu0 0.0
        %8039 = vmatprep.subr.mxu0 0.0
        %8040 = vmatpush1.xpose.msra.mxu0 0.0
        %8041 = vmatprep.subr.mxu0 0.0
        %8042 = vmatpush1.xpose.msra.mxu0 0.0
        %8043 = vmatprep.subr.mxu0 0.0
        %8044 = vmatpush1.xpose.msra.mxu0 0.0
        %8045 = vmatprep.subr.mxu0 0.0
        %8046 = vmatpush1.xpose.msra.mxu0 0.0
        %8047 = vmatprep.mubr.f32.mxu0 %v7943
        %8048 = vmatmul.mubr.f32.gmra.mrb[0].mxu0 %v7942
        %v8049 = vpop.f32.mrb[0].mxu0
        %v8050 = vadd.f32 %v7981, %v8049
        %v8051 = vpop.f32.mrb[0].mxu0
        %8052 = vdwg.mxu0
        %v8053 = vadd.f32 %v7768, %v8050
        %v8054 = vld [vmem:[%s9] sm:$0x1]
        %v8055 = vld [vmem:[%s10] sm:$0x1]
        %8056 = vadd.xlane.f32.xlu0 %v8053
        %v8057 = vpop.xlane.xlu0 %8056
        %v8058 = vmul.f32 %v8057, %v4244
        %v8059 = vsub.f32 %v8053, %v8058
        %v8060 = vmul.f32 %v8059, %v8059
        %8061 = vadd.xlane.f32.xlu0 %v8060
        %v8062 = vpop.xlane.xlu0 %8061
        %v8063 = vmul.f32 %v8062, %v4244
        %v8064 = vadd.f32 %v8063, 1e-05
        %v8065 = vrsqrt.pop %v8064
        %v8066 = vmul.f32 %v8059, %v8065
        %v8068 = vlaneseq
        %v8069 = vshrl.u32 %v8068, 7
        %v8070 = vsub.s32 0, %v8069
        %v8071 = vrot.slane %v8054, %v8070
        %v8073 = vmul.f32 %v8066, %v8071
        %v8075 = vlaneseq
        %v8076 = vshrl.u32 %v8075, 7
        %v8077 = vsub.s32 0, %v8076
        %v8078 = vrot.slane %v8055, %v8077
        %v8080 = vadd.f32 %v8073, %v8078
        %8081 = vst [vmem:[%s592] sm:$0xff] %v8080
        %s8082 = sand.u32 %s369, 1
        %s8083 = scalar_lea.sflag [#allocation4], %s8082
        %s8084 = sand.u32 %s369, 1
        %s8085 = smul.addr %s8084, 8
        %s8086 = scalar_lea.vmem [#allocation11], %s8085
        // Predicated region
        $region101: #{tpu_custom_call.1} parent=79 // pred_check
          %p8087 = pneg %p379
        $region102: #{tpu_custom_call.1} parent=79 // pred_check_branch
          %8089 = sbr.rel (%p8087) target = $region104
        $region103: #{tpu_custom_call.1} parent=79 // pred_region
          %s8091 = ssub.s32 128, 128
          %8092 = vsyncadd %s8083, %s8091
          %s8093 = smul.addr %s36, 128
          %s8094 = scalar_lea.hbm %s15, %s8093
          %s8096 = sshll.u32 %s8086, 4
          %s8097 = int_to_ptr.vmem [resolvable:$true] %s8096
          %8099 = dma.vmem_to_hbm [thread:$0]  %s8097, 128, %s8094, %s8083
        $region104: #{tpu_custom_call.1} parent=79 // pred_fallthru
          _
      $region80: #{tpu_custom_call.1} parent=5 // pred_fallthru
        _
      %p8100 = scmp.le.s32.totalorder 2, %s31
      // Predicated region
      $region105: #{tpu_custom_call.1} parent=5 // pred_check
        %p8101 = pneg %p8100
      $region106: #{tpu_custom_call.1} parent=5 // pred_check_branch
        %8103 = sbr.rel (%p8101) target = $region108
      $region107: #{tpu_custom_call.1} parent=5 // pred_region
        %s8104 = ssub.s32 %s31, 2
        // Predicated region
        $region109: #{tpu_custom_call.1} parent=107 // pred_check
          %p8105 = pneg %p385
        $region110: #{tpu_custom_call.1} parent=107 // pred_check_branch
          %8107 = sbr.rel (%p8105) target = $region112
        $region111: #{tpu_custom_call.1} parent=107 // pred_region
          %s8108 = sand.u32 %s370, 1
          %s8109 = scalar_lea.sflag [#allocation4], %s8108
          %s8110 = sand.u32 %s370, 1
          %s8111 = smul.addr %s8110, 8
          %s8112 = scalar_lea.vmem [#allocation11], %s8111
          %8113 = dma.done %s8109, 128
        $region112: #{tpu_custom_call.1} parent=107 // pred_fallthru
          _
      $region108: #{tpu_custom_call.1} parent=5 // pred_fallthru
        _
    $region6: #{tpu_custom_call.1} parent=1 // loop_footer
      %s35 = sadd.s32 1, %s31
    $region7: #{tpu_custom_call.1} parent=1 // loop_footer_branch
      %30 = sbr.rel target = $region3
    $region8: #{tpu_custom_call.1} parent=1 // loop_exit
      _
    %8114 = vsyncpa [#allocation3], 1
    %s8115 = scalar_lea.sflag [#allocation3], 1
    %8116 = vsyncpa %s8115, 1
    %8117 = vsyncpa [#allocation6], 1
    %s8118 = scalar_lea.sflag [#allocation6], 1
    %8119 = vsyncpa %s8118, 1
    %8120 = vsyncpa [#allocation9], 1
    %8121 = vsyncpa [#allocation4], 1
    %s8122 = scalar_lea.sflag [#allocation4], 1
    %8123 = vsyncpa %s8122, 1

</llo_original>
